<compile_context>
chip_gen: v6e
topology: v6e:2x2x1
jax: 0.10.0
libtpu: 0.0.40
codegen_flags: <defaults>
</compile_context>

<pallas_src>
import functools

import numpy as np
import jax
import jax.numpy as jnp
from jax.experimental import pallas as pl
from jax.experimental.pallas import tpu as pltpu


# ----------------------------------------------------------------------------
# Host-side constant-matrix builders (pure numpy, evaluated once at init)
# ----------------------------------------------------------------------------
def _shift_matrix(n_out, n_in, stride, pad, tap):
    """Q[o, i] = 1  iff  i == o*stride + tap - pad  and  0 <= i < n_in."""
    q = np.zeros((n_out, n_in), np.float32)
    for o in range(n_out):
        i = o * stride + tap - pad
        if 0 <= i < n_in:
            q[o, i] = 1.0
    return q


def _interp_matrix(n_in, n_out):
    """Bilinear interpolation matrix, align_corners=True (PyTorch semantics)."""
    u = np.zeros((n_out, n_in), np.float32)
    denom = max(n_out - 1, 1)
    for o in range(n_out):
        src = o * (n_in - 1) / denom
        i0 = int(np.floor(src))
        i1 = min(i0 + 1, n_in - 1)
        f = src - i0
        u[o, i0] += 1.0 - f
        u[o, i1] += f
    return u


# ----------------------------------------------------------------------------
# Deterministic parameter construction (synthetic, no checkpoint load)
# ----------------------------------------------------------------------------
def _conv_bn_params(key, cin, cout, k):
    k0, k1, k2, k3 = jax.random.split(key, 4)
    w = 0.1 * jax.random.normal(k0, (k, k, cin, cout), jnp.float32)
    gamma = 1.0 + 0.1 * jax.random.normal(k1, (cout,), jnp.float32)
    beta = 0.1 * jax.random.normal(k2, (cout,), jnp.float32)
    run_mean = 0.1 * jax.random.normal(k3, (cout,), jnp.float32)
    run_var = jnp.ones((cout,), jnp.float32)
    eps = 1e-5
    scale = gamma / jnp.sqrt(run_var + eps)
    bias = beta - run_mean * scale
    return dict(w=w, scale=scale, bias=bias)


def _plain_conv_params(key, cin, cout, k):
    k0, k1 = jax.random.split(key, 2)
    w = 0.1 * jax.random.normal(k0, (k, k, cin, cout), jnp.float32)
    b = 0.1 * jax.random.normal(k1, (cout,), jnp.float32)
    return dict(w=w, scale=jnp.ones((cout,), jnp.float32), bias=b)


def init_featurenet_params(seed=0):
    keys = jax.random.split(jax.random.PRNGKey(seed), 13)
    return {
        'conv0_0': _conv_bn_params(keys[0], 3, 8, 3),
        'conv0_1': _conv_bn_params(keys[1], 8, 8, 3),
        'conv1_0': _conv_bn_params(keys[2], 8, 16, 5),
        'conv1_1': _conv_bn_params(keys[3], 16, 16, 3),
        'conv1_2': _conv_bn_params(keys[4], 16, 16, 3),
        'conv2_0': _conv_bn_params(keys[5], 16, 32, 5),
        'conv2_1': _conv_bn_params(keys[6], 32, 32, 3),
        'conv2_2': _conv_bn_params(keys[7], 32, 32, 3),
        'toplayer': _plain_conv_params(keys[8], 32, 32, 1),
        'lat1': _plain_conv_params(keys[9], 16, 32, 1),
        'lat0': _plain_conv_params(keys[10], 8, 32, 1),
        'smooth1': _plain_conv_params(keys[11], 32, 16, 3),
        'smooth0': _plain_conv_params(keys[12], 32, 8, 3),
    }


# ----------------------------------------------------------------------------
# Plan builder: repack conv/BN weights into the constant matmul matrices that
# feed the single fused kernel.  Run once at init (host-side, numpy).
# ----------------------------------------------------------------------------
_LAYER_DEFS = (
    #  name      k  stride pad  relu  input stage (0: full res, 1: /2, 2: /4)
    ('conv0_0', 3, 1, 1, True, 0),
    ('conv0_1', 3, 1, 1, True, 0),
    ('conv1_0', 5, 2, 2, True, 0),
    ('conv1_1', 3, 1, 1, True, 1),
    ('conv1_2', 3, 1, 1, True, 1),
    ('conv2_0', 5, 2, 2, True, 1),
    ('conv2_1', 3, 1, 1, True, 2),
    ('conv2_2', 3, 1, 1, True, 2),
    ('toplayer', 1, 1, 0, False, 2),
    ('lat1', 1, 1, 0, False, 1),
    ('lat0', 1, 1, 0, False, 0),
    ('smooth1', 3, 1, 1, False, 1),
    ('smooth0', 3, 1, 1, False, 0),
)


def build_featurenet_plan(params, batch, height, width):
    N = batch

    def out_hw(h, w, k, s, p):
        return (h + 2 * p - k) // s + 1, (w + 2 * p - k) // s + 1

    hw = [(height, width)]
    hw.append(out_hw(*hw[0], 5, 2, 2))   # stage 1
    hw.append(out_hw(*hw[1], 5, 2, 2))   # stage 2
    assert hw[0] == (2 * hw[1][0], 2 * hw[1][1])
    assert hw[1] == (2 * hw[2][0], 2 * hw[2][1])

    consts = []
    s_cache = {}
    layers = {}

    def add(a):
        consts.append(jnp.asarray(a, jnp.float32))
        return len(consts) - 1

    for name, k, stride, pad, relu, stage in _LAYER_DEFS:
        p = params[name]
        w = np.asarray(p['w'], np.float32)          # (k, k, Cin, Cout)
        scale = np.asarray(p['scale'], np.float32)  # (Cout,)  BN scale (or 1)
        bias = np.asarray(p['bias'], np.float32)    # (Cout,)  folded bias
        cin, cout = w.shape[2], w.shape[3]
        H, W = hw[stage]
        Ho, Wo = out_hw(H, W, k, stride, pad)

        # M_kh: horizontal taps + stride + zero padding + weights + BN scale.
        m_stack = np.zeros((k, W * cin, Wo * cout), np.float32)
        for kh in range(k):
            for kw in range(k):
                P = _shift_matrix(Wo, W, stride, pad, kw).T       # (W, Wo)
                if P.any():
                    m_stack[kh] += np.kron(P, w[kh, kw] * scale[None, :])
        m_idx = add(m_stack)

        # S_kh: vertical taps + stride + zero padding (shared per geometry).
        if k == 1 and stride == 1 and pad == 0:
            s_idx, s_identity = None, ()              # identity: skip the matmul
        else:
            geom = (H, Ho, k, stride, pad)
            if geom not in s_cache:
                qs = [_shift_matrix(Ho, H, stride, pad, kh) for kh in range(k)]
                s_stack = np.stack(
                    [np.kron(np.eye(N, dtype=np.float32), q) for q in qs], 0)
                ident = tuple(
                    bool(np.array_equal(q, np.eye(H, dtype=np.float32)))
                    for q in qs)
                s_cache[geom] = (add(s_stack), ident)
            s_idx, s_identity = s_cache[geom]

        b_idx = add(np.tile(bias, Wo)[None, :])       # (1, Wo*Cout)

        layers[name] = dict(k=k, relu=relu, S=s_idx, S_id=s_identity,
                            M=m_idx, b=b_idx)

    # Bilinear x2 upsample (align_corners=True), separable:  up = SU @ X @ MU.
    def upsample(level_in, level_out, c):
        (hi, wi), (ho, wo) = hw[level_in], hw[level_out]
        su = np.kron(np.eye(N, dtype=np.float32), _interp_matrix(hi, ho))
        mu = np.kron(_interp_matrix(wi, wo).T, np.eye(c, dtype=np.float32))
        return add(su), add(mu)

    plan = dict(layers=layers,
                up21=upsample(2, 1, 32),
                up10=upsample(1, 0, 32),
                batch=N, hw=tuple(hw), out_channels=(32, 16, 8))
    return consts, plan


# ----------------------------------------------------------------------------
# The single fused Pallas kernel
# ----------------------------------------------------------------------------
def _make_fused_kernel(plan, num_consts):
    layers = plan['layers']
    up21, up10 = plan['up21'], plan['up10']

    def kernel(*refs):
        x_ref = refs[0]
        cref = refs[1:1 + num_consts]
        feat2_ref, feat1_ref, feat0_ref = refs[1 + num_consts:]

        def conv(a, name):
            cfg = layers[name]
            m_ref = cref[cfg['M']]
            acc = None
            for kh in range(cfg['k']):
                rows = a
                if cfg['S'] is not None and not cfg['S_id'][kh]:
                    rows = jnp.dot(cref[cfg['S']][kh], a,
                                   preferred_element_type=jnp.float32)
                part = jnp.dot(rows, m_ref[kh],
                               preferred_element_type=jnp.float32)
                acc = part if acc is None else acc + part
            out = acc + cref[cfg['b']][...]
            if cfg['relu']:
                out = jnp.maximum(out, 0.0)
            return out

        def upsample_add(top, lateral, idx):
            su = cref[idx[0]][...]
            mu = cref[idx[1]][...]
            up = jnp.dot(jnp.dot(su, top, preferred_element_type=jnp.float32),
                         mu, preferred_element_type=jnp.float32)
            return up + lateral

        x = x_ref[...]                                   # (N*H0, W0*Cin)
        c0 = conv(conv(x, 'conv0_0'), 'conv0_1')         # (N*H0, W0*8)
        c1 = conv(conv(conv(c0, 'conv1_0'), 'conv1_1'), 'conv1_2')  # (N*H1, W1*16)
        c2 = conv(conv(conv(c1, 'conv2_0'), 'conv2_1'), 'conv2_2')  # (N*H2, W2*32)

        feat2 = conv(c2, 'toplayer')                                 # (N*H2, W2*32)
        feat1 = upsample_add(feat2, conv(c1, 'lat1'), up21)          # (N*H1, W1*32)
        feat0 = upsample_add(feat1, conv(c0, 'lat0'), up10)          # (N*H0, W0*32)

        feat2_ref[...] = feat2
        feat1_ref[...] = conv(feat1, 'smooth1')                      # (N*H1, W1*16)
        feat0_ref[...] = conv(feat0, 'smooth0')                      # (N*H0, W0*8)

    return kernel


def featurenet_apply(consts, x_nchw, *, plan):
    """Fused FeatureNet forward.  Returns [feat2, feat1, feat0] in NCHW."""
    N = plan['batch']
    (H0, W0), (H1, W1), (H2, W2) = plan['hw']
    C2, C1, C0 = plan['out_channels']
    cin = x_nchw.shape[1]

    # NCHW -> lane-dense 2-D layout (N*H, W*C), channels minor.
    x2d = jnp.transpose(x_nchw.astype(jnp.float32), (0, 2, 3, 1)
                        ).reshape(N * H0, W0 * cin)

    inputs = [x2d] + list(consts)
    kernel = _make_fused_kernel(plan, len(consts))

    def full_spec(shape):
        nd = len(shape)
        return pl.BlockSpec(shape, lambda i, _nd=nd: (0,) * _nd)

    out_shapes = (
        jax.ShapeDtypeStruct((N * H2, W2 * C2), jnp.float32),   # feat2
        jax.ShapeDtypeStruct((N * H1, W1 * C1), jnp.float32),   # feat1
        jax.ShapeDtypeStruct((N * H0, W0 * C0), jnp.float32),   # feat0
    )

    feat2, feat1, feat0 = pl.pallas_call(
        kernel,
        out_shape=out_shapes,
        grid=(1,),
        in_specs=[full_spec(a.shape) for a in inputs],
        out_specs=tuple(full_spec(s.shape) for s in out_shapes),
        compiler_params=pltpu.CompilerParams(
            dimension_semantics=("arbitrary",),
            vmem_limit_bytes=32 * 1024 * 1024),
    )(*inputs)

    def to_nchw(t, h, w, c):
        return jnp.transpose(t.reshape(N, h, w, c), (0, 3, 1, 2))

    return [to_nchw(feat2, H2, W2, C2),
            to_nchw(feat1, H1, W1, C1),
            to_nchw(feat0, H0, W0, C0)]


# ----------------------------------------------------------------------------
# Plain-JAX (XLA) reference with identical semantics, for validation
# ----------------------------------------------------------------------------
def _ref_conv(x, p, stride, pad, relu):
    out = jax.lax.conv_general_dilated(
        x, p['w'], window_strides=(stride, stride),
        padding=[(pad, pad), (pad, pad)],
        dimension_numbers=('NHWC', 'HWIO', 'NHWC'))
    out = out * p['scale'] + p['bias']
    return jnp.maximum(out, 0.0) if relu else out


def _ref_upsample_add(x, y):
    _, h, w, _ = x.shape
    _, ho, wo, _ = y.shape
    uh = jnp.asarray(_interp_matrix(h, ho))
    uw = jnp.asarray(_interp_matrix(w, wo))
    return jnp.einsum('oh,pw,nhwc->nopc', uh, uw, x) + y


def featurenet_reference(params, x_nchw):
    x = jnp.transpose(x_nchw.astype(jnp.float32), (0, 2, 3, 1))
    c0 = _ref_conv(x, params['conv0_0'], 1, 1, True)
    c0 = _ref_conv(c0, params['conv0_1'], 1, 1, True)
    c1 = _ref_conv(c0, params['conv1_0'], 2, 2, True)
    c1 = _ref_conv(c1, params['conv1_1'], 1, 1, True)
    c1 = _ref_conv(c1, params['conv1_2'], 1, 1, True)
    c2 = _ref_conv(c1, params['conv2_0'], 2, 2, True)
    c2 = _ref_conv(c2, params['conv2_1'], 1, 1, True)
    c2 = _ref_conv(c2, params['conv2_2'], 1, 1, True)
    feat2 = _ref_conv(c2, params['toplayer'], 1, 0, False)
    feat1 = _ref_upsample_add(feat2, _ref_conv(c1, params['lat1'], 1, 0, False))
    feat0 = _ref_upsample_add(feat1, _ref_conv(c0, params['lat0'], 1, 0, False))
    feat1 = _ref_conv(feat1, params['smooth1'], 1, 1, False)
    feat0 = _ref_conv(feat0, params['smooth0'], 1, 1, False)
    to_nchw = lambda t: jnp.transpose(t, (0, 3, 1, 2))
    return [to_nchw(feat2), to_nchw(feat1), to_nchw(feat0)]


# ----------------------------------------------------------------------------
if __name__ == "__main__":
    key = jax.random.PRNGKey(0)
    x = jax.random.normal(key, (2, 3, 16, 16), jnp.float32)   # NCHW input

    params = init_featurenet_params(seed=0)
    # One-time host-side weight repacking into the kernel's constant matrices.
    consts, plan = build_featurenet_plan(params, batch=2, height=16, width=16)

    fwd = jax.jit(functools.partial(featurenet_apply, plan=plan))
    feat2, feat1, feat0 = fwd(consts, x)
    jax.block_until_ready((feat2, feat1, feat0))

    assert feat2.shape == (2, 32, 4, 4)
    assert feat1.shape == (2, 16, 8, 8)
    assert feat0.shape == (2, 8, 16, 16)

    # Validate the fused Pallas kernel against the plain-JAX reference.
    ref2, ref1, ref0 = featurenet_reference(params, x)
    for name, got, want in (('feat2', feat2, ref2), ('feat1', feat1, ref1),
                            ('feat0', feat0, ref0)):
        err = float(jnp.max(jnp.abs(got - want)))
        assert err < 1e-3, f"{name}: max abs error vs reference = {err}"

    print("KERNEL_OK")
</pallas_src>

<mosaic_0001>
module attributes {stable_mosaic.version = 11 : i64} {
  func.func @kernel(%arg0: i32, %arg1: memref<32x48xf32, #tpu.memory_space<vmem>>, %arg2: memref<3x48x128xf32, #tpu.memory_space<vmem>>, %arg3: memref<3x32x32xf32, #tpu.memory_space<vmem>>, %arg4: memref<1x128xf32, #tpu.memory_space<vmem>>, %arg5: memref<3x128x128xf32, #tpu.memory_space<vmem>>, %arg6: memref<1x128xf32, #tpu.memory_space<vmem>>, %arg7: memref<5x128x128xf32, #tpu.memory_space<vmem>>, %arg8: memref<5x16x32xf32, #tpu.memory_space<vmem>>, %arg9: memref<1x128xf32, #tpu.memory_space<vmem>>, %arg10: memref<3x128x128xf32, #tpu.memory_space<vmem>>, %arg11: memref<3x16x16xf32, #tpu.memory_space<vmem>>, %arg12: memref<1x128xf32, #tpu.memory_space<vmem>>, %arg13: memref<3x128x128xf32, #tpu.memory_space<vmem>>, %arg14: memref<1x128xf32, #tpu.memory_space<vmem>>, %arg15: memref<5x128x128xf32, #tpu.memory_space<vmem>>, %arg16: memref<5x8x16xf32, #tpu.memory_space<vmem>>, %arg17: memref<1x128xf32, #tpu.memory_space<vmem>>, %arg18: memref<3x128x128xf32, #tpu.memory_space<vmem>>, %arg19: memref<3x8x8xf32, #tpu.memory_space<vmem>>, %arg20: memref<1x128xf32, #tpu.memory_space<vmem>>, %arg21: memref<3x128x128xf32, #tpu.memory_space<vmem>>, %arg22: memref<1x128xf32, #tpu.memory_space<vmem>>, %arg23: memref<1x128x128xf32, #tpu.memory_space<vmem>>, %arg24: memref<1x128xf32, #tpu.memory_space<vmem>>, %arg25: memref<1x128x256xf32, #tpu.memory_space<vmem>>, %arg26: memref<1x256xf32, #tpu.memory_space<vmem>>, %arg27: memref<1x128x512xf32, #tpu.memory_space<vmem>>, %arg28: memref<1x512xf32, #tpu.memory_space<vmem>>, %arg29: memref<3x256x128xf32, #tpu.memory_space<vmem>>, %arg30: memref<1x128xf32, #tpu.memory_space<vmem>>, %arg31: memref<3x512x128xf32, #tpu.memory_space<vmem>>, %arg32: memref<1x128xf32, #tpu.memory_space<vmem>>, %arg33: memref<16x8xf32, #tpu.memory_space<vmem>>, %arg34: memref<128x256xf32, #tpu.memory_space<vmem>>, %arg35: memref<32x16xf32, #tpu.memory_space<vmem>>, %arg36: memref<256x512xf32, #tpu.memory_space<vmem>>, %arg37: memref<8x128xf32, #tpu.memory_space<vmem>>, %arg38: memref<16x128xf32, #tpu.memory_space<vmem>>, %arg39: memref<32x128xf32, #tpu.memory_space<vmem>>) attributes {dimension_semantics = [#tpu.dimension_semantics<arbitrary>], iteration_bounds = array<i64: 1>, scalar_prefetch = 0 : i64, scratch_operands = 0 : i64, tpu.core_type = #tpu.core_type<tc>, window_params = [{pipeline_mode = #tpu.pipeline_mode<synchronous>, transform_indices = @transform_0, window_bounds = array<i64: 32, 48>}, {pipeline_mode = #tpu.pipeline_mode<synchronous>, transform_indices = @transform_1, window_bounds = array<i64: 3, 48, 128>}, {pipeline_mode = #tpu.pipeline_mode<synchronous>, transform_indices = @transform_2, window_bounds = array<i64: 3, 32, 32>}, {pipeline_mode = #tpu.pipeline_mode<synchronous>, transform_indices = @transform_3, window_bounds = array<i64: 1, 128>}, {pipeline_mode = #tpu.pipeline_mode<synchronous>, transform_indices = @transform_4, window_bounds = array<i64: 3, 128, 128>}, {pipeline_mode = #tpu.pipeline_mode<synchronous>, transform_indices = @transform_5, window_bounds = array<i64: 1, 128>}, {pipeline_mode = #tpu.pipeline_mode<synchronous>, transform_indices = @transform_6, window_bounds = array<i64: 5, 128, 128>}, {pipeline_mode = #tpu.pipeline_mode<synchronous>, transform_indices = @transform_7, window_bounds = array<i64: 5, 16, 32>}, {pipeline_mode = #tpu.pipeline_mode<synchronous>, transform_indices = @transform_8, window_bounds = array<i64: 1, 128>}, {pipeline_mode = #tpu.pipeline_mode<synchronous>, transform_indices = @transform_9, window_bounds = array<i64: 3, 128, 128>}, {pipeline_mode = #tpu.pipeline_mode<synchronous>, transform_indices = @transform_10, window_bounds = array<i64: 3, 16, 16>}, {pipeline_mode = #tpu.pipeline_mode<synchronous>, transform_indices = @transform_11, window_bounds = array<i64: 1, 128>}, {pipeline_mode = #tpu.pipeline_mode<synchronous>, transform_indices = @transform_12, window_bounds = array<i64: 3, 128, 128>}, {pipeline_mode = #tpu.pipeline_mode<synchronous>, transform_indices = @transform_13, window_bounds = array<i64: 1, 128>}, {pipeline_mode = #tpu.pipeline_mode<synchronous>, transform_indices = @transform_14, window_bounds = array<i64: 5, 128, 128>}, {pipeline_mode = #tpu.pipeline_mode<synchronous>, transform_indices = @transform_15, window_bounds = array<i64: 5, 8, 16>}, {pipeline_mode = #tpu.pipeline_mode<synchronous>, transform_indices = @transform_16, window_bounds = array<i64: 1, 128>}, {pipeline_mode = #tpu.pipeline_mode<synchronous>, transform_indices = @transform_17, window_bounds = array<i64: 3, 128, 128>}, {pipeline_mode = #tpu.pipeline_mode<synchronous>, transform_indices = @transform_18, window_bounds = array<i64: 3, 8, 8>}, {pipeline_mode = #tpu.pipeline_mode<synchronous>, transform_indices = @transform_19, window_bounds = array<i64: 1, 128>}, {pipeline_mode = #tpu.pipeline_mode<synchronous>, transform_indices = @transform_20, window_bounds = array<i64: 3, 128, 128>}, {pipeline_mode = #tpu.pipeline_mode<synchronous>, transform_indices = @transform_21, window_bounds = array<i64: 1, 128>}, {pipeline_mode = #tpu.pipeline_mode<synchronous>, transform_indices = @transform_22, window_bounds = array<i64: 1, 128, 128>}, {pipeline_mode = #tpu.pipeline_mode<synchronous>, transform_indices = @transform_23, window_bounds = array<i64: 1, 128>}, {pipeline_mode = #tpu.pipeline_mode<synchronous>, transform_indices = @transform_24, window_bounds = array<i64: 1, 128, 256>}, {pipeline_mode = #tpu.pipeline_mode<synchronous>, transform_indices = @transform_25, window_bounds = array<i64: 1, 256>}, {pipeline_mode = #tpu.pipeline_mode<synchronous>, transform_indices = @transform_26, window_bounds = array<i64: 1, 128, 512>}, {pipeline_mode = #tpu.pipeline_mode<synchronous>, transform_indices = @transform_27, window_bounds = array<i64: 1, 512>}, {pipeline_mode = #tpu.pipeline_mode<synchronous>, transform_indices = @transform_28, window_bounds = array<i64: 3, 256, 128>}, {pipeline_mode = #tpu.pipeline_mode<synchronous>, transform_indices = @transform_29, window_bounds = array<i64: 1, 128>}, {pipeline_mode = #tpu.pipeline_mode<synchronous>, transform_indices = @transform_30, window_bounds = array<i64: 3, 512, 128>}, {pipeline_mode = #tpu.pipeline_mode<synchronous>, transform_indices = @transform_31, window_bounds = array<i64: 1, 128>}, {pipeline_mode = #tpu.pipeline_mode<synchronous>, transform_indices = @transform_32, window_bounds = array<i64: 16, 8>}, {pipeline_mode = #tpu.pipeline_mode<synchronous>, transform_indices = @transform_33, window_bounds = array<i64: 128, 256>}, {pipeline_mode = #tpu.pipeline_mode<synchronous>, transform_indices = @transform_34, window_bounds = array<i64: 32, 16>}, {pipeline_mode = #tpu.pipeline_mode<synchronous>, transform_indices = @transform_35, window_bounds = array<i64: 256, 512>}, {pipeline_mode = #tpu.pipeline_mode<synchronous>, transform_indices = @transform_36, window_bounds = array<i64: 8, 128>}, {pipeline_mode = #tpu.pipeline_mode<synchronous>, transform_indices = @transform_37, window_bounds = array<i64: 16, 128>}, {pipeline_mode = #tpu.pipeline_mode<synchronous>, transform_indices = @transform_38, window_bounds = array<i64: 32, 128>}]} {
    %c0 = arith.constant 0 : index
    %c0_0 = arith.constant 0 : index
    %0 = vector.load %arg1[%c0, %c0_0] : memref<32x48xf32, #tpu.memory_space<vmem>>, vector<32x48xf32>
    %c0_1 = arith.constant 0 : index
    %c0_2 = arith.constant 0 : index
    %c0_3 = arith.constant 0 : index
    %1 = vector.load %arg3[%c0_1, %c0_2, %c0_3] : memref<3x32x32xf32, #tpu.memory_space<vmem>>, vector<1x32x32xf32>
    %2 = vector.shape_cast %1 : vector<1x32x32xf32> to vector<32x32xf32>
    %cst = arith.constant dense<0.000000e+00> : vector<32x48xf32>
    %3 = tpu.matmul %2, %0, %cst {dimension_numbers = #tpu.dot_dimension_numbers<[1], [0], [0], [1], [0, 0, 1, 1], [], []>} : vector<32x32xf32>, vector<32x48xf32>, vector<32x48xf32> -> vector<32x48xf32>
    %c0_4 = arith.constant 0 : index
    %c0_5 = arith.constant 0 : index
    %c0_6 = arith.constant 0 : index
    %4 = vector.load %arg2[%c0_4, %c0_5, %c0_6] : memref<3x48x128xf32, #tpu.memory_space<vmem>>, vector<1x48x128xf32>
    %5 = vector.shape_cast %4 : vector<1x48x128xf32> to vector<48x128xf32>
    %cst_7 = arith.constant dense<0.000000e+00> : vector<32x128xf32>
    %6 = tpu.matmul %3, %5, %cst_7 {dimension_numbers = #tpu.dot_dimension_numbers<[1], [0], [0], [1], [0, 0, 1, 1], [], []>} : vector<32x48xf32>, vector<48x128xf32>, vector<32x128xf32> -> vector<32x128xf32>
    %c1 = arith.constant 1 : index
    %c0_8 = arith.constant 0 : index
    %c0_9 = arith.constant 0 : index
    %7 = vector.load %arg2[%c1, %c0_8, %c0_9] : memref<3x48x128xf32, #tpu.memory_space<vmem>>, vector<1x48x128xf32>
    %8 = vector.shape_cast %7 : vector<1x48x128xf32> to vector<48x128xf32>
    %cst_10 = arith.constant dense<0.000000e+00> : vector<32x128xf32>
    %9 = tpu.matmul %0, %8, %cst_10 {dimension_numbers = #tpu.dot_dimension_numbers<[1], [0], [0], [1], [0, 0, 1, 1], [], []>} : vector<32x48xf32>, vector<48x128xf32>, vector<32x128xf32> -> vector<32x128xf32>
    %10 = arith.addf %6, %9 : vector<32x128xf32>
    %c2 = arith.constant 2 : index
    %c0_11 = arith.constant 0 : index
    %c0_12 = arith.constant 0 : index
    %11 = vector.load %arg3[%c2, %c0_11, %c0_12] : memref<3x32x32xf32, #tpu.memory_space<vmem>>, vector<1x32x32xf32>
    %12 = vector.shape_cast %11 : vector<1x32x32xf32> to vector<32x32xf32>
    %cst_13 = arith.constant dense<0.000000e+00> : vector<32x48xf32>
    %13 = tpu.matmul %12, %0, %cst_13 {dimension_numbers = #tpu.dot_dimension_numbers<[1], [0], [0], [1], [0, 0, 1, 1], [], []>} : vector<32x32xf32>, vector<32x48xf32>, vector<32x48xf32> -> vector<32x48xf32>
    %c2_14 = arith.constant 2 : index
    %c0_15 = arith.constant 0 : index
    %c0_16 = arith.constant 0 : index
    %14 = vector.load %arg2[%c2_14, %c0_15, %c0_16] : memref<3x48x128xf32, #tpu.memory_space<vmem>>, vector<1x48x128xf32>
    %15 = vector.shape_cast %14 : vector<1x48x128xf32> to vector<48x128xf32>
    %cst_17 = arith.constant dense<0.000000e+00> : vector<32x128xf32>
    %16 = tpu.matmul %13, %15, %cst_17 {dimension_numbers = #tpu.dot_dimension_numbers<[1], [0], [0], [1], [0, 0, 1, 1], [], []>} : vector<32x48xf32>, vector<48x128xf32>, vector<32x128xf32> -> vector<32x128xf32>
    %17 = arith.addf %10, %16 : vector<32x128xf32>
    %c0_18 = arith.constant 0 : index
    %c0_19 = arith.constant 0 : index
    %18 = vector.load %arg4[%c0_18, %c0_19] : memref<1x128xf32, #tpu.memory_space<vmem>>, vector<1x128xf32>
    %19 = vector.broadcast %18 : vector<1x128xf32> to vector<32x128xf32>
    %20 = arith.addf %17, %19 : vector<32x128xf32>
    %cst_20 = arith.constant 0.000000e+00 : f32
    %21 = vector.broadcast %cst_20 : f32 to vector<32x128xf32>
    %22 = arith.maximumf %20, %21 : vector<32x128xf32>
    %c0_21 = arith.constant 0 : index
    %c0_22 = arith.constant 0 : index
    %c0_23 = arith.constant 0 : index
    %23 = vector.load %arg3[%c0_21, %c0_22, %c0_23] : memref<3x32x32xf32, #tpu.memory_space<vmem>>, vector<1x32x32xf32>
    %24 = vector.shape_cast %23 : vector<1x32x32xf32> to vector<32x32xf32>
    %cst_24 = arith.constant dense<0.000000e+00> : vector<32x128xf32>
    %25 = tpu.matmul %24, %22, %cst_24 {dimension_numbers = #tpu.dot_dimension_numbers<[1], [0], [0], [1], [0, 0, 1, 1], [], []>} : vector<32x32xf32>, vector<32x128xf32>, vector<32x128xf32> -> vector<32x128xf32>
    %c0_25 = arith.constant 0 : index
    %c0_26 = arith.constant 0 : index
    %c0_27 = arith.constant 0 : index
    %26 = vector.load %arg5[%c0_25, %c0_26, %c0_27] : memref<3x128x128xf32, #tpu.memory_space<vmem>>, vector<1x128x128xf32>
    %27 = vector.shape_cast %26 : vector<1x128x128xf32> to vector<128x128xf32>
    %cst_28 = arith.constant dense<0.000000e+00> : vector<32x128xf32>
    %28 = tpu.matmul %25, %27, %cst_28 {dimension_numbers = #tpu.dot_dimension_numbers<[1], [0], [0], [1], [0, 0, 1, 1], [], []>} : vector<32x128xf32>, vector<128x128xf32>, vector<32x128xf32> -> vector<32x128xf32>
    %c1_29 = arith.constant 1 : index
    %c0_30 = arith.constant 0 : index
    %c0_31 = arith.constant 0 : index
    %29 = vector.load %arg5[%c1_29, %c0_30, %c0_31] : memref<3x128x128xf32, #tpu.memory_space<vmem>>, vector<1x128x128xf32>
    %30 = vector.shape_cast %29 : vector<1x128x128xf32> to vector<128x128xf32>
    %cst_32 = arith.constant dense<0.000000e+00> : vector<32x128xf32>
    %31 = tpu.matmul %22, %30, %cst_32 {dimension_numbers = #tpu.dot_dimension_numbers<[1], [0], [0], [1], [0, 0, 1, 1], [], []>} : vector<32x128xf32>, vector<128x128xf32>, vector<32x128xf32> -> vector<32x128xf32>
    %32 = arith.addf %28, %31 : vector<32x128xf32>
    %c2_33 = arith.constant 2 : index
    %c0_34 = arith.constant 0 : index
    %c0_35 = arith.constant 0 : index
    %33 = vector.load %arg3[%c2_33, %c0_34, %c0_35] : memref<3x32x32xf32, #tpu.memory_space<vmem>>, vector<1x32x32xf32>
    %34 = vector.shape_cast %33 : vector<1x32x32xf32> to vector<32x32xf32>
    %cst_36 = arith.constant dense<0.000000e+00> : vector<32x128xf32>
    %35 = tpu.matmul %34, %22, %cst_36 {dimension_numbers = #tpu.dot_dimension_numbers<[1], [0], [0], [1], [0, 0, 1, 1], [], []>} : vector<32x32xf32>, vector<32x128xf32>, vector<32x128xf32> -> vector<32x128xf32>
    %c2_37 = arith.constant 2 : index
    %c0_38 = arith.constant 0 : index
    %c0_39 = arith.constant 0 : index
    %36 = vector.load %arg5[%c2_37, %c0_38, %c0_39] : memref<3x128x128xf32, #tpu.memory_space<vmem>>, vector<1x128x128xf32>
    %37 = vector.shape_cast %36 : vector<1x128x128xf32> to vector<128x128xf32>
    %cst_40 = arith.constant dense<0.000000e+00> : vector<32x128xf32>
    %38 = tpu.matmul %35, %37, %cst_40 {dimension_numbers = #tpu.dot_dimension_numbers<[1], [0], [0], [1], [0, 0, 1, 1], [], []>} : vector<32x128xf32>, vector<128x128xf32>, vector<32x128xf32> -> vector<32x128xf32>
    %39 = arith.addf %32, %38 : vector<32x128xf32>
    %c0_41 = arith.constant 0 : index
    %c0_42 = arith.constant 0 : index
    %40 = vector.load %arg6[%c0_41, %c0_42] : memref<1x128xf32, #tpu.memory_space<vmem>>, vector<1x128xf32>
    %41 = vector.broadcast %40 : vector<1x128xf32> to vector<32x128xf32>
    %42 = arith.addf %39, %41 : vector<32x128xf32>
    %cst_43 = arith.constant 0.000000e+00 : f32
    %43 = vector.broadcast %cst_43 : f32 to vector<32x128xf32>
    %44 = arith.maximumf %42, %43 : vector<32x128xf32>
    %c0_44 = arith.constant 0 : index
    %c0_45 = arith.constant 0 : index
    %c0_46 = arith.constant 0 : index
    %45 = vector.load %arg8[%c0_44, %c0_45, %c0_46] : memref<5x16x32xf32, #tpu.memory_space<vmem>>, vector<1x16x32xf32>
    %46 = vector.shape_cast %45 : vector<1x16x32xf32> to vector<16x32xf32>
    %cst_47 = arith.constant dense<0.000000e+00> : vector<16x128xf32>
    %47 = tpu.matmul %46, %44, %cst_47 {dimension_numbers = #tpu.dot_dimension_numbers<[1], [0], [0], [1], [0, 0, 1, 1], [], []>} : vector<16x32xf32>, vector<32x128xf32>, vector<16x128xf32> -> vector<16x128xf32>
    %c0_48 = arith.constant 0 : index
    %c0_49 = arith.constant 0 : index
    %c0_50 = arith.constant 0 : index
    %48 = vector.load %arg7[%c0_48, %c0_49, %c0_50] : memref<5x128x128xf32, #tpu.memory_space<vmem>>, vector<1x128x128xf32>
    %49 = vector.shape_cast %48 : vector<1x128x128xf32> to vector<128x128xf32>
    %cst_51 = arith.constant dense<0.000000e+00> : vector<16x128xf32>
    %50 = tpu.matmul %47, %49, %cst_51 {dimension_numbers = #tpu.dot_dimension_numbers<[1], [0], [0], [1], [0, 0, 1, 1], [], []>} : vector<16x128xf32>, vector<128x128xf32>, vector<16x128xf32> -> vector<16x128xf32>
    %c1_52 = arith.constant 1 : index
    %c0_53 = arith.constant 0 : index
    %c0_54 = arith.constant 0 : index
    %51 = vector.load %arg8[%c1_52, %c0_53, %c0_54] : memref<5x16x32xf32, #tpu.memory_space<vmem>>, vector<1x16x32xf32>
    %52 = vector.shape_cast %51 : vector<1x16x32xf32> to vector<16x32xf32>
    %cst_55 = arith.constant dense<0.000000e+00> : vector<16x128xf32>
    %53 = tpu.matmul %52, %44, %cst_55 {dimension_numbers = #tpu.dot_dimension_numbers<[1], [0], [0], [1], [0, 0, 1, 1], [], []>} : vector<16x32xf32>, vector<32x128xf32>, vector<16x128xf32> -> vector<16x128xf32>
    %c1_56 = arith.constant 1 : index
    %c0_57 = arith.constant 0 : index
    %c0_58 = arith.constant 0 : index
    %54 = vector.load %arg7[%c1_56, %c0_57, %c0_58] : memref<5x128x128xf32, #tpu.memory_space<vmem>>, vector<1x128x128xf32>
    %55 = vector.shape_cast %54 : vector<1x128x128xf32> to vector<128x128xf32>
    %cst_59 = arith.constant dense<0.000000e+00> : vector<16x128xf32>
    %56 = tpu.matmul %53, %55, %cst_59 {dimension_numbers = #tpu.dot_dimension_numbers<[1], [0], [0], [1], [0, 0, 1, 1], [], []>} : vector<16x128xf32>, vector<128x128xf32>, vector<16x128xf32> -> vector<16x128xf32>
    %57 = arith.addf %50, %56 : vector<16x128xf32>
    %c2_60 = arith.constant 2 : index
    %c0_61 = arith.constant 0 : index
    %c0_62 = arith.constant 0 : index
    %58 = vector.load %arg8[%c2_60, %c0_61, %c0_62] : memref<5x16x32xf32, #tpu.memory_space<vmem>>, vector<1x16x32xf32>
    %59 = vector.shape_cast %58 : vector<1x16x32xf32> to vector<16x32xf32>
    %cst_63 = arith.constant dense<0.000000e+00> : vector<16x128xf32>
    %60 = tpu.matmul %59, %44, %cst_63 {dimension_numbers = #tpu.dot_dimension_numbers<[1], [0], [0], [1], [0, 0, 1, 1], [], []>} : vector<16x32xf32>, vector<32x128xf32>, vector<16x128xf32> -> vector<16x128xf32>
    %c2_64 = arith.constant 2 : index
    %c0_65 = arith.constant 0 : index
    %c0_66 = arith.constant 0 : index
    %61 = vector.load %arg7[%c2_64, %c0_65, %c0_66] : memref<5x128x128xf32, #tpu.memory_space<vmem>>, vector<1x128x128xf32>
    %62 = vector.shape_cast %61 : vector<1x128x128xf32> to vector<128x128xf32>
    %cst_67 = arith.constant dense<0.000000e+00> : vector<16x128xf32>
    %63 = tpu.matmul %60, %62, %cst_67 {dimension_numbers = #tpu.dot_dimension_numbers<[1], [0], [0], [1], [0, 0, 1, 1], [], []>} : vector<16x128xf32>, vector<128x128xf32>, vector<16x128xf32> -> vector<16x128xf32>
    %64 = arith.addf %57, %63 : vector<16x128xf32>
    %c3 = arith.constant 3 : index
    %c0_68 = arith.constant 0 : index
    %c0_69 = arith.constant 0 : index
    %65 = vector.load %arg8[%c3, %c0_68, %c0_69] : memref<5x16x32xf32, #tpu.memory_space<vmem>>, vector<1x16x32xf32>
    %66 = vector.shape_cast %65 : vector<1x16x32xf32> to vector<16x32xf32>
    %cst_70 = arith.constant dense<0.000000e+00> : vector<16x128xf32>
    %67 = tpu.matmul %66, %44, %cst_70 {dimension_numbers = #tpu.dot_dimension_numbers<[1], [0], [0], [1], [0, 0, 1, 1], [], []>} : vector<16x32xf32>, vector<32x128xf32>, vector<16x128xf32> -> vector<16x128xf32>
    %c3_71 = arith.constant 3 : index
    %c0_72 = arith.constant 0 : index
    %c0_73 = arith.constant 0 : index
    %68 = vector.load %arg7[%c3_71, %c0_72, %c0_73] : memref<5x128x128xf32, #tpu.memory_space<vmem>>, vector<1x128x128xf32>
    %69 = vector.shape_cast %68 : vector<1x128x128xf32> to vector<128x128xf32>
    %cst_74 = arith.constant dense<0.000000e+00> : vector<16x128xf32>
    %70 = tpu.matmul %67, %69, %cst_74 {dimension_numbers = #tpu.dot_dimension_numbers<[1], [0], [0], [1], [0, 0, 1, 1], [], []>} : vector<16x128xf32>, vector<128x128xf32>, vector<16x128xf32> -> vector<16x128xf32>
    %71 = arith.addf %64, %70 : vector<16x128xf32>
    %c4 = arith.constant 4 : index
    %c0_75 = arith.constant 0 : index
    %c0_76 = arith.constant 0 : index
    %72 = vector.load %arg8[%c4, %c0_75, %c0_76] : memref<5x16x32xf32, #tpu.memory_space<vmem>>, vector<1x16x32xf32>
    %73 = vector.shape_cast %72 : vector<1x16x32xf32> to vector<16x32xf32>
    %cst_77 = arith.constant dense<0.000000e+00> : vector<16x128xf32>
    %74 = tpu.matmul %73, %44, %cst_77 {dimension_numbers = #tpu.dot_dimension_numbers<[1], [0], [0], [1], [0, 0, 1, 1], [], []>} : vector<16x32xf32>, vector<32x128xf32>, vector<16x128xf32> -> vector<16x128xf32>
    %c4_78 = arith.constant 4 : index
    %c0_79 = arith.constant 0 : index
    %c0_80 = arith.constant 0 : index
    %75 = vector.load %arg7[%c4_78, %c0_79, %c0_80] : memref<5x128x128xf32, #tpu.memory_space<vmem>>, vector<1x128x128xf32>
    %76 = vector.shape_cast %75 : vector<1x128x128xf32> to vector<128x128xf32>
    %cst_81 = arith.constant dense<0.000000e+00> : vector<16x128xf32>
    %77 = tpu.matmul %74, %76, %cst_81 {dimension_numbers = #tpu.dot_dimension_numbers<[1], [0], [0], [1], [0, 0, 1, 1], [], []>} : vector<16x128xf32>, vector<128x128xf32>, vector<16x128xf32> -> vector<16x128xf32>
    %78 = arith.addf %71, %77 : vector<16x128xf32>
    %c0_82 = arith.constant 0 : index
    %c0_83 = arith.constant 0 : index
    %79 = vector.load %arg9[%c0_82, %c0_83] : memref<1x128xf32, #tpu.memory_space<vmem>>, vector<1x128xf32>
    %80 = vector.broadcast %79 : vector<1x128xf32> to vector<16x128xf32>
    %81 = arith.addf %78, %80 : vector<16x128xf32>
    %cst_84 = arith.constant 0.000000e+00 : f32
    %82 = vector.broadcast %cst_84 : f32 to vector<16x128xf32>
    %83 = arith.maximumf %81, %82 : vector<16x128xf32>
    %c0_85 = arith.constant 0 : index
    %c0_86 = arith.constant 0 : index
    %c0_87 = arith.constant 0 : index
    %84 = vector.load %arg11[%c0_85, %c0_86, %c0_87] : memref<3x16x16xf32, #tpu.memory_space<vmem>>, vector<1x16x16xf32>
    %85 = vector.shape_cast %84 : vector<1x16x16xf32> to vector<16x16xf32>
    %cst_88 = arith.constant dense<0.000000e+00> : vector<16x128xf32>
    %86 = tpu.matmul %85, %83, %cst_88 {dimension_numbers = #tpu.dot_dimension_numbers<[1], [0], [0], [1], [0, 0, 1, 1], [], []>} : vector<16x16xf32>, vector<16x128xf32>, vector<16x128xf32> -> vector<16x128xf32>
    %c0_89 = arith.constant 0 : index
    %c0_90 = arith.constant 0 : index
    %c0_91 = arith.constant 0 : index
    %87 = vector.load %arg10[%c0_89, %c0_90, %c0_91] : memref<3x128x128xf32, #tpu.memory_space<vmem>>, vector<1x128x128xf32>
    %88 = vector.shape_cast %87 : vector<1x128x128xf32> to vector<128x128xf32>
    %cst_92 = arith.constant dense<0.000000e+00> : vector<16x128xf32>
    %89 = tpu.matmul %86, %88, %cst_92 {dimension_numbers = #tpu.dot_dimension_numbers<[1], [0], [0], [1], [0, 0, 1, 1], [], []>} : vector<16x128xf32>, vector<128x128xf32>, vector<16x128xf32> -> vector<16x128xf32>
    %c1_93 = arith.constant 1 : index
    %c0_94 = arith.constant 0 : index
    %c0_95 = arith.constant 0 : index
    %90 = vector.load %arg10[%c1_93, %c0_94, %c0_95] : memref<3x128x128xf32, #tpu.memory_space<vmem>>, vector<1x128x128xf32>
    %91 = vector.shape_cast %90 : vector<1x128x128xf32> to vector<128x128xf32>
    %cst_96 = arith.constant dense<0.000000e+00> : vector<16x128xf32>
    %92 = tpu.matmul %83, %91, %cst_96 {dimension_numbers = #tpu.dot_dimension_numbers<[1], [0], [0], [1], [0, 0, 1, 1], [], []>} : vector<16x128xf32>, vector<128x128xf32>, vector<16x128xf32> -> vector<16x128xf32>
    %93 = arith.addf %89, %92 : vector<16x128xf32>
    %c2_97 = arith.constant 2 : index
    %c0_98 = arith.constant 0 : index
    %c0_99 = arith.constant 0 : index
    %94 = vector.load %arg11[%c2_97, %c0_98, %c0_99] : memref<3x16x16xf32, #tpu.memory_space<vmem>>, vector<1x16x16xf32>
    %95 = vector.shape_cast %94 : vector<1x16x16xf32> to vector<16x16xf32>
    %cst_100 = arith.constant dense<0.000000e+00> : vector<16x128xf32>
    %96 = tpu.matmul %95, %83, %cst_100 {dimension_numbers = #tpu.dot_dimension_numbers<[1], [0], [0], [1], [0, 0, 1, 1], [], []>} : vector<16x16xf32>, vector<16x128xf32>, vector<16x128xf32> -> vector<16x128xf32>
    %c2_101 = arith.constant 2 : index
    %c0_102 = arith.constant 0 : index
    %c0_103 = arith.constant 0 : index
    %97 = vector.load %arg10[%c2_101, %c0_102, %c0_103] : memref<3x128x128xf32, #tpu.memory_space<vmem>>, vector<1x128x128xf32>
    %98 = vector.shape_cast %97 : vector<1x128x128xf32> to vector<128x128xf32>
    %cst_104 = arith.constant dense<0.000000e+00> : vector<16x128xf32>
    %99 = tpu.matmul %96, %98, %cst_104 {dimension_numbers = #tpu.dot_dimension_numbers<[1], [0], [0], [1], [0, 0, 1, 1], [], []>} : vector<16x128xf32>, vector<128x128xf32>, vector<16x128xf32> -> vector<16x128xf32>
    %100 = arith.addf %93, %99 : vector<16x128xf32>
    %c0_105 = arith.constant 0 : index
    %c0_106 = arith.constant 0 : index
    %101 = vector.load %arg12[%c0_105, %c0_106] : memref<1x128xf32, #tpu.memory_space<vmem>>, vector<1x128xf32>
    %102 = vector.broadcast %101 : vector<1x128xf32> to vector<16x128xf32>
    %103 = arith.addf %100, %102 : vector<16x128xf32>
    %cst_107 = arith.constant 0.000000e+00 : f32
    %104 = vector.broadcast %cst_107 : f32 to vector<16x128xf32>
    %105 = arith.maximumf %103, %104 : vector<16x128xf32>
    %c0_108 = arith.constant 0 : index
    %c0_109 = arith.constant 0 : index
    %c0_110 = arith.constant 0 : index
    %106 = vector.load %arg11[%c0_108, %c0_109, %c0_110] : memref<3x16x16xf32, #tpu.memory_space<vmem>>, vector<1x16x16xf32>
    %107 = vector.shape_cast %106 : vector<1x16x16xf32> to vector<16x16xf32>
    %cst_111 = arith.constant dense<0.000000e+00> : vector<16x128xf32>
    %108 = tpu.matmul %107, %105, %cst_111 {dimension_numbers = #tpu.dot_dimension_numbers<[1], [0], [0], [1], [0, 0, 1, 1], [], []>} : vector<16x16xf32>, vector<16x128xf32>, vector<16x128xf32> -> vector<16x128xf32>
    %c0_112 = arith.constant 0 : index
    %c0_113 = arith.constant 0 : index
    %c0_114 = arith.constant 0 : index
    %109 = vector.load %arg13[%c0_112, %c0_113, %c0_114] : memref<3x128x128xf32, #tpu.memory_space<vmem>>, vector<1x128x128xf32>
    %110 = vector.shape_cast %109 : vector<1x128x128xf32> to vector<128x128xf32>
    %cst_115 = arith.constant dense<0.000000e+00> : vector<16x128xf32>
    %111 = tpu.matmul %108, %110, %cst_115 {dimension_numbers = #tpu.dot_dimension_numbers<[1], [0], [0], [1], [0, 0, 1, 1], [], []>} : vector<16x128xf32>, vector<128x128xf32>, vector<16x128xf32> -> vector<16x128xf32>
    %c1_116 = arith.constant 1 : index
    %c0_117 = arith.constant 0 : index
    %c0_118 = arith.constant 0 : index
    %112 = vector.load %arg13[%c1_116, %c0_117, %c0_118] : memref<3x128x128xf32, #tpu.memory_space<vmem>>, vector<1x128x128xf32>
    %113 = vector.shape_cast %112 : vector<1x128x128xf32> to vector<128x128xf32>
    %cst_119 = arith.constant dense<0.000000e+00> : vector<16x128xf32>
    %114 = tpu.matmul %105, %113, %cst_119 {dimension_numbers = #tpu.dot_dimension_numbers<[1], [0], [0], [1], [0, 0, 1, 1], [], []>} : vector<16x128xf32>, vector<128x128xf32>, vector<16x128xf32> -> vector<16x128xf32>
    %115 = arith.addf %111, %114 : vector<16x128xf32>
    %c2_120 = arith.constant 2 : index
    %c0_121 = arith.constant 0 : index
    %c0_122 = arith.constant 0 : index
    %116 = vector.load %arg11[%c2_120, %c0_121, %c0_122] : memref<3x16x16xf32, #tpu.memory_space<vmem>>, vector<1x16x16xf32>
    %117 = vector.shape_cast %116 : vector<1x16x16xf32> to vector<16x16xf32>
    %cst_123 = arith.constant dense<0.000000e+00> : vector<16x128xf32>
    %118 = tpu.matmul %117, %105, %cst_123 {dimension_numbers = #tpu.dot_dimension_numbers<[1], [0], [0], [1], [0, 0, 1, 1], [], []>} : vector<16x16xf32>, vector<16x128xf32>, vector<16x128xf32> -> vector<16x128xf32>
    %c2_124 = arith.constant 2 : index
    %c0_125 = arith.constant 0 : index
    %c0_126 = arith.constant 0 : index
    %119 = vector.load %arg13[%c2_124, %c0_125, %c0_126] : memref<3x128x128xf32, #tpu.memory_space<vmem>>, vector<1x128x128xf32>
    %120 = vector.shape_cast %119 : vector<1x128x128xf32> to vector<128x128xf32>
    %cst_127 = arith.constant dense<0.000000e+00> : vector<16x128xf32>
    %121 = tpu.matmul %118, %120, %cst_127 {dimension_numbers = #tpu.dot_dimension_numbers<[1], [0], [0], [1], [0, 0, 1, 1], [], []>} : vector<16x128xf32>, vector<128x128xf32>, vector<16x128xf32> -> vector<16x128xf32>
    %122 = arith.addf %115, %121 : vector<16x128xf32>
    %c0_128 = arith.constant 0 : index
    %c0_129 = arith.constant 0 : index
    %123 = vector.load %arg14[%c0_128, %c0_129] : memref<1x128xf32, #tpu.memory_space<vmem>>, vector<1x128xf32>
    %124 = vector.broadcast %123 : vector<1x128xf32> to vector<16x128xf32>
    %125 = arith.addf %122, %124 : vector<16x128xf32>
    %cst_130 = arith.constant 0.000000e+00 : f32
    %126 = vector.broadcast %cst_130 : f32 to vector<16x128xf32>
    %127 = arith.maximumf %125, %126 : vector<16x128xf32>
    %c0_131 = arith.constant 0 : index
    %c0_132 = arith.constant 0 : index
    %c0_133 = arith.constant 0 : index
    %128 = vector.load %arg16[%c0_131, %c0_132, %c0_133] : memref<5x8x16xf32, #tpu.memory_space<vmem>>, vector<1x8x16xf32>
    %129 = vector.shape_cast %128 : vector<1x8x16xf32> to vector<8x16xf32>
    %cst_134 = arith.constant dense<0.000000e+00> : vector<8x128xf32>
    %130 = tpu.matmul %129, %127, %cst_134 {dimension_numbers = #tpu.dot_dimension_numbers<[1], [0], [0], [1], [0, 0, 1, 1], [], []>} : vector<8x16xf32>, vector<16x128xf32>, vector<8x128xf32> -> vector<8x128xf32>
    %c0_135 = arith.constant 0 : index
    %c0_136 = arith.constant 0 : index
    %c0_137 = arith.constant 0 : index
    %131 = vector.load %arg15[%c0_135, %c0_136, %c0_137] : memref<5x128x128xf32, #tpu.memory_space<vmem>>, vector<1x128x128xf32>
    %132 = vector.shape_cast %131 : vector<1x128x128xf32> to vector<128x128xf32>
    %cst_138 = arith.constant dense<0.000000e+00> : vector<8x128xf32>
    %133 = tpu.matmul %130, %132, %cst_138 {dimension_numbers = #tpu.dot_dimension_numbers<[1], [0], [0], [1], [0, 0, 1, 1], [], []>} : vector<8x128xf32>, vector<128x128xf32>, vector<8x128xf32> -> vector<8x128xf32>
    %c1_139 = arith.constant 1 : index
    %c0_140 = arith.constant 0 : index
    %c0_141 = arith.constant 0 : index
    %134 = vector.load %arg16[%c1_139, %c0_140, %c0_141] : memref<5x8x16xf32, #tpu.memory_space<vmem>>, vector<1x8x16xf32>
    %135 = vector.shape_cast %134 : vector<1x8x16xf32> to vector<8x16xf32>
    %cst_142 = arith.constant dense<0.000000e+00> : vector<8x128xf32>
    %136 = tpu.matmul %135, %127, %cst_142 {dimension_numbers = #tpu.dot_dimension_numbers<[1], [0], [0], [1], [0, 0, 1, 1], [], []>} : vector<8x16xf32>, vector<16x128xf32>, vector<8x128xf32> -> vector<8x128xf32>
    %c1_143 = arith.constant 1 : index
    %c0_144 = arith.constant 0 : index
    %c0_145 = arith.constant 0 : index
    %137 = vector.load %arg15[%c1_143, %c0_144, %c0_145] : memref<5x128x128xf32, #tpu.memory_space<vmem>>, vector<1x128x128xf32>
    %138 = vector.shape_cast %137 : vector<1x128x128xf32> to vector<128x128xf32>
    %cst_146 = arith.constant dense<0.000000e+00> : vector<8x128xf32>
    %139 = tpu.matmul %136, %138, %cst_146 {dimension_numbers = #tpu.dot_dimension_numbers<[1], [0], [0], [1], [0, 0, 1, 1], [], []>} : vector<8x128xf32>, vector<128x128xf32>, vector<8x128xf32> -> vector<8x128xf32>
    %140 = arith.addf %133, %139 : vector<8x128xf32>
    %c2_147 = arith.constant 2 : index
    %c0_148 = arith.constant 0 : index
    %c0_149 = arith.constant 0 : index
    %141 = vector.load %arg16[%c2_147, %c0_148, %c0_149] : memref<5x8x16xf32, #tpu.memory_space<vmem>>, vector<1x8x16xf32>
    %142 = vector.shape_cast %141 : vector<1x8x16xf32> to vector<8x16xf32>
    %cst_150 = arith.constant dense<0.000000e+00> : vector<8x128xf32>
    %143 = tpu.matmul %142, %127, %cst_150 {dimension_numbers = #tpu.dot_dimension_numbers<[1], [0], [0], [1], [0, 0, 1, 1], [], []>} : vector<8x16xf32>, vector<16x128xf32>, vector<8x128xf32> -> vector<8x128xf32>
    %c2_151 = arith.constant 2 : index
    %c0_152 = arith.constant 0 : index
    %c0_153 = arith.constant 0 : index
    %144 = vector.load %arg15[%c2_151, %c0_152, %c0_153] : memref<5x128x128xf32, #tpu.memory_space<vmem>>, vector<1x128x128xf32>
    %145 = vector.shape_cast %144 : vector<1x128x128xf32> to vector<128x128xf32>
    %cst_154 = arith.constant dense<0.000000e+00> : vector<8x128xf32>
    %146 = tpu.matmul %143, %145, %cst_154 {dimension_numbers = #tpu.dot_dimension_numbers<[1], [0], [0], [1], [0, 0, 1, 1], [], []>} : vector<8x128xf32>, vector<128x128xf32>, vector<8x128xf32> -> vector<8x128xf32>
    %147 = arith.addf %140, %146 : vector<8x128xf32>
    %c3_155 = arith.constant 3 : index
    %c0_156 = arith.constant 0 : index
    %c0_157 = arith.constant 0 : index
    %148 = vector.load %arg16[%c3_155, %c0_156, %c0_157] : memref<5x8x16xf32, #tpu.memory_space<vmem>>, vector<1x8x16xf32>
    %149 = vector.shape_cast %148 : vector<1x8x16xf32> to vector<8x16xf32>
    %cst_158 = arith.constant dense<0.000000e+00> : vector<8x128xf32>
    %150 = tpu.matmul %149, %127, %cst_158 {dimension_numbers = #tpu.dot_dimension_numbers<[1], [0], [0], [1], [0, 0, 1, 1], [], []>} : vector<8x16xf32>, vector<16x128xf32>, vector<8x128xf32> -> vector<8x128xf32>
    %c3_159 = arith.constant 3 : index
    %c0_160 = arith.constant 0 : index
    %c0_161 = arith.constant 0 : index
    %151 = vector.load %arg15[%c3_159, %c0_160, %c0_161] : memref<5x128x128xf32, #tpu.memory_space<vmem>>, vector<1x128x128xf32>
    %152 = vector.shape_cast %151 : vector<1x128x128xf32> to vector<128x128xf32>
    %cst_162 = arith.constant dense<0.000000e+00> : vector<8x128xf32>
    %153 = tpu.matmul %150, %152, %cst_162 {dimension_numbers = #tpu.dot_dimension_numbers<[1], [0], [0], [1], [0, 0, 1, 1], [], []>} : vector<8x128xf32>, vector<128x128xf32>, vector<8x128xf32> -> vector<8x128xf32>
    %154 = arith.addf %147, %153 : vector<8x128xf32>
    %c4_163 = arith.constant 4 : index
    %c0_164 = arith.constant 0 : index
    %c0_165 = arith.constant 0 : index
    %155 = vector.load %arg16[%c4_163, %c0_164, %c0_165] : memref<5x8x16xf32, #tpu.memory_space<vmem>>, vector<1x8x16xf32>
    %156 = vector.shape_cast %155 : vector<1x8x16xf32> to vector<8x16xf32>
    %cst_166 = arith.constant dense<0.000000e+00> : vector<8x128xf32>
    %157 = tpu.matmul %156, %127, %cst_166 {dimension_numbers = #tpu.dot_dimension_numbers<[1], [0], [0], [1], [0, 0, 1, 1], [], []>} : vector<8x16xf32>, vector<16x128xf32>, vector<8x128xf32> -> vector<8x128xf32>
    %c4_167 = arith.constant 4 : index
    %c0_168 = arith.constant 0 : index
    %c0_169 = arith.constant 0 : index
    %158 = vector.load %arg15[%c4_167, %c0_168, %c0_169] : memref<5x128x128xf32, #tpu.memory_space<vmem>>, vector<1x128x128xf32>
    %159 = vector.shape_cast %158 : vector<1x128x128xf32> to vector<128x128xf32>
    %cst_170 = arith.constant dense<0.000000e+00> : vector<8x128xf32>
    %160 = tpu.matmul %157, %159, %cst_170 {dimension_numbers = #tpu.dot_dimension_numbers<[1], [0], [0], [1], [0, 0, 1, 1], [], []>} : vector<8x128xf32>, vector<128x128xf32>, vector<8x128xf32> -> vector<8x128xf32>
    %161 = arith.addf %154, %160 : vector<8x128xf32>
    %c0_171 = arith.constant 0 : index
    %c0_172 = arith.constant 0 : index
    %162 = vector.load %arg17[%c0_171, %c0_172] : memref<1x128xf32, #tpu.memory_space<vmem>>, vector<1x128xf32>
    %163 = vector.broadcast %162 : vector<1x128xf32> to vector<8x128xf32>
    %164 = arith.addf %161, %163 : vector<8x128xf32>
    %cst_173 = arith.constant 0.000000e+00 : f32
    %165 = vector.broadcast %cst_173 : f32 to vector<8x128xf32>
    %166 = arith.maximumf %164, %165 : vector<8x128xf32>
    %c0_174 = arith.constant 0 : index
    %c0_175 = arith.constant 0 : index
    %c0_176 = arith.constant 0 : index
    %167 = vector.load %arg19[%c0_174, %c0_175, %c0_176] : memref<3x8x8xf32, #tpu.memory_space<vmem>>, vector<1x8x8xf32>
    %168 = vector.shape_cast %167 : vector<1x8x8xf32> to vector<8x8xf32>
    %cst_177 = arith.constant dense<0.000000e+00> : vector<8x128xf32>
    %169 = tpu.matmul %168, %166, %cst_177 {dimension_numbers = #tpu.dot_dimension_numbers<[1], [0], [0], [1], [0, 0, 1, 1], [], []>} : vector<8x8xf32>, vector<8x128xf32>, vector<8x128xf32> -> vector<8x128xf32>
    %c0_178 = arith.constant 0 : index
    %c0_179 = arith.constant 0 : index
    %c0_180 = arith.constant 0 : index
    %170 = vector.load %arg18[%c0_178, %c0_179, %c0_180] : memref<3x128x128xf32, #tpu.memory_space<vmem>>, vector<1x128x128xf32>
    %171 = vector.shape_cast %170 : vector<1x128x128xf32> to vector<128x128xf32>
    %cst_181 = arith.constant dense<0.000000e+00> : vector<8x128xf32>
    %172 = tpu.matmul %169, %171, %cst_181 {dimension_numbers = #tpu.dot_dimension_numbers<[1], [0], [0], [1], [0, 0, 1, 1], [], []>} : vector<8x128xf32>, vector<128x128xf32>, vector<8x128xf32> -> vector<8x128xf32>
    %c1_182 = arith.constant 1 : index
    %c0_183 = arith.constant 0 : index
    %c0_184 = arith.constant 0 : index
    %173 = vector.load %arg18[%c1_182, %c0_183, %c0_184] : memref<3x128x128xf32, #tpu.memory_space<vmem>>, vector<1x128x128xf32>
    %174 = vector.shape_cast %173 : vector<1x128x128xf32> to vector<128x128xf32>
    %cst_185 = arith.constant dense<0.000000e+00> : vector<8x128xf32>
    %175 = tpu.matmul %166, %174, %cst_185 {dimension_numbers = #tpu.dot_dimension_numbers<[1], [0], [0], [1], [0, 0, 1, 1], [], []>} : vector<8x128xf32>, vector<128x128xf32>, vector<8x128xf32> -> vector<8x128xf32>
    %176 = arith.addf %172, %175 : vector<8x128xf32>
    %c2_186 = arith.constant 2 : index
    %c0_187 = arith.constant 0 : index
    %c0_188 = arith.constant 0 : index
    %177 = vector.load %arg19[%c2_186, %c0_187, %c0_188] : memref<3x8x8xf32, #tpu.memory_space<vmem>>, vector<1x8x8xf32>
    %178 = vector.shape_cast %177 : vector<1x8x8xf32> to vector<8x8xf32>
    %cst_189 = arith.constant dense<0.000000e+00> : vector<8x128xf32>
    %179 = tpu.matmul %178, %166, %cst_189 {dimension_numbers = #tpu.dot_dimension_numbers<[1], [0], [0], [1], [0, 0, 1, 1], [], []>} : vector<8x8xf32>, vector<8x128xf32>, vector<8x128xf32> -> vector<8x128xf32>
    %c2_190 = arith.constant 2 : index
    %c0_191 = arith.constant 0 : index
    %c0_192 = arith.constant 0 : index
    %180 = vector.load %arg18[%c2_190, %c0_191, %c0_192] : memref<3x128x128xf32, #tpu.memory_space<vmem>>, vector<1x128x128xf32>
    %181 = vector.shape_cast %180 : vector<1x128x128xf32> to vector<128x128xf32>
    %cst_193 = arith.constant dense<0.000000e+00> : vector<8x128xf32>
    %182 = tpu.matmul %179, %181, %cst_193 {dimension_numbers = #tpu.dot_dimension_numbers<[1], [0], [0], [1], [0, 0, 1, 1], [], []>} : vector<8x128xf32>, vector<128x128xf32>, vector<8x128xf32> -> vector<8x128xf32>
    %183 = arith.addf %176, %182 : vector<8x128xf32>
    %c0_194 = arith.constant 0 : index
    %c0_195 = arith.constant 0 : index
    %184 = vector.load %arg20[%c0_194, %c0_195] : memref<1x128xf32, #tpu.memory_space<vmem>>, vector<1x128xf32>
    %185 = vector.broadcast %184 : vector<1x128xf32> to vector<8x128xf32>
    %186 = arith.addf %183, %185 : vector<8x128xf32>
    %cst_196 = arith.constant 0.000000e+00 : f32
    %187 = vector.broadcast %cst_196 : f32 to vector<8x128xf32>
    %188 = arith.maximumf %186, %187 : vector<8x128xf32>
    %c0_197 = arith.constant 0 : index
    %c0_198 = arith.constant 0 : index
    %c0_199 = arith.constant 0 : index
    %189 = vector.load %arg19[%c0_197, %c0_198, %c0_199] : memref<3x8x8xf32, #tpu.memory_space<vmem>>, vector<1x8x8xf32>
    %190 = vector.shape_cast %189 : vector<1x8x8xf32> to vector<8x8xf32>
    %cst_200 = arith.constant dense<0.000000e+00> : vector<8x128xf32>
    %191 = tpu.matmul %190, %188, %cst_200 {dimension_numbers = #tpu.dot_dimension_numbers<[1], [0], [0], [1], [0, 0, 1, 1], [], []>} : vector<8x8xf32>, vector<8x128xf32>, vector<8x128xf32> -> vector<8x128xf32>
    %c0_201 = arith.constant 0 : index
    %c0_202 = arith.constant 0 : index
    %c0_203 = arith.constant 0 : index
    %192 = vector.load %arg21[%c0_201, %c0_202, %c0_203] : memref<3x128x128xf32, #tpu.memory_space<vmem>>, vector<1x128x128xf32>
    %193 = vector.shape_cast %192 : vector<1x128x128xf32> to vector<128x128xf32>
    %cst_204 = arith.constant dense<0.000000e+00> : vector<8x128xf32>
    %194 = tpu.matmul %191, %193, %cst_204 {dimension_numbers = #tpu.dot_dimension_numbers<[1], [0], [0], [1], [0, 0, 1, 1], [], []>} : vector<8x128xf32>, vector<128x128xf32>, vector<8x128xf32> -> vector<8x128xf32>
    %c1_205 = arith.constant 1 : index
    %c0_206 = arith.constant 0 : index
    %c0_207 = arith.constant 0 : index
    %195 = vector.load %arg21[%c1_205, %c0_206, %c0_207] : memref<3x128x128xf32, #tpu.memory_space<vmem>>, vector<1x128x128xf32>
    %196 = vector.shape_cast %195 : vector<1x128x128xf32> to vector<128x128xf32>
    %cst_208 = arith.constant dense<0.000000e+00> : vector<8x128xf32>
    %197 = tpu.matmul %188, %196, %cst_208 {dimension_numbers = #tpu.dot_dimension_numbers<[1], [0], [0], [1], [0, 0, 1, 1], [], []>} : vector<8x128xf32>, vector<128x128xf32>, vector<8x128xf32> -> vector<8x128xf32>
    %198 = arith.addf %194, %197 : vector<8x128xf32>
    %c2_209 = arith.constant 2 : index
    %c0_210 = arith.constant 0 : index
    %c0_211 = arith.constant 0 : index
    %199 = vector.load %arg19[%c2_209, %c0_210, %c0_211] : memref<3x8x8xf32, #tpu.memory_space<vmem>>, vector<1x8x8xf32>
    %200 = vector.shape_cast %199 : vector<1x8x8xf32> to vector<8x8xf32>
    %cst_212 = arith.constant dense<0.000000e+00> : vector<8x128xf32>
    %201 = tpu.matmul %200, %188, %cst_212 {dimension_numbers = #tpu.dot_dimension_numbers<[1], [0], [0], [1], [0, 0, 1, 1], [], []>} : vector<8x8xf32>, vector<8x128xf32>, vector<8x128xf32> -> vector<8x128xf32>
    %c2_213 = arith.constant 2 : index
    %c0_214 = arith.constant 0 : index
    %c0_215 = arith.constant 0 : index
    %202 = vector.load %arg21[%c2_213, %c0_214, %c0_215] : memref<3x128x128xf32, #tpu.memory_space<vmem>>, vector<1x128x128xf32>
    %203 = vector.shape_cast %202 : vector<1x128x128xf32> to vector<128x128xf32>
    %cst_216 = arith.constant dense<0.000000e+00> : vector<8x128xf32>
    %204 = tpu.matmul %201, %203, %cst_216 {dimension_numbers = #tpu.dot_dimension_numbers<[1], [0], [0], [1], [0, 0, 1, 1], [], []>} : vector<8x128xf32>, vector<128x128xf32>, vector<8x128xf32> -> vector<8x128xf32>
    %205 = arith.addf %198, %204 : vector<8x128xf32>
    %c0_217 = arith.constant 0 : index
    %c0_218 = arith.constant 0 : index
    %206 = vector.load %arg22[%c0_217, %c0_218] : memref<1x128xf32, #tpu.memory_space<vmem>>, vector<1x128xf32>
    %207 = vector.broadcast %206 : vector<1x128xf32> to vector<8x128xf32>
    %208 = arith.addf %205, %207 : vector<8x128xf32>
    %cst_219 = arith.constant 0.000000e+00 : f32
    %209 = vector.broadcast %cst_219 : f32 to vector<8x128xf32>
    %210 = arith.maximumf %208, %209 : vector<8x128xf32>
    %c0_220 = arith.constant 0 : index
    %c0_221 = arith.constant 0 : index
    %c0_222 = arith.constant 0 : index
    %211 = vector.load %arg23[%c0_220, %c0_221, %c0_222] : memref<1x128x128xf32, #tpu.memory_space<vmem>>, vector<1x128x128xf32>
    %212 = vector.shape_cast %211 : vector<1x128x128xf32> to vector<128x128xf32>
    %cst_223 = arith.constant dense<0.000000e+00> : vector<8x128xf32>
    %213 = tpu.matmul %210, %212, %cst_223 {dimension_numbers = #tpu.dot_dimension_numbers<[1], [0], [0], [1], [0, 0, 1, 1], [], []>} : vector<8x128xf32>, vector<128x128xf32>, vector<8x128xf32> -> vector<8x128xf32>
    %c0_224 = arith.constant 0 : index
    %c0_225 = arith.constant 0 : index
    %214 = vector.load %arg24[%c0_224, %c0_225] : memref<1x128xf32, #tpu.memory_space<vmem>>, vector<1x128xf32>
    %215 = vector.broadcast %214 : vector<1x128xf32> to vector<8x128xf32>
    %216 = arith.addf %213, %215 : vector<8x128xf32>
    %c0_226 = arith.constant 0 : index
    %c0_227 = arith.constant 0 : index
    %c0_228 = arith.constant 0 : index
    %217 = vector.load %arg25[%c0_226, %c0_227, %c0_228] : memref<1x128x256xf32, #tpu.memory_space<vmem>>, vector<1x128x256xf32>
    %218 = vector.shape_cast %217 : vector<1x128x256xf32> to vector<128x256xf32>
    %cst_229 = arith.constant dense<0.000000e+00> : vector<16x256xf32>
    %219 = tpu.matmul %127, %218, %cst_229 {dimension_numbers = #tpu.dot_dimension_numbers<[1], [0], [0], [1], [0, 0, 1, 1], [], []>} : vector<16x128xf32>, vector<128x256xf32>, vector<16x256xf32> -> vector<16x256xf32>
    %c0_230 = arith.constant 0 : index
    %c0_231 = arith.constant 0 : index
    %220 = vector.load %arg26[%c0_230, %c0_231] : memref<1x256xf32, #tpu.memory_space<vmem>>, vector<1x256xf32>
    %221 = vector.broadcast %220 : vector<1x256xf32> to vector<16x256xf32>
    %222 = arith.addf %219, %221 : vector<16x256xf32>
    %c0_232 = arith.constant 0 : index
    %c0_233 = arith.constant 0 : index
    %223 = vector.load %arg33[%c0_232, %c0_233] : memref<16x8xf32, #tpu.memory_space<vmem>>, vector<16x8xf32>
    %c0_234 = arith.constant 0 : index
    %c0_235 = arith.constant 0 : index
    %224 = vector.load %arg34[%c0_234, %c0_235] : memref<128x256xf32, #tpu.memory_space<vmem>>, vector<128x256xf32>
    %cst_236 = arith.constant dense<0.000000e+00> : vector<16x128xf32>
    %225 = tpu.matmul %223, %216, %cst_236 {dimension_numbers = #tpu.dot_dimension_numbers<[1], [0], [0], [1], [0, 0, 1, 1], [], []>} : vector<16x8xf32>, vector<8x128xf32>, vector<16x128xf32> -> vector<16x128xf32>
    %cst_237 = arith.constant dense<0.000000e+00> : vector<16x256xf32>
    %226 = tpu.matmul %225, %224, %cst_237 {dimension_numbers = #tpu.dot_dimension_numbers<[1], [0], [0], [1], [0, 0, 1, 1], [], []>} : vector<16x128xf32>, vector<128x256xf32>, vector<16x256xf32> -> vector<16x256xf32>
    %227 = arith.addf %226, %222 : vector<16x256xf32>
    %c0_238 = arith.constant 0 : index
    %c0_239 = arith.constant 0 : index
    %c0_240 = arith.constant 0 : index
    %228 = vector.load %arg27[%c0_238, %c0_239, %c0_240] : memref<1x128x512xf32, #tpu.memory_space<vmem>>, vector<1x128x512xf32>
    %229 = vector.shape_cast %228 : vector<1x128x512xf32> to vector<128x512xf32>
    %cst_241 = arith.constant dense<0.000000e+00> : vector<32x512xf32>
    %230 = tpu.matmul %44, %229, %cst_241 {dimension_numbers = #tpu.dot_dimension_numbers<[1], [0], [0], [1], [0, 0, 1, 1], [], []>} : vector<32x128xf32>, vector<128x512xf32>, vector<32x512xf32> -> vector<32x512xf32>
    %c0_242 = arith.constant 0 : index
    %c0_243 = arith.constant 0 : index
    %231 = vector.load %arg28[%c0_242, %c0_243] : memref<1x512xf32, #tpu.memory_space<vmem>>, vector<1x512xf32>
    %232 = vector.broadcast %231 : vector<1x512xf32> to vector<32x512xf32>
    %233 = arith.addf %230, %232 : vector<32x512xf32>
    %c0_244 = arith.constant 0 : index
    %c0_245 = arith.constant 0 : index
    %234 = vector.load %arg35[%c0_244, %c0_245] : memref<32x16xf32, #tpu.memory_space<vmem>>, vector<32x16xf32>
    %c0_246 = arith.constant 0 : index
    %c0_247 = arith.constant 0 : index
    %235 = vector.load %arg36[%c0_246, %c0_247] : memref<256x512xf32, #tpu.memory_space<vmem>>, vector<256x512xf32>
    %cst_248 = arith.constant dense<0.000000e+00> : vector<32x256xf32>
    %236 = tpu.matmul %234, %227, %cst_248 {dimension_numbers = #tpu.dot_dimension_numbers<[1], [0], [0], [1], [0, 0, 1, 1], [], []>} : vector<32x16xf32>, vector<16x256xf32>, vector<32x256xf32> -> vector<32x256xf32>
    %cst_249 = arith.constant dense<0.000000e+00> : vector<32x512xf32>
    %237 = tpu.matmul %236, %235, %cst_249 {dimension_numbers = #tpu.dot_dimension_numbers<[1], [0], [0], [1], [0, 0, 1, 1], [], []>} : vector<32x256xf32>, vector<256x512xf32>, vector<32x512xf32> -> vector<32x512xf32>
    %238 = arith.addf %237, %233 : vector<32x512xf32>
    %c0_250 = arith.constant 0 : index
    %c0_251 = arith.constant 0 : index
    %239 = vector.load %arg37[%c0_250, %c0_251] : memref<8x128xf32, #tpu.memory_space<vmem>>, vector<8x128xf32>
    tpu.vector_store %arg37[%c0_250, %c0_251], %216 {strides = array<i32>} : memref<8x128xf32, #tpu.memory_space<vmem>>, vector<8x128xf32>,
    %c0_252 = arith.constant 0 : index
    %c0_253 = arith.constant 0 : index
    %c0_254 = arith.constant 0 : index
    %240 = vector.load %arg11[%c0_252, %c0_253, %c0_254] : memref<3x16x16xf32, #tpu.memory_space<vmem>>, vector<1x16x16xf32>
    %241 = vector.shape_cast %240 : vector<1x16x16xf32> to vector<16x16xf32>
    %cst_255 = arith.constant dense<0.000000e+00> : vector<16x256xf32>
    %242 = tpu.matmul %241, %227, %cst_255 {dimension_numbers = #tpu.dot_dimension_numbers<[1], [0], [0], [1], [0, 0, 1, 1], [], []>} : vector<16x16xf32>, vector<16x256xf32>, vector<16x256xf32> -> vector<16x256xf32>
    %c0_256 = arith.constant 0 : index
    %c0_257 = arith.constant 0 : index
    %c0_258 = arith.constant 0 : index
    %243 = vector.load %arg29[%c0_256, %c0_257, %c0_258] : memref<3x256x128xf32, #tpu.memory_space<vmem>>, vector<1x256x128xf32>
    %244 = vector.shape_cast %243 : vector<1x256x128xf32> to vector<256x128xf32>
    %cst_259 = arith.constant dense<0.000000e+00> : vector<16x128xf32>
    %245 = tpu.matmul %242, %244, %cst_259 {dimension_numbers = #tpu.dot_dimension_numbers<[1], [0], [0], [1], [0, 0, 1, 1], [], []>} : vector<16x256xf32>, vector<256x128xf32>, vector<16x128xf32> -> vector<16x128xf32>
    %c1_260 = arith.constant 1 : index
    %c0_261 = arith.constant 0 : index
    %c0_262 = arith.constant 0 : index
    %246 = vector.load %arg29[%c1_260, %c0_261, %c0_262] : memref<3x256x128xf32, #tpu.memory_space<vmem>>, vector<1x256x128xf32>
    %247 = vector.shape_cast %246 : vector<1x256x128xf32> to vector<256x128xf32>
    %cst_263 = arith.constant dense<0.000000e+00> : vector<16x128xf32>
    %248 = tpu.matmul %227, %247, %cst_263 {dimension_numbers = #tpu.dot_dimension_numbers<[1], [0], [0], [1], [0, 0, 1, 1], [], []>} : vector<16x256xf32>, vector<256x128xf32>, vector<16x128xf32> -> vector<16x128xf32>
    %249 = arith.addf %245, %248 : vector<16x128xf32>
    %c2_264 = arith.constant 2 : index
    %c0_265 = arith.constant 0 : index
    %c0_266 = arith.constant 0 : index
    %250 = vector.load %arg11[%c2_264, %c0_265, %c0_266] : memref<3x16x16xf32, #tpu.memory_space<vmem>>, vector<1x16x16xf32>
    %251 = vector.shape_cast %250 : vector<1x16x16xf32> to vector<16x16xf32>
    %cst_267 = arith.constant dense<0.000000e+00> : vector<16x256xf32>
    %252 = tpu.matmul %251, %227, %cst_267 {dimension_numbers = #tpu.dot_dimension_numbers<[1], [0], [0], [1], [0, 0, 1, 1], [], []>} : vector<16x16xf32>, vector<16x256xf32>, vector<16x256xf32> -> vector<16x256xf32>
    %c2_268 = arith.constant 2 : index
    %c0_269 = arith.constant 0 : index
    %c0_270 = arith.constant 0 : index
    %253 = vector.load %arg29[%c2_268, %c0_269, %c0_270] : memref<3x256x128xf32, #tpu.memory_space<vmem>>, vector<1x256x128xf32>
    %254 = vector.shape_cast %253 : vector<1x256x128xf32> to vector<256x128xf32>
    %cst_271 = arith.constant dense<0.000000e+00> : vector<16x128xf32>
    %255 = tpu.matmul %252, %254, %cst_271 {dimension_numbers = #tpu.dot_dimension_numbers<[1], [0], [0], [1], [0, 0, 1, 1], [], []>} : vector<16x256xf32>, vector<256x128xf32>, vector<16x128xf32> -> vector<16x128xf32>
    %256 = arith.addf %249, %255 : vector<16x128xf32>
    %c0_272 = arith.constant 0 : index
    %c0_273 = arith.constant 0 : index
    %257 = vector.load %arg30[%c0_272, %c0_273] : memref<1x128xf32, #tpu.memory_space<vmem>>, vector<1x128xf32>
    %258 = vector.broadcast %257 : vector<1x128xf32> to vector<16x128xf32>
    %259 = arith.addf %256, %258 : vector<16x128xf32>
    %c0_274 = arith.constant 0 : index
    %c0_275 = arith.constant 0 : index
    %260 = vector.load %arg38[%c0_274, %c0_275] : memref<16x128xf32, #tpu.memory_space<vmem>>, vector<16x128xf32>
    tpu.vector_store %arg38[%c0_274, %c0_275], %259 {strides = array<i32>} : memref<16x128xf32, #tpu.memory_space<vmem>>, vector<16x128xf32>,
    %c0_276 = arith.constant 0 : index
    %c0_277 = arith.constant 0 : index
    %c0_278 = arith.constant 0 : index
    %261 = vector.load %arg3[%c0_276, %c0_277, %c0_278] : memref<3x32x32xf32, #tpu.memory_space<vmem>>, vector<1x32x32xf32>
    %262 = vector.shape_cast %261 : vector<1x32x32xf32> to vector<32x32xf32>
    %cst_279 = arith.constant dense<0.000000e+00> : vector<32x512xf32>
    %263 = tpu.matmul %262, %238, %cst_279 {dimension_numbers = #tpu.dot_dimension_numbers<[1], [0], [0], [1], [0, 0, 1, 1], [], []>} : vector<32x32xf32>, vector<32x512xf32>, vector<32x512xf32> -> vector<32x512xf32>
    %c0_280 = arith.constant 0 : index
    %c0_281 = arith.constant 0 : index
    %c0_282 = arith.constant 0 : index
    %264 = vector.load %arg31[%c0_280, %c0_281, %c0_282] : memref<3x512x128xf32, #tpu.memory_space<vmem>>, vector<1x512x128xf32>
    %265 = vector.shape_cast %264 : vector<1x512x128xf32> to vector<512x128xf32>
    %cst_283 = arith.constant dense<0.000000e+00> : vector<32x128xf32>
    %266 = tpu.matmul %263, %265, %cst_283 {dimension_numbers = #tpu.dot_dimension_numbers<[1], [0], [0], [1], [0, 0, 1, 1], [], []>} : vector<32x512xf32>, vector<512x128xf32>, vector<32x128xf32> -> vector<32x128xf32>
    %c1_284 = arith.constant 1 : index
    %c0_285 = arith.constant 0 : index
    %c0_286 = arith.constant 0 : index
    %267 = vector.load %arg31[%c1_284, %c0_285, %c0_286] : memref<3x512x128xf32, #tpu.memory_space<vmem>>, vector<1x512x128xf32>
    %268 = vector.shape_cast %267 : vector<1x512x128xf32> to vector<512x128xf32>
    %cst_287 = arith.constant dense<0.000000e+00> : vector<32x128xf32>
    %269 = tpu.matmul %238, %268, %cst_287 {dimension_numbers = #tpu.dot_dimension_numbers<[1], [0], [0], [1], [0, 0, 1, 1], [], []>} : vector<32x512xf32>, vector<512x128xf32>, vector<32x128xf32> -> vector<32x128xf32>
    %270 = arith.addf %266, %269 : vector<32x128xf32>
    %c2_288 = arith.constant 2 : index
    %c0_289 = arith.constant 0 : index
    %c0_290 = arith.constant 0 : index
    %271 = vector.load %arg3[%c2_288, %c0_289, %c0_290] : memref<3x32x32xf32, #tpu.memory_space<vmem>>, vector<1x32x32xf32>
    %272 = vector.shape_cast %271 : vector<1x32x32xf32> to vector<32x32xf32>
    %cst_291 = arith.constant dense<0.000000e+00> : vector<32x512xf32>
    %273 = tpu.matmul %272, %238, %cst_291 {dimension_numbers = #tpu.dot_dimension_numbers<[1], [0], [0], [1], [0, 0, 1, 1], [], []>} : vector<32x32xf32>, vector<32x512xf32>, vector<32x512xf32> -> vector<32x512xf32>
    %c2_292 = arith.constant 2 : index
    %c0_293 = arith.constant 0 : index
    %c0_294 = arith.constant 0 : index
    %274 = vector.load %arg31[%c2_292, %c0_293, %c0_294] : memref<3x512x128xf32, #tpu.memory_space<vmem>>, vector<1x512x128xf32>
    %275 = vector.shape_cast %274 : vector<1x512x128xf32> to vector<512x128xf32>
    %cst_295 = arith.constant dense<0.000000e+00> : vector<32x128xf32>
    %276 = tpu.matmul %273, %275, %cst_295 {dimension_numbers = #tpu.dot_dimension_numbers<[1], [0], [0], [1], [0, 0, 1, 1], [], []>} : vector<32x512xf32>, vector<512x128xf32>, vector<32x128xf32> -> vector<32x128xf32>
    %277 = arith.addf %270, %276 : vector<32x128xf32>
    %c0_296 = arith.constant 0 : index
    %c0_297 = arith.constant 0 : index
    %278 = vector.load %arg32[%c0_296, %c0_297] : memref<1x128xf32, #tpu.memory_space<vmem>>, vector<1x128xf32>
    %279 = vector.broadcast %278 : vector<1x128xf32> to vector<32x128xf32>
    %280 = arith.addf %277, %279 : vector<32x128xf32>
    %c0_298 = arith.constant 0 : index
    %c0_299 = arith.constant 0 : index
    %281 = vector.load %arg39[%c0_298, %c0_299] : memref<32x128xf32, #tpu.memory_space<vmem>>, vector<32x128xf32>
    tpu.vector_store %arg39[%c0_298, %c0_299], %280 {strides = array<i32>} : memref<32x128xf32, #tpu.memory_space<vmem>>, vector<32x128xf32>,
    return
  }
  func.func @transform_0(%arg0: i32) -> (i32, i32) {
    %c0_i32 = arith.constant 0 : i32
    %c0_i32_0 = arith.constant 0 : i32
    %c0_i32_1 = arith.constant 0 : i32
    return %c0_i32, %c0_i32_0 : i32, i32
  }
  func.func @transform_1(%arg0: i32) -> (i32, i32, i32) {
    %c0_i32 = arith.constant 0 : i32
    %c0_i32_0 = arith.constant 0 : i32
    %c0_i32_1 = arith.constant 0 : i32
    %c0_i32_2 = arith.constant 0 : i32
    return %c0_i32, %c0_i32_0, %c0_i32_1 : i32, i32, i32
  }
  func.func @transform_2(%arg0: i32) -> (i32, i32, i32) {
    %c0_i32 = arith.constant 0 : i32
    %c0_i32_0 = arith.constant 0 : i32
    %c0_i32_1 = arith.constant 0 : i32
    %c0_i32_2 = arith.constant 0 : i32
    return %c0_i32, %c0_i32_0, %c0_i32_1 : i32, i32, i32
  }
  func.func @transform_3(%arg0: i32) -> (i32, i32) {
    %c0_i32 = arith.constant 0 : i32
    %c0_i32_0 = arith.constant 0 : i32
    %c0_i32_1 = arith.constant 0 : i32
    return %c0_i32, %c0_i32_0 : i32, i32
  }
  func.func @transform_4(%arg0: i32) -> (i32, i32, i32) {
    %c0_i32 = arith.constant 0 : i32
    %c0_i32_0 = arith.constant 0 : i32
    %c0_i32_1 = arith.constant 0 : i32
    %c0_i32_2 = arith.constant 0 : i32
    return %c0_i32, %c0_i32_0, %c0_i32_1 : i32, i32, i32
  }
  func.func @transform_5(%arg0: i32) -> (i32, i32) {
    %c0_i32 = arith.constant 0 : i32
    %c0_i32_0 = arith.constant 0 : i32
    %c0_i32_1 = arith.constant 0 : i32
    return %c0_i32, %c0_i32_0 : i32, i32
  }
  func.func @transform_6(%arg0: i32) -> (i32, i32, i32) {
    %c0_i32 = arith.constant 0 : i32
    %c0_i32_0 = arith.constant 0 : i32
    %c0_i32_1 = arith.constant 0 : i32
    %c0_i32_2 = arith.constant 0 : i32
    return %c0_i32, %c0_i32_0, %c0_i32_1 : i32, i32, i32
  }
  func.func @transform_7(%arg0: i32) -> (i32, i32, i32) {
    %c0_i32 = arith.constant 0 : i32
    %c0_i32_0 = arith.constant 0 : i32
    %c0_i32_1 = arith.constant 0 : i32
    %c0_i32_2 = arith.constant 0 : i32
    return %c0_i32, %c0_i32_0, %c0_i32_1 : i32, i32, i32
  }
  func.func @transform_8(%arg0: i32) -> (i32, i32) {
    %c0_i32 = arith.constant 0 : i32
    %c0_i32_0 = arith.constant 0 : i32
    %c0_i32_1 = arith.constant 0 : i32
    return %c0_i32, %c0_i32_0 : i32, i32
  }
  func.func @transform_9(%arg0: i32) -> (i32, i32, i32) {
    %c0_i32 = arith.constant 0 : i32
    %c0_i32_0 = arith.constant 0 : i32
    %c0_i32_1 = arith.constant 0 : i32
    %c0_i32_2 = arith.constant 0 : i32
    return %c0_i32, %c0_i32_0, %c0_i32_1 : i32, i32, i32
  }
  func.func @transform_10(%arg0: i32) -> (i32, i32, i32) {
    %c0_i32 = arith.constant 0 : i32
    %c0_i32_0 = arith.constant 0 : i32
    %c0_i32_1 = arith.constant 0 : i32
    %c0_i32_2 = arith.constant 0 : i32
    return %c0_i32, %c0_i32_0, %c0_i32_1 : i32, i32, i32
  }
  func.func @transform_11(%arg0: i32) -> (i32, i32) {
    %c0_i32 = arith.constant 0 : i32
    %c0_i32_0 = arith.constant 0 : i32
    %c0_i32_1 = arith.constant 0 : i32
    return %c0_i32, %c0_i32_0 : i32, i32
  }
  func.func @transform_12(%arg0: i32) -> (i32, i32, i32) {
    %c0_i32 = arith.constant 0 : i32
    %c0_i32_0 = arith.constant 0 : i32
    %c0_i32_1 = arith.constant 0 : i32
    %c0_i32_2 = arith.constant 0 : i32
    return %c0_i32, %c0_i32_0, %c0_i32_1 : i32, i32, i32
  }
  func.func @transform_13(%arg0: i32) -> (i32, i32) {
    %c0_i32 = arith.constant 0 : i32
    %c0_i32_0 = arith.constant 0 : i32
    %c0_i32_1 = arith.constant 0 : i32
    return %c0_i32, %c0_i32_0 : i32, i32
  }
  func.func @transform_14(%arg0: i32) -> (i32, i32, i32) {
    %c0_i32 = arith.constant 0 : i32
    %c0_i32_0 = arith.constant 0 : i32
    %c0_i32_1 = arith.constant 0 : i32
    %c0_i32_2 = arith.constant 0 : i32
    return %c0_i32, %c0_i32_0, %c0_i32_1 : i32, i32, i32
  }
  func.func @transform_15(%arg0: i32) -> (i32, i32, i32) {
    %c0_i32 = arith.constant 0 : i32
    %c0_i32_0 = arith.constant 0 : i32
    %c0_i32_1 = arith.constant 0 : i32
    %c0_i32_2 = arith.constant 0 : i32
    return %c0_i32, %c0_i32_0, %c0_i32_1 : i32, i32, i32
  }
  func.func @transform_16(%arg0: i32) -> (i32, i32) {
    %c0_i32 = arith.constant 0 : i32
    %c0_i32_0 = arith.constant 0 : i32
    %c0_i32_1 = arith.constant 0 : i32
    return %c0_i32, %c0_i32_0 : i32, i32
  }
  func.func @transform_17(%arg0: i32) -> (i32, i32, i32) {
    %c0_i32 = arith.constant 0 : i32
    %c0_i32_0 = arith.constant 0 : i32
    %c0_i32_1 = arith.constant 0 : i32
    %c0_i32_2 = arith.constant 0 : i32
    return %c0_i32, %c0_i32_0, %c0_i32_1 : i32, i32, i32
  }
  func.func @transform_18(%arg0: i32) -> (i32, i32, i32) {
    %c0_i32 = arith.constant 0 : i32
    %c0_i32_0 = arith.constant 0 : i32
    %c0_i32_1 = arith.constant 0 : i32
    %c0_i32_2 = arith.constant 0 : i32
    return %c0_i32, %c0_i32_0, %c0_i32_1 : i32, i32, i32
  }
  func.func @transform_19(%arg0: i32) -> (i32, i32) {
    %c0_i32 = arith.constant 0 : i32
    %c0_i32_0 = arith.constant 0 : i32
    %c0_i32_1 = arith.constant 0 : i32
    return %c0_i32, %c0_i32_0 : i32, i32
  }
  func.func @transform_20(%arg0: i32) -> (i32, i32, i32) {
    %c0_i32 = arith.constant 0 : i32
    %c0_i32_0 = arith.constant 0 : i32
    %c0_i32_1 = arith.constant 0 : i32
    %c0_i32_2 = arith.constant 0 : i32
    return %c0_i32, %c0_i32_0, %c0_i32_1 : i32, i32, i32
  }
  func.func @transform_21(%arg0: i32) -> (i32, i32) {
    %c0_i32 = arith.constant 0 : i32
    %c0_i32_0 = arith.constant 0 : i32
    %c0_i32_1 = arith.constant 0 : i32
    return %c0_i32, %c0_i32_0 : i32, i32
  }
  func.func @transform_22(%arg0: i32) -> (i32, i32, i32) {
    %c0_i32 = arith.constant 0 : i32
    %c0_i32_0 = arith.constant 0 : i32
    %c0_i32_1 = arith.constant 0 : i32
    %c0_i32_2 = arith.constant 0 : i32
    return %c0_i32, %c0_i32_0, %c0_i32_1 : i32, i32, i32
  }
  func.func @transform_23(%arg0: i32) -> (i32, i32) {
    %c0_i32 = arith.constant 0 : i32
    %c0_i32_0 = arith.constant 0 : i32
    %c0_i32_1 = arith.constant 0 : i32
    return %c0_i32, %c0_i32_0 : i32, i32
  }
  func.func @transform_24(%arg0: i32) -> (i32, i32, i32) {
    %c0_i32 = arith.constant 0 : i32
    %c0_i32_0 = arith.constant 0 : i32
    %c0_i32_1 = arith.constant 0 : i32
    %c0_i32_2 = arith.constant 0 : i32
    return %c0_i32, %c0_i32_0, %c0_i32_1 : i32, i32, i32
  }
  func.func @transform_25(%arg0: i32) -> (i32, i32) {
    %c0_i32 = arith.constant 0 : i32
    %c0_i32_0 = arith.constant 0 : i32
    %c0_i32_1 = arith.constant 0 : i32
    return %c0_i32, %c0_i32_0 : i32, i32
  }
  func.func @transform_26(%arg0: i32) -> (i32, i32, i32) {
    %c0_i32 = arith.constant 0 : i32
    %c0_i32_0 = arith.constant 0 : i32
    %c0_i32_1 = arith.constant 0 : i32
    %c0_i32_2 = arith.constant 0 : i32
    return %c0_i32, %c0_i32_0, %c0_i32_1 : i32, i32, i32
  }
  func.func @transform_27(%arg0: i32) -> (i32, i32) {
    %c0_i32 = arith.constant 0 : i32
    %c0_i32_0 = arith.constant 0 : i32
    %c0_i32_1 = arith.constant 0 : i32
    return %c0_i32, %c0_i32_0 : i32, i32
  }
  func.func @transform_28(%arg0: i32) -> (i32, i32, i32) {
    %c0_i32 = arith.constant 0 : i32
    %c0_i32_0 = arith.constant 0 : i32
    %c0_i32_1 = arith.constant 0 : i32
    %c0_i32_2 = arith.constant 0 : i32
    return %c0_i32, %c0_i32_0, %c0_i32_1 : i32, i32, i32
  }
  func.func @transform_29(%arg0: i32) -> (i32, i32) {
    %c0_i32 = arith.constant 0 : i32
    %c0_i32_0 = arith.constant 0 : i32
    %c0_i32_1 = arith.constant 0 : i32
    return %c0_i32, %c0_i32_0 : i32, i32
  }
  func.func @transform_30(%arg0: i32) -> (i32, i32, i32) {
    %c0_i32 = arith.constant 0 : i32
    %c0_i32_0 = arith.constant 0 : i32
    %c0_i32_1 = arith.constant 0 : i32
    %c0_i32_2 = arith.constant 0 : i32
    return %c0_i32, %c0_i32_0, %c0_i32_1 : i32, i32, i32
  }
  func.func @transform_31(%arg0: i32) -> (i32, i32) {
    %c0_i32 = arith.constant 0 : i32
    %c0_i32_0 = arith.constant 0 : i32
    %c0_i32_1 = arith.constant 0 : i32
    return %c0_i32, %c0_i32_0 : i32, i32
  }
  func.func @transform_32(%arg0: i32) -> (i32, i32) {
    %c0_i32 = arith.constant 0 : i32
    %c0_i32_0 = arith.constant 0 : i32
    %c0_i32_1 = arith.constant 0 : i32
    return %c0_i32, %c0_i32_0 : i32, i32
  }
  func.func @transform_33(%arg0: i32) -> (i32, i32) {
    %c0_i32 = arith.constant 0 : i32
    %c0_i32_0 = arith.constant 0 : i32
    %c0_i32_1 = arith.constant 0 : i32
    return %c0_i32, %c0_i32_0 : i32, i32
  }
  func.func @transform_34(%arg0: i32) -> (i32, i32) {
    %c0_i32 = arith.constant 0 : i32
    %c0_i32_0 = arith.constant 0 : i32
    %c0_i32_1 = arith.constant 0 : i32
    return %c0_i32, %c0_i32_0 : i32, i32
  }
  func.func @transform_35(%arg0: i32) -> (i32, i32) {
    %c0_i32 = arith.constant 0 : i32
    %c0_i32_0 = arith.constant 0 : i32
    %c0_i32_1 = arith.constant 0 : i32
    return %c0_i32, %c0_i32_0 : i32, i32
  }
  func.func @transform_36(%arg0: i32) -> (i32, i32) {
    %c0_i32 = arith.constant 0 : i32
    %c0_i32_0 = arith.constant 0 : i32
    %c0_i32_1 = arith.constant 0 : i32
    return %c0_i32, %c0_i32_0 : i32, i32
  }
  func.func @transform_37(%arg0: i32) -> (i32, i32) {
    %c0_i32 = arith.constant 0 : i32
    %c0_i32_0 = arith.constant 0 : i32
    %c0_i32_1 = arith.constant 0 : i32
    return %c0_i32, %c0_i32_0 : i32, i32
  }
  func.func @transform_38(%arg0: i32) -> (i32, i32) {
    %c0_i32 = arith.constant 0 : i32
    %c0_i32_0 = arith.constant 0 : i32
    %c0_i32_1 = arith.constant 0 : i32
    return %c0_i32, %c0_i32_0 : i32, i32
  }
}

</mosaic_0001>

<llo_original>
// kernel: featurenet_apply.1
$region0: #{featurenet_apply.1}
  #allocation0 [shape = 'u32[]', space=smem, size = 0x4, offset = 0x4, fixed_abs, tag = 'smem constant byte address 0x4 - core index']
  #allocation1 [shape = 'u32[144,128]{1,0:T(1,128)}', space=vmem, size = 0x12000, scoped, tag = 'internal scratch']
  %s0 = inlined_call_operand.smem [shape: u32[39], index: -1, kind: input, shape index: {}]
  %s1 = sld [smem:[%s0]]
  %s2 = scalar_lea.smem %s0, 1
  %s3 = sld [smem:[%s2]]
  %s4 = scalar_lea.smem %s0, 2
  %s5 = sld [smem:[%s4]]
  %s6 = scalar_lea.smem %s0, 3
  %s7 = sld [smem:[%s6]]
  %s8 = scalar_lea.smem %s0, 4
  %s9 = sld [smem:[%s8]]
  %s10 = scalar_lea.smem %s0, 5
  %s11 = sld [smem:[%s10]]
  %s12 = scalar_lea.smem %s0, 6
  %s13 = sld [smem:[%s12]]
  %s14 = scalar_lea.smem %s0, 7
  %s15 = sld [smem:[%s14]]
  %s16 = scalar_lea.smem %s0, 8
  %s17 = sld [smem:[%s16]]
  %s18 = scalar_lea.smem %s0, 9
  %s19 = sld [smem:[%s18]]
  %s20 = scalar_lea.smem %s0, 10
  %s21 = sld [smem:[%s20]]
  %s22 = scalar_lea.smem %s0, 11
  %s23 = sld [smem:[%s22]]
  %s24 = scalar_lea.smem %s0, 12
  %s25 = sld [smem:[%s24]]
  %s26 = scalar_lea.smem %s0, 13
  %s27 = sld [smem:[%s26]]
  %s28 = scalar_lea.smem %s0, 14
  %s29 = sld [smem:[%s28]]
  %s30 = scalar_lea.smem %s0, 15
  %s31 = sld [smem:[%s30]]
  %s32 = scalar_lea.smem %s0, 16
  %s33 = sld [smem:[%s32]]
  %s34 = scalar_lea.smem %s0, 17
  %s35 = sld [smem:[%s34]]
  %s36 = scalar_lea.smem %s0, 18
  %s37 = sld [smem:[%s36]]
  %s38 = scalar_lea.smem %s0, 19
  %s39 = sld [smem:[%s38]]
  %s40 = scalar_lea.smem %s0, 20
  %s41 = sld [smem:[%s40]]
  %s42 = scalar_lea.smem %s0, 21
  %s43 = sld [smem:[%s42]]
  %s44 = scalar_lea.smem %s0, 22
  %s45 = sld [smem:[%s44]]
  %s46 = scalar_lea.smem %s0, 23
  %s47 = sld [smem:[%s46]]
  %s48 = scalar_lea.smem %s0, 24
  %s49 = sld [smem:[%s48]]
  %s50 = scalar_lea.smem %s0, 25
  %s51 = sld [smem:[%s50]]
  %s52 = scalar_lea.smem %s0, 26
  %s53 = sld [smem:[%s52]]
  %s54 = scalar_lea.smem %s0, 27
  %s55 = sld [smem:[%s54]]
  %s56 = scalar_lea.smem %s0, 28
  %s57 = sld [smem:[%s56]]
  %s58 = scalar_lea.smem %s0, 29
  %s59 = sld [smem:[%s58]]
  %s60 = scalar_lea.smem %s0, 30
  %s61 = sld [smem:[%s60]]
  %s62 = scalar_lea.smem %s0, 31
  %s63 = sld [smem:[%s62]]
  %s64 = scalar_lea.smem %s0, 32
  %s65 = sld [smem:[%s64]]
  %s66 = scalar_lea.smem %s0, 33
  %s67 = sld [smem:[%s66]]
  %s68 = scalar_lea.smem %s0, 34
  %s69 = sld [smem:[%s68]]
  %s70 = scalar_lea.smem %s0, 35
  %s71 = sld [smem:[%s70]]
  %s72 = scalar_lea.smem %s0, 36
  %s73 = sld [smem:[%s72]]
  %s74 = scalar_lea.smem %s0, 37
  %s75 = sld [smem:[%s74]]
  %s76 = scalar_lea.smem %s0, 38
  %s77 = sld [smem:[%s76]]
  %78 = xla_tuple %s73, %s75, %s77
  %s79 = sld [smem:[#allocation0]]
  $region286: #{featurenet_apply.1} parent=0
    _
  %s81 = ssub.s32 1, %s79
  %s82 = scalar_select 0, %s81, %s79
  $region1: #{featurenet_apply.1} parent=0
    #allocation2 [shape = 'u8[73728]{0}', space=vmem, size = 0x12000, scoped, tag = 'input window, operand 1, single buffered']
    #allocation3 [shape = 's32[1]{0}', space=sflag, size = 0x4, scoped, tag = 'scoped memory for featurenet_apply.1']
    #allocation4 [shape = 'u8[49152]{0}', space=vmem, size = 0xc000, scoped, tag = 'input window, operand 2, single buffered']
    #allocation5 [shape = 's32[1]{0}', space=sflag, size = 0x4, scoped, tag = 'scoped memory for featurenet_apply.1']
    #allocation6 [shape = 'u8[196608]{0}', space=vmem, size = 0x30000, scoped, tag = 'input window, operand 4, single buffered']
    #allocation7 [shape = 'u8[512]{0}', space=vmem, size = 0x400, scoped, tag = 'input window, operand 5, single buffered']
    #allocation8 [shape = 's32[1]{0}', space=sflag, size = 0x4, scoped, tag = 'scoped memory for featurenet_apply.1']
    #allocation9 [shape = 'u8[327680]{0}', space=vmem, size = 0x50000, scoped, tag = 'input window, operand 6, single buffered']
    #allocation10 [shape = 'u8[40960]{0}', space=vmem, size = 0xa000, scoped, tag = 'input window, operand 7, single buffered']
    #allocation11 [shape = 's32[1]{0}', space=sflag, size = 0x4, scoped, tag = 'scoped memory for featurenet_apply.1']
    #allocation12 [shape = 'u8[512]{0}', space=vmem, size = 0x400, scoped, tag = 'input window, operand 8, single buffered']
    #allocation13 [shape = 'u8[196608]{0}', space=vmem, size = 0x30000, scoped, tag = 'input window, operand 9, single buffered']
    #allocation14 [shape = 's32[1]{0}', space=sflag, size = 0x4, scoped, tag = 'scoped memory for featurenet_apply.1']
    #allocation15 [shape = 'u8[24576]{0}', space=vmem, size = 0x6000, scoped, tag = 'input window, operand 10, single buffered']
    #allocation16 [shape = 'u8[196608]{0}', space=vmem, size = 0x30000, scoped, tag = 'input window, operand 12, single buffered']
    #allocation17 [shape = 's32[1]{0}', space=sflag, size = 0x4, scoped, tag = 'scoped memory for featurenet_apply.1']
    #allocation18 [shape = 'u8[327680]{0}', space=vmem, size = 0x50000, scoped, tag = 'input window, operand 14, single buffered']
    #allocation19 [shape = 'u8[20480]{0}', space=vmem, size = 0x5000, scoped, tag = 'input window, operand 15, single buffered']
    #allocation20 [shape = 's32[1]{0}', space=sflag, size = 0x4, scoped, tag = 'scoped memory for featurenet_apply.1']
    #allocation21 [shape = 'u8[512]{0}', space=vmem, size = 0x400, scoped, tag = 'input window, operand 16, single buffered']
    #allocation22 [shape = 'u8[196608]{0}', space=vmem, size = 0x30000, scoped, tag = 'input window, operand 17, single buffered']
    #allocation23 [shape = 's32[1]{0}', space=sflag, size = 0x4, scoped, tag = 'scoped memory for featurenet_apply.1']
    #allocation24 [shape = 'u8[12288]{0}', space=vmem, size = 0x3000, scoped, tag = 'input window, operand 18, single buffered']
    #allocation25 [shape = 'u8[512]{0}', space=vmem, size = 0x400, scoped, tag = 'input window, operand 19, single buffered']
    #allocation26 [shape = 's32[1]{0}', space=sflag, size = 0x4, scoped, tag = 'scoped memory for featurenet_apply.1']
    #allocation27 [shape = 'u8[196608]{0}', space=vmem, size = 0x30000, scoped, tag = 'input window, operand 20, single buffered']
    #allocation28 [shape = 'u8[512]{0}', space=vmem, size = 0x400, scoped, tag = 'input window, operand 21, single buffered']
    #allocation29 [shape = 's32[1]{0}', space=sflag, size = 0x4, scoped, tag = 'scoped memory for featurenet_apply.1']
    #allocation30 [shape = 'u8[65536]{0}', space=vmem, size = 0x10000, scoped, tag = 'input window, operand 22, single buffered']
    #allocation31 [shape = 'u8[512]{0}', space=vmem, size = 0x400, scoped, tag = 'input window, operand 23, single buffered']
    #allocation32 [shape = 's32[1]{0}', space=sflag, size = 0x4, scoped, tag = 'scoped memory for featurenet_apply.1']
    #allocation33 [shape = 'u8[131072]{0}', space=vmem, size = 0x20000, scoped, tag = 'input window, operand 24, single buffered']
    #allocation34 [shape = 'u8[1024]{0}', space=vmem, size = 0x400, scoped, tag = 'input window, operand 25, single buffered']
    #allocation35 [shape = 's32[1]{0}', space=sflag, size = 0x4, scoped, tag = 'scoped memory for featurenet_apply.1']
    #allocation36 [shape = 'u8[2048]{0}', space=vmem, size = 0x800, scoped, tag = 'input window, operand 27, single buffered']
    #allocation37 [shape = 'u8[393216]{0}', space=vmem, size = 0x60000, scoped, tag = 'input window, operand 28, single buffered']
    #allocation38 [shape = 's32[1]{0}', space=sflag, size = 0x4, scoped, tag = 'scoped memory for featurenet_apply.1']
    #allocation39 [shape = 'u8[512]{0}', space=vmem, size = 0x400, scoped, tag = 'input window, operand 29, single buffered']
    #allocation40 [shape = 'u8[786432]{0}', space=vmem, size = 0xc0000, scoped, tag = 'input window, operand 30, single buffered']
    #allocation41 [shape = 's32[1]{0}', space=sflag, size = 0x4, scoped, tag = 'scoped memory for featurenet_apply.1']
    #allocation42 [shape = 'u8[512]{0}', space=vmem, size = 0x400, scoped, tag = 'input window, operand 31, single buffered']
    #allocation43 [shape = 'u8[131072]{0}', space=vmem, size = 0x20000, scoped, tag = 'input window, operand 33, single buffered']
    #allocation44 [shape = 's32[1]{0}', space=sflag, size = 0x4, scoped, tag = 'scoped memory for featurenet_apply.1']
    #allocation45 [shape = 'u8[524288]{0}', space=vmem, size = 0x80000, scoped, tag = 'input window, operand 35, single buffered']
    %83 = vsyncpa [#allocation3], 0
    %84 = vsyncpa [#allocation5], 0
    %85 = vsyncpa [#allocation8], 0
    %86 = vsyncpa [#allocation11], 0
    %87 = vsyncpa [#allocation14], 0
    %88 = vsyncpa [#allocation17], 0
    %89 = vsyncpa [#allocation20], 0
    %90 = vsyncpa [#allocation23], 0
    %91 = vsyncpa [#allocation26], 0
    %92 = vsyncpa [#allocation29], 0
    %93 = vsyncpa [#allocation32], 0
    %94 = vsyncpa [#allocation35], 0
    %95 = vsyncpa [#allocation38], 0
    %96 = vsyncpa [#allocation41], 0
    %97 = vsyncpa [#allocation44], 0
    // Predicated region
    $region2: #{featurenet_apply.1} parent=1 // pred_check
      _
    $region3: #{featurenet_apply.1} parent=1 // pred_check_branch
      %99 = sbr.rel (0) target = $region5
    $region4: #{featurenet_apply.1} parent=1 // pred_region
      _
    $region5: #{featurenet_apply.1} parent=1 // pred_fallthru
      _
    // Predicated region
    $region6: #{featurenet_apply.1} parent=1 // pred_check
      _
    $region7: #{featurenet_apply.1} parent=1 // pred_check_branch
      %101 = sbr.rel (0) target = $region9
    $region8: #{featurenet_apply.1} parent=1 // pred_region
      %s103 = ssub.s32 2304, 2304
      %104 = vsyncadd [#allocation3], %s103
      %s105 = sshll.u32 [#allocation2], 4
      %s106 = int_to_ptr.vmem [resolvable:$true] %s105
      %111 = dma.hbm_to_vmem [thread:$0]  %s3, 2304, %s106, [#allocation3], 128, 128, 8
    $region9: #{featurenet_apply.1} parent=1 // pred_fallthru
      _
    // Predicated region
    $region10: #{featurenet_apply.1} parent=1 // pred_check
      _
    $region11: #{featurenet_apply.1} parent=1 // pred_check_branch
      %113 = sbr.rel (0) target = $region13
    $region12: #{featurenet_apply.1} parent=1 // pred_region
      %s115 = ssub.s32 1536, 1536
      %116 = vsyncadd [#allocation5], %s115
      %s117 = sshll.u32 [#allocation4], 4
      %s118 = int_to_ptr.vmem [resolvable:$true] %s117
      %123 = dma.hbm_to_vmem [thread:$0]  %s5, 1536, %s118, [#allocation5], 128, 128, 8
    $region13: #{featurenet_apply.1} parent=1 // pred_fallthru
      _
    // Predicated region
    $region14: #{featurenet_apply.1} parent=1 // pred_check
      _
    $region15: #{featurenet_apply.1} parent=1 // pred_check_branch
      %125 = sbr.rel (0) target = $region17
    $region16: #{featurenet_apply.1} parent=1 // pred_region
      _
    $region17: #{featurenet_apply.1} parent=1 // pred_fallthru
      _
    // Predicated region
    $region18: #{featurenet_apply.1} parent=1 // pred_check
      _
    $region19: #{featurenet_apply.1} parent=1 // pred_check_branch
      %127 = sbr.rel (0) target = $region21
    $region20: #{featurenet_apply.1} parent=1 // pred_region
      %s129 = ssub.s32 6144, 6144
      %130 = vsyncadd [#allocation5], %s129
      %s131 = sshll.u32 [#allocation6], 4
      %s132 = int_to_ptr.vmem [resolvable:$true] %s131
      %137 = dma.hbm_to_vmem [thread:$0]  %s9, 6144, %s132, [#allocation5], 128, 128, 8
    $region21: #{featurenet_apply.1} parent=1 // pred_fallthru
      _
    // Predicated region
    $region22: #{featurenet_apply.1} parent=1 // pred_check
      _
    $region23: #{featurenet_apply.1} parent=1 // pred_check_branch
      %139 = sbr.rel (0) target = $region25
    $region24: #{featurenet_apply.1} parent=1 // pred_region
      %s141 = ssub.s32 16, 16
      %142 = vsyncadd [#allocation8], %s141
      %s144 = sshll.u32 [#allocation7], 4
      %s145 = int_to_ptr.vmem [resolvable:$true] %s144
      %147 = dma.hbm_to_vmem [thread:$0]  %s11, 16, %s145, [#allocation8]
    $region25: #{featurenet_apply.1} parent=1 // pred_fallthru
      _
    // Predicated region
    $region26: #{featurenet_apply.1} parent=1 // pred_check
      _
    $region27: #{featurenet_apply.1} parent=1 // pred_check_branch
      %149 = sbr.rel (0) target = $region29
    $region28: #{featurenet_apply.1} parent=1 // pred_region
      %s151 = ssub.s32 10240, 10240
      %152 = vsyncadd [#allocation8], %s151
      %s153 = sshll.u32 [#allocation9], 4
      %s154 = int_to_ptr.vmem [resolvable:$true] %s153
      %159 = dma.hbm_to_vmem [thread:$0]  %s13, 10240, %s154, [#allocation8], 128, 128, 8
    $region29: #{featurenet_apply.1} parent=1 // pred_fallthru
      _
    // Predicated region
    $region30: #{featurenet_apply.1} parent=1 // pred_check
      _
    $region31: #{featurenet_apply.1} parent=1 // pred_check_branch
      %161 = sbr.rel (0) target = $region33
    $region32: #{featurenet_apply.1} parent=1 // pred_region
      %s163 = ssub.s32 1280, 1280
      %164 = vsyncadd [#allocation11], %s163
      %s165 = sshll.u32 [#allocation10], 4
      %s166 = int_to_ptr.vmem [resolvable:$true] %s165
      %171 = dma.hbm_to_vmem [thread:$0]  %s15, 1280, %s166, [#allocation11], 128, 128, 8
    $region33: #{featurenet_apply.1} parent=1 // pred_fallthru
      _
    // Predicated region
    $region34: #{featurenet_apply.1} parent=1 // pred_check
      _
    $region35: #{featurenet_apply.1} parent=1 // pred_check_branch
      %173 = sbr.rel (0) target = $region37
    $region36: #{featurenet_apply.1} parent=1 // pred_region
      %s175 = ssub.s32 16, 16
      %176 = vsyncadd [#allocation11], %s175
      %s178 = sshll.u32 [#allocation12], 4
      %s179 = int_to_ptr.vmem [resolvable:$true] %s178
      %181 = dma.hbm_to_vmem [thread:$0]  %s17, 16, %s179, [#allocation11]
    $region37: #{featurenet_apply.1} parent=1 // pred_fallthru
      _
    // Predicated region
    $region38: #{featurenet_apply.1} parent=1 // pred_check
      _
    $region39: #{featurenet_apply.1} parent=1 // pred_check_branch
      %183 = sbr.rel (0) target = $region41
    $region40: #{featurenet_apply.1} parent=1 // pred_region
      %s185 = ssub.s32 6144, 6144
      %186 = vsyncadd [#allocation14], %s185
      %s187 = sshll.u32 [#allocation13], 4
      %s188 = int_to_ptr.vmem [resolvable:$true] %s187
      %193 = dma.hbm_to_vmem [thread:$0]  %s19, 6144, %s188, [#allocation14], 128, 128, 8
    $region41: #{featurenet_apply.1} parent=1 // pred_fallthru
      _
    // Predicated region
    $region42: #{featurenet_apply.1} parent=1 // pred_check
      _
    $region43: #{featurenet_apply.1} parent=1 // pred_check_branch
      %195 = sbr.rel (0) target = $region45
    $region44: #{featurenet_apply.1} parent=1 // pred_region
      %s197 = ssub.s32 768, 768
      %198 = vsyncadd [#allocation14], %s197
      %s199 = sshll.u32 [#allocation15], 4
      %s200 = int_to_ptr.vmem [resolvable:$true] %s199
      %205 = dma.hbm_to_vmem [thread:$0]  %s21, 768, %s200, [#allocation14], 128, 128, 8
    $region45: #{featurenet_apply.1} parent=1 // pred_fallthru
      _
    // Predicated region
    $region46: #{featurenet_apply.1} parent=1 // pred_check
      _
    $region47: #{featurenet_apply.1} parent=1 // pred_check_branch
      %207 = sbr.rel (0) target = $region49
    $region48: #{featurenet_apply.1} parent=1 // pred_region
      _
    $region49: #{featurenet_apply.1} parent=1 // pred_fallthru
      _
    // Predicated region
    $region50: #{featurenet_apply.1} parent=1 // pred_check
      _
    $region51: #{featurenet_apply.1} parent=1 // pred_check_branch
      %209 = sbr.rel (0) target = $region53
    $region52: #{featurenet_apply.1} parent=1 // pred_region
      %s211 = ssub.s32 6144, 6144
      %212 = vsyncadd [#allocation17], %s211
      %s213 = sshll.u32 [#allocation16], 4
      %s214 = int_to_ptr.vmem [resolvable:$true] %s213
      %219 = dma.hbm_to_vmem [thread:$0]  %s25, 6144, %s214, [#allocation17], 128, 128, 8
    $region53: #{featurenet_apply.1} parent=1 // pred_fallthru
      _
    // Predicated region
    $region54: #{featurenet_apply.1} parent=1 // pred_check
      _
    $region55: #{featurenet_apply.1} parent=1 // pred_check_branch
      %221 = sbr.rel (0) target = $region57
    $region56: #{featurenet_apply.1} parent=1 // pred_region
      _
    $region57: #{featurenet_apply.1} parent=1 // pred_fallthru
      _
    // Predicated region
    $region58: #{featurenet_apply.1} parent=1 // pred_check
      _
    $region59: #{featurenet_apply.1} parent=1 // pred_check_branch
      %223 = sbr.rel (0) target = $region61
    $region60: #{featurenet_apply.1} parent=1 // pred_region
      %s225 = ssub.s32 10240, 10240
      %226 = vsyncadd [#allocation17], %s225
      %s227 = sshll.u32 [#allocation18], 4
      %s228 = int_to_ptr.vmem [resolvable:$true] %s227
      %233 = dma.hbm_to_vmem [thread:$0]  %s29, 10240, %s228, [#allocation17], 128, 128, 8
    $region61: #{featurenet_apply.1} parent=1 // pred_fallthru
      _
    // Predicated region
    $region62: #{featurenet_apply.1} parent=1 // pred_check
      _
    $region63: #{featurenet_apply.1} parent=1 // pred_check_branch
      %235 = sbr.rel (0) target = $region65
    $region64: #{featurenet_apply.1} parent=1 // pred_region
      %s237 = ssub.s32 640, 640
      %238 = vsyncadd [#allocation20], %s237
      %s239 = sshll.u32 [#allocation19], 4
      %s240 = int_to_ptr.vmem [resolvable:$true] %s239
      %245 = dma.hbm_to_vmem [thread:$0]  %s31, 640, %s240, [#allocation20], 128, 128, 8
    $region65: #{featurenet_apply.1} parent=1 // pred_fallthru
      _
    // Predicated region
    $region66: #{featurenet_apply.1} parent=1 // pred_check
      _
    $region67: #{featurenet_apply.1} parent=1 // pred_check_branch
      %247 = sbr.rel (0) target = $region69
    $region68: #{featurenet_apply.1} parent=1 // pred_region
      %s249 = ssub.s32 16, 16
      %250 = vsyncadd [#allocation20], %s249
      %s252 = sshll.u32 [#allocation21], 4
      %s253 = int_to_ptr.vmem [resolvable:$true] %s252
      %255 = dma.hbm_to_vmem [thread:$0]  %s33, 16, %s253, [#allocation20]
    $region69: #{featurenet_apply.1} parent=1 // pred_fallthru
      _
    // Predicated region
    $region70: #{featurenet_apply.1} parent=1 // pred_check
      _
    $region71: #{featurenet_apply.1} parent=1 // pred_check_branch
      %257 = sbr.rel (0) target = $region73
    $region72: #{featurenet_apply.1} parent=1 // pred_region
      %s259 = ssub.s32 6144, 6144
      %260 = vsyncadd [#allocation23], %s259
      %s261 = sshll.u32 [#allocation22], 4
      %s262 = int_to_ptr.vmem [resolvable:$true] %s261
      %267 = dma.hbm_to_vmem [thread:$0]  %s35, 6144, %s262, [#allocation23], 128, 128, 8
    $region73: #{featurenet_apply.1} parent=1 // pred_fallthru
      _
    // Predicated region
    $region74: #{featurenet_apply.1} parent=1 // pred_check
      _
    $region75: #{featurenet_apply.1} parent=1 // pred_check_branch
      %269 = sbr.rel (0) target = $region77
    $region76: #{featurenet_apply.1} parent=1 // pred_region
      %s271 = ssub.s32 384, 384
      %272 = vsyncadd [#allocation23], %s271
      %s273 = sshll.u32 [#allocation24], 4
      %s274 = int_to_ptr.vmem [resolvable:$true] %s273
      %279 = dma.hbm_to_vmem [thread:$0]  %s37, 384, %s274, [#allocation23], 128, 128, 8
    $region77: #{featurenet_apply.1} parent=1 // pred_fallthru
      _
    // Predicated region
    $region78: #{featurenet_apply.1} parent=1 // pred_check
      _
    $region79: #{featurenet_apply.1} parent=1 // pred_check_branch
      %281 = sbr.rel (0) target = $region81
    $region80: #{featurenet_apply.1} parent=1 // pred_region
      %s283 = ssub.s32 16, 16
      %284 = vsyncadd [#allocation26], %s283
      %s286 = sshll.u32 [#allocation25], 4
      %s287 = int_to_ptr.vmem [resolvable:$true] %s286
      %289 = dma.hbm_to_vmem [thread:$0]  %s39, 16, %s287, [#allocation26]
    $region81: #{featurenet_apply.1} parent=1 // pred_fallthru
      _
    // Predicated region
    $region82: #{featurenet_apply.1} parent=1 // pred_check
      _
    $region83: #{featurenet_apply.1} parent=1 // pred_check_branch
      %291 = sbr.rel (0) target = $region85
    $region84: #{featurenet_apply.1} parent=1 // pred_region
      %s293 = ssub.s32 6144, 6144
      %294 = vsyncadd [#allocation26], %s293
      %s295 = sshll.u32 [#allocation27], 4
      %s296 = int_to_ptr.vmem [resolvable:$true] %s295
      %301 = dma.hbm_to_vmem [thread:$0]  %s41, 6144, %s296, [#allocation26], 128, 128, 8
    $region85: #{featurenet_apply.1} parent=1 // pred_fallthru
      _
    // Predicated region
    $region86: #{featurenet_apply.1} parent=1 // pred_check
      _
    $region87: #{featurenet_apply.1} parent=1 // pred_check_branch
      %303 = sbr.rel (0) target = $region89
    $region88: #{featurenet_apply.1} parent=1 // pred_region
      %s305 = ssub.s32 16, 16
      %306 = vsyncadd [#allocation29], %s305
      %s308 = sshll.u32 [#allocation28], 4
      %s309 = int_to_ptr.vmem [resolvable:$true] %s308
      %311 = dma.hbm_to_vmem [thread:$0]  %s43, 16, %s309, [#allocation29]
    $region89: #{featurenet_apply.1} parent=1 // pred_fallthru
      _
    // Predicated region
    $region90: #{featurenet_apply.1} parent=1 // pred_check
      _
    $region91: #{featurenet_apply.1} parent=1 // pred_check_branch
      %313 = sbr.rel (0) target = $region93
    $region92: #{featurenet_apply.1} parent=1 // pred_region
      %s315 = ssub.s32 2048, 2048
      %316 = vsyncadd [#allocation29], %s315
      %s317 = sshll.u32 [#allocation30], 4
      %s318 = int_to_ptr.vmem [resolvable:$true] %s317
      %323 = dma.hbm_to_vmem [thread:$0]  %s45, 2048, %s318, [#allocation29], 128, 128, 8
    $region93: #{featurenet_apply.1} parent=1 // pred_fallthru
      _
    // Predicated region
    $region94: #{featurenet_apply.1} parent=1 // pred_check
      _
    $region95: #{featurenet_apply.1} parent=1 // pred_check_branch
      %325 = sbr.rel (0) target = $region97
    $region96: #{featurenet_apply.1} parent=1 // pred_region
      %s327 = ssub.s32 16, 16
      %328 = vsyncadd [#allocation32], %s327
      %s330 = sshll.u32 [#allocation31], 4
      %s331 = int_to_ptr.vmem [resolvable:$true] %s330
      %333 = dma.hbm_to_vmem [thread:$0]  %s47, 16, %s331, [#allocation32]
    $region97: #{featurenet_apply.1} parent=1 // pred_fallthru
      _
    // Predicated region
    $region98: #{featurenet_apply.1} parent=1 // pred_check
      _
    $region99: #{featurenet_apply.1} parent=1 // pred_check_branch
      %335 = sbr.rel (0) target = $region101
    $region100: #{featurenet_apply.1} parent=1 // pred_region
      %s337 = ssub.s32 4096, 4096
      %338 = vsyncadd [#allocation32], %s337
      %s339 = sshll.u32 [#allocation33], 4
      %s340 = int_to_ptr.vmem [resolvable:$true] %s339
      %345 = dma.hbm_to_vmem [thread:$0]  %s49, 4096, %s340, [#allocation32], 256, 256, 16
    $region101: #{featurenet_apply.1} parent=1 // pred_fallthru
      _
    // Predicated region
    $region102: #{featurenet_apply.1} parent=1 // pred_check
      _
    $region103: #{featurenet_apply.1} parent=1 // pred_check_branch
      %347 = sbr.rel (0) target = $region105
    $region104: #{featurenet_apply.1} parent=1 // pred_region
      %s349 = ssub.s32 32, 32
      %350 = vsyncadd [#allocation35], %s349
      %s352 = sshll.u32 [#allocation34], 4
      %s353 = int_to_ptr.vmem [resolvable:$true] %s352
      %355 = dma.hbm_to_vmem [thread:$0]  %s51, 32, %s353, [#allocation35]
    $region105: #{featurenet_apply.1} parent=1 // pred_fallthru
      _
    // Predicated region
    $region106: #{featurenet_apply.1} parent=1 // pred_check
      _
    $region107: #{featurenet_apply.1} parent=1 // pred_check_branch
      %357 = sbr.rel (0) target = $region109
    $region108: #{featurenet_apply.1} parent=1 // pred_region
      _
    $region109: #{featurenet_apply.1} parent=1 // pred_fallthru
      _
    // Predicated region
    $region110: #{featurenet_apply.1} parent=1 // pred_check
      _
    $region111: #{featurenet_apply.1} parent=1 // pred_check_branch
      %359 = sbr.rel (0) target = $region113
    $region112: #{featurenet_apply.1} parent=1 // pred_region
      %s361 = ssub.s32 64, 64
      %362 = vsyncadd [#allocation35], %s361
      %s364 = sshll.u32 [#allocation36], 4
      %s365 = int_to_ptr.vmem [resolvable:$true] %s364
      %367 = dma.hbm_to_vmem [thread:$0]  %s55, 64, %s365, [#allocation35]
    $region113: #{featurenet_apply.1} parent=1 // pred_fallthru
      _
    // Predicated region
    $region114: #{featurenet_apply.1} parent=1 // pred_check
      _
    $region115: #{featurenet_apply.1} parent=1 // pred_check_branch
      %369 = sbr.rel (0) target = $region117
    $region116: #{featurenet_apply.1} parent=1 // pred_region
      %s371 = ssub.s32 12288, 12288
      %372 = vsyncadd [#allocation38], %s371
      %s373 = sshll.u32 [#allocation37], 4
      %s374 = int_to_ptr.vmem [resolvable:$true] %s373
      %379 = dma.hbm_to_vmem [thread:$0]  %s57, 12288, %s374, [#allocation38], 128, 128, 8
    $region117: #{featurenet_apply.1} parent=1 // pred_fallthru
      _
    // Predicated region
    $region118: #{featurenet_apply.1} parent=1 // pred_check
      _
    $region119: #{featurenet_apply.1} parent=1 // pred_check_branch
      %381 = sbr.rel (0) target = $region121
    $region120: #{featurenet_apply.1} parent=1 // pred_region
      %s383 = ssub.s32 16, 16
      %384 = vsyncadd [#allocation38], %s383
      %s386 = sshll.u32 [#allocation39], 4
      %s387 = int_to_ptr.vmem [resolvable:$true] %s386
      %389 = dma.hbm_to_vmem [thread:$0]  %s59, 16, %s387, [#allocation38]
    $region121: #{featurenet_apply.1} parent=1 // pred_fallthru
      _
    // Predicated region
    $region122: #{featurenet_apply.1} parent=1 // pred_check
      _
    $region123: #{featurenet_apply.1} parent=1 // pred_check_branch
      %391 = sbr.rel (0) target = $region125
    $region124: #{featurenet_apply.1} parent=1 // pred_region
      %s393 = ssub.s32 24576, 24576
      %394 = vsyncadd [#allocation41], %s393
      %s395 = sshll.u32 [#allocation40], 4
      %s396 = int_to_ptr.vmem [resolvable:$true] %s395
      %401 = dma.hbm_to_vmem [thread:$0]  %s61, 24576, %s396, [#allocation41], 128, 128, 8
    $region125: #{featurenet_apply.1} parent=1 // pred_fallthru
      _
    // Predicated region
    $region126: #{featurenet_apply.1} parent=1 // pred_check
      _
    $region127: #{featurenet_apply.1} parent=1 // pred_check_branch
      %403 = sbr.rel (0) target = $region129
    $region128: #{featurenet_apply.1} parent=1 // pred_region
      %s405 = ssub.s32 16, 16
      %406 = vsyncadd [#allocation41], %s405
      %s408 = sshll.u32 [#allocation42], 4
      %s409 = int_to_ptr.vmem [resolvable:$true] %s408
      %411 = dma.hbm_to_vmem [thread:$0]  %s63, 16, %s409, [#allocation41]
    $region129: #{featurenet_apply.1} parent=1 // pred_fallthru
      _
    // Predicated region
    $region130: #{featurenet_apply.1} parent=1 // pred_check
      _
    $region131: #{featurenet_apply.1} parent=1 // pred_check_branch
      %413 = sbr.rel (0) target = $region133
    $region132: #{featurenet_apply.1} parent=1 // pred_region
      _
    $region133: #{featurenet_apply.1} parent=1 // pred_fallthru
      _
    // Predicated region
    $region134: #{featurenet_apply.1} parent=1 // pred_check
      _
    $region135: #{featurenet_apply.1} parent=1 // pred_check_branch
      %415 = sbr.rel (0) target = $region137
    $region136: #{featurenet_apply.1} parent=1 // pred_region
      %s417 = ssub.s32 4096, 4096
      %418 = vsyncadd [#allocation44], %s417
      %s419 = sshll.u32 [#allocation43], 4
      %s420 = int_to_ptr.vmem [resolvable:$true] %s419
      %425 = dma.hbm_to_vmem [thread:$0]  %s67, 4096, %s420, [#allocation44], 256, 256, 16
    $region137: #{featurenet_apply.1} parent=1 // pred_fallthru
      _
    // Predicated region
    $region138: #{featurenet_apply.1} parent=1 // pred_check
      _
    $region139: #{featurenet_apply.1} parent=1 // pred_check_branch
      %427 = sbr.rel (0) target = $region141
    $region140: #{featurenet_apply.1} parent=1 // pred_region
      _
    $region141: #{featurenet_apply.1} parent=1 // pred_fallthru
      _
    // Predicated region
    $region142: #{featurenet_apply.1} parent=1 // pred_check
      _
    $region143: #{featurenet_apply.1} parent=1 // pred_check_branch
      %429 = sbr.rel (0) target = $region145
    $region144: #{featurenet_apply.1} parent=1 // pred_region
      %s431 = ssub.s32 16384, 16384
      %432 = vsyncadd [#allocation44], %s431
      %s433 = sshll.u32 [#allocation45], 4
      %s434 = int_to_ptr.vmem [resolvable:$true] %s433
      %439 = dma.hbm_to_vmem [thread:$0]  %s71, 16384, %s434, [#allocation44], 512, 512, 32
    $region145: #{featurenet_apply.1} parent=1 // pred_fallthru
      _
    // Predicated region
    $region146: #{featurenet_apply.1} parent=1 // pred_check
      _
    $region147: #{featurenet_apply.1} parent=1 // pred_check_branch
      %441 = sbr.rel (0) target = $region149
    $region148: #{featurenet_apply.1} parent=1 // pred_region
      %442 = dma.done [#allocation3], 2304
    $region149: #{featurenet_apply.1} parent=1 // pred_fallthru
      _
    // Predicated region
    $region150: #{featurenet_apply.1} parent=1 // pred_check
      _
    $region151: #{featurenet_apply.1} parent=1 // pred_check_branch
      %444 = sbr.rel (0) target = $region153
    $region152: #{featurenet_apply.1} parent=1 // pred_region
      %445 = dma.done [#allocation5], 1536
    $region153: #{featurenet_apply.1} parent=1 // pred_fallthru
      _
    // Predicated region
    $region154: #{featurenet_apply.1} parent=1 // pred_check
      _
    $region155: #{featurenet_apply.1} parent=1 // pred_check_branch
      %447 = sbr.rel (0) target = $region157
    $region156: #{featurenet_apply.1} parent=1 // pred_region
      %448 = dma.done [#allocation5], 6144
    $region157: #{featurenet_apply.1} parent=1 // pred_fallthru
      _
    // Predicated region
    $region158: #{featurenet_apply.1} parent=1 // pred_check
      _
    $region159: #{featurenet_apply.1} parent=1 // pred_check_branch
      %450 = sbr.rel (0) target = $region161
    $region160: #{featurenet_apply.1} parent=1 // pred_region
      %451 = dma.done [#allocation8], 16
    $region161: #{featurenet_apply.1} parent=1 // pred_fallthru
      _
    // Predicated region
    $region162: #{featurenet_apply.1} parent=1 // pred_check
      _
    $region163: #{featurenet_apply.1} parent=1 // pred_check_branch
      %453 = sbr.rel (0) target = $region165
    $region164: #{featurenet_apply.1} parent=1 // pred_region
      %454 = dma.done [#allocation8], 10240
    $region165: #{featurenet_apply.1} parent=1 // pred_fallthru
      _
    // Predicated region
    $region166: #{featurenet_apply.1} parent=1 // pred_check
      _
    $region167: #{featurenet_apply.1} parent=1 // pred_check_branch
      %456 = sbr.rel (0) target = $region169
    $region168: #{featurenet_apply.1} parent=1 // pred_region
      %457 = dma.done [#allocation11], 1280
    $region169: #{featurenet_apply.1} parent=1 // pred_fallthru
      _
    // Predicated region
    $region170: #{featurenet_apply.1} parent=1 // pred_check
      _
    $region171: #{featurenet_apply.1} parent=1 // pred_check_branch
      %459 = sbr.rel (0) target = $region173
    $region172: #{featurenet_apply.1} parent=1 // pred_region
      %460 = dma.done [#allocation11], 16
    $region173: #{featurenet_apply.1} parent=1 // pred_fallthru
      _
    // Predicated region
    $region174: #{featurenet_apply.1} parent=1 // pred_check
      _
    $region175: #{featurenet_apply.1} parent=1 // pred_check_branch
      %462 = sbr.rel (0) target = $region177
    $region176: #{featurenet_apply.1} parent=1 // pred_region
      %463 = dma.done [#allocation14], 6144
    $region177: #{featurenet_apply.1} parent=1 // pred_fallthru
      _
    // Predicated region
    $region178: #{featurenet_apply.1} parent=1 // pred_check
      _
    $region179: #{featurenet_apply.1} parent=1 // pred_check_branch
      %465 = sbr.rel (0) target = $region181
    $region180: #{featurenet_apply.1} parent=1 // pred_region
      %466 = dma.done [#allocation14], 768
    $region181: #{featurenet_apply.1} parent=1 // pred_fallthru
      _
    // Predicated region
    $region182: #{featurenet_apply.1} parent=1 // pred_check
      _
    $region183: #{featurenet_apply.1} parent=1 // pred_check_branch
      %468 = sbr.rel (0) target = $region185
    $region184: #{featurenet_apply.1} parent=1 // pred_region
      %469 = dma.done [#allocation17], 6144
    $region185: #{featurenet_apply.1} parent=1 // pred_fallthru
      _
    // Predicated region
    $region186: #{featurenet_apply.1} parent=1 // pred_check
      _
    $region187: #{featurenet_apply.1} parent=1 // pred_check_branch
      %471 = sbr.rel (0) target = $region189
    $region188: #{featurenet_apply.1} parent=1 // pred_region
      %472 = dma.done [#allocation17], 10240
    $region189: #{featurenet_apply.1} parent=1 // pred_fallthru
      _
    // Predicated region
    $region190: #{featurenet_apply.1} parent=1 // pred_check
      _
    $region191: #{featurenet_apply.1} parent=1 // pred_check_branch
      %474 = sbr.rel (0) target = $region193
    $region192: #{featurenet_apply.1} parent=1 // pred_region
      %475 = dma.done [#allocation20], 640
    $region193: #{featurenet_apply.1} parent=1 // pred_fallthru
      _
    // Predicated region
    $region194: #{featurenet_apply.1} parent=1 // pred_check
      _
    $region195: #{featurenet_apply.1} parent=1 // pred_check_branch
      %477 = sbr.rel (0) target = $region197
    $region196: #{featurenet_apply.1} parent=1 // pred_region
      %478 = dma.done [#allocation20], 16
    $region197: #{featurenet_apply.1} parent=1 // pred_fallthru
      _
    // Predicated region
    $region198: #{featurenet_apply.1} parent=1 // pred_check
      _
    $region199: #{featurenet_apply.1} parent=1 // pred_check_branch
      %480 = sbr.rel (0) target = $region201
    $region200: #{featurenet_apply.1} parent=1 // pred_region
      %481 = dma.done [#allocation23], 6144
    $region201: #{featurenet_apply.1} parent=1 // pred_fallthru
      _
    // Predicated region
    $region202: #{featurenet_apply.1} parent=1 // pred_check
      _
    $region203: #{featurenet_apply.1} parent=1 // pred_check_branch
      %483 = sbr.rel (0) target = $region205
    $region204: #{featurenet_apply.1} parent=1 // pred_region
      %484 = dma.done [#allocation23], 384
    $region205: #{featurenet_apply.1} parent=1 // pred_fallthru
      _
    // Predicated region
    $region206: #{featurenet_apply.1} parent=1 // pred_check
      _
    $region207: #{featurenet_apply.1} parent=1 // pred_check_branch
      %486 = sbr.rel (0) target = $region209
    $region208: #{featurenet_apply.1} parent=1 // pred_region
      %487 = dma.done [#allocation26], 16
    $region209: #{featurenet_apply.1} parent=1 // pred_fallthru
      _
    // Predicated region
    $region210: #{featurenet_apply.1} parent=1 // pred_check
      _
    $region211: #{featurenet_apply.1} parent=1 // pred_check_branch
      %489 = sbr.rel (0) target = $region213
    $region212: #{featurenet_apply.1} parent=1 // pred_region
      %490 = dma.done [#allocation26], 6144
    $region213: #{featurenet_apply.1} parent=1 // pred_fallthru
      _
    // Predicated region
    $region214: #{featurenet_apply.1} parent=1 // pred_check
      _
    $region215: #{featurenet_apply.1} parent=1 // pred_check_branch
      %492 = sbr.rel (0) target = $region217
    $region216: #{featurenet_apply.1} parent=1 // pred_region
      %493 = dma.done [#allocation29], 16
    $region217: #{featurenet_apply.1} parent=1 // pred_fallthru
      _
    // Predicated region
    $region218: #{featurenet_apply.1} parent=1 // pred_check
      _
    $region219: #{featurenet_apply.1} parent=1 // pred_check_branch
      %495 = sbr.rel (0) target = $region221
    $region220: #{featurenet_apply.1} parent=1 // pred_region
      %496 = dma.done [#allocation29], 2048
    $region221: #{featurenet_apply.1} parent=1 // pred_fallthru
      _
    // Predicated region
    $region222: #{featurenet_apply.1} parent=1 // pred_check
      _
    $region223: #{featurenet_apply.1} parent=1 // pred_check_branch
      %498 = sbr.rel (0) target = $region225
    $region224: #{featurenet_apply.1} parent=1 // pred_region
      %499 = dma.done [#allocation32], 16
    $region225: #{featurenet_apply.1} parent=1 // pred_fallthru
      _
    // Predicated region
    $region226: #{featurenet_apply.1} parent=1 // pred_check
      _
    $region227: #{featurenet_apply.1} parent=1 // pred_check_branch
      %501 = sbr.rel (0) target = $region229
    $region228: #{featurenet_apply.1} parent=1 // pred_region
      %502 = dma.done [#allocation32], 4096
    $region229: #{featurenet_apply.1} parent=1 // pred_fallthru
      _
    // Predicated region
    $region230: #{featurenet_apply.1} parent=1 // pred_check
      _
    $region231: #{featurenet_apply.1} parent=1 // pred_check_branch
      %504 = sbr.rel (0) target = $region233
    $region232: #{featurenet_apply.1} parent=1 // pred_region
      %505 = dma.done [#allocation35], 32
    $region233: #{featurenet_apply.1} parent=1 // pred_fallthru
      _
    // Predicated region
    $region234: #{featurenet_apply.1} parent=1 // pred_check
      _
    $region235: #{featurenet_apply.1} parent=1 // pred_check_branch
      %507 = sbr.rel (0) target = $region237
    $region236: #{featurenet_apply.1} parent=1 // pred_region
      %508 = dma.done [#allocation35], 64
    $region237: #{featurenet_apply.1} parent=1 // pred_fallthru
      _
    // Predicated region
    $region238: #{featurenet_apply.1} parent=1 // pred_check
      _
    $region239: #{featurenet_apply.1} parent=1 // pred_check_branch
      %510 = sbr.rel (0) target = $region241
    $region240: #{featurenet_apply.1} parent=1 // pred_region
      %511 = dma.done [#allocation38], 12288
    $region241: #{featurenet_apply.1} parent=1 // pred_fallthru
      _
    // Predicated region
    $region242: #{featurenet_apply.1} parent=1 // pred_check
      _
    $region243: #{featurenet_apply.1} parent=1 // pred_check_branch
      %513 = sbr.rel (0) target = $region245
    $region244: #{featurenet_apply.1} parent=1 // pred_region
      %514 = dma.done [#allocation38], 16
    $region245: #{featurenet_apply.1} parent=1 // pred_fallthru
      _
    // Predicated region
    $region246: #{featurenet_apply.1} parent=1 // pred_check
      _
    $region247: #{featurenet_apply.1} parent=1 // pred_check_branch
      %516 = sbr.rel (0) target = $region249
    $region248: #{featurenet_apply.1} parent=1 // pred_region
      %517 = dma.done [#allocation41], 24576
    $region249: #{featurenet_apply.1} parent=1 // pred_fallthru
      _
    // Predicated region
    $region250: #{featurenet_apply.1} parent=1 // pred_check
      _
    $region251: #{featurenet_apply.1} parent=1 // pred_check_branch
      %519 = sbr.rel (0) target = $region253
    $region252: #{featurenet_apply.1} parent=1 // pred_region
      %520 = dma.done [#allocation41], 16
    $region253: #{featurenet_apply.1} parent=1 // pred_fallthru
      _
    // Predicated region
    $region254: #{featurenet_apply.1} parent=1 // pred_check
      _
    $region255: #{featurenet_apply.1} parent=1 // pred_check_branch
      %522 = sbr.rel (0) target = $region257
    $region256: #{featurenet_apply.1} parent=1 // pred_region
      %523 = dma.done [#allocation44], 4096
    $region257: #{featurenet_apply.1} parent=1 // pred_fallthru
      _
    // Predicated region
    $region258: #{featurenet_apply.1} parent=1 // pred_check
      _
    $region259: #{featurenet_apply.1} parent=1 // pred_check_branch
      %525 = sbr.rel (0) target = $region261
    $region260: #{featurenet_apply.1} parent=1 // pred_region
      %526 = dma.done [#allocation44], 16384
    $region261: #{featurenet_apply.1} parent=1 // pred_fallthru
      _
    %v527 = vld [vmem:[%s1] sm:$0xff]
    %v528 = vld [vmem:[%s1 + $0x8] sm:$0xff]
    %v529 = vld [vmem:[%s1 + $0x10] sm:$0xff]
    %v530 = vld [vmem:[%s1 + $0x18] sm:$0xff]
    %v531 = vld [vmem:[#allocation4] sm:$0xff]
    %v532 = vld [vmem:[#allocation4 + $0x8] sm:$0xff]
    %v533 = vld [vmem:[#allocation4 + $0x10] sm:$0xff]
    %v534 = vld [vmem:[#allocation4 + $0x18] sm:$0xff]
    %vm535 = vcmask 261120
    %v537 = vsel %vm535, %v531, 0
    %v540 = vsel %vm535, %v532, 0
    %v543 = vsel %vm535, %v533, 0
    %v546 = vsel %vm535, %v534, 0
    %548 = vmatprep.subr.mxu0 0.0
    %549 = vmatpush1.msra.mxu0 0.0
    %550 = vmatprep.subr.mxu0 0.0
    %551 = vmatpush1.msra.mxu0 0.0
    %552 = vmatprep.subr.mxu0 0.0
    %553 = vmatpush1.msra.mxu0 0.0
    %554 = vmatprep.subr.mxu0 0.0
    %555 = vmatpush1.msra.mxu0 0.0
    %556 = vmatprep.subr.mxu0 0.0
    %557 = vmatpush1.msra.mxu0 0.0
    %558 = vmatprep.subr.mxu0 0.0
    %559 = vmatpush1.msra.mxu0 0.0
    %560 = vmatprep.subr.mxu0 0.0
    %561 = vmatpush1.msra.mxu0 0.0
    %562 = vmatprep.subr.mxu0 0.0
    %563 = vmatpush1.msra.mxu0 0.0
    %564 = vmatprep.subr.mxu0 0.0
    %565 = vmatpush1.msra.mxu0 0.0
    %566 = vmatprep.subr.mxu0 0.0
    %567 = vmatpush1.msra.mxu0 0.0
    %568 = vmatprep.subr.mxu0 0.0
    %569 = vmatpush1.msra.mxu0 0.0
    %570 = vmatprep.subr.mxu0 0.0
    %571 = vmatpush1.msra.mxu0 0.0
    %572 = vmatprep.subr.mxu0 0.0
    %573 = vmatpush1.msra.mxu0 %v530
    %574 = vmatprep.subr.mxu0 0.0
    %575 = vmatpush1.msra.mxu0 %v529
    %576 = vmatprep.subr.mxu0 0.0
    %577 = vmatpush1.msra.mxu0 %v528
    %578 = vmatprep.subr.mxu0 0.0
    %579 = vmatpush1.msra.mxu0 %v527
    %580 = vmatprep.subr.mxu0 0.0
    %581 = vmatpush2.msra.mxu0 0.0
    %582 = vmatprep.subr.mxu0 0.0
    %583 = vmatpush2.msra.mxu0 0.0
    %584 = vmatprep.subr.mxu0 0.0
    %585 = vmatpush2.msra.mxu0 0.0
    %586 = vmatprep.subr.mxu0 0.0
    %587 = vmatpush2.msra.mxu0 0.0
    %588 = vmatprep.subr.mxu0 0.0
    %589 = vmatpush2.msra.mxu0 0.0
    %590 = vmatprep.subr.mxu0 0.0
    %591 = vmatpush2.msra.mxu0 0.0
    %592 = vmatprep.subr.mxu0 0.0
    %593 = vmatpush2.msra.mxu0 0.0
    %594 = vmatprep.subr.mxu0 0.0
    %595 = vmatpush2.msra.mxu0 0.0
    %596 = vmatprep.subr.mxu0 0.0
    %597 = vmatpush2.msra.mxu0 0.0
    %598 = vmatprep.subr.mxu0 0.0
    %599 = vmatpush2.msra.mxu0 0.0
    %600 = vmatprep.subr.mxu0 0.0
    %601 = vmatpush2.msra.mxu0 0.0
    %602 = vmatprep.subr.mxu0 0.0
    %603 = vmatpush2.msra.mxu0 0.0
    %604 = vmatprep.subr.mxu0 0.0
    %605 = vmatpush2.msra.mxu0 0.0
    %606 = vmatprep.subr.mxu0 0.0
    %607 = vmatpush2.msra.mxu0 0.0
    %608 = vmatprep.subr.mxu0 0.0
    %609 = vmatpush2.msra.mxu0 0.0
    %610 = vmatprep.subr.mxu0 0.0
    %611 = vmatpush2.msra.mxu0 0.0
    %612 = vmatprep.mubr.f32.mxu0 0.0
    %613 = vmatmul.mubr.f32.gmra.mxu0 %v537
    %v614 = vpop.f32.mrf.mxu0
    %v615 = vadd.f32 0.0, %v614
    %v616 = vpop.f32.mrf.mxu0
    %617 = vmatprep.mubr.f32.mxu0 0.0
    %618 = vmatmul.mubr.f32.gmra.mxu0 %v540
    %v619 = vpop.f32.mrf.mxu0
    %v620 = vadd.f32 0.0, %v619
    %v621 = vpop.f32.mrf.mxu0
    %622 = vmatprep.mubr.f32.mxu0 0.0
    %623 = vmatmul.mubr.f32.gmra.mxu0 %v543
    %v624 = vpop.f32.mrf.mxu0
    %v625 = vadd.f32 0.0, %v624
    %v626 = vpop.f32.mrf.mxu0
    %627 = vmatprep.mubr.f32.mxu0 0.0
    %628 = vmatmul.mubr.f32.gmra.mxu0 %v546
    %v629 = vpop.f32.mrf.mxu0
    %v630 = vadd.f32 0.0, %v629
    %v631 = vpop.f32.mrf.mxu0
    %632 = vdwg.mxu0
    %v633 = vld [vmem:[#allocation2] sm:$0xff]
    %v634 = vld [vmem:[#allocation2 + $0x8] sm:$0xff]
    %v635 = vld [vmem:[#allocation2 + $0x10] sm:$0xff]
    %v636 = vld [vmem:[#allocation2 + $0x18] sm:$0xff]
    %v637 = vld [vmem:[#allocation2 + $0x20] sm:$0xff]
    %v638 = vld [vmem:[#allocation2 + $0x28] sm:$0xff]
    %s639 = scalar_lea.vmem [#allocation2], 48
    %v640 = vld [vmem:[%s639] sm:$0xff]
    %v641 = vld [vmem:[%s639 + $0x8] sm:$0xff]
    %v642 = vld [vmem:[%s639 + $0x10] sm:$0xff]
    %v643 = vld [vmem:[%s639 + $0x18] sm:$0xff]
    %v644 = vld [vmem:[%s639 + $0x20] sm:$0xff]
    %v645 = vld [vmem:[%s639 + $0x28] sm:$0xff]
    %vm646 = vcmask 392192
    %v648 = vsel %vm646, %v527, 0
    %v651 = vsel %vm646, %v528, 0
    %v654 = vsel %vm646, %v529, 0
    %v657 = vsel %vm646, %v530, 0
    %659 = vmatprep.subr.mxu0 0.0
    %660 = vmatpush1.msra.mxu0 0.0
    %661 = vmatprep.subr.mxu0 0.0
    %662 = vmatpush1.msra.mxu0 0.0
    %663 = vmatprep.subr.mxu0 0.0
    %664 = vmatpush1.msra.mxu0 0.0
    %665 = vmatprep.subr.mxu0 0.0
    %666 = vmatpush1.msra.mxu0 0.0
    %667 = vmatprep.subr.mxu0 0.0
    %668 = vmatpush1.msra.mxu0 0.0
    %669 = vmatprep.subr.mxu0 0.0
    %670 = vmatpush1.msra.mxu0 0.0
    %671 = vmatprep.subr.mxu0 0.0
    %672 = vmatpush1.msra.mxu0 0.0
    %673 = vmatprep.subr.mxu0 0.0
    %674 = vmatpush1.msra.mxu0 0.0
    %675 = vmatprep.subr.mxu0 0.0
    %676 = vmatpush1.msra.mxu0 0.0
    %677 = vmatprep.subr.mxu0 0.0
    %678 = vmatpush1.msra.mxu0 0.0
    %679 = vmatprep.subr.mxu0 0.0
    %680 = vmatpush1.msra.mxu0 %v645
    %681 = vmatprep.subr.mxu0 0.0
    %682 = vmatpush1.msra.mxu0 %v644
    %683 = vmatprep.subr.mxu0 0.0
    %684 = vmatpush1.msra.mxu0 %v643
    %685 = vmatprep.subr.mxu0 0.0
    %686 = vmatpush1.msra.mxu0 %v642
    %687 = vmatprep.subr.mxu0 0.0
    %688 = vmatpush1.msra.mxu0 %v641
    %689 = vmatprep.subr.mxu0 0.0
    %690 = vmatpush1.msra.mxu0 %v640
    %691 = vmatprep.subr.mxu0 0.0
    %692 = vmatpush2.msra.mxu0 0.0
    %693 = vmatprep.subr.mxu0 0.0
    %694 = vmatpush2.msra.mxu0 0.0
    %695 = vmatprep.subr.mxu0 0.0
    %696 = vmatpush2.msra.mxu0 0.0
    %697 = vmatprep.subr.mxu0 0.0
    %698 = vmatpush2.msra.mxu0 0.0
    %699 = vmatprep.subr.mxu0 0.0
    %700 = vmatpush2.msra.mxu0 0.0
    %701 = vmatprep.subr.mxu0 0.0
    %702 = vmatpush2.msra.mxu0 0.0
    %703 = vmatprep.subr.mxu0 0.0
    %704 = vmatpush2.msra.mxu0 0.0
    %705 = vmatprep.subr.mxu0 0.0
    %706 = vmatpush2.msra.mxu0 0.0
    %707 = vmatprep.subr.mxu0 0.0
    %708 = vmatpush2.msra.mxu0 0.0
    %709 = vmatprep.subr.mxu0 0.0
    %710 = vmatpush2.msra.mxu0 0.0
    %711 = vmatprep.subr.mxu0 0.0
    %712 = vmatpush2.msra.mxu0 0.0
    %713 = vmatprep.subr.mxu0 0.0
    %714 = vmatpush2.msra.mxu0 0.0
    %715 = vmatprep.subr.mxu0 0.0
    %716 = vmatpush2.msra.mxu0 0.0
    %717 = vmatprep.subr.mxu0 0.0
    %718 = vmatpush2.msra.mxu0 0.0
    %719 = vmatprep.subr.mxu0 0.0
    %720 = vmatpush2.msra.mxu0 0.0
    %721 = vmatprep.subr.mxu0 0.0
    %722 = vmatpush2.msra.mxu0 0.0
    %723 = vmatprep.mubr.f32.mxu0 0.0
    %724 = vmatmul.mubr.f32.gmra.mxu0 %v648
    %v725 = vpop.f32.mrf.mxu0
    %v726 = vadd.f32 0.0, %v725
    %v727 = vpop.f32.mrf.mxu0
    %728 = vmatprep.mubr.f32.mxu0 0.0
    %729 = vmatmul.mubr.f32.gmra.mxu0 %v651
    %v730 = vpop.f32.mrf.mxu0
    %v731 = vadd.f32 0.0, %v730
    %v732 = vpop.f32.mrf.mxu0
    %733 = vmatprep.mubr.f32.mxu0 0.0
    %734 = vmatmul.mubr.f32.gmra.mxu0 %v654
    %v735 = vpop.f32.mrf.mxu0
    %v736 = vadd.f32 0.0, %v735
    %v737 = vpop.f32.mrf.mxu0
    %738 = vmatprep.mubr.f32.mxu0 0.0
    %739 = vmatmul.mubr.f32.gmra.mxu0 %v657
    %v740 = vpop.f32.mrf.mxu0
    %v741 = vadd.f32 0.0, %v740
    %v742 = vpop.f32.mrf.mxu0
    %743 = vdwg.mxu0
    %v745 = vsel %vm646, %v615, 0
    %v748 = vsel %vm646, %v620, 0
    %v751 = vsel %vm646, %v625, 0
    %v754 = vsel %vm646, %v630, 0
    %756 = vmatprep.subr.mxu0 0.0
    %757 = vmatpush1.msra.mxu0 0.0
    %758 = vmatprep.subr.mxu0 0.0
    %759 = vmatpush1.msra.mxu0 0.0
    %760 = vmatprep.subr.mxu0 0.0
    %761 = vmatpush1.msra.mxu0 0.0
    %762 = vmatprep.subr.mxu0 0.0
    %763 = vmatpush1.msra.mxu0 0.0
    %764 = vmatprep.subr.mxu0 0.0
    %765 = vmatpush1.msra.mxu0 0.0
    %766 = vmatprep.subr.mxu0 0.0
    %767 = vmatpush1.msra.mxu0 0.0
    %768 = vmatprep.subr.mxu0 0.0
    %769 = vmatpush1.msra.mxu0 0.0
    %770 = vmatprep.subr.mxu0 0.0
    %771 = vmatpush1.msra.mxu0 0.0
    %772 = vmatprep.subr.mxu0 0.0
    %773 = vmatpush1.msra.mxu0 0.0
    %774 = vmatprep.subr.mxu0 0.0
    %775 = vmatpush1.msra.mxu0 0.0
    %776 = vmatprep.subr.mxu0 0.0
    %777 = vmatpush1.msra.mxu0 %v638
    %778 = vmatprep.subr.mxu0 0.0
    %779 = vmatpush1.msra.mxu0 %v637
    %780 = vmatprep.subr.mxu0 0.0
    %781 = vmatpush1.msra.mxu0 %v636
    %782 = vmatprep.subr.mxu0 0.0
    %783 = vmatpush1.msra.mxu0 %v635
    %784 = vmatprep.subr.mxu0 0.0
    %785 = vmatpush1.msra.mxu0 %v634
    %786 = vmatprep.subr.mxu0 0.0
    %787 = vmatpush1.msra.mxu0 %v633
    %788 = vmatprep.subr.mxu0 0.0
    %789 = vmatpush2.msra.mxu0 0.0
    %790 = vmatprep.subr.mxu0 0.0
    %791 = vmatpush2.msra.mxu0 0.0
    %792 = vmatprep.subr.mxu0 0.0
    %793 = vmatpush2.msra.mxu0 0.0
    %794 = vmatprep.subr.mxu0 0.0
    %795 = vmatpush2.msra.mxu0 0.0
    %796 = vmatprep.subr.mxu0 0.0
    %797 = vmatpush2.msra.mxu0 0.0
    %798 = vmatprep.subr.mxu0 0.0
    %799 = vmatpush2.msra.mxu0 0.0
    %800 = vmatprep.subr.mxu0 0.0
    %801 = vmatpush2.msra.mxu0 0.0
    %802 = vmatprep.subr.mxu0 0.0
    %803 = vmatpush2.msra.mxu0 0.0
    %804 = vmatprep.subr.mxu0 0.0
    %805 = vmatpush2.msra.mxu0 0.0
    %806 = vmatprep.subr.mxu0 0.0
    %807 = vmatpush2.msra.mxu0 0.0
    %808 = vmatprep.subr.mxu0 0.0
    %809 = vmatpush2.msra.mxu0 0.0
    %810 = vmatprep.subr.mxu0 0.0
    %811 = vmatpush2.msra.mxu0 0.0
    %812 = vmatprep.subr.mxu0 0.0
    %813 = vmatpush2.msra.mxu0 0.0
    %814 = vmatprep.subr.mxu0 0.0
    %815 = vmatpush2.msra.mxu0 0.0
    %816 = vmatprep.subr.mxu0 0.0
    %817 = vmatpush2.msra.mxu0 0.0
    %818 = vmatprep.subr.mxu0 0.0
    %819 = vmatpush2.msra.mxu0 0.0
    %820 = vmatprep.mubr.f32.mxu0 0.0
    %821 = vmatmul.mubr.f32.gmra.mxu0 %v745
    %v822 = vpop.f32.mrf.mxu0
    %v823 = vadd.f32 %v726, %v822
    %v824 = vpop.f32.mrf.mxu0
    %825 = vmatprep.mubr.f32.mxu0 0.0
    %826 = vmatmul.mubr.f32.gmra.mxu0 %v748
    %v827 = vpop.f32.mrf.mxu0
    %v828 = vadd.f32 %v731, %v827
    %v829 = vpop.f32.mrf.mxu0
    %830 = vmatprep.mubr.f32.mxu0 0.0
    %831 = vmatmul.mubr.f32.gmra.mxu0 %v751
    %v832 = vpop.f32.mrf.mxu0
    %v833 = vadd.f32 %v736, %v832
    %v834 = vpop.f32.mrf.mxu0
    %835 = vmatprep.mubr.f32.mxu0 0.0
    %836 = vmatmul.mubr.f32.gmra.mxu0 %v754
    %v837 = vpop.f32.mrf.mxu0
    %v838 = vadd.f32 %v741, %v837
    %v839 = vpop.f32.mrf.mxu0
    %840 = vdwg.mxu0
    %s841 = scalar_lea.vmem [#allocation4], 64
    %v842 = vld [vmem:[%s841] sm:$0xff]
    %v843 = vld [vmem:[%s841 + $0x8] sm:$0xff]
    %v844 = vld [vmem:[%s841 + $0x10] sm:$0xff]
    %v845 = vld [vmem:[%s841 + $0x18] sm:$0xff]
    %v847 = vsel %vm535, %v842, 0
    %v850 = vsel %vm535, %v843, 0
    %v853 = vsel %vm535, %v844, 0
    %v856 = vsel %vm535, %v845, 0
    %858 = vmatprep.subr.mxu0 0.0
    %859 = vmatpush1.msra.mxu0 0.0
    %860 = vmatprep.subr.mxu0 0.0
    %861 = vmatpush1.msra.mxu0 0.0
    %862 = vmatprep.subr.mxu0 0.0
    %863 = vmatpush1.msra.mxu0 0.0
    %864 = vmatprep.subr.mxu0 0.0
    %865 = vmatpush1.msra.mxu0 0.0
    %866 = vmatprep.subr.mxu0 0.0
    %867 = vmatpush1.msra.mxu0 0.0
    %868 = vmatprep.subr.mxu0 0.0
    %869 = vmatpush1.msra.mxu0 0.0
    %870 = vmatprep.subr.mxu0 0.0
    %871 = vmatpush1.msra.mxu0 0.0
    %872 = vmatprep.subr.mxu0 0.0
    %873 = vmatpush1.msra.mxu0 0.0
    %874 = vmatprep.subr.mxu0 0.0
    %875 = vmatpush1.msra.mxu0 0.0
    %876 = vmatprep.subr.mxu0 0.0
    %877 = vmatpush1.msra.mxu0 0.0
    %878 = vmatprep.subr.mxu0 0.0
    %879 = vmatpush1.msra.mxu0 0.0
    %880 = vmatprep.subr.mxu0 0.0
    %881 = vmatpush1.msra.mxu0 0.0
    %882 = vmatprep.subr.mxu0 0.0
    %883 = vmatpush1.msra.mxu0 %v530
    %884 = vmatprep.subr.mxu0 0.0
    %885 = vmatpush1.msra.mxu0 %v529
    %886 = vmatprep.subr.mxu0 0.0
    %887 = vmatpush1.msra.mxu0 %v528
    %888 = vmatprep.subr.mxu0 0.0
    %889 = vmatpush1.msra.mxu0 %v527
    %890 = vmatprep.subr.mxu0 0.0
    %891 = vmatpush2.msra.mxu0 0.0
    %892 = vmatprep.subr.mxu0 0.0
    %893 = vmatpush2.msra.mxu0 0.0
    %894 = vmatprep.subr.mxu0 0.0
    %895 = vmatpush2.msra.mxu0 0.0
    %896 = vmatprep.subr.mxu0 0.0
    %897 = vmatpush2.msra.mxu0 0.0
    %898 = vmatprep.subr.mxu0 0.0
    %899 = vmatpush2.msra.mxu0 0.0
    %900 = vmatprep.subr.mxu0 0.0
    %901 = vmatpush2.msra.mxu0 0.0
    %902 = vmatprep.subr.mxu0 0.0
    %903 = vmatpush2.msra.mxu0 0.0
    %904 = vmatprep.subr.mxu0 0.0
    %905 = vmatpush2.msra.mxu0 0.0
    %906 = vmatprep.subr.mxu0 0.0
    %907 = vmatpush2.msra.mxu0 0.0
    %908 = vmatprep.subr.mxu0 0.0
    %909 = vmatpush2.msra.mxu0 0.0
    %910 = vmatprep.subr.mxu0 0.0
    %911 = vmatpush2.msra.mxu0 0.0
    %912 = vmatprep.subr.mxu0 0.0
    %913 = vmatpush2.msra.mxu0 0.0
    %914 = vmatprep.subr.mxu0 0.0
    %915 = vmatpush2.msra.mxu0 0.0
    %916 = vmatprep.subr.mxu0 0.0
    %917 = vmatpush2.msra.mxu0 0.0
    %918 = vmatprep.subr.mxu0 0.0
    %919 = vmatpush2.msra.mxu0 0.0
    %920 = vmatprep.subr.mxu0 0.0
    %921 = vmatpush2.msra.mxu0 0.0
    %922 = vmatprep.mubr.f32.mxu0 0.0
    %923 = vmatmul.mubr.f32.gmra.mxu0 %v847
    %v924 = vpop.f32.mrf.mxu0
    %v925 = vadd.f32 0.0, %v924
    %v926 = vpop.f32.mrf.mxu0
    %927 = vmatprep.mubr.f32.mxu0 0.0
    %928 = vmatmul.mubr.f32.gmra.mxu0 %v850
    %v929 = vpop.f32.mrf.mxu0
    %v930 = vadd.f32 0.0, %v929
    %v931 = vpop.f32.mrf.mxu0
    %932 = vmatprep.mubr.f32.mxu0 0.0
    %933 = vmatmul.mubr.f32.gmra.mxu0 %v853
    %v934 = vpop.f32.mrf.mxu0
    %v935 = vadd.f32 0.0, %v934
    %v936 = vpop.f32.mrf.mxu0
    %937 = vmatprep.mubr.f32.mxu0 0.0
    %938 = vmatmul.mubr.f32.gmra.mxu0 %v856
    %v939 = vpop.f32.mrf.mxu0
    %v940 = vadd.f32 0.0, %v939
    %v941 = vpop.f32.mrf.mxu0
    %942 = vdwg.mxu0
    %s943 = scalar_lea.vmem [#allocation2], 96
    %v944 = vld [vmem:[%s943] sm:$0xff]
    %v945 = vld [vmem:[%s943 + $0x8] sm:$0xff]
    %v946 = vld [vmem:[%s943 + $0x10] sm:$0xff]
    %v947 = vld [vmem:[%s943 + $0x18] sm:$0xff]
    %v948 = vld [vmem:[%s943 + $0x20] sm:$0xff]
    %v949 = vld [vmem:[%s943 + $0x28] sm:$0xff]
    %v951 = vsel %vm646, %v925, 0
    %v954 = vsel %vm646, %v930, 0
    %v957 = vsel %vm646, %v935, 0
    %v960 = vsel %vm646, %v940, 0
    %962 = vmatprep.subr.mxu0 0.0
    %963 = vmatpush1.msra.mxu0 0.0
    %964 = vmatprep.subr.mxu0 0.0
    %965 = vmatpush1.msra.mxu0 0.0
    %966 = vmatprep.subr.mxu0 0.0
    %967 = vmatpush1.msra.mxu0 0.0
    %968 = vmatprep.subr.mxu0 0.0
    %969 = vmatpush1.msra.mxu0 0.0
    %970 = vmatprep.subr.mxu0 0.0
    %971 = vmatpush1.msra.mxu0 0.0
    %972 = vmatprep.subr.mxu0 0.0
    %973 = vmatpush1.msra.mxu0 0.0
    %974 = vmatprep.subr.mxu0 0.0
    %975 = vmatpush1.msra.mxu0 0.0
    %976 = vmatprep.subr.mxu0 0.0
    %977 = vmatpush1.msra.mxu0 0.0
    %978 = vmatprep.subr.mxu0 0.0
    %979 = vmatpush1.msra.mxu0 0.0
    %980 = vmatprep.subr.mxu0 0.0
    %981 = vmatpush1.msra.mxu0 0.0
    %982 = vmatprep.subr.mxu0 0.0
    %983 = vmatpush1.msra.mxu0 %v949
    %984 = vmatprep.subr.mxu0 0.0
    %985 = vmatpush1.msra.mxu0 %v948
    %986 = vmatprep.subr.mxu0 0.0
    %987 = vmatpush1.msra.mxu0 %v947
    %988 = vmatprep.subr.mxu0 0.0
    %989 = vmatpush1.msra.mxu0 %v946
    %990 = vmatprep.subr.mxu0 0.0
    %991 = vmatpush1.msra.mxu0 %v945
    %992 = vmatprep.subr.mxu0 0.0
    %993 = vmatpush1.msra.mxu0 %v944
    %994 = vmatprep.subr.mxu0 0.0
    %995 = vmatpush2.msra.mxu0 0.0
    %996 = vmatprep.subr.mxu0 0.0
    %997 = vmatpush2.msra.mxu0 0.0
    %998 = vmatprep.subr.mxu0 0.0
    %999 = vmatpush2.msra.mxu0 0.0
    %1000 = vmatprep.subr.mxu0 0.0
    %1001 = vmatpush2.msra.mxu0 0.0
    %1002 = vmatprep.subr.mxu0 0.0
    %1003 = vmatpush2.msra.mxu0 0.0
    %1004 = vmatprep.subr.mxu0 0.0
    %1005 = vmatpush2.msra.mxu0 0.0
    %1006 = vmatprep.subr.mxu0 0.0
    %1007 = vmatpush2.msra.mxu0 0.0
    %1008 = vmatprep.subr.mxu0 0.0
    %1009 = vmatpush2.msra.mxu0 0.0
    %1010 = vmatprep.subr.mxu0 0.0
    %1011 = vmatpush2.msra.mxu0 0.0
    %1012 = vmatprep.subr.mxu0 0.0
    %1013 = vmatpush2.msra.mxu0 0.0
    %1014 = vmatprep.subr.mxu0 0.0
    %1015 = vmatpush2.msra.mxu0 0.0
    %1016 = vmatprep.subr.mxu0 0.0
    %1017 = vmatpush2.msra.mxu0 0.0
    %1018 = vmatprep.subr.mxu0 0.0
    %1019 = vmatpush2.msra.mxu0 0.0
    %1020 = vmatprep.subr.mxu0 0.0
    %1021 = vmatpush2.msra.mxu0 0.0
    %1022 = vmatprep.subr.mxu0 0.0
    %1023 = vmatpush2.msra.mxu0 0.0
    %1024 = vmatprep.subr.mxu0 0.0
    %1025 = vmatpush2.msra.mxu0 0.0
    %1026 = vmatprep.mubr.f32.mxu0 0.0
    %1027 = vmatmul.mubr.f32.gmra.mxu0 %v951
    %v1028 = vpop.f32.mrf.mxu0
    %v1029 = vadd.f32 0.0, %v1028
    %v1030 = vpop.f32.mrf.mxu0
    %1031 = vmatprep.mubr.f32.mxu0 0.0
    %1032 = vmatmul.mubr.f32.gmra.mxu0 %v954
    %v1033 = vpop.f32.mrf.mxu0
    %v1034 = vadd.f32 0.0, %v1033
    %v1035 = vpop.f32.mrf.mxu0
    %1036 = vmatprep.mubr.f32.mxu0 0.0
    %1037 = vmatmul.mubr.f32.gmra.mxu0 %v957
    %v1038 = vpop.f32.mrf.mxu0
    %v1039 = vadd.f32 0.0, %v1038
    %v1040 = vpop.f32.mrf.mxu0
    %1041 = vmatprep.mubr.f32.mxu0 0.0
    %1042 = vmatmul.mubr.f32.gmra.mxu0 %v960
    %v1043 = vpop.f32.mrf.mxu0
    %v1044 = vadd.f32 0.0, %v1043
    %v1045 = vpop.f32.mrf.mxu0
    %1046 = vdwg.mxu0
    %v1047 = vadd.f32 %v823, %v1029
    %v1048 = vadd.f32 %v828, %v1034
    %v1049 = vadd.f32 %v833, %v1039
    %v1050 = vadd.f32 %v838, %v1044
    %v1051 = vld [vmem:[%s7] sm:$0x1]
    %v1053 = vlaneseq
    %v1054 = vshrl.u32 %v1053, 7
    %v1055 = vsub.s32 0, %v1054
    %v1056 = vrot.slane %v1051, %v1055
    %v1058 = vadd.f32 %v1047, %v1056
    %v1059 = vadd.f32 %v1048, %v1056
    %v1060 = vadd.f32 %v1049, %v1056
    %v1061 = vadd.f32 %v1050, %v1056
    %v1062 = vmax.f32 %v1058, 0.0
    %v1063 = vmax.f32 %v1059, 0.0
    %v1064 = vmax.f32 %v1060, 0.0
    %v1065 = vmax.f32 %v1061, 0.0
    %1066 = vmatprep.subr.mxu0 0.0
    %1067 = vmatpush1.msra.mxu0 0.0
    %1068 = vmatprep.subr.mxu0 0.0
    %1069 = vmatpush1.msra.mxu0 0.0
    %1070 = vmatprep.subr.mxu0 0.0
    %1071 = vmatpush1.msra.mxu0 0.0
    %1072 = vmatprep.subr.mxu0 0.0
    %1073 = vmatpush1.msra.mxu0 0.0
    %1074 = vmatprep.subr.mxu0 0.0
    %1075 = vmatpush1.msra.mxu0 0.0
    %1076 = vmatprep.subr.mxu0 0.0
    %1077 = vmatpush1.msra.mxu0 0.0
    %1078 = vmatprep.subr.mxu0 0.0
    %1079 = vmatpush1.msra.mxu0 0.0
    %1080 = vmatprep.subr.mxu0 0.0
    %1081 = vmatpush1.msra.mxu0 0.0
    %1082 = vmatprep.subr.mxu0 0.0
    %1083 = vmatpush1.msra.mxu0 0.0
    %1084 = vmatprep.subr.mxu0 0.0
    %1085 = vmatpush1.msra.mxu0 0.0
    %1086 = vmatprep.subr.mxu0 0.0
    %1087 = vmatpush1.msra.mxu0 0.0
    %1088 = vmatprep.subr.mxu0 0.0
    %1089 = vmatpush1.msra.mxu0 0.0
    %1090 = vmatprep.subr.mxu0 0.0
    %1091 = vmatpush1.msra.mxu0 %v1065
    %1092 = vmatprep.subr.mxu0 0.0
    %1093 = vmatpush1.msra.mxu0 %v1064
    %1094 = vmatprep.subr.mxu0 0.0
    %1095 = vmatpush1.msra.mxu0 %v1063
    %1096 = vmatprep.subr.mxu0 0.0
    %1097 = vmatpush1.msra.mxu0 %v1062
    %1098 = vmatprep.subr.mxu0 0.0
    %1099 = vmatpush2.msra.mxu0 0.0
    %1100 = vmatprep.subr.mxu0 0.0
    %1101 = vmatpush2.msra.mxu0 0.0
    %1102 = vmatprep.subr.mxu0 0.0
    %1103 = vmatpush2.msra.mxu0 0.0
    %1104 = vmatprep.subr.mxu0 0.0
    %1105 = vmatpush2.msra.mxu0 0.0
    %1106 = vmatprep.subr.mxu0 0.0
    %1107 = vmatpush2.msra.mxu0 0.0
    %1108 = vmatprep.subr.mxu0 0.0
    %1109 = vmatpush2.msra.mxu0 0.0
    %1110 = vmatprep.subr.mxu0 0.0
    %1111 = vmatpush2.msra.mxu0 0.0
    %1112 = vmatprep.subr.mxu0 0.0
    %1113 = vmatpush2.msra.mxu0 0.0
    %1114 = vmatprep.subr.mxu0 0.0
    %1115 = vmatpush2.msra.mxu0 0.0
    %1116 = vmatprep.subr.mxu0 0.0
    %1117 = vmatpush2.msra.mxu0 0.0
    %1118 = vmatprep.subr.mxu0 0.0
    %1119 = vmatpush2.msra.mxu0 0.0
    %1120 = vmatprep.subr.mxu0 0.0
    %1121 = vmatpush2.msra.mxu0 0.0
    %1122 = vmatprep.subr.mxu0 0.0
    %1123 = vmatpush2.msra.mxu0 0.0
    %1124 = vmatprep.subr.mxu0 0.0
    %1125 = vmatpush2.msra.mxu0 0.0
    %1126 = vmatprep.subr.mxu0 0.0
    %1127 = vmatpush2.msra.mxu0 0.0
    %1128 = vmatprep.subr.mxu0 0.0
    %1129 = vmatpush2.msra.mxu0 0.0
    %1130 = vmatprep.mubr.f32.mxu0 0.0
    %1131 = vmatmul.mubr.f32.gmra.mxu0 %v537
    %v1132 = vpop.f32.mrf.mxu0
    %v1133 = vadd.f32 0.0, %v1132
    %v1134 = vpop.f32.mrf.mxu0
    %1135 = vmatprep.mubr.f32.mxu0 0.0
    %1136 = vmatmul.mubr.f32.gmra.mxu0 %v540
    %v1137 = vpop.f32.mrf.mxu0
    %v1138 = vadd.f32 0.0, %v1137
    %v1139 = vpop.f32.mrf.mxu0
    %1140 = vmatprep.mubr.f32.mxu0 0.0
    %1141 = vmatmul.mubr.f32.gmra.mxu0 %v543
    %v1142 = vpop.f32.mrf.mxu0
    %v1143 = vadd.f32 0.0, %v1142
    %v1144 = vpop.f32.mrf.mxu0
    %1145 = vmatprep.mubr.f32.mxu0 0.0
    %1146 = vmatmul.mubr.f32.gmra.mxu0 %v546
    %v1147 = vpop.f32.mrf.mxu0
    %v1148 = vadd.f32 0.0, %v1147
    %v1149 = vpop.f32.mrf.mxu0
    %1150 = vdwg.mxu0
    %v1151 = vld [vmem:[#allocation6] sm:$0xff]
    %v1152 = vld [vmem:[#allocation6 + $0x8] sm:$0xff]
    %v1153 = vld [vmem:[#allocation6 + $0x10] sm:$0xff]
    %v1154 = vld [vmem:[#allocation6 + $0x18] sm:$0xff]
    %v1155 = vld [vmem:[#allocation6 + $0x20] sm:$0xff]
    %v1156 = vld [vmem:[#allocation6 + $0x28] sm:$0xff]
    %v1157 = vld [vmem:[#allocation6 + $0x30] sm:$0xff]
    %v1158 = vld [vmem:[#allocation6 + $0x38] sm:$0xff]
    %v1159 = vld [vmem:[#allocation6 + $0x40] sm:$0xff]
    %v1160 = vld [vmem:[#allocation6 + $0x48] sm:$0xff]
    %v1161 = vld [vmem:[#allocation6 + $0x50] sm:$0xff]
    %v1162 = vld [vmem:[#allocation6 + $0x58] sm:$0xff]
    %v1163 = vld [vmem:[#allocation6 + $0x60] sm:$0xff]
    %v1164 = vld [vmem:[#allocation6 + $0x68] sm:$0xff]
    %v1165 = vld [vmem:[#allocation6 + $0x70] sm:$0xff]
    %v1166 = vld [vmem:[#allocation6 + $0x78] sm:$0xff]
    %s1167 = scalar_lea.vmem [#allocation6], 128
    %v1168 = vld [vmem:[%s1167] sm:$0xff]
    %v1169 = vld [vmem:[%s1167 + $0x8] sm:$0xff]
    %v1170 = vld [vmem:[%s1167 + $0x10] sm:$0xff]
    %v1171 = vld [vmem:[%s1167 + $0x18] sm:$0xff]
    %v1172 = vld [vmem:[%s1167 + $0x20] sm:$0xff]
    %v1173 = vld [vmem:[%s1167 + $0x28] sm:$0xff]
    %v1174 = vld [vmem:[%s1167 + $0x30] sm:$0xff]
    %v1175 = vld [vmem:[%s1167 + $0x38] sm:$0xff]
    %v1176 = vld [vmem:[%s1167 + $0x40] sm:$0xff]
    %v1177 = vld [vmem:[%s1167 + $0x48] sm:$0xff]
    %v1178 = vld [vmem:[%s1167 + $0x50] sm:$0xff]
    %v1179 = vld [vmem:[%s1167 + $0x58] sm:$0xff]
    %v1180 = vld [vmem:[%s1167 + $0x60] sm:$0xff]
    %v1181 = vld [vmem:[%s1167 + $0x68] sm:$0xff]
    %v1182 = vld [vmem:[%s1167 + $0x70] sm:$0xff]
    %v1183 = vld [vmem:[%s1167 + $0x78] sm:$0xff]
    %1184 = vmatprep.subr.mxu0 0.0
    %1185 = vmatpush1.msra.mxu0 %v1183
    %1186 = vmatprep.subr.mxu0 0.0
    %1187 = vmatpush1.msra.mxu0 %v1182
    %1188 = vmatprep.subr.mxu0 0.0
    %1189 = vmatpush1.msra.mxu0 %v1181
    %1190 = vmatprep.subr.mxu0 0.0
    %1191 = vmatpush1.msra.mxu0 %v1180
    %1192 = vmatprep.subr.mxu0 0.0
    %1193 = vmatpush1.msra.mxu0 %v1179
    %1194 = vmatprep.subr.mxu0 0.0
    %1195 = vmatpush1.msra.mxu0 %v1178
    %1196 = vmatprep.subr.mxu0 0.0
    %1197 = vmatpush1.msra.mxu0 %v1177
    %1198 = vmatprep.subr.mxu0 0.0
    %1199 = vmatpush1.msra.mxu0 %v1176
    %1200 = vmatprep.subr.mxu0 0.0
    %1201 = vmatpush1.msra.mxu0 %v1175
    %1202 = vmatprep.subr.mxu0 0.0
    %1203 = vmatpush1.msra.mxu0 %v1174
    %1204 = vmatprep.subr.mxu0 0.0
    %1205 = vmatpush1.msra.mxu0 %v1173
    %1206 = vmatprep.subr.mxu0 0.0
    %1207 = vmatpush1.msra.mxu0 %v1172
    %1208 = vmatprep.subr.mxu0 0.0
    %1209 = vmatpush1.msra.mxu0 %v1171
    %1210 = vmatprep.subr.mxu0 0.0
    %1211 = vmatpush1.msra.mxu0 %v1170
    %1212 = vmatprep.subr.mxu0 0.0
    %1213 = vmatpush1.msra.mxu0 %v1169
    %1214 = vmatprep.subr.mxu0 0.0
    %1215 = vmatpush1.msra.mxu0 %v1168
    %1216 = vmatprep.subr.mxu0 0.0
    %1217 = vmatpush2.msra.mxu0 0.0
    %1218 = vmatprep.subr.mxu0 0.0
    %1219 = vmatpush2.msra.mxu0 0.0
    %1220 = vmatprep.subr.mxu0 0.0
    %1221 = vmatpush2.msra.mxu0 0.0
    %1222 = vmatprep.subr.mxu0 0.0
    %1223 = vmatpush2.msra.mxu0 0.0
    %1224 = vmatprep.subr.mxu0 0.0
    %1225 = vmatpush2.msra.mxu0 0.0
    %1226 = vmatprep.subr.mxu0 0.0
    %1227 = vmatpush2.msra.mxu0 0.0
    %1228 = vmatprep.subr.mxu0 0.0
    %1229 = vmatpush2.msra.mxu0 0.0
    %1230 = vmatprep.subr.mxu0 0.0
    %1231 = vmatpush2.msra.mxu0 0.0
    %1232 = vmatprep.subr.mxu0 0.0
    %1233 = vmatpush2.msra.mxu0 0.0
    %1234 = vmatprep.subr.mxu0 0.0
    %1235 = vmatpush2.msra.mxu0 0.0
    %1236 = vmatprep.subr.mxu0 0.0
    %1237 = vmatpush2.msra.mxu0 0.0
    %1238 = vmatprep.subr.mxu0 0.0
    %1239 = vmatpush2.msra.mxu0 0.0
    %1240 = vmatprep.subr.mxu0 0.0
    %1241 = vmatpush2.msra.mxu0 0.0
    %1242 = vmatprep.subr.mxu0 0.0
    %1243 = vmatpush2.msra.mxu0 0.0
    %1244 = vmatprep.subr.mxu0 0.0
    %1245 = vmatpush2.msra.mxu0 0.0
    %1246 = vmatprep.subr.mxu0 0.0
    %1247 = vmatpush2.msra.mxu0 0.0
    %1248 = vmatprep.mubr.f32.mxu0 0.0
    %1249 = vmatmul.mubr.f32.gmra.mxu0 %v1062
    %v1250 = vpop.f32.mrf.mxu0
    %v1251 = vadd.f32 0.0, %v1250
    %v1252 = vpop.f32.mrf.mxu0
    %1253 = vmatprep.mubr.f32.mxu0 0.0
    %1254 = vmatmul.mubr.f32.gmra.mxu0 %v1063
    %v1255 = vpop.f32.mrf.mxu0
    %v1256 = vadd.f32 0.0, %v1255
    %v1257 = vpop.f32.mrf.mxu0
    %1258 = vmatprep.mubr.f32.mxu0 0.0
    %1259 = vmatmul.mubr.f32.gmra.mxu0 %v1064
    %v1260 = vpop.f32.mrf.mxu0
    %v1261 = vadd.f32 0.0, %v1260
    %v1262 = vpop.f32.mrf.mxu0
    %1263 = vmatprep.mubr.f32.mxu0 0.0
    %1264 = vmatmul.mubr.f32.gmra.mxu0 %v1065
    %v1265 = vpop.f32.mrf.mxu0
    %v1266 = vadd.f32 0.0, %v1265
    %v1267 = vpop.f32.mrf.mxu0
    %1268 = vdwg.mxu0
    %1269 = vmatprep.subr.mxu0 0.0
    %1270 = vmatpush1.msra.mxu0 %v1166
    %1271 = vmatprep.subr.mxu0 0.0
    %1272 = vmatpush1.msra.mxu0 %v1165
    %1273 = vmatprep.subr.mxu0 0.0
    %1274 = vmatpush1.msra.mxu0 %v1164
    %1275 = vmatprep.subr.mxu0 0.0
    %1276 = vmatpush1.msra.mxu0 %v1163
    %1277 = vmatprep.subr.mxu0 0.0
    %1278 = vmatpush1.msra.mxu0 %v1162
    %1279 = vmatprep.subr.mxu0 0.0
    %1280 = vmatpush1.msra.mxu0 %v1161
    %1281 = vmatprep.subr.mxu0 0.0
    %1282 = vmatpush1.msra.mxu0 %v1160
    %1283 = vmatprep.subr.mxu0 0.0
    %1284 = vmatpush1.msra.mxu0 %v1159
    %1285 = vmatprep.subr.mxu0 0.0
    %1286 = vmatpush1.msra.mxu0 %v1158
    %1287 = vmatprep.subr.mxu0 0.0
    %1288 = vmatpush1.msra.mxu0 %v1157
    %1289 = vmatprep.subr.mxu0 0.0
    %1290 = vmatpush1.msra.mxu0 %v1156
    %1291 = vmatprep.subr.mxu0 0.0
    %1292 = vmatpush1.msra.mxu0 %v1155
    %1293 = vmatprep.subr.mxu0 0.0
    %1294 = vmatpush1.msra.mxu0 %v1154
    %1295 = vmatprep.subr.mxu0 0.0
    %1296 = vmatpush1.msra.mxu0 %v1153
    %1297 = vmatprep.subr.mxu0 0.0
    %1298 = vmatpush1.msra.mxu0 %v1152
    %1299 = vmatprep.subr.mxu0 0.0
    %1300 = vmatpush1.msra.mxu0 %v1151
    %1301 = vmatprep.subr.mxu0 0.0
    %1302 = vmatpush2.msra.mxu0 0.0
    %1303 = vmatprep.subr.mxu0 0.0
    %1304 = vmatpush2.msra.mxu0 0.0
    %1305 = vmatprep.subr.mxu0 0.0
    %1306 = vmatpush2.msra.mxu0 0.0
    %1307 = vmatprep.subr.mxu0 0.0
    %1308 = vmatpush2.msra.mxu0 0.0
    %1309 = vmatprep.subr.mxu0 0.0
    %1310 = vmatpush2.msra.mxu0 0.0
    %1311 = vmatprep.subr.mxu0 0.0
    %1312 = vmatpush2.msra.mxu0 0.0
    %1313 = vmatprep.subr.mxu0 0.0
    %1314 = vmatpush2.msra.mxu0 0.0
    %1315 = vmatprep.subr.mxu0 0.0
    %1316 = vmatpush2.msra.mxu0 0.0
    %1317 = vmatprep.subr.mxu0 0.0
    %1318 = vmatpush2.msra.mxu0 0.0
    %1319 = vmatprep.subr.mxu0 0.0
    %1320 = vmatpush2.msra.mxu0 0.0
    %1321 = vmatprep.subr.mxu0 0.0
    %1322 = vmatpush2.msra.mxu0 0.0
    %1323 = vmatprep.subr.mxu0 0.0
    %1324 = vmatpush2.msra.mxu0 0.0
    %1325 = vmatprep.subr.mxu0 0.0
    %1326 = vmatpush2.msra.mxu0 0.0
    %1327 = vmatprep.subr.mxu0 0.0
    %1328 = vmatpush2.msra.mxu0 0.0
    %1329 = vmatprep.subr.mxu0 0.0
    %1330 = vmatpush2.msra.mxu0 0.0
    %1331 = vmatprep.subr.mxu0 0.0
    %1332 = vmatpush2.msra.mxu0 0.0
    %1333 = vmatprep.mubr.f32.mxu0 0.0
    %1334 = vmatmul.mubr.f32.gmra.mxu0 %v1133
    %v1335 = vpop.f32.mrf.mxu0
    %v1336 = vadd.f32 %v1251, %v1335
    %v1337 = vpop.f32.mrf.mxu0
    %1338 = vmatprep.mubr.f32.mxu0 0.0
    %1339 = vmatmul.mubr.f32.gmra.mxu0 %v1138
    %v1340 = vpop.f32.mrf.mxu0
    %v1341 = vadd.f32 %v1256, %v1340
    %v1342 = vpop.f32.mrf.mxu0
    %1343 = vmatprep.mubr.f32.mxu0 0.0
    %1344 = vmatmul.mubr.f32.gmra.mxu0 %v1143
    %v1345 = vpop.f32.mrf.mxu0
    %v1346 = vadd.f32 %v1261, %v1345
    %v1347 = vpop.f32.mrf.mxu0
    %1348 = vmatprep.mubr.f32.mxu0 0.0
    %1349 = vmatmul.mubr.f32.gmra.mxu0 %v1148
    %v1350 = vpop.f32.mrf.mxu0
    %v1351 = vadd.f32 %v1266, %v1350
    %v1352 = vpop.f32.mrf.mxu0
    %1353 = vdwg.mxu0
    %1354 = vmatprep.subr.mxu0 0.0
    %1355 = vmatpush1.msra.mxu0 0.0
    %1356 = vmatprep.subr.mxu0 0.0
    %1357 = vmatpush1.msra.mxu0 0.0
    %1358 = vmatprep.subr.mxu0 0.0
    %1359 = vmatpush1.msra.mxu0 0.0
    %1360 = vmatprep.subr.mxu0 0.0
    %1361 = vmatpush1.msra.mxu0 0.0
    %1362 = vmatprep.subr.mxu0 0.0
    %1363 = vmatpush1.msra.mxu0 0.0
    %1364 = vmatprep.subr.mxu0 0.0
    %1365 = vmatpush1.msra.mxu0 0.0
    %1366 = vmatprep.subr.mxu0 0.0
    %1367 = vmatpush1.msra.mxu0 0.0
    %1368 = vmatprep.subr.mxu0 0.0
    %1369 = vmatpush1.msra.mxu0 0.0
    %1370 = vmatprep.subr.mxu0 0.0
    %1371 = vmatpush1.msra.mxu0 0.0
    %1372 = vmatprep.subr.mxu0 0.0
    %1373 = vmatpush1.msra.mxu0 0.0
    %1374 = vmatprep.subr.mxu0 0.0
    %1375 = vmatpush1.msra.mxu0 0.0
    %1376 = vmatprep.subr.mxu0 0.0
    %1377 = vmatpush1.msra.mxu0 0.0
    %1378 = vmatprep.subr.mxu0 0.0
    %1379 = vmatpush1.msra.mxu0 %v1065
    %1380 = vmatprep.subr.mxu0 0.0
    %1381 = vmatpush1.msra.mxu0 %v1064
    %1382 = vmatprep.subr.mxu0 0.0
    %1383 = vmatpush1.msra.mxu0 %v1063
    %1384 = vmatprep.subr.mxu0 0.0
    %1385 = vmatpush1.msra.mxu0 %v1062
    %1386 = vmatprep.subr.mxu0 0.0
    %1387 = vmatpush2.msra.mxu0 0.0
    %1388 = vmatprep.subr.mxu0 0.0
    %1389 = vmatpush2.msra.mxu0 0.0
    %1390 = vmatprep.subr.mxu0 0.0
    %1391 = vmatpush2.msra.mxu0 0.0
    %1392 = vmatprep.subr.mxu0 0.0
    %1393 = vmatpush2.msra.mxu0 0.0
    %1394 = vmatprep.subr.mxu0 0.0
    %1395 = vmatpush2.msra.mxu0 0.0
    %1396 = vmatprep.subr.mxu0 0.0
    %1397 = vmatpush2.msra.mxu0 0.0
    %1398 = vmatprep.subr.mxu0 0.0
    %1399 = vmatpush2.msra.mxu0 0.0
    %1400 = vmatprep.subr.mxu0 0.0
    %1401 = vmatpush2.msra.mxu0 0.0
    %1402 = vmatprep.subr.mxu0 0.0
    %1403 = vmatpush2.msra.mxu0 0.0
    %1404 = vmatprep.subr.mxu0 0.0
    %1405 = vmatpush2.msra.mxu0 0.0
    %1406 = vmatprep.subr.mxu0 0.0
    %1407 = vmatpush2.msra.mxu0 0.0
    %1408 = vmatprep.subr.mxu0 0.0
    %1409 = vmatpush2.msra.mxu0 0.0
    %1410 = vmatprep.subr.mxu0 0.0
    %1411 = vmatpush2.msra.mxu0 0.0
    %1412 = vmatprep.subr.mxu0 0.0
    %1413 = vmatpush2.msra.mxu0 0.0
    %1414 = vmatprep.subr.mxu0 0.0
    %1415 = vmatpush2.msra.mxu0 0.0
    %1416 = vmatprep.subr.mxu0 0.0
    %1417 = vmatpush2.msra.mxu0 0.0
    %1418 = vmatprep.mubr.f32.mxu0 0.0
    %1419 = vmatmul.mubr.f32.gmra.mxu0 %v847
    %v1420 = vpop.f32.mrf.mxu0
    %v1421 = vadd.f32 0.0, %v1420
    %v1422 = vpop.f32.mrf.mxu0
    %1423 = vmatprep.mubr.f32.mxu0 0.0
    %1424 = vmatmul.mubr.f32.gmra.mxu0 %v850
    %v1425 = vpop.f32.mrf.mxu0
    %v1426 = vadd.f32 0.0, %v1425
    %v1427 = vpop.f32.mrf.mxu0
    %1428 = vmatprep.mubr.f32.mxu0 0.0
    %1429 = vmatmul.mubr.f32.gmra.mxu0 %v853
    %v1430 = vpop.f32.mrf.mxu0
    %v1431 = vadd.f32 0.0, %v1430
    %v1432 = vpop.f32.mrf.mxu0
    %1433 = vmatprep.mubr.f32.mxu0 0.0
    %1434 = vmatmul.mubr.f32.gmra.mxu0 %v856
    %v1435 = vpop.f32.mrf.mxu0
    %v1436 = vadd.f32 0.0, %v1435
    %v1437 = vpop.f32.mrf.mxu0
    %1438 = vdwg.mxu0
    %s1439 = scalar_lea.vmem [#allocation6], 256
    %v1440 = vld [vmem:[%s1439] sm:$0xff]
    %v1441 = vld [vmem:[%s1439 + $0x8] sm:$0xff]
    %v1442 = vld [vmem:[%s1439 + $0x10] sm:$0xff]
    %v1443 = vld [vmem:[%s1439 + $0x18] sm:$0xff]
    %v1444 = vld [vmem:[%s1439 + $0x20] sm:$0xff]
    %v1445 = vld [vmem:[%s1439 + $0x28] sm:$0xff]
    %v1446 = vld [vmem:[%s1439 + $0x30] sm:$0xff]
    %v1447 = vld [vmem:[%s1439 + $0x38] sm:$0xff]
    %v1448 = vld [vmem:[%s1439 + $0x40] sm:$0xff]
    %v1449 = vld [vmem:[%s1439 + $0x48] sm:$0xff]
    %v1450 = vld [vmem:[%s1439 + $0x50] sm:$0xff]
    %v1451 = vld [vmem:[%s1439 + $0x58] sm:$0xff]
    %v1452 = vld [vmem:[%s1439 + $0x60] sm:$0xff]
    %v1453 = vld [vmem:[%s1439 + $0x68] sm:$0xff]
    %v1454 = vld [vmem:[%s1439 + $0x70] sm:$0xff]
    %v1455 = vld [vmem:[%s1439 + $0x78] sm:$0xff]
    %1456 = vmatprep.subr.mxu0 0.0
    %1457 = vmatpush1.msra.mxu0 %v1455
    %1458 = vmatprep.subr.mxu0 0.0
    %1459 = vmatpush1.msra.mxu0 %v1454
    %1460 = vmatprep.subr.mxu0 0.0
    %1461 = vmatpush1.msra.mxu0 %v1453
    %1462 = vmatprep.subr.mxu0 0.0
    %1463 = vmatpush1.msra.mxu0 %v1452
    %1464 = vmatprep.subr.mxu0 0.0
    %1465 = vmatpush1.msra.mxu0 %v1451
    %1466 = vmatprep.subr.mxu0 0.0
    %1467 = vmatpush1.msra.mxu0 %v1450
    %1468 = vmatprep.subr.mxu0 0.0
    %1469 = vmatpush1.msra.mxu0 %v1449
    %1470 = vmatprep.subr.mxu0 0.0
    %1471 = vmatpush1.msra.mxu0 %v1448
    %1472 = vmatprep.subr.mxu0 0.0
    %1473 = vmatpush1.msra.mxu0 %v1447
    %1474 = vmatprep.subr.mxu0 0.0
    %1475 = vmatpush1.msra.mxu0 %v1446
    %1476 = vmatprep.subr.mxu0 0.0
    %1477 = vmatpush1.msra.mxu0 %v1445
    %1478 = vmatprep.subr.mxu0 0.0
    %1479 = vmatpush1.msra.mxu0 %v1444
    %1480 = vmatprep.subr.mxu0 0.0
    %1481 = vmatpush1.msra.mxu0 %v1443
    %1482 = vmatprep.subr.mxu0 0.0
    %1483 = vmatpush1.msra.mxu0 %v1442
    %1484 = vmatprep.subr.mxu0 0.0
    %1485 = vmatpush1.msra.mxu0 %v1441
    %1486 = vmatprep.subr.mxu0 0.0
    %1487 = vmatpush1.msra.mxu0 %v1440
    %1488 = vmatprep.subr.mxu0 0.0
    %1489 = vmatpush2.msra.mxu0 0.0
    %1490 = vmatprep.subr.mxu0 0.0
    %1491 = vmatpush2.msra.mxu0 0.0
    %1492 = vmatprep.subr.mxu0 0.0
    %1493 = vmatpush2.msra.mxu0 0.0
    %1494 = vmatprep.subr.mxu0 0.0
    %1495 = vmatpush2.msra.mxu0 0.0
    %1496 = vmatprep.subr.mxu0 0.0
    %1497 = vmatpush2.msra.mxu0 0.0
    %1498 = vmatprep.subr.mxu0 0.0
    %1499 = vmatpush2.msra.mxu0 0.0
    %1500 = vmatprep.subr.mxu0 0.0
    %1501 = vmatpush2.msra.mxu0 0.0
    %1502 = vmatprep.subr.mxu0 0.0
    %1503 = vmatpush2.msra.mxu0 0.0
    %1504 = vmatprep.subr.mxu0 0.0
    %1505 = vmatpush2.msra.mxu0 0.0
    %1506 = vmatprep.subr.mxu0 0.0
    %1507 = vmatpush2.msra.mxu0 0.0
    %1508 = vmatprep.subr.mxu0 0.0
    %1509 = vmatpush2.msra.mxu0 0.0
    %1510 = vmatprep.subr.mxu0 0.0
    %1511 = vmatpush2.msra.mxu0 0.0
    %1512 = vmatprep.subr.mxu0 0.0
    %1513 = vmatpush2.msra.mxu0 0.0
    %1514 = vmatprep.subr.mxu0 0.0
    %1515 = vmatpush2.msra.mxu0 0.0
    %1516 = vmatprep.subr.mxu0 0.0
    %1517 = vmatpush2.msra.mxu0 0.0
    %1518 = vmatprep.subr.mxu0 0.0
    %1519 = vmatpush2.msra.mxu0 0.0
    %1520 = vmatprep.mubr.f32.mxu0 0.0
    %1521 = vmatmul.mubr.f32.gmra.mxu0 %v1421
    %v1522 = vpop.f32.mrf.mxu0
    %v1523 = vadd.f32 0.0, %v1522
    %v1524 = vpop.f32.mrf.mxu0
    %1525 = vmatprep.mubr.f32.mxu0 0.0
    %1526 = vmatmul.mubr.f32.gmra.mxu0 %v1426
    %v1527 = vpop.f32.mrf.mxu0
    %v1528 = vadd.f32 0.0, %v1527
    %v1529 = vpop.f32.mrf.mxu0
    %1530 = vmatprep.mubr.f32.mxu0 0.0
    %1531 = vmatmul.mubr.f32.gmra.mxu0 %v1431
    %v1532 = vpop.f32.mrf.mxu0
    %v1533 = vadd.f32 0.0, %v1532
    %v1534 = vpop.f32.mrf.mxu0
    %1535 = vmatprep.mubr.f32.mxu0 0.0
    %1536 = vmatmul.mubr.f32.gmra.mxu0 %v1436
    %v1537 = vpop.f32.mrf.mxu0
    %v1538 = vadd.f32 0.0, %v1537
    %v1539 = vpop.f32.mrf.mxu0
    %1540 = vdwg.mxu0
    %v1541 = vadd.f32 %v1336, %v1523
    %v1542 = vadd.f32 %v1341, %v1528
    %v1543 = vadd.f32 %v1346, %v1533
    %v1544 = vadd.f32 %v1351, %v1538
    %v1545 = vld [vmem:[#allocation7] sm:$0x1]
    %v1547 = vlaneseq
    %v1548 = vshrl.u32 %v1547, 7
    %v1549 = vsub.s32 0, %v1548
    %v1550 = vrot.slane %v1545, %v1549
    %v1552 = vadd.f32 %v1541, %v1550
    %v1553 = vadd.f32 %v1542, %v1550
    %v1554 = vadd.f32 %v1543, %v1550
    %v1555 = vadd.f32 %v1544, %v1550
    %v1556 = vmax.f32 %v1552, 0.0
    %v1557 = vmax.f32 %v1553, 0.0
    %v1558 = vmax.f32 %v1554, 0.0
    %v1559 = vmax.f32 %v1555, 0.0
    %v1560 = vld [vmem:[#allocation10] sm:$0xff]
    %v1561 = vld [vmem:[#allocation10 + $0x8] sm:$0xff]
    %v1563 = vsel %vm535, %v1560, 0
    %v1566 = vsel %vm535, %v1561, 0
    %1568 = vmatprep.subr.mxu0 0.0
    %1569 = vmatpush1.msra.mxu0 0.0
    %1570 = vmatprep.subr.mxu0 0.0
    %1571 = vmatpush1.msra.mxu0 0.0
    %1572 = vmatprep.subr.mxu0 0.0
    %1573 = vmatpush1.msra.mxu0 0.0
    %1574 = vmatprep.subr.mxu0 0.0
    %1575 = vmatpush1.msra.mxu0 0.0
    %1576 = vmatprep.subr.mxu0 0.0
    %1577 = vmatpush1.msra.mxu0 0.0
    %1578 = vmatprep.subr.mxu0 0.0
    %1579 = vmatpush1.msra.mxu0 0.0
    %1580 = vmatprep.subr.mxu0 0.0
    %1581 = vmatpush1.msra.mxu0 0.0
    %1582 = vmatprep.subr.mxu0 0.0
    %1583 = vmatpush1.msra.mxu0 0.0
    %1584 = vmatprep.subr.mxu0 0.0
    %1585 = vmatpush1.msra.mxu0 0.0
    %1586 = vmatprep.subr.mxu0 0.0
    %1587 = vmatpush1.msra.mxu0 0.0
    %1588 = vmatprep.subr.mxu0 0.0
    %1589 = vmatpush1.msra.mxu0 0.0
    %1590 = vmatprep.subr.mxu0 0.0
    %1591 = vmatpush1.msra.mxu0 0.0
    %1592 = vmatprep.subr.mxu0 0.0
    %1593 = vmatpush1.msra.mxu0 %v1559
    %1594 = vmatprep.subr.mxu0 0.0
    %1595 = vmatpush1.msra.mxu0 %v1558
    %1596 = vmatprep.subr.mxu0 0.0
    %1597 = vmatpush1.msra.mxu0 %v1557
    %1598 = vmatprep.subr.mxu0 0.0
    %1599 = vmatpush1.msra.mxu0 %v1556
    %1600 = vmatprep.subr.mxu0 0.0
    %1601 = vmatpush2.msra.mxu0 0.0
    %1602 = vmatprep.subr.mxu0 0.0
    %1603 = vmatpush2.msra.mxu0 0.0
    %1604 = vmatprep.subr.mxu0 0.0
    %1605 = vmatpush2.msra.mxu0 0.0
    %1606 = vmatprep.subr.mxu0 0.0
    %1607 = vmatpush2.msra.mxu0 0.0
    %1608 = vmatprep.subr.mxu0 0.0
    %1609 = vmatpush2.msra.mxu0 0.0
    %1610 = vmatprep.subr.mxu0 0.0
    %1611 = vmatpush2.msra.mxu0 0.0
    %1612 = vmatprep.subr.mxu0 0.0
    %1613 = vmatpush2.msra.mxu0 0.0
    %1614 = vmatprep.subr.mxu0 0.0
    %1615 = vmatpush2.msra.mxu0 0.0
    %1616 = vmatprep.subr.mxu0 0.0
    %1617 = vmatpush2.msra.mxu0 0.0
    %1618 = vmatprep.subr.mxu0 0.0
    %1619 = vmatpush2.msra.mxu0 0.0
    %1620 = vmatprep.subr.mxu0 0.0
    %1621 = vmatpush2.msra.mxu0 0.0
    %1622 = vmatprep.subr.mxu0 0.0
    %1623 = vmatpush2.msra.mxu0 0.0
    %1624 = vmatprep.subr.mxu0 0.0
    %1625 = vmatpush2.msra.mxu0 0.0
    %1626 = vmatprep.subr.mxu0 0.0
    %1627 = vmatpush2.msra.mxu0 0.0
    %1628 = vmatprep.subr.mxu0 0.0
    %1629 = vmatpush2.msra.mxu0 0.0
    %1630 = vmatprep.subr.mxu0 0.0
    %1631 = vmatpush2.msra.mxu0 0.0
    %1632 = vmatprep.mubr.f32.mxu0 0.0
    %1633 = vmatmul.mubr.f32.gmra.mxu0 %v1563
    %v1634 = vpop.f32.mrf.mxu0
    %v1635 = vadd.f32 0.0, %v1634
    %v1636 = vpop.f32.mrf.mxu0
    %1637 = vmatprep.mubr.f32.mxu0 0.0
    %1638 = vmatmul.mubr.f32.gmra.mxu0 %v1566
    %v1639 = vpop.f32.mrf.mxu0
    %v1640 = vadd.f32 0.0, %v1639
    %v1641 = vpop.f32.mrf.mxu0
    %1642 = vdwg.mxu0
    %v1643 = vld [vmem:[#allocation9] sm:$0xff]
    %v1644 = vld [vmem:[#allocation9 + $0x8] sm:$0xff]
    %v1645 = vld [vmem:[#allocation9 + $0x10] sm:$0xff]
    %v1646 = vld [vmem:[#allocation9 + $0x18] sm:$0xff]
    %v1647 = vld [vmem:[#allocation9 + $0x20] sm:$0xff]
    %v1648 = vld [vmem:[#allocation9 + $0x28] sm:$0xff]
    %v1649 = vld [vmem:[#allocation9 + $0x30] sm:$0xff]
    %v1650 = vld [vmem:[#allocation9 + $0x38] sm:$0xff]
    %v1651 = vld [vmem:[#allocation9 + $0x40] sm:$0xff]
    %v1652 = vld [vmem:[#allocation9 + $0x48] sm:$0xff]
    %v1653 = vld [vmem:[#allocation9 + $0x50] sm:$0xff]
    %v1654 = vld [vmem:[#allocation9 + $0x58] sm:$0xff]
    %v1655 = vld [vmem:[#allocation9 + $0x60] sm:$0xff]
    %v1656 = vld [vmem:[#allocation9 + $0x68] sm:$0xff]
    %v1657 = vld [vmem:[#allocation9 + $0x70] sm:$0xff]
    %v1658 = vld [vmem:[#allocation9 + $0x78] sm:$0xff]
    %s1659 = scalar_lea.vmem [#allocation10], 16
    %v1660 = vld [vmem:[%s1659] sm:$0xff]
    %v1661 = vld [vmem:[%s1659 + $0x8] sm:$0xff]
    %v1663 = vsel %vm535, %v1660, 0
    %v1666 = vsel %vm535, %v1661, 0
    %1668 = vmatprep.subr.mxu0 0.0
    %1669 = vmatpush1.msra.mxu0 0.0
    %1670 = vmatprep.subr.mxu0 0.0
    %1671 = vmatpush1.msra.mxu0 0.0
    %1672 = vmatprep.subr.mxu0 0.0
    %1673 = vmatpush1.msra.mxu0 0.0
    %1674 = vmatprep.subr.mxu0 0.0
    %1675 = vmatpush1.msra.mxu0 0.0
    %1676 = vmatprep.subr.mxu0 0.0
    %1677 = vmatpush1.msra.mxu0 0.0
    %1678 = vmatprep.subr.mxu0 0.0
    %1679 = vmatpush1.msra.mxu0 0.0
    %1680 = vmatprep.subr.mxu0 0.0
    %1681 = vmatpush1.msra.mxu0 0.0
    %1682 = vmatprep.subr.mxu0 0.0
    %1683 = vmatpush1.msra.mxu0 0.0
    %1684 = vmatprep.subr.mxu0 0.0
    %1685 = vmatpush1.msra.mxu0 0.0
    %1686 = vmatprep.subr.mxu0 0.0
    %1687 = vmatpush1.msra.mxu0 0.0
    %1688 = vmatprep.subr.mxu0 0.0
    %1689 = vmatpush1.msra.mxu0 0.0
    %1690 = vmatprep.subr.mxu0 0.0
    %1691 = vmatpush1.msra.mxu0 0.0
    %1692 = vmatprep.subr.mxu0 0.0
    %1693 = vmatpush1.msra.mxu0 %v1559
    %1694 = vmatprep.subr.mxu0 0.0
    %1695 = vmatpush1.msra.mxu0 %v1558
    %1696 = vmatprep.subr.mxu0 0.0
    %1697 = vmatpush1.msra.mxu0 %v1557
    %1698 = vmatprep.subr.mxu0 0.0
    %1699 = vmatpush1.msra.mxu0 %v1556
    %1700 = vmatprep.subr.mxu0 0.0
    %1701 = vmatpush2.msra.mxu0 0.0
    %1702 = vmatprep.subr.mxu0 0.0
    %1703 = vmatpush2.msra.mxu0 0.0
    %1704 = vmatprep.subr.mxu0 0.0
    %1705 = vmatpush2.msra.mxu0 0.0
    %1706 = vmatprep.subr.mxu0 0.0
    %1707 = vmatpush2.msra.mxu0 0.0
    %1708 = vmatprep.subr.mxu0 0.0
    %1709 = vmatpush2.msra.mxu0 0.0
    %1710 = vmatprep.subr.mxu0 0.0
    %1711 = vmatpush2.msra.mxu0 0.0
    %1712 = vmatprep.subr.mxu0 0.0
    %1713 = vmatpush2.msra.mxu0 0.0
    %1714 = vmatprep.subr.mxu0 0.0
    %1715 = vmatpush2.msra.mxu0 0.0
    %1716 = vmatprep.subr.mxu0 0.0
    %1717 = vmatpush2.msra.mxu0 0.0
    %1718 = vmatprep.subr.mxu0 0.0
    %1719 = vmatpush2.msra.mxu0 0.0
    %1720 = vmatprep.subr.mxu0 0.0
    %1721 = vmatpush2.msra.mxu0 0.0
    %1722 = vmatprep.subr.mxu0 0.0
    %1723 = vmatpush2.msra.mxu0 0.0
    %1724 = vmatprep.subr.mxu0 0.0
    %1725 = vmatpush2.msra.mxu0 0.0
    %1726 = vmatprep.subr.mxu0 0.0
    %1727 = vmatpush2.msra.mxu0 0.0
    %1728 = vmatprep.subr.mxu0 0.0
    %1729 = vmatpush2.msra.mxu0 0.0
    %1730 = vmatprep.subr.mxu0 0.0
    %1731 = vmatpush2.msra.mxu0 0.0
    %1732 = vmatprep.mubr.f32.mxu0 0.0
    %1733 = vmatmul.mubr.f32.gmra.mxu0 %v1663
    %v1734 = vpop.f32.mrf.mxu0
    %v1735 = vadd.f32 0.0, %v1734
    %v1736 = vpop.f32.mrf.mxu0
    %1737 = vmatprep.mubr.f32.mxu0 0.0
    %1738 = vmatmul.mubr.f32.gmra.mxu0 %v1666
    %v1739 = vpop.f32.mrf.mxu0
    %v1740 = vadd.f32 0.0, %v1739
    %v1741 = vpop.f32.mrf.mxu0
    %1742 = vdwg.mxu0
    %s1743 = scalar_lea.vmem [#allocation9], 128
    %v1744 = vld [vmem:[%s1743] sm:$0xff]
    %v1745 = vld [vmem:[%s1743 + $0x8] sm:$0xff]
    %v1746 = vld [vmem:[%s1743 + $0x10] sm:$0xff]
    %v1747 = vld [vmem:[%s1743 + $0x18] sm:$0xff]
    %v1748 = vld [vmem:[%s1743 + $0x20] sm:$0xff]
    %v1749 = vld [vmem:[%s1743 + $0x28] sm:$0xff]
    %v1750 = vld [vmem:[%s1743 + $0x30] sm:$0xff]
    %v1751 = vld [vmem:[%s1743 + $0x38] sm:$0xff]
    %v1752 = vld [vmem:[%s1743 + $0x40] sm:$0xff]
    %v1753 = vld [vmem:[%s1743 + $0x48] sm:$0xff]
    %v1754 = vld [vmem:[%s1743 + $0x50] sm:$0xff]
    %v1755 = vld [vmem:[%s1743 + $0x58] sm:$0xff]
    %v1756 = vld [vmem:[%s1743 + $0x60] sm:$0xff]
    %v1757 = vld [vmem:[%s1743 + $0x68] sm:$0xff]
    %v1758 = vld [vmem:[%s1743 + $0x70] sm:$0xff]
    %v1759 = vld [vmem:[%s1743 + $0x78] sm:$0xff]
    %1760 = vmatprep.subr.mxu0 0.0
    %1761 = vmatpush1.msra.mxu0 %v1759
    %1762 = vmatprep.subr.mxu0 0.0
    %1763 = vmatpush1.msra.mxu0 %v1758
    %1764 = vmatprep.subr.mxu0 0.0
    %1765 = vmatpush1.msra.mxu0 %v1757
    %1766 = vmatprep.subr.mxu0 0.0
    %1767 = vmatpush1.msra.mxu0 %v1756
    %1768 = vmatprep.subr.mxu0 0.0
    %1769 = vmatpush1.msra.mxu0 %v1755
    %1770 = vmatprep.subr.mxu0 0.0
    %1771 = vmatpush1.msra.mxu0 %v1754
    %1772 = vmatprep.subr.mxu0 0.0
    %1773 = vmatpush1.msra.mxu0 %v1753
    %1774 = vmatprep.subr.mxu0 0.0
    %1775 = vmatpush1.msra.mxu0 %v1752
    %1776 = vmatprep.subr.mxu0 0.0
    %1777 = vmatpush1.msra.mxu0 %v1751
    %1778 = vmatprep.subr.mxu0 0.0
    %1779 = vmatpush1.msra.mxu0 %v1750
    %1780 = vmatprep.subr.mxu0 0.0
    %1781 = vmatpush1.msra.mxu0 %v1749
    %1782 = vmatprep.subr.mxu0 0.0
    %1783 = vmatpush1.msra.mxu0 %v1748
    %1784 = vmatprep.subr.mxu0 0.0
    %1785 = vmatpush1.msra.mxu0 %v1747
    %1786 = vmatprep.subr.mxu0 0.0
    %1787 = vmatpush1.msra.mxu0 %v1746
    %1788 = vmatprep.subr.mxu0 0.0
    %1789 = vmatpush1.msra.mxu0 %v1745
    %1790 = vmatprep.subr.mxu0 0.0
    %1791 = vmatpush1.msra.mxu0 %v1744
    %1792 = vmatprep.subr.mxu0 0.0
    %1793 = vmatpush2.msra.mxu0 0.0
    %1794 = vmatprep.subr.mxu0 0.0
    %1795 = vmatpush2.msra.mxu0 0.0
    %1796 = vmatprep.subr.mxu0 0.0
    %1797 = vmatpush2.msra.mxu0 0.0
    %1798 = vmatprep.subr.mxu0 0.0
    %1799 = vmatpush2.msra.mxu0 0.0
    %1800 = vmatprep.subr.mxu0 0.0
    %1801 = vmatpush2.msra.mxu0 0.0
    %1802 = vmatprep.subr.mxu0 0.0
    %1803 = vmatpush2.msra.mxu0 0.0
    %1804 = vmatprep.subr.mxu0 0.0
    %1805 = vmatpush2.msra.mxu0 0.0
    %1806 = vmatprep.subr.mxu0 0.0
    %1807 = vmatpush2.msra.mxu0 0.0
    %1808 = vmatprep.subr.mxu0 0.0
    %1809 = vmatpush2.msra.mxu0 0.0
    %1810 = vmatprep.subr.mxu0 0.0
    %1811 = vmatpush2.msra.mxu0 0.0
    %1812 = vmatprep.subr.mxu0 0.0
    %1813 = vmatpush2.msra.mxu0 0.0
    %1814 = vmatprep.subr.mxu0 0.0
    %1815 = vmatpush2.msra.mxu0 0.0
    %1816 = vmatprep.subr.mxu0 0.0
    %1817 = vmatpush2.msra.mxu0 0.0
    %1818 = vmatprep.subr.mxu0 0.0
    %1819 = vmatpush2.msra.mxu0 0.0
    %1820 = vmatprep.subr.mxu0 0.0
    %1821 = vmatpush2.msra.mxu0 0.0
    %1822 = vmatprep.subr.mxu0 0.0
    %1823 = vmatpush2.msra.mxu0 0.0
    %1824 = vmatprep.mubr.f32.mxu0 0.0
    %1825 = vmatmul.mubr.f32.gmra.mxu0 %v1735
    %v1826 = vpop.f32.mrf.mxu0
    %v1827 = vadd.f32 0.0, %v1826
    %v1828 = vpop.f32.mrf.mxu0
    %1829 = vmatprep.mubr.f32.mxu0 0.0
    %1830 = vmatmul.mubr.f32.gmra.mxu0 %v1740
    %v1831 = vpop.f32.mrf.mxu0
    %v1832 = vadd.f32 0.0, %v1831
    %v1833 = vpop.f32.mrf.mxu0
    %1834 = vdwg.mxu0
    %1835 = vmatprep.subr.mxu0 0.0
    %1836 = vmatpush1.msra.mxu0 %v1658
    %1837 = vmatprep.subr.mxu0 0.0
    %1838 = vmatpush1.msra.mxu0 %v1657
    %1839 = vmatprep.subr.mxu0 0.0
    %1840 = vmatpush1.msra.mxu0 %v1656
    %1841 = vmatprep.subr.mxu0 0.0
    %1842 = vmatpush1.msra.mxu0 %v1655
    %1843 = vmatprep.subr.mxu0 0.0
    %1844 = vmatpush1.msra.mxu0 %v1654
    %1845 = vmatprep.subr.mxu0 0.0
    %1846 = vmatpush1.msra.mxu0 %v1653
    %1847 = vmatprep.subr.mxu0 0.0
    %1848 = vmatpush1.msra.mxu0 %v1652
    %1849 = vmatprep.subr.mxu0 0.0
    %1850 = vmatpush1.msra.mxu0 %v1651
    %1851 = vmatprep.subr.mxu0 0.0
    %1852 = vmatpush1.msra.mxu0 %v1650
    %1853 = vmatprep.subr.mxu0 0.0
    %1854 = vmatpush1.msra.mxu0 %v1649
    %1855 = vmatprep.subr.mxu0 0.0
    %1856 = vmatpush1.msra.mxu0 %v1648
    %1857 = vmatprep.subr.mxu0 0.0
    %1858 = vmatpush1.msra.mxu0 %v1647
    %1859 = vmatprep.subr.mxu0 0.0
    %1860 = vmatpush1.msra.mxu0 %v1646
    %1861 = vmatprep.subr.mxu0 0.0
    %1862 = vmatpush1.msra.mxu0 %v1645
    %1863 = vmatprep.subr.mxu0 0.0
    %1864 = vmatpush1.msra.mxu0 %v1644
    %1865 = vmatprep.subr.mxu0 0.0
    %1866 = vmatpush1.msra.mxu0 %v1643
    %1867 = vmatprep.subr.mxu0 0.0
    %1868 = vmatpush2.msra.mxu0 0.0
    %1869 = vmatprep.subr.mxu0 0.0
    %1870 = vmatpush2.msra.mxu0 0.0
    %1871 = vmatprep.subr.mxu0 0.0
    %1872 = vmatpush2.msra.mxu0 0.0
    %1873 = vmatprep.subr.mxu0 0.0
    %1874 = vmatpush2.msra.mxu0 0.0
    %1875 = vmatprep.subr.mxu0 0.0
    %1876 = vmatpush2.msra.mxu0 0.0
    %1877 = vmatprep.subr.mxu0 0.0
    %1878 = vmatpush2.msra.mxu0 0.0
    %1879 = vmatprep.subr.mxu0 0.0
    %1880 = vmatpush2.msra.mxu0 0.0
    %1881 = vmatprep.subr.mxu0 0.0
    %1882 = vmatpush2.msra.mxu0 0.0
    %1883 = vmatprep.subr.mxu0 0.0
    %1884 = vmatpush2.msra.mxu0 0.0
    %1885 = vmatprep.subr.mxu0 0.0
    %1886 = vmatpush2.msra.mxu0 0.0
    %1887 = vmatprep.subr.mxu0 0.0
    %1888 = vmatpush2.msra.mxu0 0.0
    %1889 = vmatprep.subr.mxu0 0.0
    %1890 = vmatpush2.msra.mxu0 0.0
    %1891 = vmatprep.subr.mxu0 0.0
    %1892 = vmatpush2.msra.mxu0 0.0
    %1893 = vmatprep.subr.mxu0 0.0
    %1894 = vmatpush2.msra.mxu0 0.0
    %1895 = vmatprep.subr.mxu0 0.0
    %1896 = vmatpush2.msra.mxu0 0.0
    %1897 = vmatprep.subr.mxu0 0.0
    %1898 = vmatpush2.msra.mxu0 0.0
    %1899 = vmatprep.mubr.f32.mxu0 0.0
    %1900 = vmatmul.mubr.f32.gmra.mxu0 %v1635
    %v1901 = vpop.f32.mrf.mxu0
    %v1902 = vadd.f32 %v1827, %v1901
    %v1903 = vpop.f32.mrf.mxu0
    %1904 = vmatprep.mubr.f32.mxu0 0.0
    %1905 = vmatmul.mubr.f32.gmra.mxu0 %v1640
    %v1906 = vpop.f32.mrf.mxu0
    %v1907 = vadd.f32 %v1832, %v1906
    %v1908 = vpop.f32.mrf.mxu0
    %1909 = vdwg.mxu0
    %s1910 = scalar_lea.vmem [#allocation10], 32
    %v1911 = vld [vmem:[%s1910] sm:$0xff]
    %v1912 = vld [vmem:[%s1910 + $0x8] sm:$0xff]
    %v1914 = vsel %vm535, %v1911, 0
    %v1917 = vsel %vm535, %v1912, 0
    %1919 = vmatprep.subr.mxu0 0.0
    %1920 = vmatpush1.msra.mxu0 0.0
    %1921 = vmatprep.subr.mxu0 0.0
    %1922 = vmatpush1.msra.mxu0 0.0
    %1923 = vmatprep.subr.mxu0 0.0
    %1924 = vmatpush1.msra.mxu0 0.0
    %1925 = vmatprep.subr.mxu0 0.0
    %1926 = vmatpush1.msra.mxu0 0.0
    %1927 = vmatprep.subr.mxu0 0.0
    %1928 = vmatpush1.msra.mxu0 0.0
    %1929 = vmatprep.subr.mxu0 0.0
    %1930 = vmatpush1.msra.mxu0 0.0
    %1931 = vmatprep.subr.mxu0 0.0
    %1932 = vmatpush1.msra.mxu0 0.0
    %1933 = vmatprep.subr.mxu0 0.0
    %1934 = vmatpush1.msra.mxu0 0.0
    %1935 = vmatprep.subr.mxu0 0.0
    %1936 = vmatpush1.msra.mxu0 0.0
    %1937 = vmatprep.subr.mxu0 0.0
    %1938 = vmatpush1.msra.mxu0 0.0
    %1939 = vmatprep.subr.mxu0 0.0
    %1940 = vmatpush1.msra.mxu0 0.0
    %1941 = vmatprep.subr.mxu0 0.0
    %1942 = vmatpush1.msra.mxu0 0.0
    %1943 = vmatprep.subr.mxu0 0.0
    %1944 = vmatpush1.msra.mxu0 %v1559
    %1945 = vmatprep.subr.mxu0 0.0
    %1946 = vmatpush1.msra.mxu0 %v1558
    %1947 = vmatprep.subr.mxu0 0.0
    %1948 = vmatpush1.msra.mxu0 %v1557
    %1949 = vmatprep.subr.mxu0 0.0
    %1950 = vmatpush1.msra.mxu0 %v1556
    %1951 = vmatprep.subr.mxu0 0.0
    %1952 = vmatpush2.msra.mxu0 0.0
    %1953 = vmatprep.subr.mxu0 0.0
    %1954 = vmatpush2.msra.mxu0 0.0
    %1955 = vmatprep.subr.mxu0 0.0
    %1956 = vmatpush2.msra.mxu0 0.0
    %1957 = vmatprep.subr.mxu0 0.0
    %1958 = vmatpush2.msra.mxu0 0.0
    %1959 = vmatprep.subr.mxu0 0.0
    %1960 = vmatpush2.msra.mxu0 0.0
    %1961 = vmatprep.subr.mxu0 0.0
    %1962 = vmatpush2.msra.mxu0 0.0
    %1963 = vmatprep.subr.mxu0 0.0
    %1964 = vmatpush2.msra.mxu0 0.0
    %1965 = vmatprep.subr.mxu0 0.0
    %1966 = vmatpush2.msra.mxu0 0.0
    %1967 = vmatprep.subr.mxu0 0.0
    %1968 = vmatpush2.msra.mxu0 0.0
    %1969 = vmatprep.subr.mxu0 0.0
    %1970 = vmatpush2.msra.mxu0 0.0
    %1971 = vmatprep.subr.mxu0 0.0
    %1972 = vmatpush2.msra.mxu0 0.0
    %1973 = vmatprep.subr.mxu0 0.0
    %1974 = vmatpush2.msra.mxu0 0.0
    %1975 = vmatprep.subr.mxu0 0.0
    %1976 = vmatpush2.msra.mxu0 0.0
    %1977 = vmatprep.subr.mxu0 0.0
    %1978 = vmatpush2.msra.mxu0 0.0
    %1979 = vmatprep.subr.mxu0 0.0
    %1980 = vmatpush2.msra.mxu0 0.0
    %1981 = vmatprep.subr.mxu0 0.0
    %1982 = vmatpush2.msra.mxu0 0.0
    %1983 = vmatprep.mubr.f32.mxu0 0.0
    %1984 = vmatmul.mubr.f32.gmra.mxu0 %v1914
    %v1985 = vpop.f32.mrf.mxu0
    %v1986 = vadd.f32 0.0, %v1985
    %v1987 = vpop.f32.mrf.mxu0
    %1988 = vmatprep.mubr.f32.mxu0 0.0
    %1989 = vmatmul.mubr.f32.gmra.mxu0 %v1917
    %v1990 = vpop.f32.mrf.mxu0
    %v1991 = vadd.f32 0.0, %v1990
    %v1992 = vpop.f32.mrf.mxu0
    %1993 = vdwg.mxu0
    %s1994 = scalar_lea.vmem [#allocation9], 256
    %v1995 = vld [vmem:[%s1994] sm:$0xff]
    %v1996 = vld [vmem:[%s1994 + $0x8] sm:$0xff]
    %v1997 = vld [vmem:[%s1994 + $0x10] sm:$0xff]
    %v1998 = vld [vmem:[%s1994 + $0x18] sm:$0xff]
    %v1999 = vld [vmem:[%s1994 + $0x20] sm:$0xff]
    %v2000 = vld [vmem:[%s1994 + $0x28] sm:$0xff]
    %v2001 = vld [vmem:[%s1994 + $0x30] sm:$0xff]
    %v2002 = vld [vmem:[%s1994 + $0x38] sm:$0xff]
    %v2003 = vld [vmem:[%s1994 + $0x40] sm:$0xff]
    %v2004 = vld [vmem:[%s1994 + $0x48] sm:$0xff]
    %v2005 = vld [vmem:[%s1994 + $0x50] sm:$0xff]
    %v2006 = vld [vmem:[%s1994 + $0x58] sm:$0xff]
    %v2007 = vld [vmem:[%s1994 + $0x60] sm:$0xff]
    %v2008 = vld [vmem:[%s1994 + $0x68] sm:$0xff]
    %v2009 = vld [vmem:[%s1994 + $0x70] sm:$0xff]
    %v2010 = vld [vmem:[%s1994 + $0x78] sm:$0xff]
    %2011 = vmatprep.subr.mxu0 0.0
    %2012 = vmatpush1.msra.mxu0 %v2010
    %2013 = vmatprep.subr.mxu0 0.0
    %2014 = vmatpush1.msra.mxu0 %v2009
    %2015 = vmatprep.subr.mxu0 0.0
    %2016 = vmatpush1.msra.mxu0 %v2008
    %2017 = vmatprep.subr.mxu0 0.0
    %2018 = vmatpush1.msra.mxu0 %v2007
    %2019 = vmatprep.subr.mxu0 0.0
    %2020 = vmatpush1.msra.mxu0 %v2006
    %2021 = vmatprep.subr.mxu0 0.0
    %2022 = vmatpush1.msra.mxu0 %v2005
    %2023 = vmatprep.subr.mxu0 0.0
    %2024 = vmatpush1.msra.mxu0 %v2004
    %2025 = vmatprep.subr.mxu0 0.0
    %2026 = vmatpush1.msra.mxu0 %v2003
    %2027 = vmatprep.subr.mxu0 0.0
    %2028 = vmatpush1.msra.mxu0 %v2002
    %2029 = vmatprep.subr.mxu0 0.0
    %2030 = vmatpush1.msra.mxu0 %v2001
    %2031 = vmatprep.subr.mxu0 0.0
    %2032 = vmatpush1.msra.mxu0 %v2000
    %2033 = vmatprep.subr.mxu0 0.0
    %2034 = vmatpush1.msra.mxu0 %v1999
    %2035 = vmatprep.subr.mxu0 0.0
    %2036 = vmatpush1.msra.mxu0 %v1998
    %2037 = vmatprep.subr.mxu0 0.0
    %2038 = vmatpush1.msra.mxu0 %v1997
    %2039 = vmatprep.subr.mxu0 0.0
    %2040 = vmatpush1.msra.mxu0 %v1996
    %2041 = vmatprep.subr.mxu0 0.0
    %2042 = vmatpush1.msra.mxu0 %v1995
    %2043 = vmatprep.subr.mxu0 0.0
    %2044 = vmatpush2.msra.mxu0 0.0
    %2045 = vmatprep.subr.mxu0 0.0
    %2046 = vmatpush2.msra.mxu0 0.0
    %2047 = vmatprep.subr.mxu0 0.0
    %2048 = vmatpush2.msra.mxu0 0.0
    %2049 = vmatprep.subr.mxu0 0.0
    %2050 = vmatpush2.msra.mxu0 0.0
    %2051 = vmatprep.subr.mxu0 0.0
    %2052 = vmatpush2.msra.mxu0 0.0
    %2053 = vmatprep.subr.mxu0 0.0
    %2054 = vmatpush2.msra.mxu0 0.0
    %2055 = vmatprep.subr.mxu0 0.0
    %2056 = vmatpush2.msra.mxu0 0.0
    %2057 = vmatprep.subr.mxu0 0.0
    %2058 = vmatpush2.msra.mxu0 0.0
    %2059 = vmatprep.subr.mxu0 0.0
    %2060 = vmatpush2.msra.mxu0 0.0
    %2061 = vmatprep.subr.mxu0 0.0
    %2062 = vmatpush2.msra.mxu0 0.0
    %2063 = vmatprep.subr.mxu0 0.0
    %2064 = vmatpush2.msra.mxu0 0.0
    %2065 = vmatprep.subr.mxu0 0.0
    %2066 = vmatpush2.msra.mxu0 0.0
    %2067 = vmatprep.subr.mxu0 0.0
    %2068 = vmatpush2.msra.mxu0 0.0
    %2069 = vmatprep.subr.mxu0 0.0
    %2070 = vmatpush2.msra.mxu0 0.0
    %2071 = vmatprep.subr.mxu0 0.0
    %2072 = vmatpush2.msra.mxu0 0.0
    %2073 = vmatprep.subr.mxu0 0.0
    %2074 = vmatpush2.msra.mxu0 0.0
    %2075 = vmatprep.mubr.f32.mxu0 0.0
    %2076 = vmatmul.mubr.f32.gmra.mxu0 %v1986
    %v2077 = vpop.f32.mrf.mxu0
    %v2078 = vadd.f32 0.0, %v2077
    %v2079 = vpop.f32.mrf.mxu0
    %2080 = vmatprep.mubr.f32.mxu0 0.0
    %2081 = vmatmul.mubr.f32.gmra.mxu0 %v1991
    %v2082 = vpop.f32.mrf.mxu0
    %v2083 = vadd.f32 0.0, %v2082
    %v2084 = vpop.f32.mrf.mxu0
    %2085 = vdwg.mxu0
    %v2086 = vadd.f32 %v1902, %v2078
    %v2087 = vadd.f32 %v1907, %v2083
    %s2088 = scalar_lea.vmem [#allocation10], 48
    %v2089 = vld [vmem:[%s2088] sm:$0xff]
    %v2090 = vld [vmem:[%s2088 + $0x8] sm:$0xff]
    %v2092 = vsel %vm535, %v2089, 0
    %v2095 = vsel %vm535, %v2090, 0
    %2097 = vmatprep.subr.mxu0 0.0
    %2098 = vmatpush1.msra.mxu0 0.0
    %2099 = vmatprep.subr.mxu0 0.0
    %2100 = vmatpush1.msra.mxu0 0.0
    %2101 = vmatprep.subr.mxu0 0.0
    %2102 = vmatpush1.msra.mxu0 0.0
    %2103 = vmatprep.subr.mxu0 0.0
    %2104 = vmatpush1.msra.mxu0 0.0
    %2105 = vmatprep.subr.mxu0 0.0
    %2106 = vmatpush1.msra.mxu0 0.0
    %2107 = vmatprep.subr.mxu0 0.0
    %2108 = vmatpush1.msra.mxu0 0.0
    %2109 = vmatprep.subr.mxu0 0.0
    %2110 = vmatpush1.msra.mxu0 0.0
    %2111 = vmatprep.subr.mxu0 0.0
    %2112 = vmatpush1.msra.mxu0 0.0
    %2113 = vmatprep.subr.mxu0 0.0
    %2114 = vmatpush1.msra.mxu0 0.0
    %2115 = vmatprep.subr.mxu0 0.0
    %2116 = vmatpush1.msra.mxu0 0.0
    %2117 = vmatprep.subr.mxu0 0.0
    %2118 = vmatpush1.msra.mxu0 0.0
    %2119 = vmatprep.subr.mxu0 0.0
    %2120 = vmatpush1.msra.mxu0 0.0
    %2121 = vmatprep.subr.mxu0 0.0
    %2122 = vmatpush1.msra.mxu0 %v1559
    %2123 = vmatprep.subr.mxu0 0.0
    %2124 = vmatpush1.msra.mxu0 %v1558
    %2125 = vmatprep.subr.mxu0 0.0
    %2126 = vmatpush1.msra.mxu0 %v1557
    %2127 = vmatprep.subr.mxu0 0.0
    %2128 = vmatpush1.msra.mxu0 %v1556
    %2129 = vmatprep.subr.mxu0 0.0
    %2130 = vmatpush2.msra.mxu0 0.0
    %2131 = vmatprep.subr.mxu0 0.0
    %2132 = vmatpush2.msra.mxu0 0.0
    %2133 = vmatprep.subr.mxu0 0.0
    %2134 = vmatpush2.msra.mxu0 0.0
    %2135 = vmatprep.subr.mxu0 0.0
    %2136 = vmatpush2.msra.mxu0 0.0
    %2137 = vmatprep.subr.mxu0 0.0
    %2138 = vmatpush2.msra.mxu0 0.0
    %2139 = vmatprep.subr.mxu0 0.0
    %2140 = vmatpush2.msra.mxu0 0.0
    %2141 = vmatprep.subr.mxu0 0.0
    %2142 = vmatpush2.msra.mxu0 0.0
    %2143 = vmatprep.subr.mxu0 0.0
    %2144 = vmatpush2.msra.mxu0 0.0
    %2145 = vmatprep.subr.mxu0 0.0
    %2146 = vmatpush2.msra.mxu0 0.0
    %2147 = vmatprep.subr.mxu0 0.0
    %2148 = vmatpush2.msra.mxu0 0.0
    %2149 = vmatprep.subr.mxu0 0.0
    %2150 = vmatpush2.msra.mxu0 0.0
    %2151 = vmatprep.subr.mxu0 0.0
    %2152 = vmatpush2.msra.mxu0 0.0
    %2153 = vmatprep.subr.mxu0 0.0
    %2154 = vmatpush2.msra.mxu0 0.0
    %2155 = vmatprep.subr.mxu0 0.0
    %2156 = vmatpush2.msra.mxu0 0.0
    %2157 = vmatprep.subr.mxu0 0.0
    %2158 = vmatpush2.msra.mxu0 0.0
    %2159 = vmatprep.subr.mxu0 0.0
    %2160 = vmatpush2.msra.mxu0 0.0
    %2161 = vmatprep.mubr.f32.mxu0 0.0
    %2162 = vmatmul.mubr.f32.gmra.mxu0 %v2092
    %v2163 = vpop.f32.mrf.mxu0
    %v2164 = vadd.f32 0.0, %v2163
    %v2165 = vpop.f32.mrf.mxu0
    %2166 = vmatprep.mubr.f32.mxu0 0.0
    %2167 = vmatmul.mubr.f32.gmra.mxu0 %v2095
    %v2168 = vpop.f32.mrf.mxu0
    %v2169 = vadd.f32 0.0, %v2168
    %v2170 = vpop.f32.mrf.mxu0
    %2171 = vdwg.mxu0
    %s2172 = scalar_lea.vmem [#allocation9], 384
    %v2173 = vld [vmem:[%s2172] sm:$0xff]
    %v2174 = vld [vmem:[%s2172 + $0x8] sm:$0xff]
    %v2175 = vld [vmem:[%s2172 + $0x10] sm:$0xff]
    %v2176 = vld [vmem:[%s2172 + $0x18] sm:$0xff]
    %v2177 = vld [vmem:[%s2172 + $0x20] sm:$0xff]
    %v2178 = vld [vmem:[%s2172 + $0x28] sm:$0xff]
    %v2179 = vld [vmem:[%s2172 + $0x30] sm:$0xff]
    %v2180 = vld [vmem:[%s2172 + $0x38] sm:$0xff]
    %v2181 = vld [vmem:[%s2172 + $0x40] sm:$0xff]
    %v2182 = vld [vmem:[%s2172 + $0x48] sm:$0xff]
    %v2183 = vld [vmem:[%s2172 + $0x50] sm:$0xff]
    %v2184 = vld [vmem:[%s2172 + $0x58] sm:$0xff]
    %v2185 = vld [vmem:[%s2172 + $0x60] sm:$0xff]
    %v2186 = vld [vmem:[%s2172 + $0x68] sm:$0xff]
    %v2187 = vld [vmem:[%s2172 + $0x70] sm:$0xff]
    %v2188 = vld [vmem:[%s2172 + $0x78] sm:$0xff]
    %2189 = vmatprep.subr.mxu0 0.0
    %2190 = vmatpush1.msra.mxu0 %v2188
    %2191 = vmatprep.subr.mxu0 0.0
    %2192 = vmatpush1.msra.mxu0 %v2187
    %2193 = vmatprep.subr.mxu0 0.0
    %2194 = vmatpush1.msra.mxu0 %v2186
    %2195 = vmatprep.subr.mxu0 0.0
    %2196 = vmatpush1.msra.mxu0 %v2185
    %2197 = vmatprep.subr.mxu0 0.0
    %2198 = vmatpush1.msra.mxu0 %v2184
    %2199 = vmatprep.subr.mxu0 0.0
    %2200 = vmatpush1.msra.mxu0 %v2183
    %2201 = vmatprep.subr.mxu0 0.0
    %2202 = vmatpush1.msra.mxu0 %v2182
    %2203 = vmatprep.subr.mxu0 0.0
    %2204 = vmatpush1.msra.mxu0 %v2181
    %2205 = vmatprep.subr.mxu0 0.0
    %2206 = vmatpush1.msra.mxu0 %v2180
    %2207 = vmatprep.subr.mxu0 0.0
    %2208 = vmatpush1.msra.mxu0 %v2179
    %2209 = vmatprep.subr.mxu0 0.0
    %2210 = vmatpush1.msra.mxu0 %v2178
    %2211 = vmatprep.subr.mxu0 0.0
    %2212 = vmatpush1.msra.mxu0 %v2177
    %2213 = vmatprep.subr.mxu0 0.0
    %2214 = vmatpush1.msra.mxu0 %v2176
    %2215 = vmatprep.subr.mxu0 0.0
    %2216 = vmatpush1.msra.mxu0 %v2175
    %2217 = vmatprep.subr.mxu0 0.0
    %2218 = vmatpush1.msra.mxu0 %v2174
    %2219 = vmatprep.subr.mxu0 0.0
    %2220 = vmatpush1.msra.mxu0 %v2173
    %2221 = vmatprep.subr.mxu0 0.0
    %2222 = vmatpush2.msra.mxu0 0.0
    %2223 = vmatprep.subr.mxu0 0.0
    %2224 = vmatpush2.msra.mxu0 0.0
    %2225 = vmatprep.subr.mxu0 0.0
    %2226 = vmatpush2.msra.mxu0 0.0
    %2227 = vmatprep.subr.mxu0 0.0
    %2228 = vmatpush2.msra.mxu0 0.0
    %2229 = vmatprep.subr.mxu0 0.0
    %2230 = vmatpush2.msra.mxu0 0.0
    %2231 = vmatprep.subr.mxu0 0.0
    %2232 = vmatpush2.msra.mxu0 0.0
    %2233 = vmatprep.subr.mxu0 0.0
    %2234 = vmatpush2.msra.mxu0 0.0
    %2235 = vmatprep.subr.mxu0 0.0
    %2236 = vmatpush2.msra.mxu0 0.0
    %2237 = vmatprep.subr.mxu0 0.0
    %2238 = vmatpush2.msra.mxu0 0.0
    %2239 = vmatprep.subr.mxu0 0.0
    %2240 = vmatpush2.msra.mxu0 0.0
    %2241 = vmatprep.subr.mxu0 0.0
    %2242 = vmatpush2.msra.mxu0 0.0
    %2243 = vmatprep.subr.mxu0 0.0
    %2244 = vmatpush2.msra.mxu0 0.0
    %2245 = vmatprep.subr.mxu0 0.0
    %2246 = vmatpush2.msra.mxu0 0.0
    %2247 = vmatprep.subr.mxu0 0.0
    %2248 = vmatpush2.msra.mxu0 0.0
    %2249 = vmatprep.subr.mxu0 0.0
    %2250 = vmatpush2.msra.mxu0 0.0
    %2251 = vmatprep.subr.mxu0 0.0
    %2252 = vmatpush2.msra.mxu0 0.0
    %2253 = vmatprep.mubr.f32.mxu0 0.0
    %2254 = vmatmul.mubr.f32.gmra.mxu0 %v2164
    %v2255 = vpop.f32.mrf.mxu0
    %v2256 = vadd.f32 0.0, %v2255
    %v2257 = vpop.f32.mrf.mxu0
    %2258 = vmatprep.mubr.f32.mxu0 0.0
    %2259 = vmatmul.mubr.f32.gmra.mxu0 %v2169
    %v2260 = vpop.f32.mrf.mxu0
    %v2261 = vadd.f32 0.0, %v2260
    %v2262 = vpop.f32.mrf.mxu0
    %2263 = vdwg.mxu0
    %v2264 = vadd.f32 %v2086, %v2256
    %v2265 = vadd.f32 %v2087, %v2261
    %s2266 = scalar_lea.vmem [#allocation10], 64
    %v2267 = vld [vmem:[%s2266] sm:$0xff]
    %v2268 = vld [vmem:[%s2266 + $0x8] sm:$0xff]
    %v2270 = vsel %vm535, %v2267, 0
    %v2273 = vsel %vm535, %v2268, 0
    %2275 = vmatprep.subr.mxu0 0.0
    %2276 = vmatpush1.msra.mxu0 0.0
    %2277 = vmatprep.subr.mxu0 0.0
    %2278 = vmatpush1.msra.mxu0 0.0
    %2279 = vmatprep.subr.mxu0 0.0
    %2280 = vmatpush1.msra.mxu0 0.0
    %2281 = vmatprep.subr.mxu0 0.0
    %2282 = vmatpush1.msra.mxu0 0.0
    %2283 = vmatprep.subr.mxu0 0.0
    %2284 = vmatpush1.msra.mxu0 0.0
    %2285 = vmatprep.subr.mxu0 0.0
    %2286 = vmatpush1.msra.mxu0 0.0
    %2287 = vmatprep.subr.mxu0 0.0
    %2288 = vmatpush1.msra.mxu0 0.0
    %2289 = vmatprep.subr.mxu0 0.0
    %2290 = vmatpush1.msra.mxu0 0.0
    %2291 = vmatprep.subr.mxu0 0.0
    %2292 = vmatpush1.msra.mxu0 0.0
    %2293 = vmatprep.subr.mxu0 0.0
    %2294 = vmatpush1.msra.mxu0 0.0
    %2295 = vmatprep.subr.mxu0 0.0
    %2296 = vmatpush1.msra.mxu0 0.0
    %2297 = vmatprep.subr.mxu0 0.0
    %2298 = vmatpush1.msra.mxu0 0.0
    %2299 = vmatprep.subr.mxu0 0.0
    %2300 = vmatpush1.msra.mxu0 %v1559
    %2301 = vmatprep.subr.mxu0 0.0
    %2302 = vmatpush1.msra.mxu0 %v1558
    %2303 = vmatprep.subr.mxu0 0.0
    %2304 = vmatpush1.msra.mxu0 %v1557
    %2305 = vmatprep.subr.mxu0 0.0
    %2306 = vmatpush1.msra.mxu0 %v1556
    %2307 = vmatprep.subr.mxu0 0.0
    %2308 = vmatpush2.msra.mxu0 0.0
    %2309 = vmatprep.subr.mxu0 0.0
    %2310 = vmatpush2.msra.mxu0 0.0
    %2311 = vmatprep.subr.mxu0 0.0
    %2312 = vmatpush2.msra.mxu0 0.0
    %2313 = vmatprep.subr.mxu0 0.0
    %2314 = vmatpush2.msra.mxu0 0.0
    %2315 = vmatprep.subr.mxu0 0.0
    %2316 = vmatpush2.msra.mxu0 0.0
    %2317 = vmatprep.subr.mxu0 0.0
    %2318 = vmatpush2.msra.mxu0 0.0
    %2319 = vmatprep.subr.mxu0 0.0
    %2320 = vmatpush2.msra.mxu0 0.0
    %2321 = vmatprep.subr.mxu0 0.0
    %2322 = vmatpush2.msra.mxu0 0.0
    %2323 = vmatprep.subr.mxu0 0.0
    %2324 = vmatpush2.msra.mxu0 0.0
    %2325 = vmatprep.subr.mxu0 0.0
    %2326 = vmatpush2.msra.mxu0 0.0
    %2327 = vmatprep.subr.mxu0 0.0
    %2328 = vmatpush2.msra.mxu0 0.0
    %2329 = vmatprep.subr.mxu0 0.0
    %2330 = vmatpush2.msra.mxu0 0.0
    %2331 = vmatprep.subr.mxu0 0.0
    %2332 = vmatpush2.msra.mxu0 0.0
    %2333 = vmatprep.subr.mxu0 0.0
    %2334 = vmatpush2.msra.mxu0 0.0
    %2335 = vmatprep.subr.mxu0 0.0
    %2336 = vmatpush2.msra.mxu0 0.0
    %2337 = vmatprep.subr.mxu0 0.0
    %2338 = vmatpush2.msra.mxu0 0.0
    %2339 = vmatprep.mubr.f32.mxu0 0.0
    %2340 = vmatmul.mubr.f32.gmra.mxu0 %v2270
    %v2341 = vpop.f32.mrf.mxu0
    %v2342 = vadd.f32 0.0, %v2341
    %v2343 = vpop.f32.mrf.mxu0
    %2344 = vmatprep.mubr.f32.mxu0 0.0
    %2345 = vmatmul.mubr.f32.gmra.mxu0 %v2273
    %v2346 = vpop.f32.mrf.mxu0
    %v2347 = vadd.f32 0.0, %v2346
    %v2348 = vpop.f32.mrf.mxu0
    %2349 = vdwg.mxu0
    %s2350 = scalar_lea.vmem [#allocation9], 512
    %v2351 = vld [vmem:[%s2350] sm:$0xff]
    %v2352 = vld [vmem:[%s2350 + $0x8] sm:$0xff]
    %v2353 = vld [vmem:[%s2350 + $0x10] sm:$0xff]
    %v2354 = vld [vmem:[%s2350 + $0x18] sm:$0xff]
    %v2355 = vld [vmem:[%s2350 + $0x20] sm:$0xff]
    %v2356 = vld [vmem:[%s2350 + $0x28] sm:$0xff]
    %v2357 = vld [vmem:[%s2350 + $0x30] sm:$0xff]
    %v2358 = vld [vmem:[%s2350 + $0x38] sm:$0xff]
    %v2359 = vld [vmem:[%s2350 + $0x40] sm:$0xff]
    %v2360 = vld [vmem:[%s2350 + $0x48] sm:$0xff]
    %v2361 = vld [vmem:[%s2350 + $0x50] sm:$0xff]
    %v2362 = vld [vmem:[%s2350 + $0x58] sm:$0xff]
    %v2363 = vld [vmem:[%s2350 + $0x60] sm:$0xff]
    %v2364 = vld [vmem:[%s2350 + $0x68] sm:$0xff]
    %v2365 = vld [vmem:[%s2350 + $0x70] sm:$0xff]
    %v2366 = vld [vmem:[%s2350 + $0x78] sm:$0xff]
    %2367 = vmatprep.subr.mxu0 0.0
    %2368 = vmatpush1.msra.mxu0 %v2366
    %2369 = vmatprep.subr.mxu0 0.0
    %2370 = vmatpush1.msra.mxu0 %v2365
    %2371 = vmatprep.subr.mxu0 0.0
    %2372 = vmatpush1.msra.mxu0 %v2364
    %2373 = vmatprep.subr.mxu0 0.0
    %2374 = vmatpush1.msra.mxu0 %v2363
    %2375 = vmatprep.subr.mxu0 0.0
    %2376 = vmatpush1.msra.mxu0 %v2362
    %2377 = vmatprep.subr.mxu0 0.0
    %2378 = vmatpush1.msra.mxu0 %v2361
    %2379 = vmatprep.subr.mxu0 0.0
    %2380 = vmatpush1.msra.mxu0 %v2360
    %2381 = vmatprep.subr.mxu0 0.0
    %2382 = vmatpush1.msra.mxu0 %v2359
    %2383 = vmatprep.subr.mxu0 0.0
    %2384 = vmatpush1.msra.mxu0 %v2358
    %2385 = vmatprep.subr.mxu0 0.0
    %2386 = vmatpush1.msra.mxu0 %v2357
    %2387 = vmatprep.subr.mxu0 0.0
    %2388 = vmatpush1.msra.mxu0 %v2356
    %2389 = vmatprep.subr.mxu0 0.0
    %2390 = vmatpush1.msra.mxu0 %v2355
    %2391 = vmatprep.subr.mxu0 0.0
    %2392 = vmatpush1.msra.mxu0 %v2354
    %2393 = vmatprep.subr.mxu0 0.0
    %2394 = vmatpush1.msra.mxu0 %v2353
    %2395 = vmatprep.subr.mxu0 0.0
    %2396 = vmatpush1.msra.mxu0 %v2352
    %2397 = vmatprep.subr.mxu0 0.0
    %2398 = vmatpush1.msra.mxu0 %v2351
    %2399 = vmatprep.subr.mxu0 0.0
    %2400 = vmatpush2.msra.mxu0 0.0
    %2401 = vmatprep.subr.mxu0 0.0
    %2402 = vmatpush2.msra.mxu0 0.0
    %2403 = vmatprep.subr.mxu0 0.0
    %2404 = vmatpush2.msra.mxu0 0.0
    %2405 = vmatprep.subr.mxu0 0.0
    %2406 = vmatpush2.msra.mxu0 0.0
    %2407 = vmatprep.subr.mxu0 0.0
    %2408 = vmatpush2.msra.mxu0 0.0
    %2409 = vmatprep.subr.mxu0 0.0
    %2410 = vmatpush2.msra.mxu0 0.0
    %2411 = vmatprep.subr.mxu0 0.0
    %2412 = vmatpush2.msra.mxu0 0.0
    %2413 = vmatprep.subr.mxu0 0.0
    %2414 = vmatpush2.msra.mxu0 0.0
    %2415 = vmatprep.subr.mxu0 0.0
    %2416 = vmatpush2.msra.mxu0 0.0
    %2417 = vmatprep.subr.mxu0 0.0
    %2418 = vmatpush2.msra.mxu0 0.0
    %2419 = vmatprep.subr.mxu0 0.0
    %2420 = vmatpush2.msra.mxu0 0.0
    %2421 = vmatprep.subr.mxu0 0.0
    %2422 = vmatpush2.msra.mxu0 0.0
    %2423 = vmatprep.subr.mxu0 0.0
    %2424 = vmatpush2.msra.mxu0 0.0
    %2425 = vmatprep.subr.mxu0 0.0
    %2426 = vmatpush2.msra.mxu0 0.0
    %2427 = vmatprep.subr.mxu0 0.0
    %2428 = vmatpush2.msra.mxu0 0.0
    %2429 = vmatprep.subr.mxu0 0.0
    %2430 = vmatpush2.msra.mxu0 0.0
    %2431 = vmatprep.mubr.f32.mxu0 0.0
    %2432 = vmatmul.mubr.f32.gmra.mxu0 %v2342
    %v2433 = vpop.f32.mrf.mxu0
    %v2434 = vadd.f32 0.0, %v2433
    %v2435 = vpop.f32.mrf.mxu0
    %2436 = vmatprep.mubr.f32.mxu0 0.0
    %2437 = vmatmul.mubr.f32.gmra.mxu0 %v2347
    %v2438 = vpop.f32.mrf.mxu0
    %v2439 = vadd.f32 0.0, %v2438
    %v2440 = vpop.f32.mrf.mxu0
    %2441 = vdwg.mxu0
    %v2442 = vadd.f32 %v2264, %v2434
    %v2443 = vadd.f32 %v2265, %v2439
    %v2444 = vld [vmem:[#allocation12] sm:$0x1]
    %v2446 = vlaneseq
    %v2447 = vshrl.u32 %v2446, 7
    %v2448 = vsub.s32 0, %v2447
    %v2449 = vrot.slane %v2444, %v2448
    %v2451 = vadd.f32 %v2442, %v2449
    %v2452 = vadd.f32 %v2443, %v2449
    %v2453 = vmax.f32 %v2451, 0.0
    %v2454 = vmax.f32 %v2452, 0.0
    %v2455 = vld [vmem:[#allocation15] sm:$0xff]
    %v2456 = vld [vmem:[#allocation15 + $0x8] sm:$0xff]
    %vm2457 = vcmask 130048
    %v2459 = vsel %vm2457, %v2455, 0
    %v2462 = vsel %vm2457, %v2456, 0
    %2464 = vmatprep.subr.mxu0 0.0
    %2465 = vmatpush1.msra.mxu0 0.0
    %2466 = vmatprep.subr.mxu0 0.0
    %2467 = vmatpush1.msra.mxu0 0.0
    %2468 = vmatprep.subr.mxu0 0.0
    %2469 = vmatpush1.msra.mxu0 0.0
    %2470 = vmatprep.subr.mxu0 0.0
    %2471 = vmatpush1.msra.mxu0 0.0
    %2472 = vmatprep.subr.mxu0 0.0
    %2473 = vmatpush1.msra.mxu0 0.0
    %2474 = vmatprep.subr.mxu0 0.0
    %2475 = vmatpush1.msra.mxu0 0.0
    %2476 = vmatprep.subr.mxu0 0.0
    %2477 = vmatpush1.msra.mxu0 0.0
    %2478 = vmatprep.subr.mxu0 0.0
    %2479 = vmatpush1.msra.mxu0 0.0
    %2480 = vmatprep.subr.mxu0 0.0
    %2481 = vmatpush1.msra.mxu0 0.0
    %2482 = vmatprep.subr.mxu0 0.0
    %2483 = vmatpush1.msra.mxu0 0.0
    %2484 = vmatprep.subr.mxu0 0.0
    %2485 = vmatpush1.msra.mxu0 0.0
    %2486 = vmatprep.subr.mxu0 0.0
    %2487 = vmatpush1.msra.mxu0 0.0
    %2488 = vmatprep.subr.mxu0 0.0
    %2489 = vmatpush1.msra.mxu0 0.0
    %2490 = vmatprep.subr.mxu0 0.0
    %2491 = vmatpush1.msra.mxu0 0.0
    %2492 = vmatprep.subr.mxu0 0.0
    %2493 = vmatpush1.msra.mxu0 %v2454
    %2494 = vmatprep.subr.mxu0 0.0
    %2495 = vmatpush1.msra.mxu0 %v2453
    %2496 = vmatprep.subr.mxu0 0.0
    %2497 = vmatpush2.msra.mxu0 0.0
    %2498 = vmatprep.subr.mxu0 0.0
    %2499 = vmatpush2.msra.mxu0 0.0
    %2500 = vmatprep.subr.mxu0 0.0
    %2501 = vmatpush2.msra.mxu0 0.0
    %2502 = vmatprep.subr.mxu0 0.0
    %2503 = vmatpush2.msra.mxu0 0.0
    %2504 = vmatprep.subr.mxu0 0.0
    %2505 = vmatpush2.msra.mxu0 0.0
    %2506 = vmatprep.subr.mxu0 0.0
    %2507 = vmatpush2.msra.mxu0 0.0
    %2508 = vmatprep.subr.mxu0 0.0
    %2509 = vmatpush2.msra.mxu0 0.0
    %2510 = vmatprep.subr.mxu0 0.0
    %2511 = vmatpush2.msra.mxu0 0.0
    %2512 = vmatprep.subr.mxu0 0.0
    %2513 = vmatpush2.msra.mxu0 0.0
    %2514 = vmatprep.subr.mxu0 0.0
    %2515 = vmatpush2.msra.mxu0 0.0
    %2516 = vmatprep.subr.mxu0 0.0
    %2517 = vmatpush2.msra.mxu0 0.0
    %2518 = vmatprep.subr.mxu0 0.0
    %2519 = vmatpush2.msra.mxu0 0.0
    %2520 = vmatprep.subr.mxu0 0.0
    %2521 = vmatpush2.msra.mxu0 0.0
    %2522 = vmatprep.subr.mxu0 0.0
    %2523 = vmatpush2.msra.mxu0 0.0
    %2524 = vmatprep.subr.mxu0 0.0
    %2525 = vmatpush2.msra.mxu0 0.0
    %2526 = vmatprep.subr.mxu0 0.0
    %2527 = vmatpush2.msra.mxu0 0.0
    %2528 = vmatprep.mubr.f32.mxu0 0.0
    %2529 = vmatmul.mubr.f32.gmra.mxu0 %v2459
    %v2530 = vpop.f32.mrf.mxu0
    %v2531 = vadd.f32 0.0, %v2530
    %v2532 = vpop.f32.mrf.mxu0
    %2533 = vmatprep.mubr.f32.mxu0 0.0
    %2534 = vmatmul.mubr.f32.gmra.mxu0 %v2462
    %v2535 = vpop.f32.mrf.mxu0
    %v2536 = vadd.f32 0.0, %v2535
    %v2537 = vpop.f32.mrf.mxu0
    %2538 = vdwg.mxu0
    %v2539 = vld [vmem:[#allocation13] sm:$0xff]
    %v2540 = vld [vmem:[#allocation13 + $0x8] sm:$0xff]
    %v2541 = vld [vmem:[#allocation13 + $0x10] sm:$0xff]
    %v2542 = vld [vmem:[#allocation13 + $0x18] sm:$0xff]
    %v2543 = vld [vmem:[#allocation13 + $0x20] sm:$0xff]
    %v2544 = vld [vmem:[#allocation13 + $0x28] sm:$0xff]
    %v2545 = vld [vmem:[#allocation13 + $0x30] sm:$0xff]
    %v2546 = vld [vmem:[#allocation13 + $0x38] sm:$0xff]
    %v2547 = vld [vmem:[#allocation13 + $0x40] sm:$0xff]
    %v2548 = vld [vmem:[#allocation13 + $0x48] sm:$0xff]
    %v2549 = vld [vmem:[#allocation13 + $0x50] sm:$0xff]
    %v2550 = vld [vmem:[#allocation13 + $0x58] sm:$0xff]
    %v2551 = vld [vmem:[#allocation13 + $0x60] sm:$0xff]
    %v2552 = vld [vmem:[#allocation13 + $0x68] sm:$0xff]
    %v2553 = vld [vmem:[#allocation13 + $0x70] sm:$0xff]
    %v2554 = vld [vmem:[#allocation13 + $0x78] sm:$0xff]
    %s2555 = scalar_lea.vmem [#allocation13], 128
    %v2556 = vld [vmem:[%s2555] sm:$0xff]
    %v2557 = vld [vmem:[%s2555 + $0x8] sm:$0xff]
    %v2558 = vld [vmem:[%s2555 + $0x10] sm:$0xff]
    %v2559 = vld [vmem:[%s2555 + $0x18] sm:$0xff]
    %v2560 = vld [vmem:[%s2555 + $0x20] sm:$0xff]
    %v2561 = vld [vmem:[%s2555 + $0x28] sm:$0xff]
    %v2562 = vld [vmem:[%s2555 + $0x30] sm:$0xff]
    %v2563 = vld [vmem:[%s2555 + $0x38] sm:$0xff]
    %v2564 = vld [vmem:[%s2555 + $0x40] sm:$0xff]
    %v2565 = vld [vmem:[%s2555 + $0x48] sm:$0xff]
    %v2566 = vld [vmem:[%s2555 + $0x50] sm:$0xff]
    %v2567 = vld [vmem:[%s2555 + $0x58] sm:$0xff]
    %v2568 = vld [vmem:[%s2555 + $0x60] sm:$0xff]
    %v2569 = vld [vmem:[%s2555 + $0x68] sm:$0xff]
    %v2570 = vld [vmem:[%s2555 + $0x70] sm:$0xff]
    %v2571 = vld [vmem:[%s2555 + $0x78] sm:$0xff]
    %2572 = vmatprep.subr.mxu0 0.0
    %2573 = vmatpush1.msra.mxu0 %v2571
    %2574 = vmatprep.subr.mxu0 0.0
    %2575 = vmatpush1.msra.mxu0 %v2570
    %2576 = vmatprep.subr.mxu0 0.0
    %2577 = vmatpush1.msra.mxu0 %v2569
    %2578 = vmatprep.subr.mxu0 0.0
    %2579 = vmatpush1.msra.mxu0 %v2568
    %2580 = vmatprep.subr.mxu0 0.0
    %2581 = vmatpush1.msra.mxu0 %v2567
    %2582 = vmatprep.subr.mxu0 0.0
    %2583 = vmatpush1.msra.mxu0 %v2566
    %2584 = vmatprep.subr.mxu0 0.0
    %2585 = vmatpush1.msra.mxu0 %v2565
    %2586 = vmatprep.subr.mxu0 0.0
    %2587 = vmatpush1.msra.mxu0 %v2564
    %2588 = vmatprep.subr.mxu0 0.0
    %2589 = vmatpush1.msra.mxu0 %v2563
    %2590 = vmatprep.subr.mxu0 0.0
    %2591 = vmatpush1.msra.mxu0 %v2562
    %2592 = vmatprep.subr.mxu0 0.0
    %2593 = vmatpush1.msra.mxu0 %v2561
    %2594 = vmatprep.subr.mxu0 0.0
    %2595 = vmatpush1.msra.mxu0 %v2560
    %2596 = vmatprep.subr.mxu0 0.0
    %2597 = vmatpush1.msra.mxu0 %v2559
    %2598 = vmatprep.subr.mxu0 0.0
    %2599 = vmatpush1.msra.mxu0 %v2558
    %2600 = vmatprep.subr.mxu0 0.0
    %2601 = vmatpush1.msra.mxu0 %v2557
    %2602 = vmatprep.subr.mxu0 0.0
    %2603 = vmatpush1.msra.mxu0 %v2556
    %2604 = vmatprep.subr.mxu0 0.0
    %2605 = vmatpush2.msra.mxu0 0.0
    %2606 = vmatprep.subr.mxu0 0.0
    %2607 = vmatpush2.msra.mxu0 0.0
    %2608 = vmatprep.subr.mxu0 0.0
    %2609 = vmatpush2.msra.mxu0 0.0
    %2610 = vmatprep.subr.mxu0 0.0
    %2611 = vmatpush2.msra.mxu0 0.0
    %2612 = vmatprep.subr.mxu0 0.0
    %2613 = vmatpush2.msra.mxu0 0.0
    %2614 = vmatprep.subr.mxu0 0.0
    %2615 = vmatpush2.msra.mxu0 0.0
    %2616 = vmatprep.subr.mxu0 0.0
    %2617 = vmatpush2.msra.mxu0 0.0
    %2618 = vmatprep.subr.mxu0 0.0
    %2619 = vmatpush2.msra.mxu0 0.0
    %2620 = vmatprep.subr.mxu0 0.0
    %2621 = vmatpush2.msra.mxu0 0.0
    %2622 = vmatprep.subr.mxu0 0.0
    %2623 = vmatpush2.msra.mxu0 0.0
    %2624 = vmatprep.subr.mxu0 0.0
    %2625 = vmatpush2.msra.mxu0 0.0
    %2626 = vmatprep.subr.mxu0 0.0
    %2627 = vmatpush2.msra.mxu0 0.0
    %2628 = vmatprep.subr.mxu0 0.0
    %2629 = vmatpush2.msra.mxu0 0.0
    %2630 = vmatprep.subr.mxu0 0.0
    %2631 = vmatpush2.msra.mxu0 0.0
    %2632 = vmatprep.subr.mxu0 0.0
    %2633 = vmatpush2.msra.mxu0 0.0
    %2634 = vmatprep.subr.mxu0 0.0
    %2635 = vmatpush2.msra.mxu0 0.0
    %2636 = vmatprep.mubr.f32.mxu0 0.0
    %2637 = vmatmul.mubr.f32.gmra.mxu0 %v2453
    %v2638 = vpop.f32.mrf.mxu0
    %v2639 = vadd.f32 0.0, %v2638
    %v2640 = vpop.f32.mrf.mxu0
    %2641 = vmatprep.mubr.f32.mxu0 0.0
    %2642 = vmatmul.mubr.f32.gmra.mxu0 %v2454
    %v2643 = vpop.f32.mrf.mxu0
    %v2644 = vadd.f32 0.0, %v2643
    %v2645 = vpop.f32.mrf.mxu0
    %2646 = vdwg.mxu0
    %2647 = vmatprep.subr.mxu0 0.0
    %2648 = vmatpush1.msra.mxu0 %v2554
    %2649 = vmatprep.subr.mxu0 0.0
    %2650 = vmatpush1.msra.mxu0 %v2553
    %2651 = vmatprep.subr.mxu0 0.0
    %2652 = vmatpush1.msra.mxu0 %v2552
    %2653 = vmatprep.subr.mxu0 0.0
    %2654 = vmatpush1.msra.mxu0 %v2551
    %2655 = vmatprep.subr.mxu0 0.0
    %2656 = vmatpush1.msra.mxu0 %v2550
    %2657 = vmatprep.subr.mxu0 0.0
    %2658 = vmatpush1.msra.mxu0 %v2549
    %2659 = vmatprep.subr.mxu0 0.0
    %2660 = vmatpush1.msra.mxu0 %v2548
    %2661 = vmatprep.subr.mxu0 0.0
    %2662 = vmatpush1.msra.mxu0 %v2547
    %2663 = vmatprep.subr.mxu0 0.0
    %2664 = vmatpush1.msra.mxu0 %v2546
    %2665 = vmatprep.subr.mxu0 0.0
    %2666 = vmatpush1.msra.mxu0 %v2545
    %2667 = vmatprep.subr.mxu0 0.0
    %2668 = vmatpush1.msra.mxu0 %v2544
    %2669 = vmatprep.subr.mxu0 0.0
    %2670 = vmatpush1.msra.mxu0 %v2543
    %2671 = vmatprep.subr.mxu0 0.0
    %2672 = vmatpush1.msra.mxu0 %v2542
    %2673 = vmatprep.subr.mxu0 0.0
    %2674 = vmatpush1.msra.mxu0 %v2541
    %2675 = vmatprep.subr.mxu0 0.0
    %2676 = vmatpush1.msra.mxu0 %v2540
    %2677 = vmatprep.subr.mxu0 0.0
    %2678 = vmatpush1.msra.mxu0 %v2539
    %2679 = vmatprep.subr.mxu0 0.0
    %2680 = vmatpush2.msra.mxu0 0.0
    %2681 = vmatprep.subr.mxu0 0.0
    %2682 = vmatpush2.msra.mxu0 0.0
    %2683 = vmatprep.subr.mxu0 0.0
    %2684 = vmatpush2.msra.mxu0 0.0
    %2685 = vmatprep.subr.mxu0 0.0
    %2686 = vmatpush2.msra.mxu0 0.0
    %2687 = vmatprep.subr.mxu0 0.0
    %2688 = vmatpush2.msra.mxu0 0.0
    %2689 = vmatprep.subr.mxu0 0.0
    %2690 = vmatpush2.msra.mxu0 0.0
    %2691 = vmatprep.subr.mxu0 0.0
    %2692 = vmatpush2.msra.mxu0 0.0
    %2693 = vmatprep.subr.mxu0 0.0
    %2694 = vmatpush2.msra.mxu0 0.0
    %2695 = vmatprep.subr.mxu0 0.0
    %2696 = vmatpush2.msra.mxu0 0.0
    %2697 = vmatprep.subr.mxu0 0.0
    %2698 = vmatpush2.msra.mxu0 0.0
    %2699 = vmatprep.subr.mxu0 0.0
    %2700 = vmatpush2.msra.mxu0 0.0
    %2701 = vmatprep.subr.mxu0 0.0
    %2702 = vmatpush2.msra.mxu0 0.0
    %2703 = vmatprep.subr.mxu0 0.0
    %2704 = vmatpush2.msra.mxu0 0.0
    %2705 = vmatprep.subr.mxu0 0.0
    %2706 = vmatpush2.msra.mxu0 0.0
    %2707 = vmatprep.subr.mxu0 0.0
    %2708 = vmatpush2.msra.mxu0 0.0
    %2709 = vmatprep.subr.mxu0 0.0
    %2710 = vmatpush2.msra.mxu0 0.0
    %2711 = vmatprep.mubr.f32.mxu0 0.0
    %2712 = vmatmul.mubr.f32.gmra.mxu0 %v2531
    %v2713 = vpop.f32.mrf.mxu0
    %v2714 = vadd.f32 %v2639, %v2713
    %v2715 = vpop.f32.mrf.mxu0
    %2716 = vmatprep.mubr.f32.mxu0 0.0
    %2717 = vmatmul.mubr.f32.gmra.mxu0 %v2536
    %v2718 = vpop.f32.mrf.mxu0
    %v2719 = vadd.f32 %v2644, %v2718
    %v2720 = vpop.f32.mrf.mxu0
    %2721 = vdwg.mxu0
    %s2722 = scalar_lea.vmem [#allocation15], 32
    %v2723 = vld [vmem:[%s2722] sm:$0xff]
    %v2724 = vld [vmem:[%s2722 + $0x8] sm:$0xff]
    %v2726 = vsel %vm2457, %v2723, 0
    %v2729 = vsel %vm2457, %v2724, 0
    %2731 = vmatprep.subr.mxu0 0.0
    %2732 = vmatpush1.msra.mxu0 0.0
    %2733 = vmatprep.subr.mxu0 0.0
    %2734 = vmatpush1.msra.mxu0 0.0
    %2735 = vmatprep.subr.mxu0 0.0
    %2736 = vmatpush1.msra.mxu0 0.0
    %2737 = vmatprep.subr.mxu0 0.0
    %2738 = vmatpush1.msra.mxu0 0.0
    %2739 = vmatprep.subr.mxu0 0.0
    %2740 = vmatpush1.msra.mxu0 0.0
    %2741 = vmatprep.subr.mxu0 0.0
    %2742 = vmatpush1.msra.mxu0 0.0
    %2743 = vmatprep.subr.mxu0 0.0
    %2744 = vmatpush1.msra.mxu0 0.0
    %2745 = vmatprep.subr.mxu0 0.0
    %2746 = vmatpush1.msra.mxu0 0.0
    %2747 = vmatprep.subr.mxu0 0.0
    %2748 = vmatpush1.msra.mxu0 0.0
    %2749 = vmatprep.subr.mxu0 0.0
    %2750 = vmatpush1.msra.mxu0 0.0
    %2751 = vmatprep.subr.mxu0 0.0
    %2752 = vmatpush1.msra.mxu0 0.0
    %2753 = vmatprep.subr.mxu0 0.0
    %2754 = vmatpush1.msra.mxu0 0.0
    %2755 = vmatprep.subr.mxu0 0.0
    %2756 = vmatpush1.msra.mxu0 0.0
    %2757 = vmatprep.subr.mxu0 0.0
    %2758 = vmatpush1.msra.mxu0 0.0
    %2759 = vmatprep.subr.mxu0 0.0
    %2760 = vmatpush1.msra.mxu0 %v2454
    %2761 = vmatprep.subr.mxu0 0.0
    %2762 = vmatpush1.msra.mxu0 %v2453
    %2763 = vmatprep.subr.mxu0 0.0
    %2764 = vmatpush2.msra.mxu0 0.0
    %2765 = vmatprep.subr.mxu0 0.0
    %2766 = vmatpush2.msra.mxu0 0.0
    %2767 = vmatprep.subr.mxu0 0.0
    %2768 = vmatpush2.msra.mxu0 0.0
    %2769 = vmatprep.subr.mxu0 0.0
    %2770 = vmatpush2.msra.mxu0 0.0
    %2771 = vmatprep.subr.mxu0 0.0
    %2772 = vmatpush2.msra.mxu0 0.0
    %2773 = vmatprep.subr.mxu0 0.0
    %2774 = vmatpush2.msra.mxu0 0.0
    %2775 = vmatprep.subr.mxu0 0.0
    %2776 = vmatpush2.msra.mxu0 0.0
    %2777 = vmatprep.subr.mxu0 0.0
    %2778 = vmatpush2.msra.mxu0 0.0
    %2779 = vmatprep.subr.mxu0 0.0
    %2780 = vmatpush2.msra.mxu0 0.0
    %2781 = vmatprep.subr.mxu0 0.0
    %2782 = vmatpush2.msra.mxu0 0.0
    %2783 = vmatprep.subr.mxu0 0.0
    %2784 = vmatpush2.msra.mxu0 0.0
    %2785 = vmatprep.subr.mxu0 0.0
    %2786 = vmatpush2.msra.mxu0 0.0
    %2787 = vmatprep.subr.mxu0 0.0
    %2788 = vmatpush2.msra.mxu0 0.0
    %2789 = vmatprep.subr.mxu0 0.0
    %2790 = vmatpush2.msra.mxu0 0.0
    %2791 = vmatprep.subr.mxu0 0.0
    %2792 = vmatpush2.msra.mxu0 0.0
    %2793 = vmatprep.subr.mxu0 0.0
    %2794 = vmatpush2.msra.mxu0 0.0
    %2795 = vmatprep.mubr.f32.mxu0 0.0
    %2796 = vmatmul.mubr.f32.gmra.mxu0 %v2726
    %v2797 = vpop.f32.mrf.mxu0
    %v2798 = vadd.f32 0.0, %v2797
    %v2799 = vpop.f32.mrf.mxu0
    %2800 = vmatprep.mubr.f32.mxu0 0.0
    %2801 = vmatmul.mubr.f32.gmra.mxu0 %v2729
    %v2802 = vpop.f32.mrf.mxu0
    %v2803 = vadd.f32 0.0, %v2802
    %v2804 = vpop.f32.mrf.mxu0
    %2805 = vdwg.mxu0
    %s2806 = scalar_lea.vmem [#allocation13], 256
    %v2807 = vld [vmem:[%s2806] sm:$0xff]
    %v2808 = vld [vmem:[%s2806 + $0x8] sm:$0xff]
    %v2809 = vld [vmem:[%s2806 + $0x10] sm:$0xff]
    %v2810 = vld [vmem:[%s2806 + $0x18] sm:$0xff]
    %v2811 = vld [vmem:[%s2806 + $0x20] sm:$0xff]
    %v2812 = vld [vmem:[%s2806 + $0x28] sm:$0xff]
    %v2813 = vld [vmem:[%s2806 + $0x30] sm:$0xff]
    %v2814 = vld [vmem:[%s2806 + $0x38] sm:$0xff]
    %v2815 = vld [vmem:[%s2806 + $0x40] sm:$0xff]
    %v2816 = vld [vmem:[%s2806 + $0x48] sm:$0xff]
    %v2817 = vld [vmem:[%s2806 + $0x50] sm:$0xff]
    %v2818 = vld [vmem:[%s2806 + $0x58] sm:$0xff]
    %v2819 = vld [vmem:[%s2806 + $0x60] sm:$0xff]
    %v2820 = vld [vmem:[%s2806 + $0x68] sm:$0xff]
    %v2821 = vld [vmem:[%s2806 + $0x70] sm:$0xff]
    %v2822 = vld [vmem:[%s2806 + $0x78] sm:$0xff]
    %2823 = vmatprep.subr.mxu0 0.0
    %2824 = vmatpush1.msra.mxu0 %v2822
    %2825 = vmatprep.subr.mxu0 0.0
    %2826 = vmatpush1.msra.mxu0 %v2821
    %2827 = vmatprep.subr.mxu0 0.0
    %2828 = vmatpush1.msra.mxu0 %v2820
    %2829 = vmatprep.subr.mxu0 0.0
    %2830 = vmatpush1.msra.mxu0 %v2819
    %2831 = vmatprep.subr.mxu0 0.0
    %2832 = vmatpush1.msra.mxu0 %v2818
    %2833 = vmatprep.subr.mxu0 0.0
    %2834 = vmatpush1.msra.mxu0 %v2817
    %2835 = vmatprep.subr.mxu0 0.0
    %2836 = vmatpush1.msra.mxu0 %v2816
    %2837 = vmatprep.subr.mxu0 0.0
    %2838 = vmatpush1.msra.mxu0 %v2815
    %2839 = vmatprep.subr.mxu0 0.0
    %2840 = vmatpush1.msra.mxu0 %v2814
    %2841 = vmatprep.subr.mxu0 0.0
    %2842 = vmatpush1.msra.mxu0 %v2813
    %2843 = vmatprep.subr.mxu0 0.0
    %2844 = vmatpush1.msra.mxu0 %v2812
    %2845 = vmatprep.subr.mxu0 0.0
    %2846 = vmatpush1.msra.mxu0 %v2811
    %2847 = vmatprep.subr.mxu0 0.0
    %2848 = vmatpush1.msra.mxu0 %v2810
    %2849 = vmatprep.subr.mxu0 0.0
    %2850 = vmatpush1.msra.mxu0 %v2809
    %2851 = vmatprep.subr.mxu0 0.0
    %2852 = vmatpush1.msra.mxu0 %v2808
    %2853 = vmatprep.subr.mxu0 0.0
    %2854 = vmatpush1.msra.mxu0 %v2807
    %2855 = vmatprep.subr.mxu0 0.0
    %2856 = vmatpush2.msra.mxu0 0.0
    %2857 = vmatprep.subr.mxu0 0.0
    %2858 = vmatpush2.msra.mxu0 0.0
    %2859 = vmatprep.subr.mxu0 0.0
    %2860 = vmatpush2.msra.mxu0 0.0
    %2861 = vmatprep.subr.mxu0 0.0
    %2862 = vmatpush2.msra.mxu0 0.0
    %2863 = vmatprep.subr.mxu0 0.0
    %2864 = vmatpush2.msra.mxu0 0.0
    %2865 = vmatprep.subr.mxu0 0.0
    %2866 = vmatpush2.msra.mxu0 0.0
    %2867 = vmatprep.subr.mxu0 0.0
    %2868 = vmatpush2.msra.mxu0 0.0
    %2869 = vmatprep.subr.mxu0 0.0
    %2870 = vmatpush2.msra.mxu0 0.0
    %2871 = vmatprep.subr.mxu0 0.0
    %2872 = vmatpush2.msra.mxu0 0.0
    %2873 = vmatprep.subr.mxu0 0.0
    %2874 = vmatpush2.msra.mxu0 0.0
    %2875 = vmatprep.subr.mxu0 0.0
    %2876 = vmatpush2.msra.mxu0 0.0
    %2877 = vmatprep.subr.mxu0 0.0
    %2878 = vmatpush2.msra.mxu0 0.0
    %2879 = vmatprep.subr.mxu0 0.0
    %2880 = vmatpush2.msra.mxu0 0.0
    %2881 = vmatprep.subr.mxu0 0.0
    %2882 = vmatpush2.msra.mxu0 0.0
    %2883 = vmatprep.subr.mxu0 0.0
    %2884 = vmatpush2.msra.mxu0 0.0
    %2885 = vmatprep.subr.mxu0 0.0
    %2886 = vmatpush2.msra.mxu0 0.0
    %2887 = vmatprep.mubr.f32.mxu0 0.0
    %2888 = vmatmul.mubr.f32.gmra.mxu0 %v2798
    %v2889 = vpop.f32.mrf.mxu0
    %v2890 = vadd.f32 0.0, %v2889
    %v2891 = vpop.f32.mrf.mxu0
    %2892 = vmatprep.mubr.f32.mxu0 0.0
    %2893 = vmatmul.mubr.f32.gmra.mxu0 %v2803
    %v2894 = vpop.f32.mrf.mxu0
    %v2895 = vadd.f32 0.0, %v2894
    %v2896 = vpop.f32.mrf.mxu0
    %2897 = vdwg.mxu0
    %v2898 = vadd.f32 %v2714, %v2890
    %v2899 = vadd.f32 %v2719, %v2895
    %v2900 = vld [vmem:[%s23] sm:$0x1]
    %v2902 = vlaneseq
    %v2903 = vshrl.u32 %v2902, 7
    %v2904 = vsub.s32 0, %v2903
    %v2905 = vrot.slane %v2900, %v2904
    %v2907 = vadd.f32 %v2898, %v2905
    %v2908 = vadd.f32 %v2899, %v2905
    %v2909 = vmax.f32 %v2907, 0.0
    %v2910 = vmax.f32 %v2908, 0.0
    %2911 = vmatprep.subr.mxu0 0.0
    %2912 = vmatpush1.msra.mxu0 0.0
    %2913 = vmatprep.subr.mxu0 0.0
    %2914 = vmatpush1.msra.mxu0 0.0
    %2915 = vmatprep.subr.mxu0 0.0
    %2916 = vmatpush1.msra.mxu0 0.0
    %2917 = vmatprep.subr.mxu0 0.0
    %2918 = vmatpush1.msra.mxu0 0.0
    %2919 = vmatprep.subr.mxu0 0.0
    %2920 = vmatpush1.msra.mxu0 0.0
    %2921 = vmatprep.subr.mxu0 0.0
    %2922 = vmatpush1.msra.mxu0 0.0
    %2923 = vmatprep.subr.mxu0 0.0
    %2924 = vmatpush1.msra.mxu0 0.0
    %2925 = vmatprep.subr.mxu0 0.0
    %2926 = vmatpush1.msra.mxu0 0.0
    %2927 = vmatprep.subr.mxu0 0.0
    %2928 = vmatpush1.msra.mxu0 0.0
    %2929 = vmatprep.subr.mxu0 0.0
    %2930 = vmatpush1.msra.mxu0 0.0
    %2931 = vmatprep.subr.mxu0 0.0
    %2932 = vmatpush1.msra.mxu0 0.0
    %2933 = vmatprep.subr.mxu0 0.0
    %2934 = vmatpush1.msra.mxu0 0.0
    %2935 = vmatprep.subr.mxu0 0.0
    %2936 = vmatpush1.msra.mxu0 0.0
    %2937 = vmatprep.subr.mxu0 0.0
    %2938 = vmatpush1.msra.mxu0 0.0
    %2939 = vmatprep.subr.mxu0 0.0
    %2940 = vmatpush1.msra.mxu0 %v2910
    %2941 = vmatprep.subr.mxu0 0.0
    %2942 = vmatpush1.msra.mxu0 %v2909
    %2943 = vmatprep.subr.mxu0 0.0
    %2944 = vmatpush2.msra.mxu0 0.0
    %2945 = vmatprep.subr.mxu0 0.0
    %2946 = vmatpush2.msra.mxu0 0.0
    %2947 = vmatprep.subr.mxu0 0.0
    %2948 = vmatpush2.msra.mxu0 0.0
    %2949 = vmatprep.subr.mxu0 0.0
    %2950 = vmatpush2.msra.mxu0 0.0
    %2951 = vmatprep.subr.mxu0 0.0
    %2952 = vmatpush2.msra.mxu0 0.0
    %2953 = vmatprep.subr.mxu0 0.0
    %2954 = vmatpush2.msra.mxu0 0.0
    %2955 = vmatprep.subr.mxu0 0.0
    %2956 = vmatpush2.msra.mxu0 0.0
    %2957 = vmatprep.subr.mxu0 0.0
    %2958 = vmatpush2.msra.mxu0 0.0
    %2959 = vmatprep.subr.mxu0 0.0
    %2960 = vmatpush2.msra.mxu0 0.0
    %2961 = vmatprep.subr.mxu0 0.0
    %2962 = vmatpush2.msra.mxu0 0.0
    %2963 = vmatprep.subr.mxu0 0.0
    %2964 = vmatpush2.msra.mxu0 0.0
    %2965 = vmatprep.subr.mxu0 0.0
    %2966 = vmatpush2.msra.mxu0 0.0
    %2967 = vmatprep.subr.mxu0 0.0
    %2968 = vmatpush2.msra.mxu0 0.0
    %2969 = vmatprep.subr.mxu0 0.0
    %2970 = vmatpush2.msra.mxu0 0.0
    %2971 = vmatprep.subr.mxu0 0.0
    %2972 = vmatpush2.msra.mxu0 0.0
    %2973 = vmatprep.subr.mxu0 0.0
    %2974 = vmatpush2.msra.mxu0 0.0
    %2975 = vmatprep.mubr.f32.mxu0 0.0
    %2976 = vmatmul.mubr.f32.gmra.mxu0 %v2459
    %v2977 = vpop.f32.mrf.mxu0
    %v2978 = vadd.f32 0.0, %v2977
    %v2979 = vpop.f32.mrf.mxu0
    %2980 = vmatprep.mubr.f32.mxu0 0.0
    %2981 = vmatmul.mubr.f32.gmra.mxu0 %v2462
    %v2982 = vpop.f32.mrf.mxu0
    %v2983 = vadd.f32 0.0, %v2982
    %v2984 = vpop.f32.mrf.mxu0
    %2985 = vdwg.mxu0
    %v2986 = vld [vmem:[#allocation16] sm:$0xff]
    %v2987 = vld [vmem:[#allocation16 + $0x8] sm:$0xff]
    %v2988 = vld [vmem:[#allocation16 + $0x10] sm:$0xff]
    %v2989 = vld [vmem:[#allocation16 + $0x18] sm:$0xff]
    %v2990 = vld [vmem:[#allocation16 + $0x20] sm:$0xff]
    %v2991 = vld [vmem:[#allocation16 + $0x28] sm:$0xff]
    %v2992 = vld [vmem:[#allocation16 + $0x30] sm:$0xff]
    %v2993 = vld [vmem:[#allocation16 + $0x38] sm:$0xff]
    %v2994 = vld [vmem:[#allocation16 + $0x40] sm:$0xff]
    %v2995 = vld [vmem:[#allocation16 + $0x48] sm:$0xff]
    %v2996 = vld [vmem:[#allocation16 + $0x50] sm:$0xff]
    %v2997 = vld [vmem:[#allocation16 + $0x58] sm:$0xff]
    %v2998 = vld [vmem:[#allocation16 + $0x60] sm:$0xff]
    %v2999 = vld [vmem:[#allocation16 + $0x68] sm:$0xff]
    %v3000 = vld [vmem:[#allocation16 + $0x70] sm:$0xff]
    %v3001 = vld [vmem:[#allocation16 + $0x78] sm:$0xff]
    %s3002 = scalar_lea.vmem [#allocation16], 128
    %v3003 = vld [vmem:[%s3002] sm:$0xff]
    %v3004 = vld [vmem:[%s3002 + $0x8] sm:$0xff]
    %v3005 = vld [vmem:[%s3002 + $0x10] sm:$0xff]
    %v3006 = vld [vmem:[%s3002 + $0x18] sm:$0xff]
    %v3007 = vld [vmem:[%s3002 + $0x20] sm:$0xff]
    %v3008 = vld [vmem:[%s3002 + $0x28] sm:$0xff]
    %v3009 = vld [vmem:[%s3002 + $0x30] sm:$0xff]
    %v3010 = vld [vmem:[%s3002 + $0x38] sm:$0xff]
    %v3011 = vld [vmem:[%s3002 + $0x40] sm:$0xff]
    %v3012 = vld [vmem:[%s3002 + $0x48] sm:$0xff]
    %v3013 = vld [vmem:[%s3002 + $0x50] sm:$0xff]
    %v3014 = vld [vmem:[%s3002 + $0x58] sm:$0xff]
    %v3015 = vld [vmem:[%s3002 + $0x60] sm:$0xff]
    %v3016 = vld [vmem:[%s3002 + $0x68] sm:$0xff]
    %v3017 = vld [vmem:[%s3002 + $0x70] sm:$0xff]
    %v3018 = vld [vmem:[%s3002 + $0x78] sm:$0xff]
    %3019 = vmatprep.subr.mxu0 0.0
    %3020 = vmatpush1.msra.mxu0 %v3018
    %3021 = vmatprep.subr.mxu0 0.0
    %3022 = vmatpush1.msra.mxu0 %v3017
    %3023 = vmatprep.subr.mxu0 0.0
    %3024 = vmatpush1.msra.mxu0 %v3016
    %3025 = vmatprep.subr.mxu0 0.0
    %3026 = vmatpush1.msra.mxu0 %v3015
    %3027 = vmatprep.subr.mxu0 0.0
    %3028 = vmatpush1.msra.mxu0 %v3014
    %3029 = vmatprep.subr.mxu0 0.0
    %3030 = vmatpush1.msra.mxu0 %v3013
    %3031 = vmatprep.subr.mxu0 0.0
    %3032 = vmatpush1.msra.mxu0 %v3012
    %3033 = vmatprep.subr.mxu0 0.0
    %3034 = vmatpush1.msra.mxu0 %v3011
    %3035 = vmatprep.subr.mxu0 0.0
    %3036 = vmatpush1.msra.mxu0 %v3010
    %3037 = vmatprep.subr.mxu0 0.0
    %3038 = vmatpush1.msra.mxu0 %v3009
    %3039 = vmatprep.subr.mxu0 0.0
    %3040 = vmatpush1.msra.mxu0 %v3008
    %3041 = vmatprep.subr.mxu0 0.0
    %3042 = vmatpush1.msra.mxu0 %v3007
    %3043 = vmatprep.subr.mxu0 0.0
    %3044 = vmatpush1.msra.mxu0 %v3006
    %3045 = vmatprep.subr.mxu0 0.0
    %3046 = vmatpush1.msra.mxu0 %v3005
    %3047 = vmatprep.subr.mxu0 0.0
    %3048 = vmatpush1.msra.mxu0 %v3004
    %3049 = vmatprep.subr.mxu0 0.0
    %3050 = vmatpush1.msra.mxu0 %v3003
    %3051 = vmatprep.subr.mxu0 0.0
    %3052 = vmatpush2.msra.mxu0 0.0
    %3053 = vmatprep.subr.mxu0 0.0
    %3054 = vmatpush2.msra.mxu0 0.0
    %3055 = vmatprep.subr.mxu0 0.0
    %3056 = vmatpush2.msra.mxu0 0.0
    %3057 = vmatprep.subr.mxu0 0.0
    %3058 = vmatpush2.msra.mxu0 0.0
    %3059 = vmatprep.subr.mxu0 0.0
    %3060 = vmatpush2.msra.mxu0 0.0
    %3061 = vmatprep.subr.mxu0 0.0
    %3062 = vmatpush2.msra.mxu0 0.0
    %3063 = vmatprep.subr.mxu0 0.0
    %3064 = vmatpush2.msra.mxu0 0.0
    %3065 = vmatprep.subr.mxu0 0.0
    %3066 = vmatpush2.msra.mxu0 0.0
    %3067 = vmatprep.subr.mxu0 0.0
    %3068 = vmatpush2.msra.mxu0 0.0
    %3069 = vmatprep.subr.mxu0 0.0
    %3070 = vmatpush2.msra.mxu0 0.0
    %3071 = vmatprep.subr.mxu0 0.0
    %3072 = vmatpush2.msra.mxu0 0.0
    %3073 = vmatprep.subr.mxu0 0.0
    %3074 = vmatpush2.msra.mxu0 0.0
    %3075 = vmatprep.subr.mxu0 0.0
    %3076 = vmatpush2.msra.mxu0 0.0
    %3077 = vmatprep.subr.mxu0 0.0
    %3078 = vmatpush2.msra.mxu0 0.0
    %3079 = vmatprep.subr.mxu0 0.0
    %3080 = vmatpush2.msra.mxu0 0.0
    %3081 = vmatprep.subr.mxu0 0.0
    %3082 = vmatpush2.msra.mxu0 0.0
    %3083 = vmatprep.mubr.f32.mxu0 0.0
    %3084 = vmatmul.mubr.f32.gmra.mxu0 %v2909
    %v3085 = vpop.f32.mrf.mxu0
    %v3086 = vadd.f32 0.0, %v3085
    %v3087 = vpop.f32.mrf.mxu0
    %3088 = vmatprep.mubr.f32.mxu0 0.0
    %3089 = vmatmul.mubr.f32.gmra.mxu0 %v2910
    %v3090 = vpop.f32.mrf.mxu0
    %v3091 = vadd.f32 0.0, %v3090
    %v3092 = vpop.f32.mrf.mxu0
    %3093 = vdwg.mxu0
    %3094 = vmatprep.subr.mxu0 0.0
    %3095 = vmatpush1.msra.mxu0 %v3001
    %3096 = vmatprep.subr.mxu0 0.0
    %3097 = vmatpush1.msra.mxu0 %v3000
    %3098 = vmatprep.subr.mxu0 0.0
    %3099 = vmatpush1.msra.mxu0 %v2999
    %3100 = vmatprep.subr.mxu0 0.0
    %3101 = vmatpush1.msra.mxu0 %v2998
    %3102 = vmatprep.subr.mxu0 0.0
    %3103 = vmatpush1.msra.mxu0 %v2997
    %3104 = vmatprep.subr.mxu0 0.0
    %3105 = vmatpush1.msra.mxu0 %v2996
    %3106 = vmatprep.subr.mxu0 0.0
    %3107 = vmatpush1.msra.mxu0 %v2995
    %3108 = vmatprep.subr.mxu0 0.0
    %3109 = vmatpush1.msra.mxu0 %v2994
    %3110 = vmatprep.subr.mxu0 0.0
    %3111 = vmatpush1.msra.mxu0 %v2993
    %3112 = vmatprep.subr.mxu0 0.0
    %3113 = vmatpush1.msra.mxu0 %v2992
    %3114 = vmatprep.subr.mxu0 0.0
    %3115 = vmatpush1.msra.mxu0 %v2991
    %3116 = vmatprep.subr.mxu0 0.0
    %3117 = vmatpush1.msra.mxu0 %v2990
    %3118 = vmatprep.subr.mxu0 0.0
    %3119 = vmatpush1.msra.mxu0 %v2989
    %3120 = vmatprep.subr.mxu0 0.0
    %3121 = vmatpush1.msra.mxu0 %v2988
    %3122 = vmatprep.subr.mxu0 0.0
    %3123 = vmatpush1.msra.mxu0 %v2987
    %3124 = vmatprep.subr.mxu0 0.0
    %3125 = vmatpush1.msra.mxu0 %v2986
    %3126 = vmatprep.subr.mxu0 0.0
    %3127 = vmatpush2.msra.mxu0 0.0
    %3128 = vmatprep.subr.mxu0 0.0
    %3129 = vmatpush2.msra.mxu0 0.0
    %3130 = vmatprep.subr.mxu0 0.0
    %3131 = vmatpush2.msra.mxu0 0.0
    %3132 = vmatprep.subr.mxu0 0.0
    %3133 = vmatpush2.msra.mxu0 0.0
    %3134 = vmatprep.subr.mxu0 0.0
    %3135 = vmatpush2.msra.mxu0 0.0
    %3136 = vmatprep.subr.mxu0 0.0
    %3137 = vmatpush2.msra.mxu0 0.0
    %3138 = vmatprep.subr.mxu0 0.0
    %3139 = vmatpush2.msra.mxu0 0.0
    %3140 = vmatprep.subr.mxu0 0.0
    %3141 = vmatpush2.msra.mxu0 0.0
    %3142 = vmatprep.subr.mxu0 0.0
    %3143 = vmatpush2.msra.mxu0 0.0
    %3144 = vmatprep.subr.mxu0 0.0
    %3145 = vmatpush2.msra.mxu0 0.0
    %3146 = vmatprep.subr.mxu0 0.0
    %3147 = vmatpush2.msra.mxu0 0.0
    %3148 = vmatprep.subr.mxu0 0.0
    %3149 = vmatpush2.msra.mxu0 0.0
    %3150 = vmatprep.subr.mxu0 0.0
    %3151 = vmatpush2.msra.mxu0 0.0
    %3152 = vmatprep.subr.mxu0 0.0
    %3153 = vmatpush2.msra.mxu0 0.0
    %3154 = vmatprep.subr.mxu0 0.0
    %3155 = vmatpush2.msra.mxu0 0.0
    %3156 = vmatprep.subr.mxu0 0.0
    %3157 = vmatpush2.msra.mxu0 0.0
    %3158 = vmatprep.mubr.f32.mxu0 0.0
    %3159 = vmatmul.mubr.f32.gmra.mxu0 %v2978
    %v3160 = vpop.f32.mrf.mxu0
    %v3161 = vadd.f32 %v3086, %v3160
    %v3162 = vpop.f32.mrf.mxu0
    %3163 = vmatprep.mubr.f32.mxu0 0.0
    %3164 = vmatmul.mubr.f32.gmra.mxu0 %v2983
    %v3165 = vpop.f32.mrf.mxu0
    %v3166 = vadd.f32 %v3091, %v3165
    %v3167 = vpop.f32.mrf.mxu0
    %3168 = vdwg.mxu0
    %3169 = vmatprep.subr.mxu0 0.0
    %3170 = vmatpush1.msra.mxu0 0.0
    %3171 = vmatprep.subr.mxu0 0.0
    %3172 = vmatpush1.msra.mxu0 0.0
    %3173 = vmatprep.subr.mxu0 0.0
    %3174 = vmatpush1.msra.mxu0 0.0
    %3175 = vmatprep.subr.mxu0 0.0
    %3176 = vmatpush1.msra.mxu0 0.0
    %3177 = vmatprep.subr.mxu0 0.0
    %3178 = vmatpush1.msra.mxu0 0.0
    %3179 = vmatprep.subr.mxu0 0.0
    %3180 = vmatpush1.msra.mxu0 0.0
    %3181 = vmatprep.subr.mxu0 0.0
    %3182 = vmatpush1.msra.mxu0 0.0
    %3183 = vmatprep.subr.mxu0 0.0
    %3184 = vmatpush1.msra.mxu0 0.0
    %3185 = vmatprep.subr.mxu0 0.0
    %3186 = vmatpush1.msra.mxu0 0.0
    %3187 = vmatprep.subr.mxu0 0.0
    %3188 = vmatpush1.msra.mxu0 0.0
    %3189 = vmatprep.subr.mxu0 0.0
    %3190 = vmatpush1.msra.mxu0 0.0
    %3191 = vmatprep.subr.mxu0 0.0
    %3192 = vmatpush1.msra.mxu0 0.0
    %3193 = vmatprep.subr.mxu0 0.0
    %3194 = vmatpush1.msra.mxu0 0.0
    %3195 = vmatprep.subr.mxu0 0.0
    %3196 = vmatpush1.msra.mxu0 0.0
    %3197 = vmatprep.subr.mxu0 0.0
    %3198 = vmatpush1.msra.mxu0 %v2910
    %3199 = vmatprep.subr.mxu0 0.0
    %3200 = vmatpush1.msra.mxu0 %v2909
    %3201 = vmatprep.subr.mxu0 0.0
    %3202 = vmatpush2.msra.mxu0 0.0
    %3203 = vmatprep.subr.mxu0 0.0
    %3204 = vmatpush2.msra.mxu0 0.0
    %3205 = vmatprep.subr.mxu0 0.0
    %3206 = vmatpush2.msra.mxu0 0.0
    %3207 = vmatprep.subr.mxu0 0.0
    %3208 = vmatpush2.msra.mxu0 0.0
    %3209 = vmatprep.subr.mxu0 0.0
    %3210 = vmatpush2.msra.mxu0 0.0
    %3211 = vmatprep.subr.mxu0 0.0
    %3212 = vmatpush2.msra.mxu0 0.0
    %3213 = vmatprep.subr.mxu0 0.0
    %3214 = vmatpush2.msra.mxu0 0.0
    %3215 = vmatprep.subr.mxu0 0.0
    %3216 = vmatpush2.msra.mxu0 0.0
    %3217 = vmatprep.subr.mxu0 0.0
    %3218 = vmatpush2.msra.mxu0 0.0
    %3219 = vmatprep.subr.mxu0 0.0
    %3220 = vmatpush2.msra.mxu0 0.0
    %3221 = vmatprep.subr.mxu0 0.0
    %3222 = vmatpush2.msra.mxu0 0.0
    %3223 = vmatprep.subr.mxu0 0.0
    %3224 = vmatpush2.msra.mxu0 0.0
    %3225 = vmatprep.subr.mxu0 0.0
    %3226 = vmatpush2.msra.mxu0 0.0
    %3227 = vmatprep.subr.mxu0 0.0
    %3228 = vmatpush2.msra.mxu0 0.0
    %3229 = vmatprep.subr.mxu0 0.0
    %3230 = vmatpush2.msra.mxu0 0.0
    %3231 = vmatprep.subr.mxu0 0.0
    %3232 = vmatpush2.msra.mxu0 0.0
    %3233 = vmatprep.mubr.f32.mxu0 0.0
    %3234 = vmatmul.mubr.f32.gmra.mxu0 %v2726
    %v3235 = vpop.f32.mrf.mxu0
    %v3236 = vadd.f32 0.0, %v3235
    %v3237 = vpop.f32.mrf.mxu0
    %3238 = vmatprep.mubr.f32.mxu0 0.0
    %3239 = vmatmul.mubr.f32.gmra.mxu0 %v2729
    %v3240 = vpop.f32.mrf.mxu0
    %v3241 = vadd.f32 0.0, %v3240
    %v3242 = vpop.f32.mrf.mxu0
    %3243 = vdwg.mxu0
    %s3244 = scalar_lea.vmem [#allocation16], 256
    %v3245 = vld [vmem:[%s3244] sm:$0xff]
    %v3246 = vld [vmem:[%s3244 + $0x8] sm:$0xff]
    %v3247 = vld [vmem:[%s3244 + $0x10] sm:$0xff]
    %v3248 = vld [vmem:[%s3244 + $0x18] sm:$0xff]
    %v3249 = vld [vmem:[%s3244 + $0x20] sm:$0xff]
    %v3250 = vld [vmem:[%s3244 + $0x28] sm:$0xff]
    %v3251 = vld [vmem:[%s3244 + $0x30] sm:$0xff]
    %v3252 = vld [vmem:[%s3244 + $0x38] sm:$0xff]
    %v3253 = vld [vmem:[%s3244 + $0x40] sm:$0xff]
    %v3254 = vld [vmem:[%s3244 + $0x48] sm:$0xff]
    %v3255 = vld [vmem:[%s3244 + $0x50] sm:$0xff]
    %v3256 = vld [vmem:[%s3244 + $0x58] sm:$0xff]
    %v3257 = vld [vmem:[%s3244 + $0x60] sm:$0xff]
    %v3258 = vld [vmem:[%s3244 + $0x68] sm:$0xff]
    %v3259 = vld [vmem:[%s3244 + $0x70] sm:$0xff]
    %v3260 = vld [vmem:[%s3244 + $0x78] sm:$0xff]
    %3261 = vmatprep.subr.mxu0 0.0
    %3262 = vmatpush1.msra.mxu0 %v3260
    %3263 = vmatprep.subr.mxu0 0.0
    %3264 = vmatpush1.msra.mxu0 %v3259
    %3265 = vmatprep.subr.mxu0 0.0
    %3266 = vmatpush1.msra.mxu0 %v3258
    %3267 = vmatprep.subr.mxu0 0.0
    %3268 = vmatpush1.msra.mxu0 %v3257
    %3269 = vmatprep.subr.mxu0 0.0
    %3270 = vmatpush1.msra.mxu0 %v3256
    %3271 = vmatprep.subr.mxu0 0.0
    %3272 = vmatpush1.msra.mxu0 %v3255
    %3273 = vmatprep.subr.mxu0 0.0
    %3274 = vmatpush1.msra.mxu0 %v3254
    %3275 = vmatprep.subr.mxu0 0.0
    %3276 = vmatpush1.msra.mxu0 %v3253
    %3277 = vmatprep.subr.mxu0 0.0
    %3278 = vmatpush1.msra.mxu0 %v3252
    %3279 = vmatprep.subr.mxu0 0.0
    %3280 = vmatpush1.msra.mxu0 %v3251
    %3281 = vmatprep.subr.mxu0 0.0
    %3282 = vmatpush1.msra.mxu0 %v3250
    %3283 = vmatprep.subr.mxu0 0.0
    %3284 = vmatpush1.msra.mxu0 %v3249
    %3285 = vmatprep.subr.mxu0 0.0
    %3286 = vmatpush1.msra.mxu0 %v3248
    %3287 = vmatprep.subr.mxu0 0.0
    %3288 = vmatpush1.msra.mxu0 %v3247
    %3289 = vmatprep.subr.mxu0 0.0
    %3290 = vmatpush1.msra.mxu0 %v3246
    %3291 = vmatprep.subr.mxu0 0.0
    %3292 = vmatpush1.msra.mxu0 %v3245
    %3293 = vmatprep.subr.mxu0 0.0
    %3294 = vmatpush2.msra.mxu0 0.0
    %3295 = vmatprep.subr.mxu0 0.0
    %3296 = vmatpush2.msra.mxu0 0.0
    %3297 = vmatprep.subr.mxu0 0.0
    %3298 = vmatpush2.msra.mxu0 0.0
    %3299 = vmatprep.subr.mxu0 0.0
    %3300 = vmatpush2.msra.mxu0 0.0
    %3301 = vmatprep.subr.mxu0 0.0
    %3302 = vmatpush2.msra.mxu0 0.0
    %3303 = vmatprep.subr.mxu0 0.0
    %3304 = vmatpush2.msra.mxu0 0.0
    %3305 = vmatprep.subr.mxu0 0.0
    %3306 = vmatpush2.msra.mxu0 0.0
    %3307 = vmatprep.subr.mxu0 0.0
    %3308 = vmatpush2.msra.mxu0 0.0
    %3309 = vmatprep.subr.mxu0 0.0
    %3310 = vmatpush2.msra.mxu0 0.0
    %3311 = vmatprep.subr.mxu0 0.0
    %3312 = vmatpush2.msra.mxu0 0.0
    %3313 = vmatprep.subr.mxu0 0.0
    %3314 = vmatpush2.msra.mxu0 0.0
    %3315 = vmatprep.subr.mxu0 0.0
    %3316 = vmatpush2.msra.mxu0 0.0
    %3317 = vmatprep.subr.mxu0 0.0
    %3318 = vmatpush2.msra.mxu0 0.0
    %3319 = vmatprep.subr.mxu0 0.0
    %3320 = vmatpush2.msra.mxu0 0.0
    %3321 = vmatprep.subr.mxu0 0.0
    %3322 = vmatpush2.msra.mxu0 0.0
    %3323 = vmatprep.subr.mxu0 0.0
    %3324 = vmatpush2.msra.mxu0 0.0
    %3325 = vmatprep.mubr.f32.mxu0 0.0
    %3326 = vmatmul.mubr.f32.gmra.mxu0 %v3236
    %v3327 = vpop.f32.mrf.mxu0
    %v3328 = vadd.f32 0.0, %v3327
    %v3329 = vpop.f32.mrf.mxu0
    %3330 = vmatprep.mubr.f32.mxu0 0.0
    %3331 = vmatmul.mubr.f32.gmra.mxu0 %v3241
    %v3332 = vpop.f32.mrf.mxu0
    %v3333 = vadd.f32 0.0, %v3332
    %v3334 = vpop.f32.mrf.mxu0
    %3335 = vdwg.mxu0
    %v3336 = vadd.f32 %v3161, %v3328
    %v3337 = vadd.f32 %v3166, %v3333
    %v3338 = vld [vmem:[%s27] sm:$0x1]
    %v3340 = vlaneseq
    %v3341 = vshrl.u32 %v3340, 7
    %v3342 = vsub.s32 0, %v3341
    %v3343 = vrot.slane %v3338, %v3342
    %v3345 = vadd.f32 %v3336, %v3343
    %v3346 = vadd.f32 %v3337, %v3343
    %v3347 = vmax.f32 %v3345, 0.0
    %v3348 = vmax.f32 %v3346, 0.0
    %v3349 = vld [vmem:[#allocation19] sm:$0xff]
    %v3351 = vsel %vm2457, %v3349, 0
    %3353 = vmatprep.subr.mxu0 0.0
    %3354 = vmatpush1.msra.mxu0 0.0
    %3355 = vmatprep.subr.mxu0 0.0
    %3356 = vmatpush1.msra.mxu0 0.0
    %3357 = vmatprep.subr.mxu0 0.0
    %3358 = vmatpush1.msra.mxu0 0.0
    %3359 = vmatprep.subr.mxu0 0.0
    %3360 = vmatpush1.msra.mxu0 0.0
    %3361 = vmatprep.subr.mxu0 0.0
    %3362 = vmatpush1.msra.mxu0 0.0
    %3363 = vmatprep.subr.mxu0 0.0
    %3364 = vmatpush1.msra.mxu0 0.0
    %3365 = vmatprep.subr.mxu0 0.0
    %3366 = vmatpush1.msra.mxu0 0.0
    %3367 = vmatprep.subr.mxu0 0.0
    %3368 = vmatpush1.msra.mxu0 0.0
    %3369 = vmatprep.subr.mxu0 0.0
    %3370 = vmatpush1.msra.mxu0 0.0
    %3371 = vmatprep.subr.mxu0 0.0
    %3372 = vmatpush1.msra.mxu0 0.0
    %3373 = vmatprep.subr.mxu0 0.0
    %3374 = vmatpush1.msra.mxu0 0.0
    %3375 = vmatprep.subr.mxu0 0.0
    %3376 = vmatpush1.msra.mxu0 0.0
    %3377 = vmatprep.subr.mxu0 0.0
    %3378 = vmatpush1.msra.mxu0 0.0
    %3379 = vmatprep.subr.mxu0 0.0
    %3380 = vmatpush1.msra.mxu0 0.0
    %3381 = vmatprep.subr.mxu0 0.0
    %3382 = vmatpush1.msra.mxu0 %v3348
    %3383 = vmatprep.subr.mxu0 0.0
    %3384 = vmatpush1.msra.mxu0 %v3347
    %3385 = vmatprep.subr.mxu0 0.0
    %3386 = vmatpush2.msra.mxu0 0.0
    %3387 = vmatprep.subr.mxu0 0.0
    %3388 = vmatpush2.msra.mxu0 0.0
    %3389 = vmatprep.subr.mxu0 0.0
    %3390 = vmatpush2.msra.mxu0 0.0
    %3391 = vmatprep.subr.mxu0 0.0
    %3392 = vmatpush2.msra.mxu0 0.0
    %3393 = vmatprep.subr.mxu0 0.0
    %3394 = vmatpush2.msra.mxu0 0.0
    %3395 = vmatprep.subr.mxu0 0.0
    %3396 = vmatpush2.msra.mxu0 0.0
    %3397 = vmatprep.subr.mxu0 0.0
    %3398 = vmatpush2.msra.mxu0 0.0
    %3399 = vmatprep.subr.mxu0 0.0
    %3400 = vmatpush2.msra.mxu0 0.0
    %3401 = vmatprep.subr.mxu0 0.0
    %3402 = vmatpush2.msra.mxu0 0.0
    %3403 = vmatprep.subr.mxu0 0.0
    %3404 = vmatpush2.msra.mxu0 0.0
    %3405 = vmatprep.subr.mxu0 0.0
    %3406 = vmatpush2.msra.mxu0 0.0
    %3407 = vmatprep.subr.mxu0 0.0
    %3408 = vmatpush2.msra.mxu0 0.0
    %3409 = vmatprep.subr.mxu0 0.0
    %3410 = vmatpush2.msra.mxu0 0.0
    %3411 = vmatprep.subr.mxu0 0.0
    %3412 = vmatpush2.msra.mxu0 0.0
    %3413 = vmatprep.subr.mxu0 0.0
    %3414 = vmatpush2.msra.mxu0 0.0
    %3415 = vmatprep.subr.mxu0 0.0
    %3416 = vmatpush2.msra.mxu0 0.0
    %3417 = vmatprep.mubr.f32.mxu0 0.0
    %3418 = vmatmul.mubr.f32.gmra.mxu0 %v3351
    %v3419 = vpop.f32.mrf.mxu0
    %v3420 = vadd.f32 0.0, %v3419
    %v3421 = vpop.f32.mrf.mxu0
    %3422 = vdwg.mxu0
    %v3423 = vld [vmem:[#allocation18] sm:$0xff]
    %v3424 = vld [vmem:[#allocation18 + $0x8] sm:$0xff]
    %v3425 = vld [vmem:[#allocation18 + $0x10] sm:$0xff]
    %v3426 = vld [vmem:[#allocation18 + $0x18] sm:$0xff]
    %v3427 = vld [vmem:[#allocation18 + $0x20] sm:$0xff]
    %v3428 = vld [vmem:[#allocation18 + $0x28] sm:$0xff]
    %v3429 = vld [vmem:[#allocation18 + $0x30] sm:$0xff]
    %v3430 = vld [vmem:[#allocation18 + $0x38] sm:$0xff]
    %v3431 = vld [vmem:[#allocation18 + $0x40] sm:$0xff]
    %v3432 = vld [vmem:[#allocation18 + $0x48] sm:$0xff]
    %v3433 = vld [vmem:[#allocation18 + $0x50] sm:$0xff]
    %v3434 = vld [vmem:[#allocation18 + $0x58] sm:$0xff]
    %v3435 = vld [vmem:[#allocation18 + $0x60] sm:$0xff]
    %v3436 = vld [vmem:[#allocation18 + $0x68] sm:$0xff]
    %v3437 = vld [vmem:[#allocation18 + $0x70] sm:$0xff]
    %v3438 = vld [vmem:[#allocation18 + $0x78] sm:$0xff]
    %s3439 = scalar_lea.vmem [#allocation19], 8
    %v3440 = vld [vmem:[%s3439] sm:$0xff]
    %v3442 = vsel %vm2457, %v3440, 0
    %3444 = vmatprep.subr.mxu0 0.0
    %3445 = vmatpush1.msra.mxu0 0.0
    %3446 = vmatprep.subr.mxu0 0.0
    %3447 = vmatpush1.msra.mxu0 0.0
    %3448 = vmatprep.subr.mxu0 0.0
    %3449 = vmatpush1.msra.mxu0 0.0
    %3450 = vmatprep.subr.mxu0 0.0
    %3451 = vmatpush1.msra.mxu0 0.0
    %3452 = vmatprep.subr.mxu0 0.0
    %3453 = vmatpush1.msra.mxu0 0.0
    %3454 = vmatprep.subr.mxu0 0.0
    %3455 = vmatpush1.msra.mxu0 0.0
    %3456 = vmatprep.subr.mxu0 0.0
    %3457 = vmatpush1.msra.mxu0 0.0
    %3458 = vmatprep.subr.mxu0 0.0
    %3459 = vmatpush1.msra.mxu0 0.0
    %3460 = vmatprep.subr.mxu0 0.0
    %3461 = vmatpush1.msra.mxu0 0.0
    %3462 = vmatprep.subr.mxu0 0.0
    %3463 = vmatpush1.msra.mxu0 0.0
    %3464 = vmatprep.subr.mxu0 0.0
    %3465 = vmatpush1.msra.mxu0 0.0
    %3466 = vmatprep.subr.mxu0 0.0
    %3467 = vmatpush1.msra.mxu0 0.0
    %3468 = vmatprep.subr.mxu0 0.0
    %3469 = vmatpush1.msra.mxu0 0.0
    %3470 = vmatprep.subr.mxu0 0.0
    %3471 = vmatpush1.msra.mxu0 0.0
    %3472 = vmatprep.subr.mxu0 0.0
    %3473 = vmatpush1.msra.mxu0 %v3348
    %3474 = vmatprep.subr.mxu0 0.0
    %3475 = vmatpush1.msra.mxu0 %v3347
    %3476 = vmatprep.subr.mxu0 0.0
    %3477 = vmatpush2.msra.mxu0 0.0
    %3478 = vmatprep.subr.mxu0 0.0
    %3479 = vmatpush2.msra.mxu0 0.0
    %3480 = vmatprep.subr.mxu0 0.0
    %3481 = vmatpush2.msra.mxu0 0.0
    %3482 = vmatprep.subr.mxu0 0.0
    %3483 = vmatpush2.msra.mxu0 0.0
    %3484 = vmatprep.subr.mxu0 0.0
    %3485 = vmatpush2.msra.mxu0 0.0
    %3486 = vmatprep.subr.mxu0 0.0
    %3487 = vmatpush2.msra.mxu0 0.0
    %3488 = vmatprep.subr.mxu0 0.0
    %3489 = vmatpush2.msra.mxu0 0.0
    %3490 = vmatprep.subr.mxu0 0.0
    %3491 = vmatpush2.msra.mxu0 0.0
    %3492 = vmatprep.subr.mxu0 0.0
    %3493 = vmatpush2.msra.mxu0 0.0
    %3494 = vmatprep.subr.mxu0 0.0
    %3495 = vmatpush2.msra.mxu0 0.0
    %3496 = vmatprep.subr.mxu0 0.0
    %3497 = vmatpush2.msra.mxu0 0.0
    %3498 = vmatprep.subr.mxu0 0.0
    %3499 = vmatpush2.msra.mxu0 0.0
    %3500 = vmatprep.subr.mxu0 0.0
    %3501 = vmatpush2.msra.mxu0 0.0
    %3502 = vmatprep.subr.mxu0 0.0
    %3503 = vmatpush2.msra.mxu0 0.0
    %3504 = vmatprep.subr.mxu0 0.0
    %3505 = vmatpush2.msra.mxu0 0.0
    %3506 = vmatprep.subr.mxu0 0.0
    %3507 = vmatpush2.msra.mxu0 0.0
    %3508 = vmatprep.mubr.f32.mxu0 0.0
    %3509 = vmatmul.mubr.f32.gmra.mxu0 %v3442
    %v3510 = vpop.f32.mrf.mxu0
    %v3511 = vadd.f32 0.0, %v3510
    %v3512 = vpop.f32.mrf.mxu0
    %3513 = vdwg.mxu0
    %s3514 = scalar_lea.vmem [#allocation18], 128
    %v3515 = vld [vmem:[%s3514] sm:$0xff]
    %v3516 = vld [vmem:[%s3514 + $0x8] sm:$0xff]
    %v3517 = vld [vmem:[%s3514 + $0x10] sm:$0xff]
    %v3518 = vld [vmem:[%s3514 + $0x18] sm:$0xff]
    %v3519 = vld [vmem:[%s3514 + $0x20] sm:$0xff]
    %v3520 = vld [vmem:[%s3514 + $0x28] sm:$0xff]
    %v3521 = vld [vmem:[%s3514 + $0x30] sm:$0xff]
    %v3522 = vld [vmem:[%s3514 + $0x38] sm:$0xff]
    %v3523 = vld [vmem:[%s3514 + $0x40] sm:$0xff]
    %v3524 = vld [vmem:[%s3514 + $0x48] sm:$0xff]
    %v3525 = vld [vmem:[%s3514 + $0x50] sm:$0xff]
    %v3526 = vld [vmem:[%s3514 + $0x58] sm:$0xff]
    %v3527 = vld [vmem:[%s3514 + $0x60] sm:$0xff]
    %v3528 = vld [vmem:[%s3514 + $0x68] sm:$0xff]
    %v3529 = vld [vmem:[%s3514 + $0x70] sm:$0xff]
    %v3530 = vld [vmem:[%s3514 + $0x78] sm:$0xff]
    %3531 = vmatprep.subr.mxu0 0.0
    %3532 = vmatpush1.msra.mxu0 %v3530
    %3533 = vmatprep.subr.mxu0 0.0
    %3534 = vmatpush1.msra.mxu0 %v3529
    %3535 = vmatprep.subr.mxu0 0.0
    %3536 = vmatpush1.msra.mxu0 %v3528
    %3537 = vmatprep.subr.mxu0 0.0
    %3538 = vmatpush1.msra.mxu0 %v3527
    %3539 = vmatprep.subr.mxu0 0.0
    %3540 = vmatpush1.msra.mxu0 %v3526
    %3541 = vmatprep.subr.mxu0 0.0
    %3542 = vmatpush1.msra.mxu0 %v3525
    %3543 = vmatprep.subr.mxu0 0.0
    %3544 = vmatpush1.msra.mxu0 %v3524
    %3545 = vmatprep.subr.mxu0 0.0
    %3546 = vmatpush1.msra.mxu0 %v3523
    %3547 = vmatprep.subr.mxu0 0.0
    %3548 = vmatpush1.msra.mxu0 %v3522
    %3549 = vmatprep.subr.mxu0 0.0
    %3550 = vmatpush1.msra.mxu0 %v3521
    %3551 = vmatprep.subr.mxu0 0.0
    %3552 = vmatpush1.msra.mxu0 %v3520
    %3553 = vmatprep.subr.mxu0 0.0
    %3554 = vmatpush1.msra.mxu0 %v3519
    %3555 = vmatprep.subr.mxu0 0.0
    %3556 = vmatpush1.msra.mxu0 %v3518
    %3557 = vmatprep.subr.mxu0 0.0
    %3558 = vmatpush1.msra.mxu0 %v3517
    %3559 = vmatprep.subr.mxu0 0.0
    %3560 = vmatpush1.msra.mxu0 %v3516
    %3561 = vmatprep.subr.mxu0 0.0
    %3562 = vmatpush1.msra.mxu0 %v3515
    %3563 = vmatprep.subr.mxu0 0.0
    %3564 = vmatpush2.msra.mxu0 0.0
    %3565 = vmatprep.subr.mxu0 0.0
    %3566 = vmatpush2.msra.mxu0 0.0
    %3567 = vmatprep.subr.mxu0 0.0
    %3568 = vmatpush2.msra.mxu0 0.0
    %3569 = vmatprep.subr.mxu0 0.0
    %3570 = vmatpush2.msra.mxu0 0.0
    %3571 = vmatprep.subr.mxu0 0.0
    %3572 = vmatpush2.msra.mxu0 0.0
    %3573 = vmatprep.subr.mxu0 0.0
    %3574 = vmatpush2.msra.mxu0 0.0
    %3575 = vmatprep.subr.mxu0 0.0
    %3576 = vmatpush2.msra.mxu0 0.0
    %3577 = vmatprep.subr.mxu0 0.0
    %3578 = vmatpush2.msra.mxu0 0.0
    %3579 = vmatprep.subr.mxu0 0.0
    %3580 = vmatpush2.msra.mxu0 0.0
    %3581 = vmatprep.subr.mxu0 0.0
    %3582 = vmatpush2.msra.mxu0 0.0
    %3583 = vmatprep.subr.mxu0 0.0
    %3584 = vmatpush2.msra.mxu0 0.0
    %3585 = vmatprep.subr.mxu0 0.0
    %3586 = vmatpush2.msra.mxu0 0.0
    %3587 = vmatprep.subr.mxu0 0.0
    %3588 = vmatpush2.msra.mxu0 0.0
    %3589 = vmatprep.subr.mxu0 0.0
    %3590 = vmatpush2.msra.mxu0 0.0
    %3591 = vmatprep.subr.mxu0 0.0
    %3592 = vmatpush2.msra.mxu0 0.0
    %3593 = vmatprep.subr.mxu0 0.0
    %3594 = vmatpush2.msra.mxu0 0.0
    %3595 = vmatprep.mubr.f32.mxu0 0.0
    %3596 = vmatmul.mubr.f32.gmra.mxu0 %v3511
    %v3597 = vpop.f32.mrf.mxu0
    %v3598 = vadd.f32 0.0, %v3597
    %v3599 = vpop.f32.mrf.mxu0
    %3600 = vdwg.mxu0
    %3601 = vmatprep.subr.mxu0 0.0
    %3602 = vmatpush1.msra.mxu0 %v3438
    %3603 = vmatprep.subr.mxu0 0.0
    %3604 = vmatpush1.msra.mxu0 %v3437
    %3605 = vmatprep.subr.mxu0 0.0
    %3606 = vmatpush1.msra.mxu0 %v3436
    %3607 = vmatprep.subr.mxu0 0.0
    %3608 = vmatpush1.msra.mxu0 %v3435
    %3609 = vmatprep.subr.mxu0 0.0
    %3610 = vmatpush1.msra.mxu0 %v3434
    %3611 = vmatprep.subr.mxu0 0.0
    %3612 = vmatpush1.msra.mxu0 %v3433
    %3613 = vmatprep.subr.mxu0 0.0
    %3614 = vmatpush1.msra.mxu0 %v3432
    %3615 = vmatprep.subr.mxu0 0.0
    %3616 = vmatpush1.msra.mxu0 %v3431
    %3617 = vmatprep.subr.mxu0 0.0
    %3618 = vmatpush1.msra.mxu0 %v3430
    %3619 = vmatprep.subr.mxu0 0.0
    %3620 = vmatpush1.msra.mxu0 %v3429
    %3621 = vmatprep.subr.mxu0 0.0
    %3622 = vmatpush1.msra.mxu0 %v3428
    %3623 = vmatprep.subr.mxu0 0.0
    %3624 = vmatpush1.msra.mxu0 %v3427
    %3625 = vmatprep.subr.mxu0 0.0
    %3626 = vmatpush1.msra.mxu0 %v3426
    %3627 = vmatprep.subr.mxu0 0.0
    %3628 = vmatpush1.msra.mxu0 %v3425
    %3629 = vmatprep.subr.mxu0 0.0
    %3630 = vmatpush1.msra.mxu0 %v3424
    %3631 = vmatprep.subr.mxu0 0.0
    %3632 = vmatpush1.msra.mxu0 %v3423
    %3633 = vmatprep.subr.mxu0 0.0
    %3634 = vmatpush2.msra.mxu0 0.0
    %3635 = vmatprep.subr.mxu0 0.0
    %3636 = vmatpush2.msra.mxu0 0.0
    %3637 = vmatprep.subr.mxu0 0.0
    %3638 = vmatpush2.msra.mxu0 0.0
    %3639 = vmatprep.subr.mxu0 0.0
    %3640 = vmatpush2.msra.mxu0 0.0
    %3641 = vmatprep.subr.mxu0 0.0
    %3642 = vmatpush2.msra.mxu0 0.0
    %3643 = vmatprep.subr.mxu0 0.0
    %3644 = vmatpush2.msra.mxu0 0.0
    %3645 = vmatprep.subr.mxu0 0.0
    %3646 = vmatpush2.msra.mxu0 0.0
    %3647 = vmatprep.subr.mxu0 0.0
    %3648 = vmatpush2.msra.mxu0 0.0
    %3649 = vmatprep.subr.mxu0 0.0
    %3650 = vmatpush2.msra.mxu0 0.0
    %3651 = vmatprep.subr.mxu0 0.0
    %3652 = vmatpush2.msra.mxu0 0.0
    %3653 = vmatprep.subr.mxu0 0.0
    %3654 = vmatpush2.msra.mxu0 0.0
    %3655 = vmatprep.subr.mxu0 0.0
    %3656 = vmatpush2.msra.mxu0 0.0
    %3657 = vmatprep.subr.mxu0 0.0
    %3658 = vmatpush2.msra.mxu0 0.0
    %3659 = vmatprep.subr.mxu0 0.0
    %3660 = vmatpush2.msra.mxu0 0.0
    %3661 = vmatprep.subr.mxu0 0.0
    %3662 = vmatpush2.msra.mxu0 0.0
    %3663 = vmatprep.subr.mxu0 0.0
    %3664 = vmatpush2.msra.mxu0 0.0
    %3665 = vmatprep.mubr.f32.mxu0 0.0
    %3666 = vmatmul.mubr.f32.gmra.mxu0 %v3420
    %v3667 = vpop.f32.mrf.mxu0
    %v3668 = vadd.f32 %v3598, %v3667
    %v3669 = vpop.f32.mrf.mxu0
    %3670 = vdwg.mxu0
    %s3671 = scalar_lea.vmem [#allocation19], 16
    %v3672 = vld [vmem:[%s3671] sm:$0xff]
    %v3674 = vsel %vm2457, %v3672, 0
    %3676 = vmatprep.subr.mxu0 0.0
    %3677 = vmatpush1.msra.mxu0 0.0
    %3678 = vmatprep.subr.mxu0 0.0
    %3679 = vmatpush1.msra.mxu0 0.0
    %3680 = vmatprep.subr.mxu0 0.0
    %3681 = vmatpush1.msra.mxu0 0.0
    %3682 = vmatprep.subr.mxu0 0.0
    %3683 = vmatpush1.msra.mxu0 0.0
    %3684 = vmatprep.subr.mxu0 0.0
    %3685 = vmatpush1.msra.mxu0 0.0
    %3686 = vmatprep.subr.mxu0 0.0
    %3687 = vmatpush1.msra.mxu0 0.0
    %3688 = vmatprep.subr.mxu0 0.0
    %3689 = vmatpush1.msra.mxu0 0.0
    %3690 = vmatprep.subr.mxu0 0.0
    %3691 = vmatpush1.msra.mxu0 0.0
    %3692 = vmatprep.subr.mxu0 0.0
    %3693 = vmatpush1.msra.mxu0 0.0
    %3694 = vmatprep.subr.mxu0 0.0
    %3695 = vmatpush1.msra.mxu0 0.0
    %3696 = vmatprep.subr.mxu0 0.0
    %3697 = vmatpush1.msra.mxu0 0.0
    %3698 = vmatprep.subr.mxu0 0.0
    %3699 = vmatpush1.msra.mxu0 0.0
    %3700 = vmatprep.subr.mxu0 0.0
    %3701 = vmatpush1.msra.mxu0 0.0
    %3702 = vmatprep.subr.mxu0 0.0
    %3703 = vmatpush1.msra.mxu0 0.0
    %3704 = vmatprep.subr.mxu0 0.0
    %3705 = vmatpush1.msra.mxu0 %v3348
    %3706 = vmatprep.subr.mxu0 0.0
    %3707 = vmatpush1.msra.mxu0 %v3347
    %3708 = vmatprep.subr.mxu0 0.0
    %3709 = vmatpush2.msra.mxu0 0.0
    %3710 = vmatprep.subr.mxu0 0.0
    %3711 = vmatpush2.msra.mxu0 0.0
    %3712 = vmatprep.subr.mxu0 0.0
    %3713 = vmatpush2.msra.mxu0 0.0
    %3714 = vmatprep.subr.mxu0 0.0
    %3715 = vmatpush2.msra.mxu0 0.0
    %3716 = vmatprep.subr.mxu0 0.0
    %3717 = vmatpush2.msra.mxu0 0.0
    %3718 = vmatprep.subr.mxu0 0.0
    %3719 = vmatpush2.msra.mxu0 0.0
    %3720 = vmatprep.subr.mxu0 0.0
    %3721 = vmatpush2.msra.mxu0 0.0
    %3722 = vmatprep.subr.mxu0 0.0
    %3723 = vmatpush2.msra.mxu0 0.0
    %3724 = vmatprep.subr.mxu0 0.0
    %3725 = vmatpush2.msra.mxu0 0.0
    %3726 = vmatprep.subr.mxu0 0.0
    %3727 = vmatpush2.msra.mxu0 0.0
    %3728 = vmatprep.subr.mxu0 0.0
    %3729 = vmatpush2.msra.mxu0 0.0
    %3730 = vmatprep.subr.mxu0 0.0
    %3731 = vmatpush2.msra.mxu0 0.0
    %3732 = vmatprep.subr.mxu0 0.0
    %3733 = vmatpush2.msra.mxu0 0.0
    %3734 = vmatprep.subr.mxu0 0.0
    %3735 = vmatpush2.msra.mxu0 0.0
    %3736 = vmatprep.subr.mxu0 0.0
    %3737 = vmatpush2.msra.mxu0 0.0
    %3738 = vmatprep.subr.mxu0 0.0
    %3739 = vmatpush2.msra.mxu0 0.0
    %3740 = vmatprep.mubr.f32.mxu0 0.0
    %3741 = vmatmul.mubr.f32.gmra.mxu0 %v3674
    %v3742 = vpop.f32.mrf.mxu0
    %v3743 = vadd.f32 0.0, %v3742
    %v3744 = vpop.f32.mrf.mxu0
    %3745 = vdwg.mxu0
    %s3746 = scalar_lea.vmem [#allocation18], 256
    %v3747 = vld [vmem:[%s3746] sm:$0xff]
    %v3748 = vld [vmem:[%s3746 + $0x8] sm:$0xff]
    %v3749 = vld [vmem:[%s3746 + $0x10] sm:$0xff]
    %v3750 = vld [vmem:[%s3746 + $0x18] sm:$0xff]
    %v3751 = vld [vmem:[%s3746 + $0x20] sm:$0xff]
    %v3752 = vld [vmem:[%s3746 + $0x28] sm:$0xff]
    %v3753 = vld [vmem:[%s3746 + $0x30] sm:$0xff]
    %v3754 = vld [vmem:[%s3746 + $0x38] sm:$0xff]
    %v3755 = vld [vmem:[%s3746 + $0x40] sm:$0xff]
    %v3756 = vld [vmem:[%s3746 + $0x48] sm:$0xff]
    %v3757 = vld [vmem:[%s3746 + $0x50] sm:$0xff]
    %v3758 = vld [vmem:[%s3746 + $0x58] sm:$0xff]
    %v3759 = vld [vmem:[%s3746 + $0x60] sm:$0xff]
    %v3760 = vld [vmem:[%s3746 + $0x68] sm:$0xff]
    %v3761 = vld [vmem:[%s3746 + $0x70] sm:$0xff]
    %v3762 = vld [vmem:[%s3746 + $0x78] sm:$0xff]
    %3763 = vmatprep.subr.mxu0 0.0
    %3764 = vmatpush1.msra.mxu0 %v3762
    %3765 = vmatprep.subr.mxu0 0.0
    %3766 = vmatpush1.msra.mxu0 %v3761
    %3767 = vmatprep.subr.mxu0 0.0
    %3768 = vmatpush1.msra.mxu0 %v3760
    %3769 = vmatprep.subr.mxu0 0.0
    %3770 = vmatpush1.msra.mxu0 %v3759
    %3771 = vmatprep.subr.mxu0 0.0
    %3772 = vmatpush1.msra.mxu0 %v3758
    %3773 = vmatprep.subr.mxu0 0.0
    %3774 = vmatpush1.msra.mxu0 %v3757
    %3775 = vmatprep.subr.mxu0 0.0
    %3776 = vmatpush1.msra.mxu0 %v3756
    %3777 = vmatprep.subr.mxu0 0.0
    %3778 = vmatpush1.msra.mxu0 %v3755
    %3779 = vmatprep.subr.mxu0 0.0
    %3780 = vmatpush1.msra.mxu0 %v3754
    %3781 = vmatprep.subr.mxu0 0.0
    %3782 = vmatpush1.msra.mxu0 %v3753
    %3783 = vmatprep.subr.mxu0 0.0
    %3784 = vmatpush1.msra.mxu0 %v3752
    %3785 = vmatprep.subr.mxu0 0.0
    %3786 = vmatpush1.msra.mxu0 %v3751
    %3787 = vmatprep.subr.mxu0 0.0
    %3788 = vmatpush1.msra.mxu0 %v3750
    %3789 = vmatprep.subr.mxu0 0.0
    %3790 = vmatpush1.msra.mxu0 %v3749
    %3791 = vmatprep.subr.mxu0 0.0
    %3792 = vmatpush1.msra.mxu0 %v3748
    %3793 = vmatprep.subr.mxu0 0.0
    %3794 = vmatpush1.msra.mxu0 %v3747
    %3795 = vmatprep.subr.mxu0 0.0
    %3796 = vmatpush2.msra.mxu0 0.0
    %3797 = vmatprep.subr.mxu0 0.0
    %3798 = vmatpush2.msra.mxu0 0.0
    %3799 = vmatprep.subr.mxu0 0.0
    %3800 = vmatpush2.msra.mxu0 0.0
    %3801 = vmatprep.subr.mxu0 0.0
    %3802 = vmatpush2.msra.mxu0 0.0
    %3803 = vmatprep.subr.mxu0 0.0
    %3804 = vmatpush2.msra.mxu0 0.0
    %3805 = vmatprep.subr.mxu0 0.0
    %3806 = vmatpush2.msra.mxu0 0.0
    %3807 = vmatprep.subr.mxu0 0.0
    %3808 = vmatpush2.msra.mxu0 0.0
    %3809 = vmatprep.subr.mxu0 0.0
    %3810 = vmatpush2.msra.mxu0 0.0
    %3811 = vmatprep.subr.mxu0 0.0
    %3812 = vmatpush2.msra.mxu0 0.0
    %3813 = vmatprep.subr.mxu0 0.0
    %3814 = vmatpush2.msra.mxu0 0.0
    %3815 = vmatprep.subr.mxu0 0.0
    %3816 = vmatpush2.msra.mxu0 0.0
    %3817 = vmatprep.subr.mxu0 0.0
    %3818 = vmatpush2.msra.mxu0 0.0
    %3819 = vmatprep.subr.mxu0 0.0
    %3820 = vmatpush2.msra.mxu0 0.0
    %3821 = vmatprep.subr.mxu0 0.0
    %3822 = vmatpush2.msra.mxu0 0.0
    %3823 = vmatprep.subr.mxu0 0.0
    %3824 = vmatpush2.msra.mxu0 0.0
    %3825 = vmatprep.subr.mxu0 0.0
    %3826 = vmatpush2.msra.mxu0 0.0
    %3827 = vmatprep.mubr.f32.mxu0 0.0
    %3828 = vmatmul.mubr.f32.gmra.mxu0 %v3743
    %v3829 = vpop.f32.mrf.mxu0
    %v3830 = vadd.f32 0.0, %v3829
    %v3831 = vpop.f32.mrf.mxu0
    %3832 = vdwg.mxu0
    %v3833 = vadd.f32 %v3668, %v3830
    %s3834 = scalar_lea.vmem [#allocation19], 24
    %v3835 = vld [vmem:[%s3834] sm:$0xff]
    %v3837 = vsel %vm2457, %v3835, 0
    %3839 = vmatprep.subr.mxu0 0.0
    %3840 = vmatpush1.msra.mxu0 0.0
    %3841 = vmatprep.subr.mxu0 0.0
    %3842 = vmatpush1.msra.mxu0 0.0
    %3843 = vmatprep.subr.mxu0 0.0
    %3844 = vmatpush1.msra.mxu0 0.0
    %3845 = vmatprep.subr.mxu0 0.0
    %3846 = vmatpush1.msra.mxu0 0.0
    %3847 = vmatprep.subr.mxu0 0.0
    %3848 = vmatpush1.msra.mxu0 0.0
    %3849 = vmatprep.subr.mxu0 0.0
    %3850 = vmatpush1.msra.mxu0 0.0
    %3851 = vmatprep.subr.mxu0 0.0
    %3852 = vmatpush1.msra.mxu0 0.0
    %3853 = vmatprep.subr.mxu0 0.0
    %3854 = vmatpush1.msra.mxu0 0.0
    %3855 = vmatprep.subr.mxu0 0.0
    %3856 = vmatpush1.msra.mxu0 0.0
    %3857 = vmatprep.subr.mxu0 0.0
    %3858 = vmatpush1.msra.mxu0 0.0
    %3859 = vmatprep.subr.mxu0 0.0
    %3860 = vmatpush1.msra.mxu0 0.0
    %3861 = vmatprep.subr.mxu0 0.0
    %3862 = vmatpush1.msra.mxu0 0.0
    %3863 = vmatprep.subr.mxu0 0.0
    %3864 = vmatpush1.msra.mxu0 0.0
    %3865 = vmatprep.subr.mxu0 0.0
    %3866 = vmatpush1.msra.mxu0 0.0
    %3867 = vmatprep.subr.mxu0 0.0
    %3868 = vmatpush1.msra.mxu0 %v3348
    %3869 = vmatprep.subr.mxu0 0.0
    %3870 = vmatpush1.msra.mxu0 %v3347
    %3871 = vmatprep.subr.mxu0 0.0
    %3872 = vmatpush2.msra.mxu0 0.0
    %3873 = vmatprep.subr.mxu0 0.0
    %3874 = vmatpush2.msra.mxu0 0.0
    %3875 = vmatprep.subr.mxu0 0.0
    %3876 = vmatpush2.msra.mxu0 0.0
    %3877 = vmatprep.subr.mxu0 0.0
    %3878 = vmatpush2.msra.mxu0 0.0
    %3879 = vmatprep.subr.mxu0 0.0
    %3880 = vmatpush2.msra.mxu0 0.0
    %3881 = vmatprep.subr.mxu0 0.0
    %3882 = vmatpush2.msra.mxu0 0.0
    %3883 = vmatprep.subr.mxu0 0.0
    %3884 = vmatpush2.msra.mxu0 0.0
    %3885 = vmatprep.subr.mxu0 0.0
    %3886 = vmatpush2.msra.mxu0 0.0
    %3887 = vmatprep.subr.mxu0 0.0
    %3888 = vmatpush2.msra.mxu0 0.0
    %3889 = vmatprep.subr.mxu0 0.0
    %3890 = vmatpush2.msra.mxu0 0.0
    %3891 = vmatprep.subr.mxu0 0.0
    %3892 = vmatpush2.msra.mxu0 0.0
    %3893 = vmatprep.subr.mxu0 0.0
    %3894 = vmatpush2.msra.mxu0 0.0
    %3895 = vmatprep.subr.mxu0 0.0
    %3896 = vmatpush2.msra.mxu0 0.0
    %3897 = vmatprep.subr.mxu0 0.0
    %3898 = vmatpush2.msra.mxu0 0.0
    %3899 = vmatprep.subr.mxu0 0.0
    %3900 = vmatpush2.msra.mxu0 0.0
    %3901 = vmatprep.subr.mxu0 0.0
    %3902 = vmatpush2.msra.mxu0 0.0
    %3903 = vmatprep.mubr.f32.mxu0 0.0
    %3904 = vmatmul.mubr.f32.gmra.mxu0 %v3837
    %v3905 = vpop.f32.mrf.mxu0
    %v3906 = vadd.f32 0.0, %v3905
    %v3907 = vpop.f32.mrf.mxu0
    %3908 = vdwg.mxu0
    %s3909 = scalar_lea.vmem [#allocation18], 384
    %v3910 = vld [vmem:[%s3909] sm:$0xff]
    %v3911 = vld [vmem:[%s3909 + $0x8] sm:$0xff]
    %v3912 = vld [vmem:[%s3909 + $0x10] sm:$0xff]
    %v3913 = vld [vmem:[%s3909 + $0x18] sm:$0xff]
    %v3914 = vld [vmem:[%s3909 + $0x20] sm:$0xff]
    %v3915 = vld [vmem:[%s3909 + $0x28] sm:$0xff]
    %v3916 = vld [vmem:[%s3909 + $0x30] sm:$0xff]
    %v3917 = vld [vmem:[%s3909 + $0x38] sm:$0xff]
    %v3918 = vld [vmem:[%s3909 + $0x40] sm:$0xff]
    %v3919 = vld [vmem:[%s3909 + $0x48] sm:$0xff]
    %v3920 = vld [vmem:[%s3909 + $0x50] sm:$0xff]
    %v3921 = vld [vmem:[%s3909 + $0x58] sm:$0xff]
    %v3922 = vld [vmem:[%s3909 + $0x60] sm:$0xff]
    %v3923 = vld [vmem:[%s3909 + $0x68] sm:$0xff]
    %v3924 = vld [vmem:[%s3909 + $0x70] sm:$0xff]
    %v3925 = vld [vmem:[%s3909 + $0x78] sm:$0xff]
    %3926 = vmatprep.subr.mxu0 0.0
    %3927 = vmatpush1.msra.mxu0 %v3925
    %3928 = vmatprep.subr.mxu0 0.0
    %3929 = vmatpush1.msra.mxu0 %v3924
    %3930 = vmatprep.subr.mxu0 0.0
    %3931 = vmatpush1.msra.mxu0 %v3923
    %3932 = vmatprep.subr.mxu0 0.0
    %3933 = vmatpush1.msra.mxu0 %v3922
    %3934 = vmatprep.subr.mxu0 0.0
    %3935 = vmatpush1.msra.mxu0 %v3921
    %3936 = vmatprep.subr.mxu0 0.0
    %3937 = vmatpush1.msra.mxu0 %v3920
    %3938 = vmatprep.subr.mxu0 0.0
    %3939 = vmatpush1.msra.mxu0 %v3919
    %3940 = vmatprep.subr.mxu0 0.0
    %3941 = vmatpush1.msra.mxu0 %v3918
    %3942 = vmatprep.subr.mxu0 0.0
    %3943 = vmatpush1.msra.mxu0 %v3917
    %3944 = vmatprep.subr.mxu0 0.0
    %3945 = vmatpush1.msra.mxu0 %v3916
    %3946 = vmatprep.subr.mxu0 0.0
    %3947 = vmatpush1.msra.mxu0 %v3915
    %3948 = vmatprep.subr.mxu0 0.0
    %3949 = vmatpush1.msra.mxu0 %v3914
    %3950 = vmatprep.subr.mxu0 0.0
    %3951 = vmatpush1.msra.mxu0 %v3913
    %3952 = vmatprep.subr.mxu0 0.0
    %3953 = vmatpush1.msra.mxu0 %v3912
    %3954 = vmatprep.subr.mxu0 0.0
    %3955 = vmatpush1.msra.mxu0 %v3911
    %3956 = vmatprep.subr.mxu0 0.0
    %3957 = vmatpush1.msra.mxu0 %v3910
    %3958 = vmatprep.subr.mxu0 0.0
    %3959 = vmatpush2.msra.mxu0 0.0
    %3960 = vmatprep.subr.mxu0 0.0
    %3961 = vmatpush2.msra.mxu0 0.0
    %3962 = vmatprep.subr.mxu0 0.0
    %3963 = vmatpush2.msra.mxu0 0.0
    %3964 = vmatprep.subr.mxu0 0.0
    %3965 = vmatpush2.msra.mxu0 0.0
    %3966 = vmatprep.subr.mxu0 0.0
    %3967 = vmatpush2.msra.mxu0 0.0
    %3968 = vmatprep.subr.mxu0 0.0
    %3969 = vmatpush2.msra.mxu0 0.0
    %3970 = vmatprep.subr.mxu0 0.0
    %3971 = vmatpush2.msra.mxu0 0.0
    %3972 = vmatprep.subr.mxu0 0.0
    %3973 = vmatpush2.msra.mxu0 0.0
    %3974 = vmatprep.subr.mxu0 0.0
    %3975 = vmatpush2.msra.mxu0 0.0
    %3976 = vmatprep.subr.mxu0 0.0
    %3977 = vmatpush2.msra.mxu0 0.0
    %3978 = vmatprep.subr.mxu0 0.0
    %3979 = vmatpush2.msra.mxu0 0.0
    %3980 = vmatprep.subr.mxu0 0.0
    %3981 = vmatpush2.msra.mxu0 0.0
    %3982 = vmatprep.subr.mxu0 0.0
    %3983 = vmatpush2.msra.mxu0 0.0
    %3984 = vmatprep.subr.mxu0 0.0
    %3985 = vmatpush2.msra.mxu0 0.0
    %3986 = vmatprep.subr.mxu0 0.0
    %3987 = vmatpush2.msra.mxu0 0.0
    %3988 = vmatprep.subr.mxu0 0.0
    %3989 = vmatpush2.msra.mxu0 0.0
    %3990 = vmatprep.mubr.f32.mxu0 0.0
    %3991 = vmatmul.mubr.f32.gmra.mxu0 %v3906
    %v3992 = vpop.f32.mrf.mxu0
    %v3993 = vadd.f32 0.0, %v3992
    %v3994 = vpop.f32.mrf.mxu0
    %3995 = vdwg.mxu0
    %v3996 = vadd.f32 %v3833, %v3993
    %s3997 = scalar_lea.vmem [#allocation19], 32
    %v3998 = vld [vmem:[%s3997] sm:$0xff]
    %v4000 = vsel %vm2457, %v3998, 0
    %4002 = vmatprep.subr.mxu0 0.0
    %4003 = vmatpush1.msra.mxu0 0.0
    %4004 = vmatprep.subr.mxu0 0.0
    %4005 = vmatpush1.msra.mxu0 0.0
    %4006 = vmatprep.subr.mxu0 0.0
    %4007 = vmatpush1.msra.mxu0 0.0
    %4008 = vmatprep.subr.mxu0 0.0
    %4009 = vmatpush1.msra.mxu0 0.0
    %4010 = vmatprep.subr.mxu0 0.0
    %4011 = vmatpush1.msra.mxu0 0.0
    %4012 = vmatprep.subr.mxu0 0.0
    %4013 = vmatpush1.msra.mxu0 0.0
    %4014 = vmatprep.subr.mxu0 0.0
    %4015 = vmatpush1.msra.mxu0 0.0
    %4016 = vmatprep.subr.mxu0 0.0
    %4017 = vmatpush1.msra.mxu0 0.0
    %4018 = vmatprep.subr.mxu0 0.0
    %4019 = vmatpush1.msra.mxu0 0.0
    %4020 = vmatprep.subr.mxu0 0.0
    %4021 = vmatpush1.msra.mxu0 0.0
    %4022 = vmatprep.subr.mxu0 0.0
    %4023 = vmatpush1.msra.mxu0 0.0
    %4024 = vmatprep.subr.mxu0 0.0
    %4025 = vmatpush1.msra.mxu0 0.0
    %4026 = vmatprep.subr.mxu0 0.0
    %4027 = vmatpush1.msra.mxu0 0.0
    %4028 = vmatprep.subr.mxu0 0.0
    %4029 = vmatpush1.msra.mxu0 0.0
    %4030 = vmatprep.subr.mxu0 0.0
    %4031 = vmatpush1.msra.mxu0 %v3348
    %4032 = vmatprep.subr.mxu0 0.0
    %4033 = vmatpush1.msra.mxu0 %v3347
    %4034 = vmatprep.subr.mxu0 0.0
    %4035 = vmatpush2.msra.mxu0 0.0
    %4036 = vmatprep.subr.mxu0 0.0
    %4037 = vmatpush2.msra.mxu0 0.0
    %4038 = vmatprep.subr.mxu0 0.0
    %4039 = vmatpush2.msra.mxu0 0.0
    %4040 = vmatprep.subr.mxu0 0.0
    %4041 = vmatpush2.msra.mxu0 0.0
    %4042 = vmatprep.subr.mxu0 0.0
    %4043 = vmatpush2.msra.mxu0 0.0
    %4044 = vmatprep.subr.mxu0 0.0
    %4045 = vmatpush2.msra.mxu0 0.0
    %4046 = vmatprep.subr.mxu0 0.0
    %4047 = vmatpush2.msra.mxu0 0.0
    %4048 = vmatprep.subr.mxu0 0.0
    %4049 = vmatpush2.msra.mxu0 0.0
    %4050 = vmatprep.subr.mxu0 0.0
    %4051 = vmatpush2.msra.mxu0 0.0
    %4052 = vmatprep.subr.mxu0 0.0
    %4053 = vmatpush2.msra.mxu0 0.0
    %4054 = vmatprep.subr.mxu0 0.0
    %4055 = vmatpush2.msra.mxu0 0.0
    %4056 = vmatprep.subr.mxu0 0.0
    %4057 = vmatpush2.msra.mxu0 0.0
    %4058 = vmatprep.subr.mxu0 0.0
    %4059 = vmatpush2.msra.mxu0 0.0
    %4060 = vmatprep.subr.mxu0 0.0
    %4061 = vmatpush2.msra.mxu0 0.0
    %4062 = vmatprep.subr.mxu0 0.0
    %4063 = vmatpush2.msra.mxu0 0.0
    %4064 = vmatprep.subr.mxu0 0.0
    %4065 = vmatpush2.msra.mxu0 0.0
    %4066 = vmatprep.mubr.f32.mxu0 0.0
    %4067 = vmatmul.mubr.f32.gmra.mxu0 %v4000
    %v4068 = vpop.f32.mrf.mxu0
    %v4069 = vadd.f32 0.0, %v4068
    %v4070 = vpop.f32.mrf.mxu0
    %4071 = vdwg.mxu0
    %s4072 = scalar_lea.vmem [#allocation18], 512
    %v4073 = vld [vmem:[%s4072] sm:$0xff]
    %v4074 = vld [vmem:[%s4072 + $0x8] sm:$0xff]
    %v4075 = vld [vmem:[%s4072 + $0x10] sm:$0xff]
    %v4076 = vld [vmem:[%s4072 + $0x18] sm:$0xff]
    %v4077 = vld [vmem:[%s4072 + $0x20] sm:$0xff]
    %v4078 = vld [vmem:[%s4072 + $0x28] sm:$0xff]
    %v4079 = vld [vmem:[%s4072 + $0x30] sm:$0xff]
    %v4080 = vld [vmem:[%s4072 + $0x38] sm:$0xff]
    %v4081 = vld [vmem:[%s4072 + $0x40] sm:$0xff]
    %v4082 = vld [vmem:[%s4072 + $0x48] sm:$0xff]
    %v4083 = vld [vmem:[%s4072 + $0x50] sm:$0xff]
    %v4084 = vld [vmem:[%s4072 + $0x58] sm:$0xff]
    %v4085 = vld [vmem:[%s4072 + $0x60] sm:$0xff]
    %v4086 = vld [vmem:[%s4072 + $0x68] sm:$0xff]
    %v4087 = vld [vmem:[%s4072 + $0x70] sm:$0xff]
    %v4088 = vld [vmem:[%s4072 + $0x78] sm:$0xff]
    %4089 = vmatprep.subr.mxu0 0.0
    %4090 = vmatpush1.msra.mxu0 %v4088
    %4091 = vmatprep.subr.mxu0 0.0
    %4092 = vmatpush1.msra.mxu0 %v4087
    %4093 = vmatprep.subr.mxu0 0.0
    %4094 = vmatpush1.msra.mxu0 %v4086
    %4095 = vmatprep.subr.mxu0 0.0
    %4096 = vmatpush1.msra.mxu0 %v4085
    %4097 = vmatprep.subr.mxu0 0.0
    %4098 = vmatpush1.msra.mxu0 %v4084
    %4099 = vmatprep.subr.mxu0 0.0
    %4100 = vmatpush1.msra.mxu0 %v4083
    %4101 = vmatprep.subr.mxu0 0.0
    %4102 = vmatpush1.msra.mxu0 %v4082
    %4103 = vmatprep.subr.mxu0 0.0
    %4104 = vmatpush1.msra.mxu0 %v4081
    %4105 = vmatprep.subr.mxu0 0.0
    %4106 = vmatpush1.msra.mxu0 %v4080
    %4107 = vmatprep.subr.mxu0 0.0
    %4108 = vmatpush1.msra.mxu0 %v4079
    %4109 = vmatprep.subr.mxu0 0.0
    %4110 = vmatpush1.msra.mxu0 %v4078
    %4111 = vmatprep.subr.mxu0 0.0
    %4112 = vmatpush1.msra.mxu0 %v4077
    %4113 = vmatprep.subr.mxu0 0.0
    %4114 = vmatpush1.msra.mxu0 %v4076
    %4115 = vmatprep.subr.mxu0 0.0
    %4116 = vmatpush1.msra.mxu0 %v4075
    %4117 = vmatprep.subr.mxu0 0.0
    %4118 = vmatpush1.msra.mxu0 %v4074
    %4119 = vmatprep.subr.mxu0 0.0
    %4120 = vmatpush1.msra.mxu0 %v4073
    %4121 = vmatprep.subr.mxu0 0.0
    %4122 = vmatpush2.msra.mxu0 0.0
    %4123 = vmatprep.subr.mxu0 0.0
    %4124 = vmatpush2.msra.mxu0 0.0
    %4125 = vmatprep.subr.mxu0 0.0
    %4126 = vmatpush2.msra.mxu0 0.0
    %4127 = vmatprep.subr.mxu0 0.0
    %4128 = vmatpush2.msra.mxu0 0.0
    %4129 = vmatprep.subr.mxu0 0.0
    %4130 = vmatpush2.msra.mxu0 0.0
    %4131 = vmatprep.subr.mxu0 0.0
    %4132 = vmatpush2.msra.mxu0 0.0
    %4133 = vmatprep.subr.mxu0 0.0
    %4134 = vmatpush2.msra.mxu0 0.0
    %4135 = vmatprep.subr.mxu0 0.0
    %4136 = vmatpush2.msra.mxu0 0.0
    %4137 = vmatprep.subr.mxu0 0.0
    %4138 = vmatpush2.msra.mxu0 0.0
    %4139 = vmatprep.subr.mxu0 0.0
    %4140 = vmatpush2.msra.mxu0 0.0
    %4141 = vmatprep.subr.mxu0 0.0
    %4142 = vmatpush2.msra.mxu0 0.0
    %4143 = vmatprep.subr.mxu0 0.0
    %4144 = vmatpush2.msra.mxu0 0.0
    %4145 = vmatprep.subr.mxu0 0.0
    %4146 = vmatpush2.msra.mxu0 0.0
    %4147 = vmatprep.subr.mxu0 0.0
    %4148 = vmatpush2.msra.mxu0 0.0
    %4149 = vmatprep.subr.mxu0 0.0
    %4150 = vmatpush2.msra.mxu0 0.0
    %4151 = vmatprep.subr.mxu0 0.0
    %4152 = vmatpush2.msra.mxu0 0.0
    %4153 = vmatprep.mubr.f32.mxu0 0.0
    %4154 = vmatmul.mubr.f32.gmra.mxu0 %v4069
    %v4155 = vpop.f32.mrf.mxu0
    %v4156 = vadd.f32 0.0, %v4155
    %v4157 = vpop.f32.mrf.mxu0
    %4158 = vdwg.mxu0
    %v4159 = vadd.f32 %v3996, %v4156
    %v4160 = vld [vmem:[#allocation21] sm:$0x1]
    %v4162 = vlaneseq
    %v4163 = vshrl.u32 %v4162, 7
    %v4164 = vsub.s32 0, %v4163
    %v4165 = vrot.slane %v4160, %v4164
    %v4167 = vadd.f32 %v4159, %v4165
    %v4168 = vmax.f32 %v4167, 0.0
    %v4169 = vld [vmem:[#allocation24] sm:$0xff]
    %vm4170 = vcmask 64512
    %v4172 = vsel %vm4170, %v4169, 0
    %4174 = vmatprep.subr.mxu0 0.0
    %4175 = vmatpush1.msra.mxu0 0.0
    %4176 = vmatprep.subr.mxu0 0.0
    %4177 = vmatpush1.msra.mxu0 0.0
    %4178 = vmatprep.subr.mxu0 0.0
    %4179 = vmatpush1.msra.mxu0 0.0
    %4180 = vmatprep.subr.mxu0 0.0
    %4181 = vmatpush1.msra.mxu0 0.0
    %4182 = vmatprep.subr.mxu0 0.0
    %4183 = vmatpush1.msra.mxu0 0.0
    %4184 = vmatprep.subr.mxu0 0.0
    %4185 = vmatpush1.msra.mxu0 0.0
    %4186 = vmatprep.subr.mxu0 0.0
    %4187 = vmatpush1.msra.mxu0 0.0
    %4188 = vmatprep.subr.mxu0 0.0
    %4189 = vmatpush1.msra.mxu0 0.0
    %4190 = vmatprep.subr.mxu0 0.0
    %4191 = vmatpush1.msra.mxu0 0.0
    %4192 = vmatprep.subr.mxu0 0.0
    %4193 = vmatpush1.msra.mxu0 0.0
    %4194 = vmatprep.subr.mxu0 0.0
    %4195 = vmatpush1.msra.mxu0 0.0
    %4196 = vmatprep.subr.mxu0 0.0
    %4197 = vmatpush1.msra.mxu0 0.0
    %4198 = vmatprep.subr.mxu0 0.0
    %4199 = vmatpush1.msra.mxu0 0.0
    %4200 = vmatprep.subr.mxu0 0.0
    %4201 = vmatpush1.msra.mxu0 0.0
    %4202 = vmatprep.subr.mxu0 0.0
    %4203 = vmatpush1.msra.mxu0 0.0
    %4204 = vmatprep.subr.mxu0 0.0
    %4205 = vmatpush1.msra.mxu0 %v4168
    %4206 = vmatprep.subr.mxu0 0.0
    %4207 = vmatpush2.msra.mxu0 0.0
    %4208 = vmatprep.subr.mxu0 0.0
    %4209 = vmatpush2.msra.mxu0 0.0
    %4210 = vmatprep.subr.mxu0 0.0
    %4211 = vmatpush2.msra.mxu0 0.0
    %4212 = vmatprep.subr.mxu0 0.0
    %4213 = vmatpush2.msra.mxu0 0.0
    %4214 = vmatprep.subr.mxu0 0.0
    %4215 = vmatpush2.msra.mxu0 0.0
    %4216 = vmatprep.subr.mxu0 0.0
    %4217 = vmatpush2.msra.mxu0 0.0
    %4218 = vmatprep.subr.mxu0 0.0
    %4219 = vmatpush2.msra.mxu0 0.0
    %4220 = vmatprep.subr.mxu0 0.0
    %4221 = vmatpush2.msra.mxu0 0.0
    %4222 = vmatprep.subr.mxu0 0.0
    %4223 = vmatpush2.msra.mxu0 0.0
    %4224 = vmatprep.subr.mxu0 0.0
    %4225 = vmatpush2.msra.mxu0 0.0
    %4226 = vmatprep.subr.mxu0 0.0
    %4227 = vmatpush2.msra.mxu0 0.0
    %4228 = vmatprep.subr.mxu0 0.0
    %4229 = vmatpush2.msra.mxu0 0.0
    %4230 = vmatprep.subr.mxu0 0.0
    %4231 = vmatpush2.msra.mxu0 0.0
    %4232 = vmatprep.subr.mxu0 0.0
    %4233 = vmatpush2.msra.mxu0 0.0
    %4234 = vmatprep.subr.mxu0 0.0
    %4235 = vmatpush2.msra.mxu0 0.0
    %4236 = vmatprep.subr.mxu0 0.0
    %4237 = vmatpush2.msra.mxu0 0.0
    %4238 = vmatprep.mubr.f32.mxu0 0.0
    %4239 = vmatmul.mubr.f32.gmra.mxu0 %v4172
    %v4240 = vpop.f32.mrf.mxu0
    %v4241 = vadd.f32 0.0, %v4240
    %v4242 = vpop.f32.mrf.mxu0
    %4243 = vdwg.mxu0
    %v4244 = vld [vmem:[#allocation22] sm:$0xff]
    %v4245 = vld [vmem:[#allocation22 + $0x8] sm:$0xff]
    %v4246 = vld [vmem:[#allocation22 + $0x10] sm:$0xff]
    %v4247 = vld [vmem:[#allocation22 + $0x18] sm:$0xff]
    %v4248 = vld [vmem:[#allocation22 + $0x20] sm:$0xff]
    %v4249 = vld [vmem:[#allocation22 + $0x28] sm:$0xff]
    %v4250 = vld [vmem:[#allocation22 + $0x30] sm:$0xff]
    %v4251 = vld [vmem:[#allocation22 + $0x38] sm:$0xff]
    %v4252 = vld [vmem:[#allocation22 + $0x40] sm:$0xff]
    %v4253 = vld [vmem:[#allocation22 + $0x48] sm:$0xff]
    %v4254 = vld [vmem:[#allocation22 + $0x50] sm:$0xff]
    %v4255 = vld [vmem:[#allocation22 + $0x58] sm:$0xff]
    %v4256 = vld [vmem:[#allocation22 + $0x60] sm:$0xff]
    %v4257 = vld [vmem:[#allocation22 + $0x68] sm:$0xff]
    %v4258 = vld [vmem:[#allocation22 + $0x70] sm:$0xff]
    %v4259 = vld [vmem:[#allocation22 + $0x78] sm:$0xff]
    %s4260 = scalar_lea.vmem [#allocation22], 128
    %v4261 = vld [vmem:[%s4260] sm:$0xff]
    %v4262 = vld [vmem:[%s4260 + $0x8] sm:$0xff]
    %v4263 = vld [vmem:[%s4260 + $0x10] sm:$0xff]
    %v4264 = vld [vmem:[%s4260 + $0x18] sm:$0xff]
    %v4265 = vld [vmem:[%s4260 + $0x20] sm:$0xff]
    %v4266 = vld [vmem:[%s4260 + $0x28] sm:$0xff]
    %v4267 = vld [vmem:[%s4260 + $0x30] sm:$0xff]
    %v4268 = vld [vmem:[%s4260 + $0x38] sm:$0xff]
    %v4269 = vld [vmem:[%s4260 + $0x40] sm:$0xff]
    %v4270 = vld [vmem:[%s4260 + $0x48] sm:$0xff]
    %v4271 = vld [vmem:[%s4260 + $0x50] sm:$0xff]
    %v4272 = vld [vmem:[%s4260 + $0x58] sm:$0xff]
    %v4273 = vld [vmem:[%s4260 + $0x60] sm:$0xff]
    %v4274 = vld [vmem:[%s4260 + $0x68] sm:$0xff]
    %v4275 = vld [vmem:[%s4260 + $0x70] sm:$0xff]
    %v4276 = vld [vmem:[%s4260 + $0x78] sm:$0xff]
    %4277 = vmatprep.subr.mxu0 0.0
    %4278 = vmatpush1.msra.mxu0 %v4276
    %4279 = vmatprep.subr.mxu0 0.0
    %4280 = vmatpush1.msra.mxu0 %v4275
    %4281 = vmatprep.subr.mxu0 0.0
    %4282 = vmatpush1.msra.mxu0 %v4274
    %4283 = vmatprep.subr.mxu0 0.0
    %4284 = vmatpush1.msra.mxu0 %v4273
    %4285 = vmatprep.subr.mxu0 0.0
    %4286 = vmatpush1.msra.mxu0 %v4272
    %4287 = vmatprep.subr.mxu0 0.0
    %4288 = vmatpush1.msra.mxu0 %v4271
    %4289 = vmatprep.subr.mxu0 0.0
    %4290 = vmatpush1.msra.mxu0 %v4270
    %4291 = vmatprep.subr.mxu0 0.0
    %4292 = vmatpush1.msra.mxu0 %v4269
    %4293 = vmatprep.subr.mxu0 0.0
    %4294 = vmatpush1.msra.mxu0 %v4268
    %4295 = vmatprep.subr.mxu0 0.0
    %4296 = vmatpush1.msra.mxu0 %v4267
    %4297 = vmatprep.subr.mxu0 0.0
    %4298 = vmatpush1.msra.mxu0 %v4266
    %4299 = vmatprep.subr.mxu0 0.0
    %4300 = vmatpush1.msra.mxu0 %v4265
    %4301 = vmatprep.subr.mxu0 0.0
    %4302 = vmatpush1.msra.mxu0 %v4264
    %4303 = vmatprep.subr.mxu0 0.0
    %4304 = vmatpush1.msra.mxu0 %v4263
    %4305 = vmatprep.subr.mxu0 0.0
    %4306 = vmatpush1.msra.mxu0 %v4262
    %4307 = vmatprep.subr.mxu0 0.0
    %4308 = vmatpush1.msra.mxu0 %v4261
    %4309 = vmatprep.subr.mxu0 0.0
    %4310 = vmatpush2.msra.mxu0 0.0
    %4311 = vmatprep.subr.mxu0 0.0
    %4312 = vmatpush2.msra.mxu0 0.0
    %4313 = vmatprep.subr.mxu0 0.0
    %4314 = vmatpush2.msra.mxu0 0.0
    %4315 = vmatprep.subr.mxu0 0.0
    %4316 = vmatpush2.msra.mxu0 0.0
    %4317 = vmatprep.subr.mxu0 0.0
    %4318 = vmatpush2.msra.mxu0 0.0
    %4319 = vmatprep.subr.mxu0 0.0
    %4320 = vmatpush2.msra.mxu0 0.0
    %4321 = vmatprep.subr.mxu0 0.0
    %4322 = vmatpush2.msra.mxu0 0.0
    %4323 = vmatprep.subr.mxu0 0.0
    %4324 = vmatpush2.msra.mxu0 0.0
    %4325 = vmatprep.subr.mxu0 0.0
    %4326 = vmatpush2.msra.mxu0 0.0
    %4327 = vmatprep.subr.mxu0 0.0
    %4328 = vmatpush2.msra.mxu0 0.0
    %4329 = vmatprep.subr.mxu0 0.0
    %4330 = vmatpush2.msra.mxu0 0.0
    %4331 = vmatprep.subr.mxu0 0.0
    %4332 = vmatpush2.msra.mxu0 0.0
    %4333 = vmatprep.subr.mxu0 0.0
    %4334 = vmatpush2.msra.mxu0 0.0
    %4335 = vmatprep.subr.mxu0 0.0
    %4336 = vmatpush2.msra.mxu0 0.0
    %4337 = vmatprep.subr.mxu0 0.0
    %4338 = vmatpush2.msra.mxu0 0.0
    %4339 = vmatprep.subr.mxu0 0.0
    %4340 = vmatpush2.msra.mxu0 0.0
    %4341 = vmatprep.mubr.f32.mxu0 0.0
    %4342 = vmatmul.mubr.f32.gmra.mxu0 %v4168
    %v4343 = vpop.f32.mrf.mxu0
    %v4344 = vadd.f32 0.0, %v4343
    %v4345 = vpop.f32.mrf.mxu0
    %4346 = vdwg.mxu0
    %4347 = vmatprep.subr.mxu0 0.0
    %4348 = vmatpush1.msra.mxu0 %v4259
    %4349 = vmatprep.subr.mxu0 0.0
    %4350 = vmatpush1.msra.mxu0 %v4258
    %4351 = vmatprep.subr.mxu0 0.0
    %4352 = vmatpush1.msra.mxu0 %v4257
    %4353 = vmatprep.subr.mxu0 0.0
    %4354 = vmatpush1.msra.mxu0 %v4256
    %4355 = vmatprep.subr.mxu0 0.0
    %4356 = vmatpush1.msra.mxu0 %v4255
    %4357 = vmatprep.subr.mxu0 0.0
    %4358 = vmatpush1.msra.mxu0 %v4254
    %4359 = vmatprep.subr.mxu0 0.0
    %4360 = vmatpush1.msra.mxu0 %v4253
    %4361 = vmatprep.subr.mxu0 0.0
    %4362 = vmatpush1.msra.mxu0 %v4252
    %4363 = vmatprep.subr.mxu0 0.0
    %4364 = vmatpush1.msra.mxu0 %v4251
    %4365 = vmatprep.subr.mxu0 0.0
    %4366 = vmatpush1.msra.mxu0 %v4250
    %4367 = vmatprep.subr.mxu0 0.0
    %4368 = vmatpush1.msra.mxu0 %v4249
    %4369 = vmatprep.subr.mxu0 0.0
    %4370 = vmatpush1.msra.mxu0 %v4248
    %4371 = vmatprep.subr.mxu0 0.0
    %4372 = vmatpush1.msra.mxu0 %v4247
    %4373 = vmatprep.subr.mxu0 0.0
    %4374 = vmatpush1.msra.mxu0 %v4246
    %4375 = vmatprep.subr.mxu0 0.0
    %4376 = vmatpush1.msra.mxu0 %v4245
    %4377 = vmatprep.subr.mxu0 0.0
    %4378 = vmatpush1.msra.mxu0 %v4244
    %4379 = vmatprep.subr.mxu0 0.0
    %4380 = vmatpush2.msra.mxu0 0.0
    %4381 = vmatprep.subr.mxu0 0.0
    %4382 = vmatpush2.msra.mxu0 0.0
    %4383 = vmatprep.subr.mxu0 0.0
    %4384 = vmatpush2.msra.mxu0 0.0
    %4385 = vmatprep.subr.mxu0 0.0
    %4386 = vmatpush2.msra.mxu0 0.0
    %4387 = vmatprep.subr.mxu0 0.0
    %4388 = vmatpush2.msra.mxu0 0.0
    %4389 = vmatprep.subr.mxu0 0.0
    %4390 = vmatpush2.msra.mxu0 0.0
    %4391 = vmatprep.subr.mxu0 0.0
    %4392 = vmatpush2.msra.mxu0 0.0
    %4393 = vmatprep.subr.mxu0 0.0
    %4394 = vmatpush2.msra.mxu0 0.0
    %4395 = vmatprep.subr.mxu0 0.0
    %4396 = vmatpush2.msra.mxu0 0.0
    %4397 = vmatprep.subr.mxu0 0.0
    %4398 = vmatpush2.msra.mxu0 0.0
    %4399 = vmatprep.subr.mxu0 0.0
    %4400 = vmatpush2.msra.mxu0 0.0
    %4401 = vmatprep.subr.mxu0 0.0
    %4402 = vmatpush2.msra.mxu0 0.0
    %4403 = vmatprep.subr.mxu0 0.0
    %4404 = vmatpush2.msra.mxu0 0.0
    %4405 = vmatprep.subr.mxu0 0.0
    %4406 = vmatpush2.msra.mxu0 0.0
    %4407 = vmatprep.subr.mxu0 0.0
    %4408 = vmatpush2.msra.mxu0 0.0
    %4409 = vmatprep.subr.mxu0 0.0
    %4410 = vmatpush2.msra.mxu0 0.0
    %4411 = vmatprep.mubr.f32.mxu0 0.0
    %4412 = vmatmul.mubr.f32.gmra.mxu0 %v4241
    %v4413 = vpop.f32.mrf.mxu0
    %v4414 = vadd.f32 %v4344, %v4413
    %v4415 = vpop.f32.mrf.mxu0
    %4416 = vdwg.mxu0
    %s4417 = scalar_lea.vmem [#allocation24], 16
    %v4418 = vld [vmem:[%s4417] sm:$0xff]
    %v4420 = vsel %vm4170, %v4418, 0
    %4422 = vmatprep.subr.mxu0 0.0
    %4423 = vmatpush1.msra.mxu0 0.0
    %4424 = vmatprep.subr.mxu0 0.0
    %4425 = vmatpush1.msra.mxu0 0.0
    %4426 = vmatprep.subr.mxu0 0.0
    %4427 = vmatpush1.msra.mxu0 0.0
    %4428 = vmatprep.subr.mxu0 0.0
    %4429 = vmatpush1.msra.mxu0 0.0
    %4430 = vmatprep.subr.mxu0 0.0
    %4431 = vmatpush1.msra.mxu0 0.0
    %4432 = vmatprep.subr.mxu0 0.0
    %4433 = vmatpush1.msra.mxu0 0.0
    %4434 = vmatprep.subr.mxu0 0.0
    %4435 = vmatpush1.msra.mxu0 0.0
    %4436 = vmatprep.subr.mxu0 0.0
    %4437 = vmatpush1.msra.mxu0 0.0
    %4438 = vmatprep.subr.mxu0 0.0
    %4439 = vmatpush1.msra.mxu0 0.0
    %4440 = vmatprep.subr.mxu0 0.0
    %4441 = vmatpush1.msra.mxu0 0.0
    %4442 = vmatprep.subr.mxu0 0.0
    %4443 = vmatpush1.msra.mxu0 0.0
    %4444 = vmatprep.subr.mxu0 0.0
    %4445 = vmatpush1.msra.mxu0 0.0
    %4446 = vmatprep.subr.mxu0 0.0
    %4447 = vmatpush1.msra.mxu0 0.0
    %4448 = vmatprep.subr.mxu0 0.0
    %4449 = vmatpush1.msra.mxu0 0.0
    %4450 = vmatprep.subr.mxu0 0.0
    %4451 = vmatpush1.msra.mxu0 0.0
    %4452 = vmatprep.subr.mxu0 0.0
    %4453 = vmatpush1.msra.mxu0 %v4168
    %4454 = vmatprep.subr.mxu0 0.0
    %4455 = vmatpush2.msra.mxu0 0.0
    %4456 = vmatprep.subr.mxu0 0.0
    %4457 = vmatpush2.msra.mxu0 0.0
    %4458 = vmatprep.subr.mxu0 0.0
    %4459 = vmatpush2.msra.mxu0 0.0
    %4460 = vmatprep.subr.mxu0 0.0
    %4461 = vmatpush2.msra.mxu0 0.0
    %4462 = vmatprep.subr.mxu0 0.0
    %4463 = vmatpush2.msra.mxu0 0.0
    %4464 = vmatprep.subr.mxu0 0.0
    %4465 = vmatpush2.msra.mxu0 0.0
    %4466 = vmatprep.subr.mxu0 0.0
    %4467 = vmatpush2.msra.mxu0 0.0
    %4468 = vmatprep.subr.mxu0 0.0
    %4469 = vmatpush2.msra.mxu0 0.0
    %4470 = vmatprep.subr.mxu0 0.0
    %4471 = vmatpush2.msra.mxu0 0.0
    %4472 = vmatprep.subr.mxu0 0.0
    %4473 = vmatpush2.msra.mxu0 0.0
    %4474 = vmatprep.subr.mxu0 0.0
    %4475 = vmatpush2.msra.mxu0 0.0
    %4476 = vmatprep.subr.mxu0 0.0
    %4477 = vmatpush2.msra.mxu0 0.0
    %4478 = vmatprep.subr.mxu0 0.0
    %4479 = vmatpush2.msra.mxu0 0.0
    %4480 = vmatprep.subr.mxu0 0.0
    %4481 = vmatpush2.msra.mxu0 0.0
    %4482 = vmatprep.subr.mxu0 0.0
    %4483 = vmatpush2.msra.mxu0 0.0
    %4484 = vmatprep.subr.mxu0 0.0
    %4485 = vmatpush2.msra.mxu0 0.0
    %4486 = vmatprep.mubr.f32.mxu0 0.0
    %4487 = vmatmul.mubr.f32.gmra.mxu0 %v4420
    %v4488 = vpop.f32.mrf.mxu0
    %v4489 = vadd.f32 0.0, %v4488
    %v4490 = vpop.f32.mrf.mxu0
    %4491 = vdwg.mxu0
    %s4492 = scalar_lea.vmem [#allocation22], 256
    %v4493 = vld [vmem:[%s4492] sm:$0xff]
    %v4494 = vld [vmem:[%s4492 + $0x8] sm:$0xff]
    %v4495 = vld [vmem:[%s4492 + $0x10] sm:$0xff]
    %v4496 = vld [vmem:[%s4492 + $0x18] sm:$0xff]
    %v4497 = vld [vmem:[%s4492 + $0x20] sm:$0xff]
    %v4498 = vld [vmem:[%s4492 + $0x28] sm:$0xff]
    %v4499 = vld [vmem:[%s4492 + $0x30] sm:$0xff]
    %v4500 = vld [vmem:[%s4492 + $0x38] sm:$0xff]
    %v4501 = vld [vmem:[%s4492 + $0x40] sm:$0xff]
    %v4502 = vld [vmem:[%s4492 + $0x48] sm:$0xff]
    %v4503 = vld [vmem:[%s4492 + $0x50] sm:$0xff]
    %v4504 = vld [vmem:[%s4492 + $0x58] sm:$0xff]
    %v4505 = vld [vmem:[%s4492 + $0x60] sm:$0xff]
    %v4506 = vld [vmem:[%s4492 + $0x68] sm:$0xff]
    %v4507 = vld [vmem:[%s4492 + $0x70] sm:$0xff]
    %v4508 = vld [vmem:[%s4492 + $0x78] sm:$0xff]
    %4509 = vmatprep.subr.mxu0 0.0
    %4510 = vmatpush1.msra.mxu0 %v4508
    %4511 = vmatprep.subr.mxu0 0.0
    %4512 = vmatpush1.msra.mxu0 %v4507
    %4513 = vmatprep.subr.mxu0 0.0
    %4514 = vmatpush1.msra.mxu0 %v4506
    %4515 = vmatprep.subr.mxu0 0.0
    %4516 = vmatpush1.msra.mxu0 %v4505
    %4517 = vmatprep.subr.mxu0 0.0
    %4518 = vmatpush1.msra.mxu0 %v4504
    %4519 = vmatprep.subr.mxu0 0.0
    %4520 = vmatpush1.msra.mxu0 %v4503
    %4521 = vmatprep.subr.mxu0 0.0
    %4522 = vmatpush1.msra.mxu0 %v4502
    %4523 = vmatprep.subr.mxu0 0.0
    %4524 = vmatpush1.msra.mxu0 %v4501
    %4525 = vmatprep.subr.mxu0 0.0
    %4526 = vmatpush1.msra.mxu0 %v4500
    %4527 = vmatprep.subr.mxu0 0.0
    %4528 = vmatpush1.msra.mxu0 %v4499
    %4529 = vmatprep.subr.mxu0 0.0
    %4530 = vmatpush1.msra.mxu0 %v4498
    %4531 = vmatprep.subr.mxu0 0.0
    %4532 = vmatpush1.msra.mxu0 %v4497
    %4533 = vmatprep.subr.mxu0 0.0
    %4534 = vmatpush1.msra.mxu0 %v4496
    %4535 = vmatprep.subr.mxu0 0.0
    %4536 = vmatpush1.msra.mxu0 %v4495
    %4537 = vmatprep.subr.mxu0 0.0
    %4538 = vmatpush1.msra.mxu0 %v4494
    %4539 = vmatprep.subr.mxu0 0.0
    %4540 = vmatpush1.msra.mxu0 %v4493
    %4541 = vmatprep.subr.mxu0 0.0
    %4542 = vmatpush2.msra.mxu0 0.0
    %4543 = vmatprep.subr.mxu0 0.0
    %4544 = vmatpush2.msra.mxu0 0.0
    %4545 = vmatprep.subr.mxu0 0.0
    %4546 = vmatpush2.msra.mxu0 0.0
    %4547 = vmatprep.subr.mxu0 0.0
    %4548 = vmatpush2.msra.mxu0 0.0
    %4549 = vmatprep.subr.mxu0 0.0
    %4550 = vmatpush2.msra.mxu0 0.0
    %4551 = vmatprep.subr.mxu0 0.0
    %4552 = vmatpush2.msra.mxu0 0.0
    %4553 = vmatprep.subr.mxu0 0.0
    %4554 = vmatpush2.msra.mxu0 0.0
    %4555 = vmatprep.subr.mxu0 0.0
    %4556 = vmatpush2.msra.mxu0 0.0
    %4557 = vmatprep.subr.mxu0 0.0
    %4558 = vmatpush2.msra.mxu0 0.0
    %4559 = vmatprep.subr.mxu0 0.0
    %4560 = vmatpush2.msra.mxu0 0.0
    %4561 = vmatprep.subr.mxu0 0.0
    %4562 = vmatpush2.msra.mxu0 0.0
    %4563 = vmatprep.subr.mxu0 0.0
    %4564 = vmatpush2.msra.mxu0 0.0
    %4565 = vmatprep.subr.mxu0 0.0
    %4566 = vmatpush2.msra.mxu0 0.0
    %4567 = vmatprep.subr.mxu0 0.0
    %4568 = vmatpush2.msra.mxu0 0.0
    %4569 = vmatprep.subr.mxu0 0.0
    %4570 = vmatpush2.msra.mxu0 0.0
    %4571 = vmatprep.subr.mxu0 0.0
    %4572 = vmatpush2.msra.mxu0 0.0
    %4573 = vmatprep.mubr.f32.mxu0 0.0
    %4574 = vmatmul.mubr.f32.gmra.mxu0 %v4489
    %v4575 = vpop.f32.mrf.mxu0
    %v4576 = vadd.f32 0.0, %v4575
    %v4577 = vpop.f32.mrf.mxu0
    %4578 = vdwg.mxu0
    %v4579 = vadd.f32 %v4414, %v4576
    %v4580 = vld [vmem:[#allocation25] sm:$0x1]
    %v4582 = vlaneseq
    %v4583 = vshrl.u32 %v4582, 7
    %v4584 = vsub.s32 0, %v4583
    %v4585 = vrot.slane %v4580, %v4584
    %v4587 = vadd.f32 %v4579, %v4585
    %v4588 = vmax.f32 %v4587, 0.0
    %4589 = vmatprep.subr.mxu0 0.0
    %4590 = vmatpush1.msra.mxu0 0.0
    %4591 = vmatprep.subr.mxu0 0.0
    %4592 = vmatpush1.msra.mxu0 0.0
    %4593 = vmatprep.subr.mxu0 0.0
    %4594 = vmatpush1.msra.mxu0 0.0
    %4595 = vmatprep.subr.mxu0 0.0
    %4596 = vmatpush1.msra.mxu0 0.0
    %4597 = vmatprep.subr.mxu0 0.0
    %4598 = vmatpush1.msra.mxu0 0.0
    %4599 = vmatprep.subr.mxu0 0.0
    %4600 = vmatpush1.msra.mxu0 0.0
    %4601 = vmatprep.subr.mxu0 0.0
    %4602 = vmatpush1.msra.mxu0 0.0
    %4603 = vmatprep.subr.mxu0 0.0
    %4604 = vmatpush1.msra.mxu0 0.0
    %4605 = vmatprep.subr.mxu0 0.0
    %4606 = vmatpush1.msra.mxu0 0.0
    %4607 = vmatprep.subr.mxu0 0.0
    %4608 = vmatpush1.msra.mxu0 0.0
    %4609 = vmatprep.subr.mxu0 0.0
    %4610 = vmatpush1.msra.mxu0 0.0
    %4611 = vmatprep.subr.mxu0 0.0
    %4612 = vmatpush1.msra.mxu0 0.0
    %4613 = vmatprep.subr.mxu0 0.0
    %4614 = vmatpush1.msra.mxu0 0.0
    %4615 = vmatprep.subr.mxu0 0.0
    %4616 = vmatpush1.msra.mxu0 0.0
    %4617 = vmatprep.subr.mxu0 0.0
    %4618 = vmatpush1.msra.mxu0 0.0
    %4619 = vmatprep.subr.mxu0 0.0
    %4620 = vmatpush1.msra.mxu0 %v4588
    %4621 = vmatprep.subr.mxu0 0.0
    %4622 = vmatpush2.msra.mxu0 0.0
    %4623 = vmatprep.subr.mxu0 0.0
    %4624 = vmatpush2.msra.mxu0 0.0
    %4625 = vmatprep.subr.mxu0 0.0
    %4626 = vmatpush2.msra.mxu0 0.0
    %4627 = vmatprep.subr.mxu0 0.0
    %4628 = vmatpush2.msra.mxu0 0.0
    %4629 = vmatprep.subr.mxu0 0.0
    %4630 = vmatpush2.msra.mxu0 0.0
    %4631 = vmatprep.subr.mxu0 0.0
    %4632 = vmatpush2.msra.mxu0 0.0
    %4633 = vmatprep.subr.mxu0 0.0
    %4634 = vmatpush2.msra.mxu0 0.0
    %4635 = vmatprep.subr.mxu0 0.0
    %4636 = vmatpush2.msra.mxu0 0.0
    %4637 = vmatprep.subr.mxu0 0.0
    %4638 = vmatpush2.msra.mxu0 0.0
    %4639 = vmatprep.subr.mxu0 0.0
    %4640 = vmatpush2.msra.mxu0 0.0
    %4641 = vmatprep.subr.mxu0 0.0
    %4642 = vmatpush2.msra.mxu0 0.0
    %4643 = vmatprep.subr.mxu0 0.0
    %4644 = vmatpush2.msra.mxu0 0.0
    %4645 = vmatprep.subr.mxu0 0.0
    %4646 = vmatpush2.msra.mxu0 0.0
    %4647 = vmatprep.subr.mxu0 0.0
    %4648 = vmatpush2.msra.mxu0 0.0
    %4649 = vmatprep.subr.mxu0 0.0
    %4650 = vmatpush2.msra.mxu0 0.0
    %4651 = vmatprep.subr.mxu0 0.0
    %4652 = vmatpush2.msra.mxu0 0.0
    %4653 = vmatprep.mubr.f32.mxu0 0.0
    %4654 = vmatmul.mubr.f32.gmra.mxu0 %v4172
    %v4655 = vpop.f32.mrf.mxu0
    %v4656 = vadd.f32 0.0, %v4655
    %v4657 = vpop.f32.mrf.mxu0
    %4658 = vdwg.mxu0
    %v4659 = vld [vmem:[#allocation27] sm:$0xff]
    %v4660 = vld [vmem:[#allocation27 + $0x8] sm:$0xff]
    %v4661 = vld [vmem:[#allocation27 + $0x10] sm:$0xff]
    %v4662 = vld [vmem:[#allocation27 + $0x18] sm:$0xff]
    %v4663 = vld [vmem:[#allocation27 + $0x20] sm:$0xff]
    %v4664 = vld [vmem:[#allocation27 + $0x28] sm:$0xff]
    %v4665 = vld [vmem:[#allocation27 + $0x30] sm:$0xff]
    %v4666 = vld [vmem:[#allocation27 + $0x38] sm:$0xff]
    %v4667 = vld [vmem:[#allocation27 + $0x40] sm:$0xff]
    %v4668 = vld [vmem:[#allocation27 + $0x48] sm:$0xff]
    %v4669 = vld [vmem:[#allocation27 + $0x50] sm:$0xff]
    %v4670 = vld [vmem:[#allocation27 + $0x58] sm:$0xff]
    %v4671 = vld [vmem:[#allocation27 + $0x60] sm:$0xff]
    %v4672 = vld [vmem:[#allocation27 + $0x68] sm:$0xff]
    %v4673 = vld [vmem:[#allocation27 + $0x70] sm:$0xff]
    %v4674 = vld [vmem:[#allocation27 + $0x78] sm:$0xff]
    %s4675 = scalar_lea.vmem [#allocation27], 128
    %v4676 = vld [vmem:[%s4675] sm:$0xff]
    %v4677 = vld [vmem:[%s4675 + $0x8] sm:$0xff]
    %v4678 = vld [vmem:[%s4675 + $0x10] sm:$0xff]
    %v4679 = vld [vmem:[%s4675 + $0x18] sm:$0xff]
    %v4680 = vld [vmem:[%s4675 + $0x20] sm:$0xff]
    %v4681 = vld [vmem:[%s4675 + $0x28] sm:$0xff]
    %v4682 = vld [vmem:[%s4675 + $0x30] sm:$0xff]
    %v4683 = vld [vmem:[%s4675 + $0x38] sm:$0xff]
    %v4684 = vld [vmem:[%s4675 + $0x40] sm:$0xff]
    %v4685 = vld [vmem:[%s4675 + $0x48] sm:$0xff]
    %v4686 = vld [vmem:[%s4675 + $0x50] sm:$0xff]
    %v4687 = vld [vmem:[%s4675 + $0x58] sm:$0xff]
    %v4688 = vld [vmem:[%s4675 + $0x60] sm:$0xff]
    %v4689 = vld [vmem:[%s4675 + $0x68] sm:$0xff]
    %v4690 = vld [vmem:[%s4675 + $0x70] sm:$0xff]
    %v4691 = vld [vmem:[%s4675 + $0x78] sm:$0xff]
    %4692 = vmatprep.subr.mxu0 0.0
    %4693 = vmatpush1.msra.mxu0 %v4691
    %4694 = vmatprep.subr.mxu0 0.0
    %4695 = vmatpush1.msra.mxu0 %v4690
    %4696 = vmatprep.subr.mxu0 0.0
    %4697 = vmatpush1.msra.mxu0 %v4689
    %4698 = vmatprep.subr.mxu0 0.0
    %4699 = vmatpush1.msra.mxu0 %v4688
    %4700 = vmatprep.subr.mxu0 0.0
    %4701 = vmatpush1.msra.mxu0 %v4687
    %4702 = vmatprep.subr.mxu0 0.0
    %4703 = vmatpush1.msra.mxu0 %v4686
    %4704 = vmatprep.subr.mxu0 0.0
    %4705 = vmatpush1.msra.mxu0 %v4685
    %4706 = vmatprep.subr.mxu0 0.0
    %4707 = vmatpush1.msra.mxu0 %v4684
    %4708 = vmatprep.subr.mxu0 0.0
    %4709 = vmatpush1.msra.mxu0 %v4683
    %4710 = vmatprep.subr.mxu0 0.0
    %4711 = vmatpush1.msra.mxu0 %v4682
    %4712 = vmatprep.subr.mxu0 0.0
    %4713 = vmatpush1.msra.mxu0 %v4681
    %4714 = vmatprep.subr.mxu0 0.0
    %4715 = vmatpush1.msra.mxu0 %v4680
    %4716 = vmatprep.subr.mxu0 0.0
    %4717 = vmatpush1.msra.mxu0 %v4679
    %4718 = vmatprep.subr.mxu0 0.0
    %4719 = vmatpush1.msra.mxu0 %v4678
    %4720 = vmatprep.subr.mxu0 0.0
    %4721 = vmatpush1.msra.mxu0 %v4677
    %4722 = vmatprep.subr.mxu0 0.0
    %4723 = vmatpush1.msra.mxu0 %v4676
    %4724 = vmatprep.subr.mxu0 0.0
    %4725 = vmatpush2.msra.mxu0 0.0
    %4726 = vmatprep.subr.mxu0 0.0
    %4727 = vmatpush2.msra.mxu0 0.0
    %4728 = vmatprep.subr.mxu0 0.0
    %4729 = vmatpush2.msra.mxu0 0.0
    %4730 = vmatprep.subr.mxu0 0.0
    %4731 = vmatpush2.msra.mxu0 0.0
    %4732 = vmatprep.subr.mxu0 0.0
    %4733 = vmatpush2.msra.mxu0 0.0
    %4734 = vmatprep.subr.mxu0 0.0
    %4735 = vmatpush2.msra.mxu0 0.0
    %4736 = vmatprep.subr.mxu0 0.0
    %4737 = vmatpush2.msra.mxu0 0.0
    %4738 = vmatprep.subr.mxu0 0.0
    %4739 = vmatpush2.msra.mxu0 0.0
    %4740 = vmatprep.subr.mxu0 0.0
    %4741 = vmatpush2.msra.mxu0 0.0
    %4742 = vmatprep.subr.mxu0 0.0
    %4743 = vmatpush2.msra.mxu0 0.0
    %4744 = vmatprep.subr.mxu0 0.0
    %4745 = vmatpush2.msra.mxu0 0.0
    %4746 = vmatprep.subr.mxu0 0.0
    %4747 = vmatpush2.msra.mxu0 0.0
    %4748 = vmatprep.subr.mxu0 0.0
    %4749 = vmatpush2.msra.mxu0 0.0
    %4750 = vmatprep.subr.mxu0 0.0
    %4751 = vmatpush2.msra.mxu0 0.0
    %4752 = vmatprep.subr.mxu0 0.0
    %4753 = vmatpush2.msra.mxu0 0.0
    %4754 = vmatprep.subr.mxu0 0.0
    %4755 = vmatpush2.msra.mxu0 0.0
    %4756 = vmatprep.mubr.f32.mxu0 0.0
    %4757 = vmatmul.mubr.f32.gmra.mxu0 %v4588
    %v4758 = vpop.f32.mrf.mxu0
    %v4759 = vadd.f32 0.0, %v4758
    %v4760 = vpop.f32.mrf.mxu0
    %4761 = vdwg.mxu0
    %4762 = vmatprep.subr.mxu0 0.0
    %4763 = vmatpush1.msra.mxu0 %v4674
    %4764 = vmatprep.subr.mxu0 0.0
    %4765 = vmatpush1.msra.mxu0 %v4673
    %4766 = vmatprep.subr.mxu0 0.0
    %4767 = vmatpush1.msra.mxu0 %v4672
    %4768 = vmatprep.subr.mxu0 0.0
    %4769 = vmatpush1.msra.mxu0 %v4671
    %4770 = vmatprep.subr.mxu0 0.0
    %4771 = vmatpush1.msra.mxu0 %v4670
    %4772 = vmatprep.subr.mxu0 0.0
    %4773 = vmatpush1.msra.mxu0 %v4669
    %4774 = vmatprep.subr.mxu0 0.0
    %4775 = vmatpush1.msra.mxu0 %v4668
    %4776 = vmatprep.subr.mxu0 0.0
    %4777 = vmatpush1.msra.mxu0 %v4667
    %4778 = vmatprep.subr.mxu0 0.0
    %4779 = vmatpush1.msra.mxu0 %v4666
    %4780 = vmatprep.subr.mxu0 0.0
    %4781 = vmatpush1.msra.mxu0 %v4665
    %4782 = vmatprep.subr.mxu0 0.0
    %4783 = vmatpush1.msra.mxu0 %v4664
    %4784 = vmatprep.subr.mxu0 0.0
    %4785 = vmatpush1.msra.mxu0 %v4663
    %4786 = vmatprep.subr.mxu0 0.0
    %4787 = vmatpush1.msra.mxu0 %v4662
    %4788 = vmatprep.subr.mxu0 0.0
    %4789 = vmatpush1.msra.mxu0 %v4661
    %4790 = vmatprep.subr.mxu0 0.0
    %4791 = vmatpush1.msra.mxu0 %v4660
    %4792 = vmatprep.subr.mxu0 0.0
    %4793 = vmatpush1.msra.mxu0 %v4659
    %4794 = vmatprep.subr.mxu0 0.0
    %4795 = vmatpush2.msra.mxu0 0.0
    %4796 = vmatprep.subr.mxu0 0.0
    %4797 = vmatpush2.msra.mxu0 0.0
    %4798 = vmatprep.subr.mxu0 0.0
    %4799 = vmatpush2.msra.mxu0 0.0
    %4800 = vmatprep.subr.mxu0 0.0
    %4801 = vmatpush2.msra.mxu0 0.0
    %4802 = vmatprep.subr.mxu0 0.0
    %4803 = vmatpush2.msra.mxu0 0.0
    %4804 = vmatprep.subr.mxu0 0.0
    %4805 = vmatpush2.msra.mxu0 0.0
    %4806 = vmatprep.subr.mxu0 0.0
    %4807 = vmatpush2.msra.mxu0 0.0
    %4808 = vmatprep.subr.mxu0 0.0
    %4809 = vmatpush2.msra.mxu0 0.0
    %4810 = vmatprep.subr.mxu0 0.0
    %4811 = vmatpush2.msra.mxu0 0.0
    %4812 = vmatprep.subr.mxu0 0.0
    %4813 = vmatpush2.msra.mxu0 0.0
    %4814 = vmatprep.subr.mxu0 0.0
    %4815 = vmatpush2.msra.mxu0 0.0
    %4816 = vmatprep.subr.mxu0 0.0
    %4817 = vmatpush2.msra.mxu0 0.0
    %4818 = vmatprep.subr.mxu0 0.0
    %4819 = vmatpush2.msra.mxu0 0.0
    %4820 = vmatprep.subr.mxu0 0.0
    %4821 = vmatpush2.msra.mxu0 0.0
    %4822 = vmatprep.subr.mxu0 0.0
    %4823 = vmatpush2.msra.mxu0 0.0
    %4824 = vmatprep.subr.mxu0 0.0
    %4825 = vmatpush2.msra.mxu0 0.0
    %4826 = vmatprep.mubr.f32.mxu0 0.0
    %4827 = vmatmul.mubr.f32.gmra.mxu0 %v4656
    %v4828 = vpop.f32.mrf.mxu0
    %v4829 = vadd.f32 %v4759, %v4828
    %v4830 = vpop.f32.mrf.mxu0
    %4831 = vdwg.mxu0
    %4832 = vmatprep.subr.mxu0 0.0
    %4833 = vmatpush1.msra.mxu0 0.0
    %4834 = vmatprep.subr.mxu0 0.0
    %4835 = vmatpush1.msra.mxu0 0.0
    %4836 = vmatprep.subr.mxu0 0.0
    %4837 = vmatpush1.msra.mxu0 0.0
    %4838 = vmatprep.subr.mxu0 0.0
    %4839 = vmatpush1.msra.mxu0 0.0
    %4840 = vmatprep.subr.mxu0 0.0
    %4841 = vmatpush1.msra.mxu0 0.0
    %4842 = vmatprep.subr.mxu0 0.0
    %4843 = vmatpush1.msra.mxu0 0.0
    %4844 = vmatprep.subr.mxu0 0.0
    %4845 = vmatpush1.msra.mxu0 0.0
    %4846 = vmatprep.subr.mxu0 0.0
    %4847 = vmatpush1.msra.mxu0 0.0
    %4848 = vmatprep.subr.mxu0 0.0
    %4849 = vmatpush1.msra.mxu0 0.0
    %4850 = vmatprep.subr.mxu0 0.0
    %4851 = vmatpush1.msra.mxu0 0.0
    %4852 = vmatprep.subr.mxu0 0.0
    %4853 = vmatpush1.msra.mxu0 0.0
    %4854 = vmatprep.subr.mxu0 0.0
    %4855 = vmatpush1.msra.mxu0 0.0
    %4856 = vmatprep.subr.mxu0 0.0
    %4857 = vmatpush1.msra.mxu0 0.0
    %4858 = vmatprep.subr.mxu0 0.0
    %4859 = vmatpush1.msra.mxu0 0.0
    %4860 = vmatprep.subr.mxu0 0.0
    %4861 = vmatpush1.msra.mxu0 0.0
    %4862 = vmatprep.subr.mxu0 0.0
    %4863 = vmatpush1.msra.mxu0 %v4588
    %4864 = vmatprep.subr.mxu0 0.0
    %4865 = vmatpush2.msra.mxu0 0.0
    %4866 = vmatprep.subr.mxu0 0.0
    %4867 = vmatpush2.msra.mxu0 0.0
    %4868 = vmatprep.subr.mxu0 0.0
    %4869 = vmatpush2.msra.mxu0 0.0
    %4870 = vmatprep.subr.mxu0 0.0
    %4871 = vmatpush2.msra.mxu0 0.0
    %4872 = vmatprep.subr.mxu0 0.0
    %4873 = vmatpush2.msra.mxu0 0.0
    %4874 = vmatprep.subr.mxu0 0.0
    %4875 = vmatpush2.msra.mxu0 0.0
    %4876 = vmatprep.subr.mxu0 0.0
    %4877 = vmatpush2.msra.mxu0 0.0
    %4878 = vmatprep.subr.mxu0 0.0
    %4879 = vmatpush2.msra.mxu0 0.0
    %4880 = vmatprep.subr.mxu0 0.0
    %4881 = vmatpush2.msra.mxu0 0.0
    %4882 = vmatprep.subr.mxu0 0.0
    %4883 = vmatpush2.msra.mxu0 0.0
    %4884 = vmatprep.subr.mxu0 0.0
    %4885 = vmatpush2.msra.mxu0 0.0
    %4886 = vmatprep.subr.mxu0 0.0
    %4887 = vmatpush2.msra.mxu0 0.0
    %4888 = vmatprep.subr.mxu0 0.0
    %4889 = vmatpush2.msra.mxu0 0.0
    %4890 = vmatprep.subr.mxu0 0.0
    %4891 = vmatpush2.msra.mxu0 0.0
    %4892 = vmatprep.subr.mxu0 0.0
    %4893 = vmatpush2.msra.mxu0 0.0
    %4894 = vmatprep.subr.mxu0 0.0
    %4895 = vmatpush2.msra.mxu0 0.0
    %4896 = vmatprep.mubr.f32.mxu0 0.0
    %4897 = vmatmul.mubr.f32.gmra.mxu0 %v4420
    %v4898 = vpop.f32.mrf.mxu0
    %v4899 = vadd.f32 0.0, %v4898
    %v4900 = vpop.f32.mrf.mxu0
    %4901 = vdwg.mxu0
    %s4902 = scalar_lea.vmem [#allocation27], 256
    %v4903 = vld [vmem:[%s4902] sm:$0xff]
    %v4904 = vld [vmem:[%s4902 + $0x8] sm:$0xff]
    %v4905 = vld [vmem:[%s4902 + $0x10] sm:$0xff]
    %v4906 = vld [vmem:[%s4902 + $0x18] sm:$0xff]
    %v4907 = vld [vmem:[%s4902 + $0x20] sm:$0xff]
    %v4908 = vld [vmem:[%s4902 + $0x28] sm:$0xff]
    %v4909 = vld [vmem:[%s4902 + $0x30] sm:$0xff]
    %v4910 = vld [vmem:[%s4902 + $0x38] sm:$0xff]
    %v4911 = vld [vmem:[%s4902 + $0x40] sm:$0xff]
    %v4912 = vld [vmem:[%s4902 + $0x48] sm:$0xff]
    %v4913 = vld [vmem:[%s4902 + $0x50] sm:$0xff]
    %v4914 = vld [vmem:[%s4902 + $0x58] sm:$0xff]
    %v4915 = vld [vmem:[%s4902 + $0x60] sm:$0xff]
    %v4916 = vld [vmem:[%s4902 + $0x68] sm:$0xff]
    %v4917 = vld [vmem:[%s4902 + $0x70] sm:$0xff]
    %v4918 = vld [vmem:[%s4902 + $0x78] sm:$0xff]
    %4919 = vmatprep.subr.mxu0 0.0
    %4920 = vmatpush1.msra.mxu0 %v4918
    %4921 = vmatprep.subr.mxu0 0.0
    %4922 = vmatpush1.msra.mxu0 %v4917
    %4923 = vmatprep.subr.mxu0 0.0
    %4924 = vmatpush1.msra.mxu0 %v4916
    %4925 = vmatprep.subr.mxu0 0.0
    %4926 = vmatpush1.msra.mxu0 %v4915
    %4927 = vmatprep.subr.mxu0 0.0
    %4928 = vmatpush1.msra.mxu0 %v4914
    %4929 = vmatprep.subr.mxu0 0.0
    %4930 = vmatpush1.msra.mxu0 %v4913
    %4931 = vmatprep.subr.mxu0 0.0
    %4932 = vmatpush1.msra.mxu0 %v4912
    %4933 = vmatprep.subr.mxu0 0.0
    %4934 = vmatpush1.msra.mxu0 %v4911
    %4935 = vmatprep.subr.mxu0 0.0
    %4936 = vmatpush1.msra.mxu0 %v4910
    %4937 = vmatprep.subr.mxu0 0.0
    %4938 = vmatpush1.msra.mxu0 %v4909
    %4939 = vmatprep.subr.mxu0 0.0
    %4940 = vmatpush1.msra.mxu0 %v4908
    %4941 = vmatprep.subr.mxu0 0.0
    %4942 = vmatpush1.msra.mxu0 %v4907
    %4943 = vmatprep.subr.mxu0 0.0
    %4944 = vmatpush1.msra.mxu0 %v4906
    %4945 = vmatprep.subr.mxu0 0.0
    %4946 = vmatpush1.msra.mxu0 %v4905
    %4947 = vmatprep.subr.mxu0 0.0
    %4948 = vmatpush1.msra.mxu0 %v4904
    %4949 = vmatprep.subr.mxu0 0.0
    %4950 = vmatpush1.msra.mxu0 %v4903
    %4951 = vmatprep.subr.mxu0 0.0
    %4952 = vmatpush2.msra.mxu0 0.0
    %4953 = vmatprep.subr.mxu0 0.0
    %4954 = vmatpush2.msra.mxu0 0.0
    %4955 = vmatprep.subr.mxu0 0.0
    %4956 = vmatpush2.msra.mxu0 0.0
    %4957 = vmatprep.subr.mxu0 0.0
    %4958 = vmatpush2.msra.mxu0 0.0
    %4959 = vmatprep.subr.mxu0 0.0
    %4960 = vmatpush2.msra.mxu0 0.0
    %4961 = vmatprep.subr.mxu0 0.0
    %4962 = vmatpush2.msra.mxu0 0.0
    %4963 = vmatprep.subr.mxu0 0.0
    %4964 = vmatpush2.msra.mxu0 0.0
    %4965 = vmatprep.subr.mxu0 0.0
    %4966 = vmatpush2.msra.mxu0 0.0
    %4967 = vmatprep.subr.mxu0 0.0
    %4968 = vmatpush2.msra.mxu0 0.0
    %4969 = vmatprep.subr.mxu0 0.0
    %4970 = vmatpush2.msra.mxu0 0.0
    %4971 = vmatprep.subr.mxu0 0.0
    %4972 = vmatpush2.msra.mxu0 0.0
    %4973 = vmatprep.subr.mxu0 0.0
    %4974 = vmatpush2.msra.mxu0 0.0
    %4975 = vmatprep.subr.mxu0 0.0
    %4976 = vmatpush2.msra.mxu0 0.0
    %4977 = vmatprep.subr.mxu0 0.0
    %4978 = vmatpush2.msra.mxu0 0.0
    %4979 = vmatprep.subr.mxu0 0.0
    %4980 = vmatpush2.msra.mxu0 0.0
    %4981 = vmatprep.subr.mxu0 0.0
    %4982 = vmatpush2.msra.mxu0 0.0
    %4983 = vmatprep.mubr.f32.mxu0 0.0
    %4984 = vmatmul.mubr.f32.gmra.mxu0 %v4899
    %v4985 = vpop.f32.mrf.mxu0
    %v4986 = vadd.f32 0.0, %v4985
    %v4987 = vpop.f32.mrf.mxu0
    %4988 = vdwg.mxu0
    %v4989 = vadd.f32 %v4829, %v4986
    %v4990 = vld [vmem:[#allocation28] sm:$0x1]
    %v4992 = vlaneseq
    %v4993 = vshrl.u32 %v4992, 7
    %v4994 = vsub.s32 0, %v4993
    %v4995 = vrot.slane %v4990, %v4994
    %v4997 = vadd.f32 %v4989, %v4995
    %v4998 = vmax.f32 %v4997, 0.0
    %v4999 = vld [vmem:[#allocation30] sm:$0xff]
    %v5000 = vld [vmem:[#allocation30 + $0x8] sm:$0xff]
    %v5001 = vld [vmem:[#allocation30 + $0x10] sm:$0xff]
    %v5002 = vld [vmem:[#allocation30 + $0x18] sm:$0xff]
    %v5003 = vld [vmem:[#allocation30 + $0x20] sm:$0xff]
    %v5004 = vld [vmem:[#allocation30 + $0x28] sm:$0xff]
    %v5005 = vld [vmem:[#allocation30 + $0x30] sm:$0xff]
    %v5006 = vld [vmem:[#allocation30 + $0x38] sm:$0xff]
    %v5007 = vld [vmem:[#allocation30 + $0x40] sm:$0xff]
    %v5008 = vld [vmem:[#allocation30 + $0x48] sm:$0xff]
    %v5009 = vld [vmem:[#allocation30 + $0x50] sm:$0xff]
    %v5010 = vld [vmem:[#allocation30 + $0x58] sm:$0xff]
    %v5011 = vld [vmem:[#allocation30 + $0x60] sm:$0xff]
    %v5012 = vld [vmem:[#allocation30 + $0x68] sm:$0xff]
    %v5013 = vld [vmem:[#allocation30 + $0x70] sm:$0xff]
    %v5014 = vld [vmem:[#allocation30 + $0x78] sm:$0xff]
    %v5015 = vld [vmem:[#allocation31] sm:$0x1]
    %v5017 = vlaneseq
    %v5018 = vshrl.u32 %v5017, 7
    %v5019 = vsub.s32 0, %v5018
    %v5020 = vrot.slane %v5015, %v5019
    %5022 = vmatprep.subr.mxu0 0.0
    %5023 = vmatpush1.msra.mxu0 %v5014
    %5024 = vmatprep.subr.mxu0 0.0
    %5025 = vmatpush1.msra.mxu0 %v5013
    %5026 = vmatprep.subr.mxu0 0.0
    %5027 = vmatpush1.msra.mxu0 %v5012
    %5028 = vmatprep.subr.mxu0 0.0
    %5029 = vmatpush1.msra.mxu0 %v5011
    %5030 = vmatprep.subr.mxu0 0.0
    %5031 = vmatpush1.msra.mxu0 %v5010
    %5032 = vmatprep.subr.mxu0 0.0
    %5033 = vmatpush1.msra.mxu0 %v5009
    %5034 = vmatprep.subr.mxu0 0.0
    %5035 = vmatpush1.msra.mxu0 %v5008
    %5036 = vmatprep.subr.mxu0 0.0
    %5037 = vmatpush1.msra.mxu0 %v5007
    %5038 = vmatprep.subr.mxu0 0.0
    %5039 = vmatpush1.msra.mxu0 %v5006
    %5040 = vmatprep.subr.mxu0 0.0
    %5041 = vmatpush1.msra.mxu0 %v5005
    %5042 = vmatprep.subr.mxu0 0.0
    %5043 = vmatpush1.msra.mxu0 %v5004
    %5044 = vmatprep.subr.mxu0 0.0
    %5045 = vmatpush1.msra.mxu0 %v5003
    %5046 = vmatprep.subr.mxu0 0.0
    %5047 = vmatpush1.msra.mxu0 %v5002
    %5048 = vmatprep.subr.mxu0 0.0
    %5049 = vmatpush1.msra.mxu0 %v5001
    %5050 = vmatprep.subr.mxu0 0.0
    %5051 = vmatpush1.msra.mxu0 %v5000
    %5052 = vmatprep.subr.mxu0 0.0
    %5053 = vmatpush1.msra.mxu0 %v4999
    %5054 = vmatprep.subr.mxu0 0.0
    %5055 = vmatpush2.msra.mxu0 0.0
    %5056 = vmatprep.subr.mxu0 0.0
    %5057 = vmatpush2.msra.mxu0 0.0
    %5058 = vmatprep.subr.mxu0 0.0
    %5059 = vmatpush2.msra.mxu0 0.0
    %5060 = vmatprep.subr.mxu0 0.0
    %5061 = vmatpush2.msra.mxu0 0.0
    %5062 = vmatprep.subr.mxu0 0.0
    %5063 = vmatpush2.msra.mxu0 0.0
    %5064 = vmatprep.subr.mxu0 0.0
    %5065 = vmatpush2.msra.mxu0 0.0
    %5066 = vmatprep.subr.mxu0 0.0
    %5067 = vmatpush2.msra.mxu0 0.0
    %5068 = vmatprep.subr.mxu0 0.0
    %5069 = vmatpush2.msra.mxu0 0.0
    %5070 = vmatprep.subr.mxu0 0.0
    %5071 = vmatpush2.msra.mxu0 0.0
    %5072 = vmatprep.subr.mxu0 0.0
    %5073 = vmatpush2.msra.mxu0 0.0
    %5074 = vmatprep.subr.mxu0 0.0
    %5075 = vmatpush2.msra.mxu0 0.0
    %5076 = vmatprep.subr.mxu0 0.0
    %5077 = vmatpush2.msra.mxu0 0.0
    %5078 = vmatprep.subr.mxu0 0.0
    %5079 = vmatpush2.msra.mxu0 0.0
    %5080 = vmatprep.subr.mxu0 0.0
    %5081 = vmatpush2.msra.mxu0 0.0
    %5082 = vmatprep.subr.mxu0 0.0
    %5083 = vmatpush2.msra.mxu0 0.0
    %5084 = vmatprep.subr.mxu0 0.0
    %5085 = vmatpush2.msra.mxu0 0.0
    %5086 = vmatprep.mubr.f32.mxu0 0.0
    %5087 = vmatmul.mubr.f32.gmra.mxu0 %v4998
    %v5088 = vpop.f32.mrf.mxu0
    %v5089 = vadd.f32 %v5020, %v5088
    %v5090 = vpop.f32.mrf.mxu0
    %5091 = vdwg.mxu0
    %v5092 = vld [vmem:[#allocation33] sm:$0xff]
    %v5093 = vld [vmem:[#allocation33 + $0x8] sm:$0xff]
    %v5094 = vld [vmem:[#allocation33 + $0x10] sm:$0xff]
    %v5095 = vld [vmem:[#allocation33 + $0x18] sm:$0xff]
    %v5096 = vld [vmem:[#allocation33 + $0x20] sm:$0xff]
    %v5097 = vld [vmem:[#allocation33 + $0x28] sm:$0xff]
    %v5098 = vld [vmem:[#allocation33 + $0x30] sm:$0xff]
    %v5099 = vld [vmem:[#allocation33 + $0x38] sm:$0xff]
    %v5100 = vld [vmem:[#allocation33 + $0x40] sm:$0xff]
    %v5101 = vld [vmem:[#allocation33 + $0x48] sm:$0xff]
    %v5102 = vld [vmem:[#allocation33 + $0x50] sm:$0xff]
    %v5103 = vld [vmem:[#allocation33 + $0x58] sm:$0xff]
    %v5104 = vld [vmem:[#allocation33 + $0x60] sm:$0xff]
    %v5105 = vld [vmem:[#allocation33 + $0x68] sm:$0xff]
    %v5106 = vld [vmem:[#allocation33 + $0x70] sm:$0xff]
    %v5107 = vld [vmem:[#allocation33 + $0x78] sm:$0xff]
    %v5108 = vld [vmem:[#allocation33 + $0x80] sm:$0xff]
    %v5109 = vld [vmem:[#allocation33 + $0x88] sm:$0xff]
    %v5110 = vld [vmem:[#allocation33 + $0x90] sm:$0xff]
    %v5111 = vld [vmem:[#allocation33 + $0x98] sm:$0xff]
    %v5112 = vld [vmem:[#allocation33 + $0xa0] sm:$0xff]
    %v5113 = vld [vmem:[#allocation33 + $0xa8] sm:$0xff]
    %v5114 = vld [vmem:[#allocation33 + $0xb0] sm:$0xff]
    %v5115 = vld [vmem:[#allocation33 + $0xb8] sm:$0xff]
    %v5116 = vld [vmem:[#allocation33 + $0xc0] sm:$0xff]
    %v5117 = vld [vmem:[#allocation33 + $0xc8] sm:$0xff]
    %v5118 = vld [vmem:[#allocation33 + $0xd0] sm:$0xff]
    %v5119 = vld [vmem:[#allocation33 + $0xd8] sm:$0xff]
    %v5120 = vld [vmem:[#allocation33 + $0xe0] sm:$0xff]
    %v5121 = vld [vmem:[#allocation33 + $0xe8] sm:$0xff]
    %v5122 = vld [vmem:[#allocation33 + $0xf0] sm:$0xff]
    %v5123 = vld [vmem:[#allocation33 + $0xf8] sm:$0xff]
    %v5124 = vld [vmem:[#allocation34] sm:$0x3]
    %v5126 = vlaneseq
    %v5127 = vshrl.u32 %v5126, 7
    %v5128 = vsub.s32 0, %v5127
    %v5129 = vrot.slane %v5124, %v5128
    %v5130 = vlaneseq
    %v5131 = vshrl.u32 %v5130, 7
    %v5132 = vsub.s32 1, %v5131
    %v5133 = vrot.slane %v5124, %v5132
    %5136 = vmatprep.subr.mxu0 %v5123
    %5137 = vmatpush1.msra.mxu0 %v5122
    %5138 = vmatprep.subr.mxu0 %v5121
    %5139 = vmatpush1.msra.mxu0 %v5120
    %5140 = vmatprep.subr.mxu0 %v5119
    %5141 = vmatpush1.msra.mxu0 %v5118
    %5142 = vmatprep.subr.mxu0 %v5117
    %5143 = vmatpush1.msra.mxu0 %v5116
    %5144 = vmatprep.subr.mxu0 %v5115
    %5145 = vmatpush1.msra.mxu0 %v5114
    %5146 = vmatprep.subr.mxu0 %v5113
    %5147 = vmatpush1.msra.mxu0 %v5112
    %5148 = vmatprep.subr.mxu0 %v5111
    %5149 = vmatpush1.msra.mxu0 %v5110
    %5150 = vmatprep.subr.mxu0 %v5109
    %5151 = vmatpush1.msra.mxu0 %v5108
    %5152 = vmatprep.subr.mxu0 %v5107
    %5153 = vmatpush1.msra.mxu0 %v5106
    %5154 = vmatprep.subr.mxu0 %v5105
    %5155 = vmatpush1.msra.mxu0 %v5104
    %5156 = vmatprep.subr.mxu0 %v5103
    %5157 = vmatpush1.msra.mxu0 %v5102
    %5158 = vmatprep.subr.mxu0 %v5101
    %5159 = vmatpush1.msra.mxu0 %v5100
    %5160 = vmatprep.subr.mxu0 %v5099
    %5161 = vmatpush1.msra.mxu0 %v5098
    %5162 = vmatprep.subr.mxu0 %v5097
    %5163 = vmatpush1.msra.mxu0 %v5096
    %5164 = vmatprep.subr.mxu0 %v5095
    %5165 = vmatpush1.msra.mxu0 %v5094
    %5166 = vmatprep.subr.mxu0 %v5093
    %5167 = vmatpush1.msra.mxu0 %v5092
    %5168 = vmatprep.subr.mxu0 0.0
    %5169 = vmatpush2.msra.mxu0 0.0
    %5170 = vmatprep.subr.mxu0 0.0
    %5171 = vmatpush2.msra.mxu0 0.0
    %5172 = vmatprep.subr.mxu0 0.0
    %5173 = vmatpush2.msra.mxu0 0.0
    %5174 = vmatprep.subr.mxu0 0.0
    %5175 = vmatpush2.msra.mxu0 0.0
    %5176 = vmatprep.subr.mxu0 0.0
    %5177 = vmatpush2.msra.mxu0 0.0
    %5178 = vmatprep.subr.mxu0 0.0
    %5179 = vmatpush2.msra.mxu0 0.0
    %5180 = vmatprep.subr.mxu0 0.0
    %5181 = vmatpush2.msra.mxu0 0.0
    %5182 = vmatprep.subr.mxu0 0.0
    %5183 = vmatpush2.msra.mxu0 0.0
    %5184 = vmatprep.subr.mxu0 0.0
    %5185 = vmatpush2.msra.mxu0 0.0
    %5186 = vmatprep.subr.mxu0 0.0
    %5187 = vmatpush2.msra.mxu0 0.0
    %5188 = vmatprep.subr.mxu0 0.0
    %5189 = vmatpush2.msra.mxu0 0.0
    %5190 = vmatprep.subr.mxu0 0.0
    %5191 = vmatpush2.msra.mxu0 0.0
    %5192 = vmatprep.subr.mxu0 0.0
    %5193 = vmatpush2.msra.mxu0 0.0
    %5194 = vmatprep.subr.mxu0 0.0
    %5195 = vmatpush2.msra.mxu0 0.0
    %5196 = vmatprep.subr.mxu0 0.0
    %5197 = vmatpush2.msra.mxu0 0.0
    %5198 = vmatprep.subr.mxu0 0.0
    %5199 = vmatpush2.msra.mxu0 0.0
    %5200 = vmatprep.mubr.f32.mxu0 0.0
    %5201 = vmatmul.mubr.f32.gmra.mxu0 %v3347
    %v5202 = vpop.f32.mrf.mxu0
    %v5203 = vadd.f32 %v5129, %v5202
    %v5204 = vpop.f32.mrf.mxu0
    %v5205 = vadd.f32 %v5133, %v5204
    %5206 = vmatprep.mubr.f32.mxu0 0.0
    %5207 = vmatmul.mubr.f32.gmra.mxu0 %v3348
    %v5208 = vpop.f32.mrf.mxu0
    %v5209 = vadd.f32 %v5129, %v5208
    %v5210 = vpop.f32.mrf.mxu0
    %v5211 = vadd.f32 %v5133, %v5210
    %5212 = vdwg.mxu0
    %v5213 = vld [vmem:[%s65] sm:$0xff]
    %v5214 = vld [vmem:[%s65 + $0x8] sm:$0xff]
    %v5215 = vld [vmem:[#allocation43] sm:$0xff]
    %v5216 = vld [vmem:[#allocation43 + $0x8] sm:$0xff]
    %v5217 = vld [vmem:[#allocation43 + $0x10] sm:$0xff]
    %v5218 = vld [vmem:[#allocation43 + $0x18] sm:$0xff]
    %v5219 = vld [vmem:[#allocation43 + $0x20] sm:$0xff]
    %v5220 = vld [vmem:[#allocation43 + $0x28] sm:$0xff]
    %v5221 = vld [vmem:[#allocation43 + $0x30] sm:$0xff]
    %v5222 = vld [vmem:[#allocation43 + $0x38] sm:$0xff]
    %v5223 = vld [vmem:[#allocation43 + $0x40] sm:$0xff]
    %v5224 = vld [vmem:[#allocation43 + $0x48] sm:$0xff]
    %v5225 = vld [vmem:[#allocation43 + $0x50] sm:$0xff]
    %v5226 = vld [vmem:[#allocation43 + $0x58] sm:$0xff]
    %v5227 = vld [vmem:[#allocation43 + $0x60] sm:$0xff]
    %v5228 = vld [vmem:[#allocation43 + $0x68] sm:$0xff]
    %v5229 = vld [vmem:[#allocation43 + $0x70] sm:$0xff]
    %v5230 = vld [vmem:[#allocation43 + $0x78] sm:$0xff]
    %v5231 = vld [vmem:[#allocation43 + $0x80] sm:$0xff]
    %v5232 = vld [vmem:[#allocation43 + $0x88] sm:$0xff]
    %v5233 = vld [vmem:[#allocation43 + $0x90] sm:$0xff]
    %v5234 = vld [vmem:[#allocation43 + $0x98] sm:$0xff]
    %v5235 = vld [vmem:[#allocation43 + $0xa0] sm:$0xff]
    %v5236 = vld [vmem:[#allocation43 + $0xa8] sm:$0xff]
    %v5237 = vld [vmem:[#allocation43 + $0xb0] sm:$0xff]
    %v5238 = vld [vmem:[#allocation43 + $0xb8] sm:$0xff]
    %v5239 = vld [vmem:[#allocation43 + $0xc0] sm:$0xff]
    %v5240 = vld [vmem:[#allocation43 + $0xc8] sm:$0xff]
    %v5241 = vld [vmem:[#allocation43 + $0xd0] sm:$0xff]
    %v5242 = vld [vmem:[#allocation43 + $0xd8] sm:$0xff]
    %v5243 = vld [vmem:[#allocation43 + $0xe0] sm:$0xff]
    %v5244 = vld [vmem:[#allocation43 + $0xe8] sm:$0xff]
    %v5245 = vld [vmem:[#allocation43 + $0xf0] sm:$0xff]
    %v5246 = vld [vmem:[#allocation43 + $0xf8] sm:$0xff]
    %v5248 = vsel %vm4170, %v5213, 0
    %v5251 = vsel %vm4170, %v5214, 0
    %5253 = vmatprep.subr.mxu0 0.0
    %5254 = vmatpush1.msra.mxu0 0.0
    %5255 = vmatprep.subr.mxu0 0.0
    %5256 = vmatpush1.msra.mxu0 0.0
    %5257 = vmatprep.subr.mxu0 0.0
    %5258 = vmatpush1.msra.mxu0 0.0
    %5259 = vmatprep.subr.mxu0 0.0
    %5260 = vmatpush1.msra.mxu0 0.0
    %5261 = vmatprep.subr.mxu0 0.0
    %5262 = vmatpush1.msra.mxu0 0.0
    %5263 = vmatprep.subr.mxu0 0.0
    %5264 = vmatpush1.msra.mxu0 0.0
    %5265 = vmatprep.subr.mxu0 0.0
    %5266 = vmatpush1.msra.mxu0 0.0
    %5267 = vmatprep.subr.mxu0 0.0
    %5268 = vmatpush1.msra.mxu0 0.0
    %5269 = vmatprep.subr.mxu0 0.0
    %5270 = vmatpush1.msra.mxu0 0.0
    %5271 = vmatprep.subr.mxu0 0.0
    %5272 = vmatpush1.msra.mxu0 0.0
    %5273 = vmatprep.subr.mxu0 0.0
    %5274 = vmatpush1.msra.mxu0 0.0
    %5275 = vmatprep.subr.mxu0 0.0
    %5276 = vmatpush1.msra.mxu0 0.0
    %5277 = vmatprep.subr.mxu0 0.0
    %5278 = vmatpush1.msra.mxu0 0.0
    %5279 = vmatprep.subr.mxu0 0.0
    %5280 = vmatpush1.msra.mxu0 0.0
    %5281 = vmatprep.subr.mxu0 0.0
    %5282 = vmatpush1.msra.mxu0 0.0
    %5283 = vmatprep.subr.mxu0 0.0
    %5284 = vmatpush1.msra.mxu0 %v5089
    %5285 = vmatprep.subr.mxu0 0.0
    %5286 = vmatpush2.msra.mxu0 0.0
    %5287 = vmatprep.subr.mxu0 0.0
    %5288 = vmatpush2.msra.mxu0 0.0
    %5289 = vmatprep.subr.mxu0 0.0
    %5290 = vmatpush2.msra.mxu0 0.0
    %5291 = vmatprep.subr.mxu0 0.0
    %5292 = vmatpush2.msra.mxu0 0.0
    %5293 = vmatprep.subr.mxu0 0.0
    %5294 = vmatpush2.msra.mxu0 0.0
    %5295 = vmatprep.subr.mxu0 0.0
    %5296 = vmatpush2.msra.mxu0 0.0
    %5297 = vmatprep.subr.mxu0 0.0
    %5298 = vmatpush2.msra.mxu0 0.0
    %5299 = vmatprep.subr.mxu0 0.0
    %5300 = vmatpush2.msra.mxu0 0.0
    %5301 = vmatprep.subr.mxu0 0.0
    %5302 = vmatpush2.msra.mxu0 0.0
    %5303 = vmatprep.subr.mxu0 0.0
    %5304 = vmatpush2.msra.mxu0 0.0
    %5305 = vmatprep.subr.mxu0 0.0
    %5306 = vmatpush2.msra.mxu0 0.0
    %5307 = vmatprep.subr.mxu0 0.0
    %5308 = vmatpush2.msra.mxu0 0.0
    %5309 = vmatprep.subr.mxu0 0.0
    %5310 = vmatpush2.msra.mxu0 0.0
    %5311 = vmatprep.subr.mxu0 0.0
    %5312 = vmatpush2.msra.mxu0 0.0
    %5313 = vmatprep.subr.mxu0 0.0
    %5314 = vmatpush2.msra.mxu0 0.0
    %5315 = vmatprep.subr.mxu0 0.0
    %5316 = vmatpush2.msra.mxu0 0.0
    %5317 = vmatprep.mubr.f32.mxu0 0.0
    %5318 = vmatmul.mubr.f32.gmra.mxu0 %v5248
    %v5319 = vpop.f32.mrf.mxu0
    %v5320 = vadd.f32 0.0, %v5319
    %v5321 = vpop.f32.mrf.mxu0
    %5322 = vmatprep.mubr.f32.mxu0 0.0
    %5323 = vmatmul.mubr.f32.gmra.mxu0 %v5251
    %v5324 = vpop.f32.mrf.mxu0
    %v5325 = vadd.f32 0.0, %v5324
    %v5326 = vpop.f32.mrf.mxu0
    %5327 = vdwg.mxu0
    %5328 = vmatprep.subr.mxu0 %v5246
    %5329 = vmatpush1.msra.mxu0 %v5245
    %5330 = vmatprep.subr.mxu0 %v5244
    %5331 = vmatpush1.msra.mxu0 %v5243
    %5332 = vmatprep.subr.mxu0 %v5242
    %5333 = vmatpush1.msra.mxu0 %v5241
    %5334 = vmatprep.subr.mxu0 %v5240
    %5335 = vmatpush1.msra.mxu0 %v5239
    %5336 = vmatprep.subr.mxu0 %v5238
    %5337 = vmatpush1.msra.mxu0 %v5237
    %5338 = vmatprep.subr.mxu0 %v5236
    %5339 = vmatpush1.msra.mxu0 %v5235
    %5340 = vmatprep.subr.mxu0 %v5234
    %5341 = vmatpush1.msra.mxu0 %v5233
    %5342 = vmatprep.subr.mxu0 %v5232
    %5343 = vmatpush1.msra.mxu0 %v5231
    %5344 = vmatprep.subr.mxu0 %v5230
    %5345 = vmatpush1.msra.mxu0 %v5229
    %5346 = vmatprep.subr.mxu0 %v5228
    %5347 = vmatpush1.msra.mxu0 %v5227
    %5348 = vmatprep.subr.mxu0 %v5226
    %5349 = vmatpush1.msra.mxu0 %v5225
    %5350 = vmatprep.subr.mxu0 %v5224
    %5351 = vmatpush1.msra.mxu0 %v5223
    %5352 = vmatprep.subr.mxu0 %v5222
    %5353 = vmatpush1.msra.mxu0 %v5221
    %5354 = vmatprep.subr.mxu0 %v5220
    %5355 = vmatpush1.msra.mxu0 %v5219
    %5356 = vmatprep.subr.mxu0 %v5218
    %5357 = vmatpush1.msra.mxu0 %v5217
    %5358 = vmatprep.subr.mxu0 %v5216
    %5359 = vmatpush1.msra.mxu0 %v5215
    %5360 = vmatprep.subr.mxu0 0.0
    %5361 = vmatpush2.msra.mxu0 0.0
    %5362 = vmatprep.subr.mxu0 0.0
    %5363 = vmatpush2.msra.mxu0 0.0
    %5364 = vmatprep.subr.mxu0 0.0
    %5365 = vmatpush2.msra.mxu0 0.0
    %5366 = vmatprep.subr.mxu0 0.0
    %5367 = vmatpush2.msra.mxu0 0.0
    %5368 = vmatprep.subr.mxu0 0.0
    %5369 = vmatpush2.msra.mxu0 0.0
    %5370 = vmatprep.subr.mxu0 0.0
    %5371 = vmatpush2.msra.mxu0 0.0
    %5372 = vmatprep.subr.mxu0 0.0
    %5373 = vmatpush2.msra.mxu0 0.0
    %5374 = vmatprep.subr.mxu0 0.0
    %5375 = vmatpush2.msra.mxu0 0.0
    %5376 = vmatprep.subr.mxu0 0.0
    %5377 = vmatpush2.msra.mxu0 0.0
    %5378 = vmatprep.subr.mxu0 0.0
    %5379 = vmatpush2.msra.mxu0 0.0
    %5380 = vmatprep.subr.mxu0 0.0
    %5381 = vmatpush2.msra.mxu0 0.0
    %5382 = vmatprep.subr.mxu0 0.0
    %5383 = vmatpush2.msra.mxu0 0.0
    %5384 = vmatprep.subr.mxu0 0.0
    %5385 = vmatpush2.msra.mxu0 0.0
    %5386 = vmatprep.subr.mxu0 0.0
    %5387 = vmatpush2.msra.mxu0 0.0
    %5388 = vmatprep.subr.mxu0 0.0
    %5389 = vmatpush2.msra.mxu0 0.0
    %5390 = vmatprep.subr.mxu0 0.0
    %5391 = vmatpush2.msra.mxu0 0.0
    %5392 = vmatprep.mubr.f32.mxu0 0.0
    %5393 = vmatmul.mubr.f32.gmra.mxu0 %v5320
    %v5394 = vpop.f32.mrf.mxu0
    %v5395 = vadd.f32 %v5203, %v5394
    %v5396 = vpop.f32.mrf.mxu0
    %v5397 = vadd.f32 %v5205, %v5396
    %5398 = vmatprep.mubr.f32.mxu0 0.0
    %5399 = vmatmul.mubr.f32.gmra.mxu0 %v5325
    %v5400 = vpop.f32.mrf.mxu0
    %v5401 = vadd.f32 %v5209, %v5400
    %v5402 = vpop.f32.mrf.mxu0
    %v5403 = vadd.f32 %v5211, %v5402
    %5404 = vdwg.mxu0
    %v5405 = vld [vmem:[%s53] sm:$0xff]
    %v5406 = vld [vmem:[%s53 + $0x8] sm:$0xff]
    %v5407 = vld [vmem:[%s53 + $0x10] sm:$0xff]
    %v5408 = vld [vmem:[%s53 + $0x18] sm:$0xff]
    %v5409 = vld [vmem:[%s53 + $0x20] sm:$0xff]
    %v5410 = vld [vmem:[%s53 + $0x28] sm:$0xff]
    %v5411 = vld [vmem:[%s53 + $0x30] sm:$0xff]
    %v5412 = vld [vmem:[%s53 + $0x38] sm:$0xff]
    %v5413 = vld [vmem:[%s53 + $0x40] sm:$0xff]
    %v5414 = vld [vmem:[%s53 + $0x48] sm:$0xff]
    %v5415 = vld [vmem:[%s53 + $0x50] sm:$0xff]
    %v5416 = vld [vmem:[%s53 + $0x58] sm:$0xff]
    %v5417 = vld [vmem:[%s53 + $0x60] sm:$0xff]
    %v5418 = vld [vmem:[%s53 + $0x68] sm:$0xff]
    %v5419 = vld [vmem:[%s53 + $0x70] sm:$0xff]
    %v5420 = vld [vmem:[%s53 + $0x78] sm:$0xff]
    %v5421 = vld [vmem:[%s53 + $0x80] sm:$0xff]
    %v5422 = vld [vmem:[%s53 + $0x88] sm:$0xff]
    %v5423 = vld [vmem:[%s53 + $0x90] sm:$0xff]
    %v5424 = vld [vmem:[%s53 + $0x98] sm:$0xff]
    %v5425 = vld [vmem:[%s53 + $0xa0] sm:$0xff]
    %v5426 = vld [vmem:[%s53 + $0xa8] sm:$0xff]
    %v5427 = vld [vmem:[%s53 + $0xb0] sm:$0xff]
    %v5428 = vld [vmem:[%s53 + $0xb8] sm:$0xff]
    %v5429 = vld [vmem:[%s53 + $0xc0] sm:$0xff]
    %v5430 = vld [vmem:[%s53 + $0xc8] sm:$0xff]
    %v5431 = vld [vmem:[%s53 + $0xd0] sm:$0xff]
    %v5432 = vld [vmem:[%s53 + $0xd8] sm:$0xff]
    %v5433 = vld [vmem:[%s53 + $0xe0] sm:$0xff]
    %v5434 = vld [vmem:[%s53 + $0xe8] sm:$0xff]
    %v5435 = vld [vmem:[%s53 + $0xf0] sm:$0xff]
    %v5436 = vld [vmem:[%s53 + $0xf8] sm:$0xff]
    %v5437 = vld [vmem:[%s53 + $0x100] sm:$0xff]
    %v5438 = vld [vmem:[%s53 + $0x108] sm:$0xff]
    %v5439 = vld [vmem:[%s53 + $0x110] sm:$0xff]
    %v5440 = vld [vmem:[%s53 + $0x118] sm:$0xff]
    %v5441 = vld [vmem:[%s53 + $0x120] sm:$0xff]
    %v5442 = vld [vmem:[%s53 + $0x128] sm:$0xff]
    %v5443 = vld [vmem:[%s53 + $0x130] sm:$0xff]
    %v5444 = vld [vmem:[%s53 + $0x138] sm:$0xff]
    %v5445 = vld [vmem:[%s53 + $0x140] sm:$0xff]
    %v5446 = vld [vmem:[%s53 + $0x148] sm:$0xff]
    %v5447 = vld [vmem:[%s53 + $0x150] sm:$0xff]
    %v5448 = vld [vmem:[%s53 + $0x158] sm:$0xff]
    %v5449 = vld [vmem:[%s53 + $0x160] sm:$0xff]
    %v5450 = vld [vmem:[%s53 + $0x168] sm:$0xff]
    %v5451 = vld [vmem:[%s53 + $0x170] sm:$0xff]
    %v5452 = vld [vmem:[%s53 + $0x178] sm:$0xff]
    %v5453 = vld [vmem:[%s53 + $0x180] sm:$0xff]
    %v5454 = vld [vmem:[%s53 + $0x188] sm:$0xff]
    %v5455 = vld [vmem:[%s53 + $0x190] sm:$0xff]
    %v5456 = vld [vmem:[%s53 + $0x198] sm:$0xff]
    %v5457 = vld [vmem:[%s53 + $0x1a0] sm:$0xff]
    %v5458 = vld [vmem:[%s53 + $0x1a8] sm:$0xff]
    %v5459 = vld [vmem:[%s53 + $0x1b0] sm:$0xff]
    %v5460 = vld [vmem:[%s53 + $0x1b8] sm:$0xff]
    %v5461 = vld [vmem:[%s53 + $0x1c0] sm:$0xff]
    %v5462 = vld [vmem:[%s53 + $0x1c8] sm:$0xff]
    %v5463 = vld [vmem:[%s53 + $0x1d0] sm:$0xff]
    %v5464 = vld [vmem:[%s53 + $0x1d8] sm:$0xff]
    %v5465 = vld [vmem:[%s53 + $0x1e0] sm:$0xff]
    %v5466 = vld [vmem:[%s53 + $0x1e8] sm:$0xff]
    %v5467 = vld [vmem:[%s53 + $0x1f0] sm:$0xff]
    %v5468 = vld [vmem:[%s53 + $0x1f8] sm:$0xff]
    %v5469 = vld [vmem:[#allocation36] sm:$0xf]
    %v5471 = vlaneseq
    %v5472 = vshrl.u32 %v5471, 7
    %v5473 = vsub.s32 0, %v5472
    %v5474 = vrot.slane %v5469, %v5473
    %v5475 = vlaneseq
    %v5476 = vshrl.u32 %v5475, 7
    %v5477 = vsub.s32 1, %v5476
    %v5478 = vrot.slane %v5469, %v5477
    %v5479 = vlaneseq
    %v5480 = vshrl.u32 %v5479, 7
    %v5481 = vsub.s32 2, %v5480
    %v5482 = vrot.slane %v5469, %v5481
    %v5483 = vlaneseq
    %v5484 = vshrl.u32 %v5483, 7
    %v5485 = vsub.s32 3, %v5484
    %v5486 = vrot.slane %v5469, %v5485
    %5491 = vmatprep.subr.mxu0 %v5466
    %5492 = vmatpush1.msra.mxu0 %v5465
    %5493 = vmatprep.subr.mxu0 %v5462
    %5494 = vmatpush1.msra.mxu0 %v5461
    %5495 = vmatprep.subr.mxu0 %v5458
    %5496 = vmatpush1.msra.mxu0 %v5457
    %5497 = vmatprep.subr.mxu0 %v5454
    %5498 = vmatpush1.msra.mxu0 %v5453
    %5499 = vmatprep.subr.mxu0 %v5450
    %5500 = vmatpush1.msra.mxu0 %v5449
    %5501 = vmatprep.subr.mxu0 %v5446
    %5502 = vmatpush1.msra.mxu0 %v5445
    %5503 = vmatprep.subr.mxu0 %v5442
    %5504 = vmatpush1.msra.mxu0 %v5441
    %5505 = vmatprep.subr.mxu0 %v5438
    %5506 = vmatpush1.msra.mxu0 %v5437
    %5507 = vmatprep.subr.mxu0 %v5434
    %5508 = vmatpush1.msra.mxu0 %v5433
    %5509 = vmatprep.subr.mxu0 %v5430
    %5510 = vmatpush1.msra.mxu0 %v5429
    %5511 = vmatprep.subr.mxu0 %v5426
    %5512 = vmatpush1.msra.mxu0 %v5425
    %5513 = vmatprep.subr.mxu0 %v5422
    %5514 = vmatpush1.msra.mxu0 %v5421
    %5515 = vmatprep.subr.mxu0 %v5418
    %5516 = vmatpush1.msra.mxu0 %v5417
    %5517 = vmatprep.subr.mxu0 %v5414
    %5518 = vmatpush1.msra.mxu0 %v5413
    %5519 = vmatprep.subr.mxu0 %v5410
    %5520 = vmatpush1.msra.mxu0 %v5409
    %5521 = vmatprep.subr.mxu0 %v5406
    %5522 = vmatpush1.msra.mxu0 %v5405
    %5523 = vmatprep.subr.mxu0 0.0
    %5524 = vmatpush2.msra.mxu0 0.0
    %5525 = vmatprep.subr.mxu0 0.0
    %5526 = vmatpush2.msra.mxu0 0.0
    %5527 = vmatprep.subr.mxu0 0.0
    %5528 = vmatpush2.msra.mxu0 0.0
    %5529 = vmatprep.subr.mxu0 0.0
    %5530 = vmatpush2.msra.mxu0 0.0
    %5531 = vmatprep.subr.mxu0 0.0
    %5532 = vmatpush2.msra.mxu0 0.0
    %5533 = vmatprep.subr.mxu0 0.0
    %5534 = vmatpush2.msra.mxu0 0.0
    %5535 = vmatprep.subr.mxu0 0.0
    %5536 = vmatpush2.msra.mxu0 0.0
    %5537 = vmatprep.subr.mxu0 0.0
    %5538 = vmatpush2.msra.mxu0 0.0
    %5539 = vmatprep.subr.mxu0 0.0
    %5540 = vmatpush2.msra.mxu0 0.0
    %5541 = vmatprep.subr.mxu0 0.0
    %5542 = vmatpush2.msra.mxu0 0.0
    %5543 = vmatprep.subr.mxu0 0.0
    %5544 = vmatpush2.msra.mxu0 0.0
    %5545 = vmatprep.subr.mxu0 0.0
    %5546 = vmatpush2.msra.mxu0 0.0
    %5547 = vmatprep.subr.mxu0 0.0
    %5548 = vmatpush2.msra.mxu0 0.0
    %5549 = vmatprep.subr.mxu0 0.0
    %5550 = vmatpush2.msra.mxu0 0.0
    %5551 = vmatprep.subr.mxu0 0.0
    %5552 = vmatpush2.msra.mxu0 0.0
    %5553 = vmatprep.subr.mxu0 0.0
    %5554 = vmatpush2.msra.mxu0 0.0
    %5555 = vmatprep.mubr.f32.mxu0 0.0
    %5556 = vmatmul.mubr.f32.gmra.mxu0 %v1556
    %v5557 = vpop.f32.mrf.mxu0
    %v5558 = vadd.f32 %v5474, %v5557
    %v5559 = vpop.f32.mrf.mxu0
    %v5560 = vadd.f32 %v5478, %v5559
    %5561 = vmatprep.mubr.f32.mxu0 0.0
    %5562 = vmatmul.mubr.f32.gmra.mxu0 %v1557
    %v5563 = vpop.f32.mrf.mxu0
    %v5564 = vadd.f32 %v5474, %v5563
    %v5565 = vpop.f32.mrf.mxu0
    %v5566 = vadd.f32 %v5478, %v5565
    %5567 = vmatprep.mubr.f32.mxu0 0.0
    %5568 = vmatmul.mubr.f32.gmra.mxu0 %v1558
    %v5569 = vpop.f32.mrf.mxu0
    %v5570 = vadd.f32 %v5474, %v5569
    %v5571 = vpop.f32.mrf.mxu0
    %v5572 = vadd.f32 %v5478, %v5571
    %5573 = vmatprep.mubr.f32.mxu0 0.0
    %5574 = vmatmul.mubr.f32.gmra.mxu0 %v1559
    %v5575 = vpop.f32.mrf.mxu0
    %v5576 = vadd.f32 %v5474, %v5575
    %v5577 = vpop.f32.mrf.mxu0
    %v5578 = vadd.f32 %v5478, %v5577
    %5579 = vdwg.mxu0
    %5580 = vmatprep.subr.mxu0 %v5468
    %5581 = vmatpush1.msra.mxu0 %v5467
    %5582 = vmatprep.subr.mxu0 %v5464
    %5583 = vmatpush1.msra.mxu0 %v5463
    %5584 = vmatprep.subr.mxu0 %v5460
    %5585 = vmatpush1.msra.mxu0 %v5459
    %5586 = vmatprep.subr.mxu0 %v5456
    %5587 = vmatpush1.msra.mxu0 %v5455
    %5588 = vmatprep.subr.mxu0 %v5452
    %5589 = vmatpush1.msra.mxu0 %v5451
    %5590 = vmatprep.subr.mxu0 %v5448
    %5591 = vmatpush1.msra.mxu0 %v5447
    %5592 = vmatprep.subr.mxu0 %v5444
    %5593 = vmatpush1.msra.mxu0 %v5443
    %5594 = vmatprep.subr.mxu0 %v5440
    %5595 = vmatpush1.msra.mxu0 %v5439
    %5596 = vmatprep.subr.mxu0 %v5436
    %5597 = vmatpush1.msra.mxu0 %v5435
    %5598 = vmatprep.subr.mxu0 %v5432
    %5599 = vmatpush1.msra.mxu0 %v5431
    %5600 = vmatprep.subr.mxu0 %v5428
    %5601 = vmatpush1.msra.mxu0 %v5427
    %5602 = vmatprep.subr.mxu0 %v5424
    %5603 = vmatpush1.msra.mxu0 %v5423
    %5604 = vmatprep.subr.mxu0 %v5420
    %5605 = vmatpush1.msra.mxu0 %v5419
    %5606 = vmatprep.subr.mxu0 %v5416
    %5607 = vmatpush1.msra.mxu0 %v5415
    %5608 = vmatprep.subr.mxu0 %v5412
    %5609 = vmatpush1.msra.mxu0 %v5411
    %5610 = vmatprep.subr.mxu0 %v5408
    %5611 = vmatpush1.msra.mxu0 %v5407
    %5612 = vmatprep.subr.mxu0 0.0
    %5613 = vmatpush2.msra.mxu0 0.0
    %5614 = vmatprep.subr.mxu0 0.0
    %5615 = vmatpush2.msra.mxu0 0.0
    %5616 = vmatprep.subr.mxu0 0.0
    %5617 = vmatpush2.msra.mxu0 0.0
    %5618 = vmatprep.subr.mxu0 0.0
    %5619 = vmatpush2.msra.mxu0 0.0
    %5620 = vmatprep.subr.mxu0 0.0
    %5621 = vmatpush2.msra.mxu0 0.0
    %5622 = vmatprep.subr.mxu0 0.0
    %5623 = vmatpush2.msra.mxu0 0.0
    %5624 = vmatprep.subr.mxu0 0.0
    %5625 = vmatpush2.msra.mxu0 0.0
    %5626 = vmatprep.subr.mxu0 0.0
    %5627 = vmatpush2.msra.mxu0 0.0
    %5628 = vmatprep.subr.mxu0 0.0
    %5629 = vmatpush2.msra.mxu0 0.0
    %5630 = vmatprep.subr.mxu0 0.0
    %5631 = vmatpush2.msra.mxu0 0.0
    %5632 = vmatprep.subr.mxu0 0.0
    %5633 = vmatpush2.msra.mxu0 0.0
    %5634 = vmatprep.subr.mxu0 0.0
    %5635 = vmatpush2.msra.mxu0 0.0
    %5636 = vmatprep.subr.mxu0 0.0
    %5637 = vmatpush2.msra.mxu0 0.0
    %5638 = vmatprep.subr.mxu0 0.0
    %5639 = vmatpush2.msra.mxu0 0.0
    %5640 = vmatprep.subr.mxu0 0.0
    %5641 = vmatpush2.msra.mxu0 0.0
    %5642 = vmatprep.subr.mxu0 0.0
    %5643 = vmatpush2.msra.mxu0 0.0
    %5644 = vmatprep.mubr.f32.mxu0 0.0
    %5645 = vmatmul.mubr.f32.gmra.mxu0 %v1556
    %v5646 = vpop.f32.mrf.mxu0
    %v5647 = vadd.f32 %v5482, %v5646
    %v5648 = vpop.f32.mrf.mxu0
    %v5649 = vadd.f32 %v5486, %v5648
    %5650 = vmatprep.mubr.f32.mxu0 0.0
    %5651 = vmatmul.mubr.f32.gmra.mxu0 %v1557
    %v5652 = vpop.f32.mrf.mxu0
    %v5653 = vadd.f32 %v5482, %v5652
    %v5654 = vpop.f32.mrf.mxu0
    %v5655 = vadd.f32 %v5486, %v5654
    %5656 = vmatprep.mubr.f32.mxu0 0.0
    %5657 = vmatmul.mubr.f32.gmra.mxu0 %v1558
    %v5658 = vpop.f32.mrf.mxu0
    %v5659 = vadd.f32 %v5482, %v5658
    %v5660 = vpop.f32.mrf.mxu0
    %v5661 = vadd.f32 %v5486, %v5660
    %5662 = vmatprep.mubr.f32.mxu0 0.0
    %5663 = vmatmul.mubr.f32.gmra.mxu0 %v1559
    %v5664 = vpop.f32.mrf.mxu0
    %v5665 = vadd.f32 %v5482, %v5664
    %v5666 = vpop.f32.mrf.mxu0
    %v5667 = vadd.f32 %v5486, %v5666
    %5668 = vdwg.mxu0
    %v5669 = vld [vmem:[%s69] sm:$0xff]
    %v5670 = vld [vmem:[%s69 + $0x8] sm:$0xff]
    %v5671 = vld [vmem:[%s69 + $0x10] sm:$0xff]
    %v5672 = vld [vmem:[%s69 + $0x18] sm:$0xff]
    %v5673 = vld [vmem:[#allocation45] sm:$0xff]
    %v5674 = vld [vmem:[#allocation45 + $0x8] sm:$0xff]
    %v5675 = vld [vmem:[#allocation45 + $0x10] sm:$0xff]
    %v5676 = vld [vmem:[#allocation45 + $0x18] sm:$0xff]
    %v5677 = vld [vmem:[#allocation45 + $0x20] sm:$0xff]
    %v5678 = vld [vmem:[#allocation45 + $0x28] sm:$0xff]
    %v5679 = vld [vmem:[#allocation45 + $0x30] sm:$0xff]
    %v5680 = vld [vmem:[#allocation45 + $0x38] sm:$0xff]
    %v5681 = vld [vmem:[#allocation45 + $0x40] sm:$0xff]
    %v5682 = vld [vmem:[#allocation45 + $0x48] sm:$0xff]
    %v5683 = vld [vmem:[#allocation45 + $0x50] sm:$0xff]
    %v5684 = vld [vmem:[#allocation45 + $0x58] sm:$0xff]
    %v5685 = vld [vmem:[#allocation45 + $0x60] sm:$0xff]
    %v5686 = vld [vmem:[#allocation45 + $0x68] sm:$0xff]
    %v5687 = vld [vmem:[#allocation45 + $0x70] sm:$0xff]
    %v5688 = vld [vmem:[#allocation45 + $0x78] sm:$0xff]
    %v5689 = vld [vmem:[#allocation45 + $0x80] sm:$0xff]
    %v5690 = vld [vmem:[#allocation45 + $0x88] sm:$0xff]
    %v5691 = vld [vmem:[#allocation45 + $0x90] sm:$0xff]
    %v5692 = vld [vmem:[#allocation45 + $0x98] sm:$0xff]
    %v5693 = vld [vmem:[#allocation45 + $0xa0] sm:$0xff]
    %v5694 = vld [vmem:[#allocation45 + $0xa8] sm:$0xff]
    %v5695 = vld [vmem:[#allocation45 + $0xb0] sm:$0xff]
    %v5696 = vld [vmem:[#allocation45 + $0xb8] sm:$0xff]
    %v5697 = vld [vmem:[#allocation45 + $0xc0] sm:$0xff]
    %v5698 = vld [vmem:[#allocation45 + $0xc8] sm:$0xff]
    %v5699 = vld [vmem:[#allocation45 + $0xd0] sm:$0xff]
    %v5700 = vld [vmem:[#allocation45 + $0xd8] sm:$0xff]
    %v5701 = vld [vmem:[#allocation45 + $0xe0] sm:$0xff]
    %v5702 = vld [vmem:[#allocation45 + $0xe8] sm:$0xff]
    %v5703 = vld [vmem:[#allocation45 + $0xf0] sm:$0xff]
    %v5704 = vld [vmem:[#allocation45 + $0xf8] sm:$0xff]
    %v5705 = vld [vmem:[#allocation45 + $0x100] sm:$0xff]
    %v5706 = vld [vmem:[#allocation45 + $0x108] sm:$0xff]
    %v5707 = vld [vmem:[#allocation45 + $0x110] sm:$0xff]
    %v5708 = vld [vmem:[#allocation45 + $0x118] sm:$0xff]
    %v5709 = vld [vmem:[#allocation45 + $0x120] sm:$0xff]
    %v5710 = vld [vmem:[#allocation45 + $0x128] sm:$0xff]
    %v5711 = vld [vmem:[#allocation45 + $0x130] sm:$0xff]
    %v5712 = vld [vmem:[#allocation45 + $0x138] sm:$0xff]
    %v5713 = vld [vmem:[#allocation45 + $0x140] sm:$0xff]
    %v5714 = vld [vmem:[#allocation45 + $0x148] sm:$0xff]
    %v5715 = vld [vmem:[#allocation45 + $0x150] sm:$0xff]
    %v5716 = vld [vmem:[#allocation45 + $0x158] sm:$0xff]
    %v5717 = vld [vmem:[#allocation45 + $0x160] sm:$0xff]
    %v5718 = vld [vmem:[#allocation45 + $0x168] sm:$0xff]
    %v5719 = vld [vmem:[#allocation45 + $0x170] sm:$0xff]
    %v5720 = vld [vmem:[#allocation45 + $0x178] sm:$0xff]
    %v5721 = vld [vmem:[#allocation45 + $0x180] sm:$0xff]
    %v5722 = vld [vmem:[#allocation45 + $0x188] sm:$0xff]
    %v5723 = vld [vmem:[#allocation45 + $0x190] sm:$0xff]
    %v5724 = vld [vmem:[#allocation45 + $0x198] sm:$0xff]
    %v5725 = vld [vmem:[#allocation45 + $0x1a0] sm:$0xff]
    %v5726 = vld [vmem:[#allocation45 + $0x1a8] sm:$0xff]
    %v5727 = vld [vmem:[#allocation45 + $0x1b0] sm:$0xff]
    %v5728 = vld [vmem:[#allocation45 + $0x1b8] sm:$0xff]
    %v5729 = vld [vmem:[#allocation45 + $0x1c0] sm:$0xff]
    %v5730 = vld [vmem:[#allocation45 + $0x1c8] sm:$0xff]
    %v5731 = vld [vmem:[#allocation45 + $0x1d0] sm:$0xff]
    %v5732 = vld [vmem:[#allocation45 + $0x1d8] sm:$0xff]
    %v5733 = vld [vmem:[#allocation45 + $0x1e0] sm:$0xff]
    %v5734 = vld [vmem:[#allocation45 + $0x1e8] sm:$0xff]
    %v5735 = vld [vmem:[#allocation45 + $0x1f0] sm:$0xff]
    %v5736 = vld [vmem:[#allocation45 + $0x1f8] sm:$0xff]
    %v5737 = vld [vmem:[#allocation45 + $0x200] sm:$0xff]
    %v5738 = vld [vmem:[#allocation45 + $0x208] sm:$0xff]
    %v5739 = vld [vmem:[#allocation45 + $0x210] sm:$0xff]
    %v5740 = vld [vmem:[#allocation45 + $0x218] sm:$0xff]
    %v5741 = vld [vmem:[#allocation45 + $0x220] sm:$0xff]
    %v5742 = vld [vmem:[#allocation45 + $0x228] sm:$0xff]
    %v5743 = vld [vmem:[#allocation45 + $0x230] sm:$0xff]
    %v5744 = vld [vmem:[#allocation45 + $0x238] sm:$0xff]
    %v5745 = vld [vmem:[#allocation45 + $0x240] sm:$0xff]
    %v5746 = vld [vmem:[#allocation45 + $0x248] sm:$0xff]
    %v5747 = vld [vmem:[#allocation45 + $0x250] sm:$0xff]
    %v5748 = vld [vmem:[#allocation45 + $0x258] sm:$0xff]
    %v5749 = vld [vmem:[#allocation45 + $0x260] sm:$0xff]
    %v5750 = vld [vmem:[#allocation45 + $0x268] sm:$0xff]
    %v5751 = vld [vmem:[#allocation45 + $0x270] sm:$0xff]
    %v5752 = vld [vmem:[#allocation45 + $0x278] sm:$0xff]
    %v5753 = vld [vmem:[#allocation45 + $0x280] sm:$0xff]
    %v5754 = vld [vmem:[#allocation45 + $0x288] sm:$0xff]
    %v5755 = vld [vmem:[#allocation45 + $0x290] sm:$0xff]
    %v5756 = vld [vmem:[#allocation45 + $0x298] sm:$0xff]
    %v5757 = vld [vmem:[#allocation45 + $0x2a0] sm:$0xff]
    %v5758 = vld [vmem:[#allocation45 + $0x2a8] sm:$0xff]
    %v5759 = vld [vmem:[#allocation45 + $0x2b0] sm:$0xff]
    %v5760 = vld [vmem:[#allocation45 + $0x2b8] sm:$0xff]
    %v5761 = vld [vmem:[#allocation45 + $0x2c0] sm:$0xff]
    %v5762 = vld [vmem:[#allocation45 + $0x2c8] sm:$0xff]
    %v5763 = vld [vmem:[#allocation45 + $0x2d0] sm:$0xff]
    %v5764 = vld [vmem:[#allocation45 + $0x2d8] sm:$0xff]
    %v5765 = vld [vmem:[#allocation45 + $0x2e0] sm:$0xff]
    %v5766 = vld [vmem:[#allocation45 + $0x2e8] sm:$0xff]
    %v5767 = vld [vmem:[#allocation45 + $0x2f0] sm:$0xff]
    %v5768 = vld [vmem:[#allocation45 + $0x2f8] sm:$0xff]
    %v5769 = vld [vmem:[#allocation45 + $0x300] sm:$0xff]
    %v5770 = vld [vmem:[#allocation45 + $0x308] sm:$0xff]
    %v5771 = vld [vmem:[#allocation45 + $0x310] sm:$0xff]
    %v5772 = vld [vmem:[#allocation45 + $0x318] sm:$0xff]
    %v5773 = vld [vmem:[#allocation45 + $0x320] sm:$0xff]
    %v5774 = vld [vmem:[#allocation45 + $0x328] sm:$0xff]
    %v5775 = vld [vmem:[#allocation45 + $0x330] sm:$0xff]
    %v5776 = vld [vmem:[#allocation45 + $0x338] sm:$0xff]
    %v5777 = vld [vmem:[#allocation45 + $0x340] sm:$0xff]
    %v5778 = vld [vmem:[#allocation45 + $0x348] sm:$0xff]
    %v5779 = vld [vmem:[#allocation45 + $0x350] sm:$0xff]
    %v5780 = vld [vmem:[#allocation45 + $0x358] sm:$0xff]
    %v5781 = vld [vmem:[#allocation45 + $0x360] sm:$0xff]
    %v5782 = vld [vmem:[#allocation45 + $0x368] sm:$0xff]
    %v5783 = vld [vmem:[#allocation45 + $0x370] sm:$0xff]
    %v5784 = vld [vmem:[#allocation45 + $0x378] sm:$0xff]
    %v5785 = vld [vmem:[#allocation45 + $0x380] sm:$0xff]
    %v5786 = vld [vmem:[#allocation45 + $0x388] sm:$0xff]
    %v5787 = vld [vmem:[#allocation45 + $0x390] sm:$0xff]
    %v5788 = vld [vmem:[#allocation45 + $0x398] sm:$0xff]
    %v5789 = vld [vmem:[#allocation45 + $0x3a0] sm:$0xff]
    %v5790 = vld [vmem:[#allocation45 + $0x3a8] sm:$0xff]
    %v5791 = vld [vmem:[#allocation45 + $0x3b0] sm:$0xff]
    %v5792 = vld [vmem:[#allocation45 + $0x3b8] sm:$0xff]
    %v5793 = vld [vmem:[#allocation45 + $0x3c0] sm:$0xff]
    %v5794 = vld [vmem:[#allocation45 + $0x3c8] sm:$0xff]
    %v5795 = vld [vmem:[#allocation45 + $0x3d0] sm:$0xff]
    %v5796 = vld [vmem:[#allocation45 + $0x3d8] sm:$0xff]
    %v5797 = vld [vmem:[#allocation45 + $0x3e0] sm:$0xff]
    %v5798 = vld [vmem:[#allocation45 + $0x3e8] sm:$0xff]
    %v5799 = vld [vmem:[#allocation45 + $0x3f0] sm:$0xff]
    %v5800 = vld [vmem:[#allocation45 + $0x3f8] sm:$0xff]
    %v5802 = vsel %vm2457, %v5669, 0
    %v5805 = vsel %vm2457, %v5670, 0
    %v5808 = vsel %vm2457, %v5671, 0
    %v5811 = vsel %vm2457, %v5672, 0
    %5813 = vmatprep.subr.mxu0 0.0
    %5814 = vmatpush1.msra.mxu0 0.0
    %5815 = vmatprep.subr.mxu0 0.0
    %5816 = vmatpush1.msra.mxu0 0.0
    %5817 = vmatprep.subr.mxu0 0.0
    %5818 = vmatpush1.msra.mxu0 0.0
    %5819 = vmatprep.subr.mxu0 0.0
    %5820 = vmatpush1.msra.mxu0 0.0
    %5821 = vmatprep.subr.mxu0 0.0
    %5822 = vmatpush1.msra.mxu0 0.0
    %5823 = vmatprep.subr.mxu0 0.0
    %5824 = vmatpush1.msra.mxu0 0.0
    %5825 = vmatprep.subr.mxu0 0.0
    %5826 = vmatpush1.msra.mxu0 0.0
    %5827 = vmatprep.subr.mxu0 0.0
    %5828 = vmatpush1.msra.mxu0 0.0
    %5829 = vmatprep.subr.mxu0 0.0
    %5830 = vmatpush1.msra.mxu0 0.0
    %5831 = vmatprep.subr.mxu0 0.0
    %5832 = vmatpush1.msra.mxu0 0.0
    %5833 = vmatprep.subr.mxu0 0.0
    %5834 = vmatpush1.msra.mxu0 0.0
    %5835 = vmatprep.subr.mxu0 0.0
    %5836 = vmatpush1.msra.mxu0 0.0
    %5837 = vmatprep.subr.mxu0 0.0
    %5838 = vmatpush1.msra.mxu0 0.0
    %5839 = vmatprep.subr.mxu0 0.0
    %5840 = vmatpush1.msra.mxu0 0.0
    %5841 = vmatprep.subr.mxu0 %v5403
    %5842 = vmatpush1.msra.mxu0 %v5401
    %5843 = vmatprep.subr.mxu0 %v5397
    %5844 = vmatpush1.msra.mxu0 %v5395
    %5845 = vmatprep.subr.mxu0 0.0
    %5846 = vmatpush2.msra.mxu0 0.0
    %5847 = vmatprep.subr.mxu0 0.0
    %5848 = vmatpush2.msra.mxu0 0.0
    %5849 = vmatprep.subr.mxu0 0.0
    %5850 = vmatpush2.msra.mxu0 0.0
    %5851 = vmatprep.subr.mxu0 0.0
    %5852 = vmatpush2.msra.mxu0 0.0
    %5853 = vmatprep.subr.mxu0 0.0
    %5854 = vmatpush2.msra.mxu0 0.0
    %5855 = vmatprep.subr.mxu0 0.0
    %5856 = vmatpush2.msra.mxu0 0.0
    %5857 = vmatprep.subr.mxu0 0.0
    %5858 = vmatpush2.msra.mxu0 0.0
    %5859 = vmatprep.subr.mxu0 0.0
    %5860 = vmatpush2.msra.mxu0 0.0
    %5861 = vmatprep.subr.mxu0 0.0
    %5862 = vmatpush2.msra.mxu0 0.0
    %5863 = vmatprep.subr.mxu0 0.0
    %5864 = vmatpush2.msra.mxu0 0.0
    %5865 = vmatprep.subr.mxu0 0.0
    %5866 = vmatpush2.msra.mxu0 0.0
    %5867 = vmatprep.subr.mxu0 0.0
    %5868 = vmatpush2.msra.mxu0 0.0
    %5869 = vmatprep.subr.mxu0 0.0
    %5870 = vmatpush2.msra.mxu0 0.0
    %5871 = vmatprep.subr.mxu0 0.0
    %5872 = vmatpush2.msra.mxu0 0.0
    %5873 = vmatprep.subr.mxu0 0.0
    %5874 = vmatpush2.msra.mxu0 0.0
    %5875 = vmatprep.subr.mxu0 0.0
    %5876 = vmatpush2.msra.mxu0 0.0
    %5877 = vmatprep.mubr.f32.mxu0 0.0
    %5878 = vmatmul.mubr.f32.gmra.mxu0 %v5802
    %v5879 = vpop.f32.mrf.mxu0
    %v5880 = vadd.f32 0.0, %v5879
    %v5881 = vpop.f32.mrf.mxu0
    %v5882 = vadd.f32 0.0, %v5881
    %5883 = vmatprep.mubr.f32.mxu0 0.0
    %5884 = vmatmul.mubr.f32.gmra.mxu0 %v5805
    %v5885 = vpop.f32.mrf.mxu0
    %v5886 = vadd.f32 0.0, %v5885
    %v5887 = vpop.f32.mrf.mxu0
    %v5888 = vadd.f32 0.0, %v5887
    %5889 = vmatprep.mubr.f32.mxu0 0.0
    %5890 = vmatmul.mubr.f32.gmra.mxu0 %v5808
    %v5891 = vpop.f32.mrf.mxu0
    %v5892 = vadd.f32 0.0, %v5891
    %v5893 = vpop.f32.mrf.mxu0
    %v5894 = vadd.f32 0.0, %v5893
    %5895 = vmatprep.mubr.f32.mxu0 0.0
    %5896 = vmatmul.mubr.f32.gmra.mxu0 %v5811
    %v5897 = vpop.f32.mrf.mxu0
    %v5898 = vadd.f32 0.0, %v5897
    %v5899 = vpop.f32.mrf.mxu0
    %v5900 = vadd.f32 0.0, %v5899
    %5901 = vdwg.mxu0
    %5902 = vmatprep.subr.mxu0 %v5734
    %5903 = vmatpush1.msra.mxu0 %v5733
    %5904 = vmatprep.subr.mxu0 %v5730
    %5905 = vmatpush1.msra.mxu0 %v5729
    %5906 = vmatprep.subr.mxu0 %v5726
    %5907 = vmatpush1.msra.mxu0 %v5725
    %5908 = vmatprep.subr.mxu0 %v5722
    %5909 = vmatpush1.msra.mxu0 %v5721
    %5910 = vmatprep.subr.mxu0 %v5718
    %5911 = vmatpush1.msra.mxu0 %v5717
    %5912 = vmatprep.subr.mxu0 %v5714
    %5913 = vmatpush1.msra.mxu0 %v5713
    %5914 = vmatprep.subr.mxu0 %v5710
    %5915 = vmatpush1.msra.mxu0 %v5709
    %5916 = vmatprep.subr.mxu0 %v5706
    %5917 = vmatpush1.msra.mxu0 %v5705
    %5918 = vmatprep.subr.mxu0 %v5702
    %5919 = vmatpush1.msra.mxu0 %v5701
    %5920 = vmatprep.subr.mxu0 %v5698
    %5921 = vmatpush1.msra.mxu0 %v5697
    %5922 = vmatprep.subr.mxu0 %v5694
    %5923 = vmatpush1.msra.mxu0 %v5693
    %5924 = vmatprep.subr.mxu0 %v5690
    %5925 = vmatpush1.msra.mxu0 %v5689
    %5926 = vmatprep.subr.mxu0 %v5686
    %5927 = vmatpush1.msra.mxu0 %v5685
    %5928 = vmatprep.subr.mxu0 %v5682
    %5929 = vmatpush1.msra.mxu0 %v5681
    %5930 = vmatprep.subr.mxu0 %v5678
    %5931 = vmatpush1.msra.mxu0 %v5677
    %5932 = vmatprep.subr.mxu0 %v5674
    %5933 = vmatpush1.msra.mxu0 %v5673
    %5934 = vmatprep.subr.mxu0 %v5798
    %5935 = vmatpush2.msra.mxu0 %v5797
    %5936 = vmatprep.subr.mxu0 %v5794
    %5937 = vmatpush2.msra.mxu0 %v5793
    %5938 = vmatprep.subr.mxu0 %v5790
    %5939 = vmatpush2.msra.mxu0 %v5789
    %5940 = vmatprep.subr.mxu0 %v5786
    %5941 = vmatpush2.msra.mxu0 %v5785
    %5942 = vmatprep.subr.mxu0 %v5782
    %5943 = vmatpush2.msra.mxu0 %v5781
    %5944 = vmatprep.subr.mxu0 %v5778
    %5945 = vmatpush2.msra.mxu0 %v5777
    %5946 = vmatprep.subr.mxu0 %v5774
    %5947 = vmatpush2.msra.mxu0 %v5773
    %5948 = vmatprep.subr.mxu0 %v5770
    %5949 = vmatpush2.msra.mxu0 %v5769
    %5950 = vmatprep.subr.mxu0 %v5766
    %5951 = vmatpush2.msra.mxu0 %v5765
    %5952 = vmatprep.subr.mxu0 %v5762
    %5953 = vmatpush2.msra.mxu0 %v5761
    %5954 = vmatprep.subr.mxu0 %v5758
    %5955 = vmatpush2.msra.mxu0 %v5757
    %5956 = vmatprep.subr.mxu0 %v5754
    %5957 = vmatpush2.msra.mxu0 %v5753
    %5958 = vmatprep.subr.mxu0 %v5750
    %5959 = vmatpush2.msra.mxu0 %v5749
    %5960 = vmatprep.subr.mxu0 %v5746
    %5961 = vmatpush2.msra.mxu0 %v5745
    %5962 = vmatprep.subr.mxu0 %v5742
    %5963 = vmatpush2.msra.mxu0 %v5741
    %5964 = vmatprep.subr.mxu0 %v5738
    %5965 = vmatpush2.msra.mxu0 %v5737
    %5966 = vmatprep.mubr.f32.mxu0 %v5882
    %5967 = vmatmul.mubr.f32.gmra.mxu0 %v5880
    %v5968 = vpop.f32.mrf.mxu0
    %v5969 = vadd.f32 %v5558, %v5968
    %v5970 = vpop.f32.mrf.mxu0
    %v5971 = vadd.f32 %v5560, %v5970
    %5972 = vmatprep.mubr.f32.mxu0 %v5888
    %5973 = vmatmul.mubr.f32.gmra.mxu0 %v5886
    %v5974 = vpop.f32.mrf.mxu0
    %v5975 = vadd.f32 %v5564, %v5974
    %v5976 = vpop.f32.mrf.mxu0
    %v5977 = vadd.f32 %v5566, %v5976
    %5978 = vmatprep.mubr.f32.mxu0 %v5894
    %5979 = vmatmul.mubr.f32.gmra.mxu0 %v5892
    %v5980 = vpop.f32.mrf.mxu0
    %v5981 = vadd.f32 %v5570, %v5980
    %v5982 = vpop.f32.mrf.mxu0
    %v5983 = vadd.f32 %v5572, %v5982
    %5984 = vmatprep.mubr.f32.mxu0 %v5900
    %5985 = vmatmul.mubr.f32.gmra.mxu0 %v5898
    %v5986 = vpop.f32.mrf.mxu0
    %v5987 = vadd.f32 %v5576, %v5986
    %v5988 = vpop.f32.mrf.mxu0
    %v5989 = vadd.f32 %v5578, %v5988
    %5990 = vdwg.mxu0
    %5991 = vmatprep.subr.mxu0 %v5736
    %5992 = vmatpush1.msra.mxu0 %v5735
    %5993 = vmatprep.subr.mxu0 %v5732
    %5994 = vmatpush1.msra.mxu0 %v5731
    %5995 = vmatprep.subr.mxu0 %v5728
    %5996 = vmatpush1.msra.mxu0 %v5727
    %5997 = vmatprep.subr.mxu0 %v5724
    %5998 = vmatpush1.msra.mxu0 %v5723
    %5999 = vmatprep.subr.mxu0 %v5720
    %6000 = vmatpush1.msra.mxu0 %v5719
    %6001 = vmatprep.subr.mxu0 %v5716
    %6002 = vmatpush1.msra.mxu0 %v5715
    %6003 = vmatprep.subr.mxu0 %v5712
    %6004 = vmatpush1.msra.mxu0 %v5711
    %6005 = vmatprep.subr.mxu0 %v5708
    %6006 = vmatpush1.msra.mxu0 %v5707
    %6007 = vmatprep.subr.mxu0 %v5704
    %6008 = vmatpush1.msra.mxu0 %v5703
    %6009 = vmatprep.subr.mxu0 %v5700
    %6010 = vmatpush1.msra.mxu0 %v5699
    %6011 = vmatprep.subr.mxu0 %v5696
    %6012 = vmatpush1.msra.mxu0 %v5695
    %6013 = vmatprep.subr.mxu0 %v5692
    %6014 = vmatpush1.msra.mxu0 %v5691
    %6015 = vmatprep.subr.mxu0 %v5688
    %6016 = vmatpush1.msra.mxu0 %v5687
    %6017 = vmatprep.subr.mxu0 %v5684
    %6018 = vmatpush1.msra.mxu0 %v5683
    %6019 = vmatprep.subr.mxu0 %v5680
    %6020 = vmatpush1.msra.mxu0 %v5679
    %6021 = vmatprep.subr.mxu0 %v5676
    %6022 = vmatpush1.msra.mxu0 %v5675
    %6023 = vmatprep.subr.mxu0 %v5800
    %6024 = vmatpush2.msra.mxu0 %v5799
    %6025 = vmatprep.subr.mxu0 %v5796
    %6026 = vmatpush2.msra.mxu0 %v5795
    %6027 = vmatprep.subr.mxu0 %v5792
    %6028 = vmatpush2.msra.mxu0 %v5791
    %6029 = vmatprep.subr.mxu0 %v5788
    %6030 = vmatpush2.msra.mxu0 %v5787
    %6031 = vmatprep.subr.mxu0 %v5784
    %6032 = vmatpush2.msra.mxu0 %v5783
    %6033 = vmatprep.subr.mxu0 %v5780
    %6034 = vmatpush2.msra.mxu0 %v5779
    %6035 = vmatprep.subr.mxu0 %v5776
    %6036 = vmatpush2.msra.mxu0 %v5775
    %6037 = vmatprep.subr.mxu0 %v5772
    %6038 = vmatpush2.msra.mxu0 %v5771
    %6039 = vmatprep.subr.mxu0 %v5768
    %6040 = vmatpush2.msra.mxu0 %v5767
    %6041 = vmatprep.subr.mxu0 %v5764
    %6042 = vmatpush2.msra.mxu0 %v5763
    %6043 = vmatprep.subr.mxu0 %v5760
    %6044 = vmatpush2.msra.mxu0 %v5759
    %6045 = vmatprep.subr.mxu0 %v5756
    %6046 = vmatpush2.msra.mxu0 %v5755
    %6047 = vmatprep.subr.mxu0 %v5752
    %6048 = vmatpush2.msra.mxu0 %v5751
    %6049 = vmatprep.subr.mxu0 %v5748
    %6050 = vmatpush2.msra.mxu0 %v5747
    %6051 = vmatprep.subr.mxu0 %v5744
    %6052 = vmatpush2.msra.mxu0 %v5743
    %6053 = vmatprep.subr.mxu0 %v5740
    %6054 = vmatpush2.msra.mxu0 %v5739
    %6055 = vmatprep.mubr.f32.mxu0 %v5882
    %6056 = vmatmul.mubr.f32.gmra.mxu0 %v5880
    %v6057 = vpop.f32.mrf.mxu0
    %v6058 = vadd.f32 %v5647, %v6057
    %v6059 = vpop.f32.mrf.mxu0
    %v6060 = vadd.f32 %v5649, %v6059
    %6061 = vmatprep.mubr.f32.mxu0 %v5888
    %6062 = vmatmul.mubr.f32.gmra.mxu0 %v5886
    %v6063 = vpop.f32.mrf.mxu0
    %v6064 = vadd.f32 %v5653, %v6063
    %v6065 = vpop.f32.mrf.mxu0
    %v6066 = vadd.f32 %v5655, %v6065
    %6067 = vmatprep.mubr.f32.mxu0 %v5894
    %6068 = vmatmul.mubr.f32.gmra.mxu0 %v5892
    %v6069 = vpop.f32.mrf.mxu0
    %v6070 = vadd.f32 %v5659, %v6069
    %v6071 = vpop.f32.mrf.mxu0
    %v6072 = vadd.f32 %v5661, %v6071
    %6073 = vmatprep.mubr.f32.mxu0 %v5900
    %6074 = vmatmul.mubr.f32.gmra.mxu0 %v5898
    %v6075 = vpop.f32.mrf.mxu0
    %v6076 = vadd.f32 %v5665, %v6075
    %v6077 = vpop.f32.mrf.mxu0
    %v6078 = vadd.f32 %v5667, %v6077
    %6079 = vdwg.mxu0
    %6080 = vst [vmem:[%s73] sm:$0xff] %v5089
    %v6081 = vld [vmem:[#allocation15] sm:$0xff]
    %v6082 = vld [vmem:[#allocation15 + $0x8] sm:$0xff]
    %v6084 = vsel %vm2457, %v6081, 0
    %v6087 = vsel %vm2457, %v6082, 0
    %6089 = vmatprep.subr.mxu0 0.0
    %6090 = vmatpush1.msra.mxu0 0.0
    %6091 = vmatprep.subr.mxu0 0.0
    %6092 = vmatpush1.msra.mxu0 0.0
    %6093 = vmatprep.subr.mxu0 0.0
    %6094 = vmatpush1.msra.mxu0 0.0
    %6095 = vmatprep.subr.mxu0 0.0
    %6096 = vmatpush1.msra.mxu0 0.0
    %6097 = vmatprep.subr.mxu0 0.0
    %6098 = vmatpush1.msra.mxu0 0.0
    %6099 = vmatprep.subr.mxu0 0.0
    %6100 = vmatpush1.msra.mxu0 0.0
    %6101 = vmatprep.subr.mxu0 0.0
    %6102 = vmatpush1.msra.mxu0 0.0
    %6103 = vmatprep.subr.mxu0 0.0
    %6104 = vmatpush1.msra.mxu0 0.0
    %6105 = vmatprep.subr.mxu0 0.0
    %6106 = vmatpush1.msra.mxu0 0.0
    %6107 = vmatprep.subr.mxu0 0.0
    %6108 = vmatpush1.msra.mxu0 0.0
    %6109 = vmatprep.subr.mxu0 0.0
    %6110 = vmatpush1.msra.mxu0 0.0
    %6111 = vmatprep.subr.mxu0 0.0
    %6112 = vmatpush1.msra.mxu0 0.0
    %6113 = vmatprep.subr.mxu0 0.0
    %6114 = vmatpush1.msra.mxu0 0.0
    %6115 = vmatprep.subr.mxu0 0.0
    %6116 = vmatpush1.msra.mxu0 0.0
    %6117 = vmatprep.subr.mxu0 %v5403
    %6118 = vmatpush1.msra.mxu0 %v5401
    %6119 = vmatprep.subr.mxu0 %v5397
    %6120 = vmatpush1.msra.mxu0 %v5395
    %6121 = vmatprep.subr.mxu0 0.0
    %6122 = vmatpush2.msra.mxu0 0.0
    %6123 = vmatprep.subr.mxu0 0.0
    %6124 = vmatpush2.msra.mxu0 0.0
    %6125 = vmatprep.subr.mxu0 0.0
    %6126 = vmatpush2.msra.mxu0 0.0
    %6127 = vmatprep.subr.mxu0 0.0
    %6128 = vmatpush2.msra.mxu0 0.0
    %6129 = vmatprep.subr.mxu0 0.0
    %6130 = vmatpush2.msra.mxu0 0.0
    %6131 = vmatprep.subr.mxu0 0.0
    %6132 = vmatpush2.msra.mxu0 0.0
    %6133 = vmatprep.subr.mxu0 0.0
    %6134 = vmatpush2.msra.mxu0 0.0
    %6135 = vmatprep.subr.mxu0 0.0
    %6136 = vmatpush2.msra.mxu0 0.0
    %6137 = vmatprep.subr.mxu0 0.0
    %6138 = vmatpush2.msra.mxu0 0.0
    %6139 = vmatprep.subr.mxu0 0.0
    %6140 = vmatpush2.msra.mxu0 0.0
    %6141 = vmatprep.subr.mxu0 0.0
    %6142 = vmatpush2.msra.mxu0 0.0
    %6143 = vmatprep.subr.mxu0 0.0
    %6144 = vmatpush2.msra.mxu0 0.0
    %6145 = vmatprep.subr.mxu0 0.0
    %6146 = vmatpush2.msra.mxu0 0.0
    %6147 = vmatprep.subr.mxu0 0.0
    %6148 = vmatpush2.msra.mxu0 0.0
    %6149 = vmatprep.subr.mxu0 0.0
    %6150 = vmatpush2.msra.mxu0 0.0
    %6151 = vmatprep.subr.mxu0 0.0
    %6152 = vmatpush2.msra.mxu0 0.0
    %6153 = vmatprep.mubr.f32.mxu0 0.0
    %6154 = vmatmul.mubr.f32.gmra.mxu0 %v6084
    %v6155 = vpop.f32.mrf.mxu0
    %v6156 = vadd.f32 0.0, %v6155
    %v6157 = vpop.f32.mrf.mxu0
    %v6158 = vadd.f32 0.0, %v6157
    %6159 = vmatprep.mubr.f32.mxu0 0.0
    %6160 = vmatmul.mubr.f32.gmra.mxu0 %v6087
    %v6161 = vpop.f32.mrf.mxu0
    %v6162 = vadd.f32 0.0, %v6161
    %v6163 = vpop.f32.mrf.mxu0
    %v6164 = vadd.f32 0.0, %v6163
    %6165 = vdwg.mxu0
    %v6166 = vld [vmem:[#allocation37] sm:$0xff]
    %v6167 = vld [vmem:[#allocation37 + $0x8] sm:$0xff]
    %v6168 = vld [vmem:[#allocation37 + $0x10] sm:$0xff]
    %v6169 = vld [vmem:[#allocation37 + $0x18] sm:$0xff]
    %v6170 = vld [vmem:[#allocation37 + $0x20] sm:$0xff]
    %v6171 = vld [vmem:[#allocation37 + $0x28] sm:$0xff]
    %v6172 = vld [vmem:[#allocation37 + $0x30] sm:$0xff]
    %v6173 = vld [vmem:[#allocation37 + $0x38] sm:$0xff]
    %v6174 = vld [vmem:[#allocation37 + $0x40] sm:$0xff]
    %v6175 = vld [vmem:[#allocation37 + $0x48] sm:$0xff]
    %v6176 = vld [vmem:[#allocation37 + $0x50] sm:$0xff]
    %v6177 = vld [vmem:[#allocation37 + $0x58] sm:$0xff]
    %v6178 = vld [vmem:[#allocation37 + $0x60] sm:$0xff]
    %v6179 = vld [vmem:[#allocation37 + $0x68] sm:$0xff]
    %v6180 = vld [vmem:[#allocation37 + $0x70] sm:$0xff]
    %v6181 = vld [vmem:[#allocation37 + $0x78] sm:$0xff]
    %v6182 = vld [vmem:[#allocation37 + $0x80] sm:$0xff]
    %v6183 = vld [vmem:[#allocation37 + $0x88] sm:$0xff]
    %v6184 = vld [vmem:[#allocation37 + $0x90] sm:$0xff]
    %v6185 = vld [vmem:[#allocation37 + $0x98] sm:$0xff]
    %v6186 = vld [vmem:[#allocation37 + $0xa0] sm:$0xff]
    %v6187 = vld [vmem:[#allocation37 + $0xa8] sm:$0xff]
    %v6188 = vld [vmem:[#allocation37 + $0xb0] sm:$0xff]
    %v6189 = vld [vmem:[#allocation37 + $0xb8] sm:$0xff]
    %v6190 = vld [vmem:[#allocation37 + $0xc0] sm:$0xff]
    %v6191 = vld [vmem:[#allocation37 + $0xc8] sm:$0xff]
    %v6192 = vld [vmem:[#allocation37 + $0xd0] sm:$0xff]
    %v6193 = vld [vmem:[#allocation37 + $0xd8] sm:$0xff]
    %v6194 = vld [vmem:[#allocation37 + $0xe0] sm:$0xff]
    %v6195 = vld [vmem:[#allocation37 + $0xe8] sm:$0xff]
    %v6196 = vld [vmem:[#allocation37 + $0xf0] sm:$0xff]
    %v6197 = vld [vmem:[#allocation37 + $0xf8] sm:$0xff]
    %s6198 = scalar_lea.vmem [#allocation37], 256
    %v6199 = vld [vmem:[%s6198] sm:$0xff]
    %v6200 = vld [vmem:[%s6198 + $0x8] sm:$0xff]
    %v6201 = vld [vmem:[%s6198 + $0x10] sm:$0xff]
    %v6202 = vld [vmem:[%s6198 + $0x18] sm:$0xff]
    %v6203 = vld [vmem:[%s6198 + $0x20] sm:$0xff]
    %v6204 = vld [vmem:[%s6198 + $0x28] sm:$0xff]
    %v6205 = vld [vmem:[%s6198 + $0x30] sm:$0xff]
    %v6206 = vld [vmem:[%s6198 + $0x38] sm:$0xff]
    %v6207 = vld [vmem:[%s6198 + $0x40] sm:$0xff]
    %v6208 = vld [vmem:[%s6198 + $0x48] sm:$0xff]
    %v6209 = vld [vmem:[%s6198 + $0x50] sm:$0xff]
    %v6210 = vld [vmem:[%s6198 + $0x58] sm:$0xff]
    %v6211 = vld [vmem:[%s6198 + $0x60] sm:$0xff]
    %v6212 = vld [vmem:[%s6198 + $0x68] sm:$0xff]
    %v6213 = vld [vmem:[%s6198 + $0x70] sm:$0xff]
    %v6214 = vld [vmem:[%s6198 + $0x78] sm:$0xff]
    %v6215 = vld [vmem:[%s6198 + $0x80] sm:$0xff]
    %v6216 = vld [vmem:[%s6198 + $0x88] sm:$0xff]
    %v6217 = vld [vmem:[%s6198 + $0x90] sm:$0xff]
    %v6218 = vld [vmem:[%s6198 + $0x98] sm:$0xff]
    %v6219 = vld [vmem:[%s6198 + $0xa0] sm:$0xff]
    %v6220 = vld [vmem:[%s6198 + $0xa8] sm:$0xff]
    %v6221 = vld [vmem:[%s6198 + $0xb0] sm:$0xff]
    %v6222 = vld [vmem:[%s6198 + $0xb8] sm:$0xff]
    %v6223 = vld [vmem:[%s6198 + $0xc0] sm:$0xff]
    %v6224 = vld [vmem:[%s6198 + $0xc8] sm:$0xff]
    %v6225 = vld [vmem:[%s6198 + $0xd0] sm:$0xff]
    %v6226 = vld [vmem:[%s6198 + $0xd8] sm:$0xff]
    %v6227 = vld [vmem:[%s6198 + $0xe0] sm:$0xff]
    %v6228 = vld [vmem:[%s6198 + $0xe8] sm:$0xff]
    %v6229 = vld [vmem:[%s6198 + $0xf0] sm:$0xff]
    %v6230 = vld [vmem:[%s6198 + $0xf8] sm:$0xff]
    %6231 = vmatprep.subr.mxu0 0.0
    %6232 = vmatpush1.msra.mxu0 %v6214
    %6233 = vmatprep.subr.mxu0 0.0
    %6234 = vmatpush1.msra.mxu0 %v6213
    %6235 = vmatprep.subr.mxu0 0.0
    %6236 = vmatpush1.msra.mxu0 %v6212
    %6237 = vmatprep.subr.mxu0 0.0
    %6238 = vmatpush1.msra.mxu0 %v6211
    %6239 = vmatprep.subr.mxu0 0.0
    %6240 = vmatpush1.msra.mxu0 %v6210
    %6241 = vmatprep.subr.mxu0 0.0
    %6242 = vmatpush1.msra.mxu0 %v6209
    %6243 = vmatprep.subr.mxu0 0.0
    %6244 = vmatpush1.msra.mxu0 %v6208
    %6245 = vmatprep.subr.mxu0 0.0
    %6246 = vmatpush1.msra.mxu0 %v6207
    %6247 = vmatprep.subr.mxu0 0.0
    %6248 = vmatpush1.msra.mxu0 %v6206
    %6249 = vmatprep.subr.mxu0 0.0
    %6250 = vmatpush1.msra.mxu0 %v6205
    %6251 = vmatprep.subr.mxu0 0.0
    %6252 = vmatpush1.msra.mxu0 %v6204
    %6253 = vmatprep.subr.mxu0 0.0
    %6254 = vmatpush1.msra.mxu0 %v6203
    %6255 = vmatprep.subr.mxu0 0.0
    %6256 = vmatpush1.msra.mxu0 %v6202
    %6257 = vmatprep.subr.mxu0 0.0
    %6258 = vmatpush1.msra.mxu0 %v6201
    %6259 = vmatprep.subr.mxu0 0.0
    %6260 = vmatpush1.msra.mxu0 %v6200
    %6261 = vmatprep.subr.mxu0 0.0
    %6262 = vmatpush1.msra.mxu0 %v6199
    %6263 = vmatprep.subr.mxu0 0.0
    %6264 = vmatpush2.msra.mxu0 %v6230
    %6265 = vmatprep.subr.mxu0 0.0
    %6266 = vmatpush2.msra.mxu0 %v6229
    %6267 = vmatprep.subr.mxu0 0.0
    %6268 = vmatpush2.msra.mxu0 %v6228
    %6269 = vmatprep.subr.mxu0 0.0
    %6270 = vmatpush2.msra.mxu0 %v6227
    %6271 = vmatprep.subr.mxu0 0.0
    %6272 = vmatpush2.msra.mxu0 %v6226
    %6273 = vmatprep.subr.mxu0 0.0
    %6274 = vmatpush2.msra.mxu0 %v6225
    %6275 = vmatprep.subr.mxu0 0.0
    %6276 = vmatpush2.msra.mxu0 %v6224
    %6277 = vmatprep.subr.mxu0 0.0
    %6278 = vmatpush2.msra.mxu0 %v6223
    %6279 = vmatprep.subr.mxu0 0.0
    %6280 = vmatpush2.msra.mxu0 %v6222
    %6281 = vmatprep.subr.mxu0 0.0
    %6282 = vmatpush2.msra.mxu0 %v6221
    %6283 = vmatprep.subr.mxu0 0.0
    %6284 = vmatpush2.msra.mxu0 %v6220
    %6285 = vmatprep.subr.mxu0 0.0
    %6286 = vmatpush2.msra.mxu0 %v6219
    %6287 = vmatprep.subr.mxu0 0.0
    %6288 = vmatpush2.msra.mxu0 %v6218
    %6289 = vmatprep.subr.mxu0 0.0
    %6290 = vmatpush2.msra.mxu0 %v6217
    %6291 = vmatprep.subr.mxu0 0.0
    %6292 = vmatpush2.msra.mxu0 %v6216
    %6293 = vmatprep.subr.mxu0 0.0
    %6294 = vmatpush2.msra.mxu0 %v6215
    %6295 = vmatprep.mubr.f32.mxu0 %v5397
    %6296 = vmatmul.mubr.f32.gmra.mxu0 %v5395
    %v6297 = vpop.f32.mrf.mxu0
    %v6298 = vadd.f32 0.0, %v6297
    %v6299 = vpop.f32.mrf.mxu0
    %6300 = vmatprep.mubr.f32.mxu0 %v5403
    %6301 = vmatmul.mubr.f32.gmra.mxu0 %v5401
    %v6302 = vpop.f32.mrf.mxu0
    %v6303 = vadd.f32 0.0, %v6302
    %v6304 = vpop.f32.mrf.mxu0
    %6305 = vdwg.mxu0
    %6306 = vmatprep.subr.mxu0 0.0
    %6307 = vmatpush1.msra.mxu0 %v6181
    %6308 = vmatprep.subr.mxu0 0.0
    %6309 = vmatpush1.msra.mxu0 %v6180
    %6310 = vmatprep.subr.mxu0 0.0
    %6311 = vmatpush1.msra.mxu0 %v6179
    %6312 = vmatprep.subr.mxu0 0.0
    %6313 = vmatpush1.msra.mxu0 %v6178
    %6314 = vmatprep.subr.mxu0 0.0
    %6315 = vmatpush1.msra.mxu0 %v6177
    %6316 = vmatprep.subr.mxu0 0.0
    %6317 = vmatpush1.msra.mxu0 %v6176
    %6318 = vmatprep.subr.mxu0 0.0
    %6319 = vmatpush1.msra.mxu0 %v6175
    %6320 = vmatprep.subr.mxu0 0.0
    %6321 = vmatpush1.msra.mxu0 %v6174
    %6322 = vmatprep.subr.mxu0 0.0
    %6323 = vmatpush1.msra.mxu0 %v6173
    %6324 = vmatprep.subr.mxu0 0.0
    %6325 = vmatpush1.msra.mxu0 %v6172
    %6326 = vmatprep.subr.mxu0 0.0
    %6327 = vmatpush1.msra.mxu0 %v6171
    %6328 = vmatprep.subr.mxu0 0.0
    %6329 = vmatpush1.msra.mxu0 %v6170
    %6330 = vmatprep.subr.mxu0 0.0
    %6331 = vmatpush1.msra.mxu0 %v6169
    %6332 = vmatprep.subr.mxu0 0.0
    %6333 = vmatpush1.msra.mxu0 %v6168
    %6334 = vmatprep.subr.mxu0 0.0
    %6335 = vmatpush1.msra.mxu0 %v6167
    %6336 = vmatprep.subr.mxu0 0.0
    %6337 = vmatpush1.msra.mxu0 %v6166
    %6338 = vmatprep.subr.mxu0 0.0
    %6339 = vmatpush2.msra.mxu0 %v6197
    %6340 = vmatprep.subr.mxu0 0.0
    %6341 = vmatpush2.msra.mxu0 %v6196
    %6342 = vmatprep.subr.mxu0 0.0
    %6343 = vmatpush2.msra.mxu0 %v6195
    %6344 = vmatprep.subr.mxu0 0.0
    %6345 = vmatpush2.msra.mxu0 %v6194
    %6346 = vmatprep.subr.mxu0 0.0
    %6347 = vmatpush2.msra.mxu0 %v6193
    %6348 = vmatprep.subr.mxu0 0.0
    %6349 = vmatpush2.msra.mxu0 %v6192
    %6350 = vmatprep.subr.mxu0 0.0
    %6351 = vmatpush2.msra.mxu0 %v6191
    %6352 = vmatprep.subr.mxu0 0.0
    %6353 = vmatpush2.msra.mxu0 %v6190
    %6354 = vmatprep.subr.mxu0 0.0
    %6355 = vmatpush2.msra.mxu0 %v6189
    %6356 = vmatprep.subr.mxu0 0.0
    %6357 = vmatpush2.msra.mxu0 %v6188
    %6358 = vmatprep.subr.mxu0 0.0
    %6359 = vmatpush2.msra.mxu0 %v6187
    %6360 = vmatprep.subr.mxu0 0.0
    %6361 = vmatpush2.msra.mxu0 %v6186
    %6362 = vmatprep.subr.mxu0 0.0
    %6363 = vmatpush2.msra.mxu0 %v6185
    %6364 = vmatprep.subr.mxu0 0.0
    %6365 = vmatpush2.msra.mxu0 %v6184
    %6366 = vmatprep.subr.mxu0 0.0
    %6367 = vmatpush2.msra.mxu0 %v6183
    %6368 = vmatprep.subr.mxu0 0.0
    %6369 = vmatpush2.msra.mxu0 %v6182
    %6370 = vmatprep.mubr.f32.mxu0 %v6158
    %6371 = vmatmul.mubr.f32.gmra.mxu0 %v6156
    %v6372 = vpop.f32.mrf.mxu0
    %v6373 = vadd.f32 %v6298, %v6372
    %v6374 = vpop.f32.mrf.mxu0
    %6375 = vmatprep.mubr.f32.mxu0 %v6164
    %6376 = vmatmul.mubr.f32.gmra.mxu0 %v6162
    %v6377 = vpop.f32.mrf.mxu0
    %v6378 = vadd.f32 %v6303, %v6377
    %v6379 = vpop.f32.mrf.mxu0
    %6380 = vdwg.mxu0
    %v6381 = vld [vmem:[%s2722] sm:$0xff]
    %v6382 = vld [vmem:[%s2722 + $0x8] sm:$0xff]
    %v6384 = vsel %vm2457, %v6381, 0
    %v6387 = vsel %vm2457, %v6382, 0
    %6389 = vmatprep.subr.mxu0 0.0
    %6390 = vmatpush1.msra.mxu0 0.0
    %6391 = vmatprep.subr.mxu0 0.0
    %6392 = vmatpush1.msra.mxu0 0.0
    %6393 = vmatprep.subr.mxu0 0.0
    %6394 = vmatpush1.msra.mxu0 0.0
    %6395 = vmatprep.subr.mxu0 0.0
    %6396 = vmatpush1.msra.mxu0 0.0
    %6397 = vmatprep.subr.mxu0 0.0
    %6398 = vmatpush1.msra.mxu0 0.0
    %6399 = vmatprep.subr.mxu0 0.0
    %6400 = vmatpush1.msra.mxu0 0.0
    %6401 = vmatprep.subr.mxu0 0.0
    %6402 = vmatpush1.msra.mxu0 0.0
    %6403 = vmatprep.subr.mxu0 0.0
    %6404 = vmatpush1.msra.mxu0 0.0
    %6405 = vmatprep.subr.mxu0 0.0
    %6406 = vmatpush1.msra.mxu0 0.0
    %6407 = vmatprep.subr.mxu0 0.0
    %6408 = vmatpush1.msra.mxu0 0.0
    %6409 = vmatprep.subr.mxu0 0.0
    %6410 = vmatpush1.msra.mxu0 0.0
    %6411 = vmatprep.subr.mxu0 0.0
    %6412 = vmatpush1.msra.mxu0 0.0
    %6413 = vmatprep.subr.mxu0 0.0
    %6414 = vmatpush1.msra.mxu0 0.0
    %6415 = vmatprep.subr.mxu0 0.0
    %6416 = vmatpush1.msra.mxu0 0.0
    %6417 = vmatprep.subr.mxu0 %v5403
    %6418 = vmatpush1.msra.mxu0 %v5401
    %6419 = vmatprep.subr.mxu0 %v5397
    %6420 = vmatpush1.msra.mxu0 %v5395
    %6421 = vmatprep.subr.mxu0 0.0
    %6422 = vmatpush2.msra.mxu0 0.0
    %6423 = vmatprep.subr.mxu0 0.0
    %6424 = vmatpush2.msra.mxu0 0.0
    %6425 = vmatprep.subr.mxu0 0.0
    %6426 = vmatpush2.msra.mxu0 0.0
    %6427 = vmatprep.subr.mxu0 0.0
    %6428 = vmatpush2.msra.mxu0 0.0
    %6429 = vmatprep.subr.mxu0 0.0
    %6430 = vmatpush2.msra.mxu0 0.0
    %6431 = vmatprep.subr.mxu0 0.0
    %6432 = vmatpush2.msra.mxu0 0.0
    %6433 = vmatprep.subr.mxu0 0.0
    %6434 = vmatpush2.msra.mxu0 0.0
    %6435 = vmatprep.subr.mxu0 0.0
    %6436 = vmatpush2.msra.mxu0 0.0
    %6437 = vmatprep.subr.mxu0 0.0
    %6438 = vmatpush2.msra.mxu0 0.0
    %6439 = vmatprep.subr.mxu0 0.0
    %6440 = vmatpush2.msra.mxu0 0.0
    %6441 = vmatprep.subr.mxu0 0.0
    %6442 = vmatpush2.msra.mxu0 0.0
    %6443 = vmatprep.subr.mxu0 0.0
    %6444 = vmatpush2.msra.mxu0 0.0
    %6445 = vmatprep.subr.mxu0 0.0
    %6446 = vmatpush2.msra.mxu0 0.0
    %6447 = vmatprep.subr.mxu0 0.0
    %6448 = vmatpush2.msra.mxu0 0.0
    %6449 = vmatprep.subr.mxu0 0.0
    %6450 = vmatpush2.msra.mxu0 0.0
    %6451 = vmatprep.subr.mxu0 0.0
    %6452 = vmatpush2.msra.mxu0 0.0
    %6453 = vmatprep.mubr.f32.mxu0 0.0
    %6454 = vmatmul.mubr.f32.gmra.mxu0 %v6384
    %v6455 = vpop.f32.mrf.mxu0
    %v6456 = vadd.f32 0.0, %v6455
    %v6457 = vpop.f32.mrf.mxu0
    %v6458 = vadd.f32 0.0, %v6457
    %6459 = vmatprep.mubr.f32.mxu0 0.0
    %6460 = vmatmul.mubr.f32.gmra.mxu0 %v6387
    %v6461 = vpop.f32.mrf.mxu0
    %v6462 = vadd.f32 0.0, %v6461
    %v6463 = vpop.f32.mrf.mxu0
    %v6464 = vadd.f32 0.0, %v6463
    %6465 = vdwg.mxu0
    %s6466 = scalar_lea.vmem [#allocation37], 512
    %v6467 = vld [vmem:[%s6466] sm:$0xff]
    %v6468 = vld [vmem:[%s6466 + $0x8] sm:$0xff]
    %v6469 = vld [vmem:[%s6466 + $0x10] sm:$0xff]
    %v6470 = vld [vmem:[%s6466 + $0x18] sm:$0xff]
    %v6471 = vld [vmem:[%s6466 + $0x20] sm:$0xff]
    %v6472 = vld [vmem:[%s6466 + $0x28] sm:$0xff]
    %v6473 = vld [vmem:[%s6466 + $0x30] sm:$0xff]
    %v6474 = vld [vmem:[%s6466 + $0x38] sm:$0xff]
    %v6475 = vld [vmem:[%s6466 + $0x40] sm:$0xff]
    %v6476 = vld [vmem:[%s6466 + $0x48] sm:$0xff]
    %v6477 = vld [vmem:[%s6466 + $0x50] sm:$0xff]
    %v6478 = vld [vmem:[%s6466 + $0x58] sm:$0xff]
    %v6479 = vld [vmem:[%s6466 + $0x60] sm:$0xff]
    %v6480 = vld [vmem:[%s6466 + $0x68] sm:$0xff]
    %v6481 = vld [vmem:[%s6466 + $0x70] sm:$0xff]
    %v6482 = vld [vmem:[%s6466 + $0x78] sm:$0xff]
    %v6483 = vld [vmem:[%s6466 + $0x80] sm:$0xff]
    %v6484 = vld [vmem:[%s6466 + $0x88] sm:$0xff]
    %v6485 = vld [vmem:[%s6466 + $0x90] sm:$0xff]
    %v6486 = vld [vmem:[%s6466 + $0x98] sm:$0xff]
    %v6487 = vld [vmem:[%s6466 + $0xa0] sm:$0xff]
    %v6488 = vld [vmem:[%s6466 + $0xa8] sm:$0xff]
    %v6489 = vld [vmem:[%s6466 + $0xb0] sm:$0xff]
    %v6490 = vld [vmem:[%s6466 + $0xb8] sm:$0xff]
    %v6491 = vld [vmem:[%s6466 + $0xc0] sm:$0xff]
    %v6492 = vld [vmem:[%s6466 + $0xc8] sm:$0xff]
    %v6493 = vld [vmem:[%s6466 + $0xd0] sm:$0xff]
    %v6494 = vld [vmem:[%s6466 + $0xd8] sm:$0xff]
    %v6495 = vld [vmem:[%s6466 + $0xe0] sm:$0xff]
    %v6496 = vld [vmem:[%s6466 + $0xe8] sm:$0xff]
    %v6497 = vld [vmem:[%s6466 + $0xf0] sm:$0xff]
    %v6498 = vld [vmem:[%s6466 + $0xf8] sm:$0xff]
    %6499 = vmatprep.subr.mxu0 0.0
    %6500 = vmatpush1.msra.mxu0 %v6482
    %6501 = vmatprep.subr.mxu0 0.0
    %6502 = vmatpush1.msra.mxu0 %v6481
    %6503 = vmatprep.subr.mxu0 0.0
    %6504 = vmatpush1.msra.mxu0 %v6480
    %6505 = vmatprep.subr.mxu0 0.0
    %6506 = vmatpush1.msra.mxu0 %v6479
    %6507 = vmatprep.subr.mxu0 0.0
    %6508 = vmatpush1.msra.mxu0 %v6478
    %6509 = vmatprep.subr.mxu0 0.0
    %6510 = vmatpush1.msra.mxu0 %v6477
    %6511 = vmatprep.subr.mxu0 0.0
    %6512 = vmatpush1.msra.mxu0 %v6476
    %6513 = vmatprep.subr.mxu0 0.0
    %6514 = vmatpush1.msra.mxu0 %v6475
    %6515 = vmatprep.subr.mxu0 0.0
    %6516 = vmatpush1.msra.mxu0 %v6474
    %6517 = vmatprep.subr.mxu0 0.0
    %6518 = vmatpush1.msra.mxu0 %v6473
    %6519 = vmatprep.subr.mxu0 0.0
    %6520 = vmatpush1.msra.mxu0 %v6472
    %6521 = vmatprep.subr.mxu0 0.0
    %6522 = vmatpush1.msra.mxu0 %v6471
    %6523 = vmatprep.subr.mxu0 0.0
    %6524 = vmatpush1.msra.mxu0 %v6470
    %6525 = vmatprep.subr.mxu0 0.0
    %6526 = vmatpush1.msra.mxu0 %v6469
    %6527 = vmatprep.subr.mxu0 0.0
    %6528 = vmatpush1.msra.mxu0 %v6468
    %6529 = vmatprep.subr.mxu0 0.0
    %6530 = vmatpush1.msra.mxu0 %v6467
    %6531 = vmatprep.subr.mxu0 0.0
    %6532 = vmatpush2.msra.mxu0 %v6498
    %6533 = vmatprep.subr.mxu0 0.0
    %6534 = vmatpush2.msra.mxu0 %v6497
    %6535 = vmatprep.subr.mxu0 0.0
    %6536 = vmatpush2.msra.mxu0 %v6496
    %6537 = vmatprep.subr.mxu0 0.0
    %6538 = vmatpush2.msra.mxu0 %v6495
    %6539 = vmatprep.subr.mxu0 0.0
    %6540 = vmatpush2.msra.mxu0 %v6494
    %6541 = vmatprep.subr.mxu0 0.0
    %6542 = vmatpush2.msra.mxu0 %v6493
    %6543 = vmatprep.subr.mxu0 0.0
    %6544 = vmatpush2.msra.mxu0 %v6492
    %6545 = vmatprep.subr.mxu0 0.0
    %6546 = vmatpush2.msra.mxu0 %v6491
    %6547 = vmatprep.subr.mxu0 0.0
    %6548 = vmatpush2.msra.mxu0 %v6490
    %6549 = vmatprep.subr.mxu0 0.0
    %6550 = vmatpush2.msra.mxu0 %v6489
    %6551 = vmatprep.subr.mxu0 0.0
    %6552 = vmatpush2.msra.mxu0 %v6488
    %6553 = vmatprep.subr.mxu0 0.0
    %6554 = vmatpush2.msra.mxu0 %v6487
    %6555 = vmatprep.subr.mxu0 0.0
    %6556 = vmatpush2.msra.mxu0 %v6486
    %6557 = vmatprep.subr.mxu0 0.0
    %6558 = vmatpush2.msra.mxu0 %v6485
    %6559 = vmatprep.subr.mxu0 0.0
    %6560 = vmatpush2.msra.mxu0 %v6484
    %6561 = vmatprep.subr.mxu0 0.0
    %6562 = vmatpush2.msra.mxu0 %v6483
    %6563 = vmatprep.mubr.f32.mxu0 %v6458
    %6564 = vmatmul.mubr.f32.gmra.mxu0 %v6456
    %v6565 = vpop.f32.mrf.mxu0
    %v6566 = vadd.f32 0.0, %v6565
    %v6567 = vpop.f32.mrf.mxu0
    %6568 = vmatprep.mubr.f32.mxu0 %v6464
    %6569 = vmatmul.mubr.f32.gmra.mxu0 %v6462
    %v6570 = vpop.f32.mrf.mxu0
    %v6571 = vadd.f32 0.0, %v6570
    %v6572 = vpop.f32.mrf.mxu0
    %6573 = vdwg.mxu0
    %v6574 = vadd.f32 %v6373, %v6566
    %v6575 = vadd.f32 %v6378, %v6571
    %v6576 = vld [vmem:[#allocation39] sm:$0x1]
    %v6578 = vlaneseq
    %v6579 = vshrl.u32 %v6578, 7
    %v6580 = vsub.s32 0, %v6579
    %v6581 = vrot.slane %v6576, %v6580
    %v6583 = vadd.f32 %v6574, %v6581
    %v6584 = vadd.f32 %v6575, %v6581
    %6585 = vst [vmem:[%s75] sm:$0xff] %v6583
    %6586 = vst [vmem:[%s75 + $0x8] sm:$0xff] %v6584
    %v6587 = vld [vmem:[#allocation4] sm:$0xff]
    %v6588 = vld [vmem:[#allocation4 + $0x8] sm:$0xff]
    %v6589 = vld [vmem:[#allocation4 + $0x10] sm:$0xff]
    %v6590 = vld [vmem:[#allocation4 + $0x18] sm:$0xff]
    %v6592 = vsel %vm535, %v6587, 0
    %v6595 = vsel %vm535, %v6588, 0
    %v6598 = vsel %vm535, %v6589, 0
    %v6601 = vsel %vm535, %v6590, 0
    %6603 = vmatprep.subr.mxu0 0.0
    %6604 = vmatpush1.msra.mxu0 0.0
    %6605 = vmatprep.subr.mxu0 0.0
    %6606 = vmatpush1.msra.mxu0 0.0
    %6607 = vmatprep.subr.mxu0 0.0
    %6608 = vmatpush1.msra.mxu0 0.0
    %6609 = vmatprep.subr.mxu0 0.0
    %6610 = vmatpush1.msra.mxu0 0.0
    %6611 = vmatprep.subr.mxu0 0.0
    %6612 = vmatpush1.msra.mxu0 0.0
    %6613 = vmatprep.subr.mxu0 0.0
    %6614 = vmatpush1.msra.mxu0 0.0
    %6615 = vmatprep.subr.mxu0 0.0
    %6616 = vmatpush1.msra.mxu0 0.0
    %6617 = vmatprep.subr.mxu0 0.0
    %6618 = vmatpush1.msra.mxu0 0.0
    %6619 = vmatprep.subr.mxu0 0.0
    %6620 = vmatpush1.msra.mxu0 0.0
    %6621 = vmatprep.subr.mxu0 0.0
    %6622 = vmatpush1.msra.mxu0 0.0
    %6623 = vmatprep.subr.mxu0 0.0
    %6624 = vmatpush1.msra.mxu0 0.0
    %6625 = vmatprep.subr.mxu0 0.0
    %6626 = vmatpush1.msra.mxu0 0.0
    %6627 = vmatprep.subr.mxu0 %v5989
    %6628 = vmatpush1.msra.mxu0 %v5987
    %6629 = vmatprep.subr.mxu0 %v5983
    %6630 = vmatpush1.msra.mxu0 %v5981
    %6631 = vmatprep.subr.mxu0 %v5977
    %6632 = vmatpush1.msra.mxu0 %v5975
    %6633 = vmatprep.subr.mxu0 %v5971
    %6634 = vmatpush1.msra.mxu0 %v5969
    %6635 = vmatprep.subr.mxu0 0.0
    %6636 = vmatpush2.msra.mxu0 0.0
    %6637 = vmatprep.subr.mxu0 0.0
    %6638 = vmatpush2.msra.mxu0 0.0
    %6639 = vmatprep.subr.mxu0 0.0
    %6640 = vmatpush2.msra.mxu0 0.0
    %6641 = vmatprep.subr.mxu0 0.0
    %6642 = vmatpush2.msra.mxu0 0.0
    %6643 = vmatprep.subr.mxu0 0.0
    %6644 = vmatpush2.msra.mxu0 0.0
    %6645 = vmatprep.subr.mxu0 0.0
    %6646 = vmatpush2.msra.mxu0 0.0
    %6647 = vmatprep.subr.mxu0 0.0
    %6648 = vmatpush2.msra.mxu0 0.0
    %6649 = vmatprep.subr.mxu0 0.0
    %6650 = vmatpush2.msra.mxu0 0.0
    %6651 = vmatprep.subr.mxu0 0.0
    %6652 = vmatpush2.msra.mxu0 0.0
    %6653 = vmatprep.subr.mxu0 0.0
    %6654 = vmatpush2.msra.mxu0 0.0
    %6655 = vmatprep.subr.mxu0 0.0
    %6656 = vmatpush2.msra.mxu0 0.0
    %6657 = vmatprep.subr.mxu0 0.0
    %6658 = vmatpush2.msra.mxu0 0.0
    %6659 = vmatprep.subr.mxu0 0.0
    %6660 = vmatpush2.msra.mxu0 0.0
    %6661 = vmatprep.subr.mxu0 0.0
    %6662 = vmatpush2.msra.mxu0 0.0
    %6663 = vmatprep.subr.mxu0 0.0
    %6664 = vmatpush2.msra.mxu0 0.0
    %6665 = vmatprep.subr.mxu0 0.0
    %6666 = vmatpush2.msra.mxu0 0.0
    %6667 = vmatprep.mubr.f32.mxu0 0.0
    %6668 = vmatmul.mubr.f32.gmra.mxu0 %v6592
    %v6669 = vpop.f32.mrf.mxu0
    %v6670 = vadd.f32 0.0, %v6669
    %v6671 = vpop.f32.mrf.mxu0
    %v6672 = vadd.f32 0.0, %v6671
    %6673 = vmatprep.mubr.f32.mxu0 0.0
    %6674 = vmatmul.mubr.f32.gmra.mxu0 %v6595
    %v6675 = vpop.f32.mrf.mxu0
    %v6676 = vadd.f32 0.0, %v6675
    %v6677 = vpop.f32.mrf.mxu0
    %v6678 = vadd.f32 0.0, %v6677
    %6679 = vmatprep.mubr.f32.mxu0 0.0
    %6680 = vmatmul.mubr.f32.gmra.mxu0 %v6598
    %v6681 = vpop.f32.mrf.mxu0
    %v6682 = vadd.f32 0.0, %v6681
    %v6683 = vpop.f32.mrf.mxu0
    %v6684 = vadd.f32 0.0, %v6683
    %6685 = vmatprep.mubr.f32.mxu0 0.0
    %6686 = vmatmul.mubr.f32.gmra.mxu0 %v6601
    %v6687 = vpop.f32.mrf.mxu0
    %v6688 = vadd.f32 0.0, %v6687
    %v6689 = vpop.f32.mrf.mxu0
    %v6690 = vadd.f32 0.0, %v6689
    %6691 = vdwg.mxu0
    %6692 = vmatprep.subr.mxu0 0.0
    %6693 = vmatpush1.msra.mxu0 0.0
    %6694 = vmatprep.subr.mxu0 0.0
    %6695 = vmatpush1.msra.mxu0 0.0
    %6696 = vmatprep.subr.mxu0 0.0
    %6697 = vmatpush1.msra.mxu0 0.0
    %6698 = vmatprep.subr.mxu0 0.0
    %6699 = vmatpush1.msra.mxu0 0.0
    %6700 = vmatprep.subr.mxu0 0.0
    %6701 = vmatpush1.msra.mxu0 0.0
    %6702 = vmatprep.subr.mxu0 0.0
    %6703 = vmatpush1.msra.mxu0 0.0
    %6704 = vmatprep.subr.mxu0 0.0
    %6705 = vmatpush1.msra.mxu0 0.0
    %6706 = vmatprep.subr.mxu0 0.0
    %6707 = vmatpush1.msra.mxu0 0.0
    %6708 = vmatprep.subr.mxu0 0.0
    %6709 = vmatpush1.msra.mxu0 0.0
    %6710 = vmatprep.subr.mxu0 0.0
    %6711 = vmatpush1.msra.mxu0 0.0
    %6712 = vmatprep.subr.mxu0 0.0
    %6713 = vmatpush1.msra.mxu0 0.0
    %6714 = vmatprep.subr.mxu0 0.0
    %6715 = vmatpush1.msra.mxu0 0.0
    %6716 = vmatprep.subr.mxu0 %v6078
    %6717 = vmatpush1.msra.mxu0 %v6076
    %6718 = vmatprep.subr.mxu0 %v6072
    %6719 = vmatpush1.msra.mxu0 %v6070
    %6720 = vmatprep.subr.mxu0 %v6066
    %6721 = vmatpush1.msra.mxu0 %v6064
    %6722 = vmatprep.subr.mxu0 %v6060
    %6723 = vmatpush1.msra.mxu0 %v6058
    %6724 = vmatprep.subr.mxu0 0.0
    %6725 = vmatpush2.msra.mxu0 0.0
    %6726 = vmatprep.subr.mxu0 0.0
    %6727 = vmatpush2.msra.mxu0 0.0
    %6728 = vmatprep.subr.mxu0 0.0
    %6729 = vmatpush2.msra.mxu0 0.0
    %6730 = vmatprep.subr.mxu0 0.0
    %6731 = vmatpush2.msra.mxu0 0.0
    %6732 = vmatprep.subr.mxu0 0.0
    %6733 = vmatpush2.msra.mxu0 0.0
    %6734 = vmatprep.subr.mxu0 0.0
    %6735 = vmatpush2.msra.mxu0 0.0
    %6736 = vmatprep.subr.mxu0 0.0
    %6737 = vmatpush2.msra.mxu0 0.0
    %6738 = vmatprep.subr.mxu0 0.0
    %6739 = vmatpush2.msra.mxu0 0.0
    %6740 = vmatprep.subr.mxu0 0.0
    %6741 = vmatpush2.msra.mxu0 0.0
    %6742 = vmatprep.subr.mxu0 0.0
    %6743 = vmatpush2.msra.mxu0 0.0
    %6744 = vmatprep.subr.mxu0 0.0
    %6745 = vmatpush2.msra.mxu0 0.0
    %6746 = vmatprep.subr.mxu0 0.0
    %6747 = vmatpush2.msra.mxu0 0.0
    %6748 = vmatprep.subr.mxu0 0.0
    %6749 = vmatpush2.msra.mxu0 0.0
    %6750 = vmatprep.subr.mxu0 0.0
    %6751 = vmatpush2.msra.mxu0 0.0
    %6752 = vmatprep.subr.mxu0 0.0
    %6753 = vmatpush2.msra.mxu0 0.0
    %6754 = vmatprep.subr.mxu0 0.0
    %6755 = vmatpush2.msra.mxu0 0.0
    %6756 = vmatprep.mubr.f32.mxu0 0.0
    %6757 = vmatmul.mubr.f32.gmra.mxu0 %v6592
    %v6758 = vpop.f32.mrf.mxu0
    %v6759 = vadd.f32 0.0, %v6758
    %v6760 = vpop.f32.mrf.mxu0
    %v6761 = vadd.f32 0.0, %v6760
    %6762 = vmatprep.mubr.f32.mxu0 0.0
    %6763 = vmatmul.mubr.f32.gmra.mxu0 %v6595
    %v6764 = vpop.f32.mrf.mxu0
    %v6765 = vadd.f32 0.0, %v6764
    %v6766 = vpop.f32.mrf.mxu0
    %v6767 = vadd.f32 0.0, %v6766
    %6768 = vmatprep.mubr.f32.mxu0 0.0
    %6769 = vmatmul.mubr.f32.gmra.mxu0 %v6598
    %v6770 = vpop.f32.mrf.mxu0
    %v6771 = vadd.f32 0.0, %v6770
    %v6772 = vpop.f32.mrf.mxu0
    %v6773 = vadd.f32 0.0, %v6772
    %6774 = vmatprep.mubr.f32.mxu0 0.0
    %6775 = vmatmul.mubr.f32.gmra.mxu0 %v6601
    %v6776 = vpop.f32.mrf.mxu0
    %v6777 = vadd.f32 0.0, %v6776
    %v6778 = vpop.f32.mrf.mxu0
    %v6779 = vadd.f32 0.0, %v6778
    %6780 = vdwg.mxu0
    %v6781 = vld [vmem:[#allocation40] sm:$0xff]
    %v6782 = vld [vmem:[#allocation40 + $0x8] sm:$0xff]
    %v6783 = vld [vmem:[#allocation40 + $0x10] sm:$0xff]
    %v6784 = vld [vmem:[#allocation40 + $0x18] sm:$0xff]
    %v6785 = vld [vmem:[#allocation40 + $0x20] sm:$0xff]
    %v6786 = vld [vmem:[#allocation40 + $0x28] sm:$0xff]
    %v6787 = vld [vmem:[#allocation40 + $0x30] sm:$0xff]
    %v6788 = vld [vmem:[#allocation40 + $0x38] sm:$0xff]
    %v6789 = vld [vmem:[#allocation40 + $0x40] sm:$0xff]
    %v6790 = vld [vmem:[#allocation40 + $0x48] sm:$0xff]
    %v6791 = vld [vmem:[#allocation40 + $0x50] sm:$0xff]
    %v6792 = vld [vmem:[#allocation40 + $0x58] sm:$0xff]
    %v6793 = vld [vmem:[#allocation40 + $0x60] sm:$0xff]
    %v6794 = vld [vmem:[#allocation40 + $0x68] sm:$0xff]
    %v6795 = vld [vmem:[#allocation40 + $0x70] sm:$0xff]
    %v6796 = vld [vmem:[#allocation40 + $0x78] sm:$0xff]
    %v6797 = vld [vmem:[#allocation40 + $0x80] sm:$0xff]
    %v6798 = vld [vmem:[#allocation40 + $0x88] sm:$0xff]
    %v6799 = vld [vmem:[#allocation40 + $0x90] sm:$0xff]
    %v6800 = vld [vmem:[#allocation40 + $0x98] sm:$0xff]
    %v6801 = vld [vmem:[#allocation40 + $0xa0] sm:$0xff]
    %v6802 = vld [vmem:[#allocation40 + $0xa8] sm:$0xff]
    %v6803 = vld [vmem:[#allocation40 + $0xb0] sm:$0xff]
    %v6804 = vld [vmem:[#allocation40 + $0xb8] sm:$0xff]
    %v6805 = vld [vmem:[#allocation40 + $0xc0] sm:$0xff]
    %v6806 = vld [vmem:[#allocation40 + $0xc8] sm:$0xff]
    %v6807 = vld [vmem:[#allocation40 + $0xd0] sm:$0xff]
    %v6808 = vld [vmem:[#allocation40 + $0xd8] sm:$0xff]
    %v6809 = vld [vmem:[#allocation40 + $0xe0] sm:$0xff]
    %v6810 = vld [vmem:[#allocation40 + $0xe8] sm:$0xff]
    %v6811 = vld [vmem:[#allocation40 + $0xf0] sm:$0xff]
    %v6812 = vld [vmem:[#allocation40 + $0xf8] sm:$0xff]
    %v6813 = vld [vmem:[#allocation40 + $0x100] sm:$0xff]
    %v6814 = vld [vmem:[#allocation40 + $0x108] sm:$0xff]
    %v6815 = vld [vmem:[#allocation40 + $0x110] sm:$0xff]
    %v6816 = vld [vmem:[#allocation40 + $0x118] sm:$0xff]
    %v6817 = vld [vmem:[#allocation40 + $0x120] sm:$0xff]
    %v6818 = vld [vmem:[#allocation40 + $0x128] sm:$0xff]
    %v6819 = vld [vmem:[#allocation40 + $0x130] sm:$0xff]
    %v6820 = vld [vmem:[#allocation40 + $0x138] sm:$0xff]
    %v6821 = vld [vmem:[#allocation40 + $0x140] sm:$0xff]
    %v6822 = vld [vmem:[#allocation40 + $0x148] sm:$0xff]
    %v6823 = vld [vmem:[#allocation40 + $0x150] sm:$0xff]
    %v6824 = vld [vmem:[#allocation40 + $0x158] sm:$0xff]
    %v6825 = vld [vmem:[#allocation40 + $0x160] sm:$0xff]
    %v6826 = vld [vmem:[#allocation40 + $0x168] sm:$0xff]
    %v6827 = vld [vmem:[#allocation40 + $0x170] sm:$0xff]
    %v6828 = vld [vmem:[#allocation40 + $0x178] sm:$0xff]
    %v6829 = vld [vmem:[#allocation40 + $0x180] sm:$0xff]
    %v6830 = vld [vmem:[#allocation40 + $0x188] sm:$0xff]
    %v6831 = vld [vmem:[#allocation40 + $0x190] sm:$0xff]
    %v6832 = vld [vmem:[#allocation40 + $0x198] sm:$0xff]
    %v6833 = vld [vmem:[#allocation40 + $0x1a0] sm:$0xff]
    %v6834 = vld [vmem:[#allocation40 + $0x1a8] sm:$0xff]
    %v6835 = vld [vmem:[#allocation40 + $0x1b0] sm:$0xff]
    %v6836 = vld [vmem:[#allocation40 + $0x1b8] sm:$0xff]
    %v6837 = vld [vmem:[#allocation40 + $0x1c0] sm:$0xff]
    %v6838 = vld [vmem:[#allocation40 + $0x1c8] sm:$0xff]
    %v6839 = vld [vmem:[#allocation40 + $0x1d0] sm:$0xff]
    %v6840 = vld [vmem:[#allocation40 + $0x1d8] sm:$0xff]
    %v6841 = vld [vmem:[#allocation40 + $0x1e0] sm:$0xff]
    %v6842 = vld [vmem:[#allocation40 + $0x1e8] sm:$0xff]
    %v6843 = vld [vmem:[#allocation40 + $0x1f0] sm:$0xff]
    %v6844 = vld [vmem:[#allocation40 + $0x1f8] sm:$0xff]
    %s6845 = scalar_lea.vmem [#allocation40], 512
    %v6846 = vld [vmem:[%s6845] sm:$0xff]
    %v6847 = vld [vmem:[%s6845 + $0x8] sm:$0xff]
    %v6848 = vld [vmem:[%s6845 + $0x10] sm:$0xff]
    %v6849 = vld [vmem:[%s6845 + $0x18] sm:$0xff]
    %v6850 = vld [vmem:[%s6845 + $0x20] sm:$0xff]
    %v6851 = vld [vmem:[%s6845 + $0x28] sm:$0xff]
    %v6852 = vld [vmem:[%s6845 + $0x30] sm:$0xff]
    %v6853 = vld [vmem:[%s6845 + $0x38] sm:$0xff]
    %v6854 = vld [vmem:[%s6845 + $0x40] sm:$0xff]
    %v6855 = vld [vmem:[%s6845 + $0x48] sm:$0xff]
    %v6856 = vld [vmem:[%s6845 + $0x50] sm:$0xff]
    %v6857 = vld [vmem:[%s6845 + $0x58] sm:$0xff]
    %v6858 = vld [vmem:[%s6845 + $0x60] sm:$0xff]
    %v6859 = vld [vmem:[%s6845 + $0x68] sm:$0xff]
    %v6860 = vld [vmem:[%s6845 + $0x70] sm:$0xff]
    %v6861 = vld [vmem:[%s6845 + $0x78] sm:$0xff]
    %v6862 = vld [vmem:[%s6845 + $0x80] sm:$0xff]
    %v6863 = vld [vmem:[%s6845 + $0x88] sm:$0xff]
    %v6864 = vld [vmem:[%s6845 + $0x90] sm:$0xff]
    %v6865 = vld [vmem:[%s6845 + $0x98] sm:$0xff]
    %v6866 = vld [vmem:[%s6845 + $0xa0] sm:$0xff]
    %v6867 = vld [vmem:[%s6845 + $0xa8] sm:$0xff]
    %v6868 = vld [vmem:[%s6845 + $0xb0] sm:$0xff]
    %v6869 = vld [vmem:[%s6845 + $0xb8] sm:$0xff]
    %v6870 = vld [vmem:[%s6845 + $0xc0] sm:$0xff]
    %v6871 = vld [vmem:[%s6845 + $0xc8] sm:$0xff]
    %v6872 = vld [vmem:[%s6845 + $0xd0] sm:$0xff]
    %v6873 = vld [vmem:[%s6845 + $0xd8] sm:$0xff]
    %v6874 = vld [vmem:[%s6845 + $0xe0] sm:$0xff]
    %v6875 = vld [vmem:[%s6845 + $0xe8] sm:$0xff]
    %v6876 = vld [vmem:[%s6845 + $0xf0] sm:$0xff]
    %v6877 = vld [vmem:[%s6845 + $0xf8] sm:$0xff]
    %v6878 = vld [vmem:[%s6845 + $0x100] sm:$0xff]
    %v6879 = vld [vmem:[%s6845 + $0x108] sm:$0xff]
    %v6880 = vld [vmem:[%s6845 + $0x110] sm:$0xff]
    %v6881 = vld [vmem:[%s6845 + $0x118] sm:$0xff]
    %v6882 = vld [vmem:[%s6845 + $0x120] sm:$0xff]
    %v6883 = vld [vmem:[%s6845 + $0x128] sm:$0xff]
    %v6884 = vld [vmem:[%s6845 + $0x130] sm:$0xff]
    %v6885 = vld [vmem:[%s6845 + $0x138] sm:$0xff]
    %v6886 = vld [vmem:[%s6845 + $0x140] sm:$0xff]
    %v6887 = vld [vmem:[%s6845 + $0x148] sm:$0xff]
    %v6888 = vld [vmem:[%s6845 + $0x150] sm:$0xff]
    %v6889 = vld [vmem:[%s6845 + $0x158] sm:$0xff]
    %v6890 = vld [vmem:[%s6845 + $0x160] sm:$0xff]
    %v6891 = vld [vmem:[%s6845 + $0x168] sm:$0xff]
    %v6892 = vld [vmem:[%s6845 + $0x170] sm:$0xff]
    %v6893 = vld [vmem:[%s6845 + $0x178] sm:$0xff]
    %v6894 = vld [vmem:[%s6845 + $0x180] sm:$0xff]
    %v6895 = vld [vmem:[%s6845 + $0x188] sm:$0xff]
    %v6896 = vld [vmem:[%s6845 + $0x190] sm:$0xff]
    %v6897 = vld [vmem:[%s6845 + $0x198] sm:$0xff]
    %v6898 = vld [vmem:[%s6845 + $0x1a0] sm:$0xff]
    %v6899 = vld [vmem:[%s6845 + $0x1a8] sm:$0xff]
    %v6900 = vld [vmem:[%s6845 + $0x1b0] sm:$0xff]
    %v6901 = vld [vmem:[%s6845 + $0x1b8] sm:$0xff]
    %v6902 = vld [vmem:[%s6845 + $0x1c0] sm:$0xff]
    %v6903 = vld [vmem:[%s6845 + $0x1c8] sm:$0xff]
    %v6904 = vld [vmem:[%s6845 + $0x1d0] sm:$0xff]
    %v6905 = vld [vmem:[%s6845 + $0x1d8] sm:$0xff]
    %v6906 = vld [vmem:[%s6845 + $0x1e0] sm:$0xff]
    %v6907 = vld [vmem:[%s6845 + $0x1e8] sm:$0xff]
    %v6908 = vld [vmem:[%s6845 + $0x1f0] sm:$0xff]
    %v6909 = vld [vmem:[%s6845 + $0x1f8] sm:$0xff]
    %6910 = vmatprep.subr.mxu0 0.0
    %6911 = vmatpush1.msra.mxu0 %v6861
    %6912 = vmatprep.subr.mxu0 0.0
    %6913 = vmatpush1.msra.mxu0 %v6860
    %6914 = vmatprep.subr.mxu0 0.0
    %6915 = vmatpush1.msra.mxu0 %v6859
    %6916 = vmatprep.subr.mxu0 0.0
    %6917 = vmatpush1.msra.mxu0 %v6858
    %6918 = vmatprep.subr.mxu0 0.0
    %6919 = vmatpush1.msra.mxu0 %v6857
    %6920 = vmatprep.subr.mxu0 0.0
    %6921 = vmatpush1.msra.mxu0 %v6856
    %6922 = vmatprep.subr.mxu0 0.0
    %6923 = vmatpush1.msra.mxu0 %v6855
    %6924 = vmatprep.subr.mxu0 0.0
    %6925 = vmatpush1.msra.mxu0 %v6854
    %6926 = vmatprep.subr.mxu0 0.0
    %6927 = vmatpush1.msra.mxu0 %v6853
    %6928 = vmatprep.subr.mxu0 0.0
    %6929 = vmatpush1.msra.mxu0 %v6852
    %6930 = vmatprep.subr.mxu0 0.0
    %6931 = vmatpush1.msra.mxu0 %v6851
    %6932 = vmatprep.subr.mxu0 0.0
    %6933 = vmatpush1.msra.mxu0 %v6850
    %6934 = vmatprep.subr.mxu0 0.0
    %6935 = vmatpush1.msra.mxu0 %v6849
    %6936 = vmatprep.subr.mxu0 0.0
    %6937 = vmatpush1.msra.mxu0 %v6848
    %6938 = vmatprep.subr.mxu0 0.0
    %6939 = vmatpush1.msra.mxu0 %v6847
    %6940 = vmatprep.subr.mxu0 0.0
    %6941 = vmatpush1.msra.mxu0 %v6846
    %6942 = vmatprep.subr.mxu0 0.0
    %6943 = vmatpush2.msra.mxu0 %v6877
    %6944 = vmatprep.subr.mxu0 0.0
    %6945 = vmatpush2.msra.mxu0 %v6876
    %6946 = vmatprep.subr.mxu0 0.0
    %6947 = vmatpush2.msra.mxu0 %v6875
    %6948 = vmatprep.subr.mxu0 0.0
    %6949 = vmatpush2.msra.mxu0 %v6874
    %6950 = vmatprep.subr.mxu0 0.0
    %6951 = vmatpush2.msra.mxu0 %v6873
    %6952 = vmatprep.subr.mxu0 0.0
    %6953 = vmatpush2.msra.mxu0 %v6872
    %6954 = vmatprep.subr.mxu0 0.0
    %6955 = vmatpush2.msra.mxu0 %v6871
    %6956 = vmatprep.subr.mxu0 0.0
    %6957 = vmatpush2.msra.mxu0 %v6870
    %6958 = vmatprep.subr.mxu0 0.0
    %6959 = vmatpush2.msra.mxu0 %v6869
    %6960 = vmatprep.subr.mxu0 0.0
    %6961 = vmatpush2.msra.mxu0 %v6868
    %6962 = vmatprep.subr.mxu0 0.0
    %6963 = vmatpush2.msra.mxu0 %v6867
    %6964 = vmatprep.subr.mxu0 0.0
    %6965 = vmatpush2.msra.mxu0 %v6866
    %6966 = vmatprep.subr.mxu0 0.0
    %6967 = vmatpush2.msra.mxu0 %v6865
    %6968 = vmatprep.subr.mxu0 0.0
    %6969 = vmatpush2.msra.mxu0 %v6864
    %6970 = vmatprep.subr.mxu0 0.0
    %6971 = vmatpush2.msra.mxu0 %v6863
    %6972 = vmatprep.subr.mxu0 0.0
    %6973 = vmatpush2.msra.mxu0 %v6862
    %6974 = vmatprep.mubr.f32.mxu0 %v5971
    %6975 = vmatmul.mubr.f32.gmra.mxu0 %v5969
    %v6976 = vpop.f32.mrf.mxu0
    %v6977 = vadd.f32 0.0, %v6976
    %v6978 = vpop.f32.mrf.mxu0
    %6979 = vmatprep.mubr.f32.mxu0 %v5977
    %6980 = vmatmul.mubr.f32.gmra.mxu0 %v5975
    %v6981 = vpop.f32.mrf.mxu0
    %v6982 = vadd.f32 0.0, %v6981
    %v6983 = vpop.f32.mrf.mxu0
    %6984 = vmatprep.mubr.f32.mxu0 %v5983
    %6985 = vmatmul.mubr.f32.gmra.mxu0 %v5981
    %v6986 = vpop.f32.mrf.mxu0
    %v6987 = vadd.f32 0.0, %v6986
    %v6988 = vpop.f32.mrf.mxu0
    %6989 = vmatprep.mubr.f32.mxu0 %v5989
    %6990 = vmatmul.mubr.f32.gmra.mxu0 %v5987
    %v6991 = vpop.f32.mrf.mxu0
    %v6992 = vadd.f32 0.0, %v6991
    %v6993 = vpop.f32.mrf.mxu0
    %6994 = vdwg.mxu0
    %6995 = vmatprep.subr.mxu0 0.0
    %6996 = vmatpush1.msra.mxu0 %v6893
    %6997 = vmatprep.subr.mxu0 0.0
    %6998 = vmatpush1.msra.mxu0 %v6892
    %6999 = vmatprep.subr.mxu0 0.0
    %7000 = vmatpush1.msra.mxu0 %v6891
    %7001 = vmatprep.subr.mxu0 0.0
    %7002 = vmatpush1.msra.mxu0 %v6890
    %7003 = vmatprep.subr.mxu0 0.0
    %7004 = vmatpush1.msra.mxu0 %v6889
    %7005 = vmatprep.subr.mxu0 0.0
    %7006 = vmatpush1.msra.mxu0 %v6888
    %7007 = vmatprep.subr.mxu0 0.0
    %7008 = vmatpush1.msra.mxu0 %v6887
    %7009 = vmatprep.subr.mxu0 0.0
    %7010 = vmatpush1.msra.mxu0 %v6886
    %7011 = vmatprep.subr.mxu0 0.0
    %7012 = vmatpush1.msra.mxu0 %v6885
    %7013 = vmatprep.subr.mxu0 0.0
    %7014 = vmatpush1.msra.mxu0 %v6884
    %7015 = vmatprep.subr.mxu0 0.0
    %7016 = vmatpush1.msra.mxu0 %v6883
    %7017 = vmatprep.subr.mxu0 0.0
    %7018 = vmatpush1.msra.mxu0 %v6882
    %7019 = vmatprep.subr.mxu0 0.0
    %7020 = vmatpush1.msra.mxu0 %v6881
    %7021 = vmatprep.subr.mxu0 0.0
    %7022 = vmatpush1.msra.mxu0 %v6880
    %7023 = vmatprep.subr.mxu0 0.0
    %7024 = vmatpush1.msra.mxu0 %v6879
    %7025 = vmatprep.subr.mxu0 0.0
    %7026 = vmatpush1.msra.mxu0 %v6878
    %7027 = vmatprep.subr.mxu0 0.0
    %7028 = vmatpush2.msra.mxu0 %v6909
    %7029 = vmatprep.subr.mxu0 0.0
    %7030 = vmatpush2.msra.mxu0 %v6908
    %7031 = vmatprep.subr.mxu0 0.0
    %7032 = vmatpush2.msra.mxu0 %v6907
    %7033 = vmatprep.subr.mxu0 0.0
    %7034 = vmatpush2.msra.mxu0 %v6906
    %7035 = vmatprep.subr.mxu0 0.0
    %7036 = vmatpush2.msra.mxu0 %v6905
    %7037 = vmatprep.subr.mxu0 0.0
    %7038 = vmatpush2.msra.mxu0 %v6904
    %7039 = vmatprep.subr.mxu0 0.0
    %7040 = vmatpush2.msra.mxu0 %v6903
    %7041 = vmatprep.subr.mxu0 0.0
    %7042 = vmatpush2.msra.mxu0 %v6902
    %7043 = vmatprep.subr.mxu0 0.0
    %7044 = vmatpush2.msra.mxu0 %v6901
    %7045 = vmatprep.subr.mxu0 0.0
    %7046 = vmatpush2.msra.mxu0 %v6900
    %7047 = vmatprep.subr.mxu0 0.0
    %7048 = vmatpush2.msra.mxu0 %v6899
    %7049 = vmatprep.subr.mxu0 0.0
    %7050 = vmatpush2.msra.mxu0 %v6898
    %7051 = vmatprep.subr.mxu0 0.0
    %7052 = vmatpush2.msra.mxu0 %v6897
    %7053 = vmatprep.subr.mxu0 0.0
    %7054 = vmatpush2.msra.mxu0 %v6896
    %7055 = vmatprep.subr.mxu0 0.0
    %7056 = vmatpush2.msra.mxu0 %v6895
    %7057 = vmatprep.subr.mxu0 0.0
    %7058 = vmatpush2.msra.mxu0 %v6894
    %7059 = vmatprep.mubr.f32.mxu0 %v6060
    %7060 = vmatmul.mubr.f32.gmra.mxu0 %v6058
    %v7061 = vpop.f32.mrf.mxu0
    %v7062 = vadd.f32 %v6977, %v7061
    %v7063 = vpop.f32.mrf.mxu0
    %7064 = vmatprep.mubr.f32.mxu0 %v6066
    %7065 = vmatmul.mubr.f32.gmra.mxu0 %v6064
    %v7066 = vpop.f32.mrf.mxu0
    %v7067 = vadd.f32 %v6982, %v7066
    %v7068 = vpop.f32.mrf.mxu0
    %7069 = vmatprep.mubr.f32.mxu0 %v6072
    %7070 = vmatmul.mubr.f32.gmra.mxu0 %v6070
    %v7071 = vpop.f32.mrf.mxu0
    %v7072 = vadd.f32 %v6987, %v7071
    %v7073 = vpop.f32.mrf.mxu0
    %7074 = vmatprep.mubr.f32.mxu0 %v6078
    %7075 = vmatmul.mubr.f32.gmra.mxu0 %v6076
    %v7076 = vpop.f32.mrf.mxu0
    %v7077 = vadd.f32 %v6992, %v7076
    %v7078 = vpop.f32.mrf.mxu0
    %7079 = vdwg.mxu0
    %7080 = vmatprep.subr.mxu0 0.0
    %7081 = vmatpush1.msra.mxu0 %v6796
    %7082 = vmatprep.subr.mxu0 0.0
    %7083 = vmatpush1.msra.mxu0 %v6795
    %7084 = vmatprep.subr.mxu0 0.0
    %7085 = vmatpush1.msra.mxu0 %v6794
    %7086 = vmatprep.subr.mxu0 0.0
    %7087 = vmatpush1.msra.mxu0 %v6793
    %7088 = vmatprep.subr.mxu0 0.0
    %7089 = vmatpush1.msra.mxu0 %v6792
    %7090 = vmatprep.subr.mxu0 0.0
    %7091 = vmatpush1.msra.mxu0 %v6791
    %7092 = vmatprep.subr.mxu0 0.0
    %7093 = vmatpush1.msra.mxu0 %v6790
    %7094 = vmatprep.subr.mxu0 0.0
    %7095 = vmatpush1.msra.mxu0 %v6789
    %7096 = vmatprep.subr.mxu0 0.0
    %7097 = vmatpush1.msra.mxu0 %v6788
    %7098 = vmatprep.subr.mxu0 0.0
    %7099 = vmatpush1.msra.mxu0 %v6787
    %7100 = vmatprep.subr.mxu0 0.0
    %7101 = vmatpush1.msra.mxu0 %v6786
    %7102 = vmatprep.subr.mxu0 0.0
    %7103 = vmatpush1.msra.mxu0 %v6785
    %7104 = vmatprep.subr.mxu0 0.0
    %7105 = vmatpush1.msra.mxu0 %v6784
    %7106 = vmatprep.subr.mxu0 0.0
    %7107 = vmatpush1.msra.mxu0 %v6783
    %7108 = vmatprep.subr.mxu0 0.0
    %7109 = vmatpush1.msra.mxu0 %v6782
    %7110 = vmatprep.subr.mxu0 0.0
    %7111 = vmatpush1.msra.mxu0 %v6781
    %7112 = vmatprep.subr.mxu0 0.0
    %7113 = vmatpush2.msra.mxu0 %v6812
    %7114 = vmatprep.subr.mxu0 0.0
    %7115 = vmatpush2.msra.mxu0 %v6811
    %7116 = vmatprep.subr.mxu0 0.0
    %7117 = vmatpush2.msra.mxu0 %v6810
    %7118 = vmatprep.subr.mxu0 0.0
    %7119 = vmatpush2.msra.mxu0 %v6809
    %7120 = vmatprep.subr.mxu0 0.0
    %7121 = vmatpush2.msra.mxu0 %v6808
    %7122 = vmatprep.subr.mxu0 0.0
    %7123 = vmatpush2.msra.mxu0 %v6807
    %7124 = vmatprep.subr.mxu0 0.0
    %7125 = vmatpush2.msra.mxu0 %v6806
    %7126 = vmatprep.subr.mxu0 0.0
    %7127 = vmatpush2.msra.mxu0 %v6805
    %7128 = vmatprep.subr.mxu0 0.0
    %7129 = vmatpush2.msra.mxu0 %v6804
    %7130 = vmatprep.subr.mxu0 0.0
    %7131 = vmatpush2.msra.mxu0 %v6803
    %7132 = vmatprep.subr.mxu0 0.0
    %7133 = vmatpush2.msra.mxu0 %v6802
    %7134 = vmatprep.subr.mxu0 0.0
    %7135 = vmatpush2.msra.mxu0 %v6801
    %7136 = vmatprep.subr.mxu0 0.0
    %7137 = vmatpush2.msra.mxu0 %v6800
    %7138 = vmatprep.subr.mxu0 0.0
    %7139 = vmatpush2.msra.mxu0 %v6799
    %7140 = vmatprep.subr.mxu0 0.0
    %7141 = vmatpush2.msra.mxu0 %v6798
    %7142 = vmatprep.subr.mxu0 0.0
    %7143 = vmatpush2.msra.mxu0 %v6797
    %7144 = vmatprep.mubr.f32.mxu0 %v6672
    %7145 = vmatmul.mubr.f32.gmra.mxu0 %v6670
    %v7146 = vpop.f32.mrf.mxu0
    %v7147 = vadd.f32 %v7062, %v7146
    %v7148 = vpop.f32.mrf.mxu0
    %7149 = vmatprep.mubr.f32.mxu0 %v6678
    %7150 = vmatmul.mubr.f32.gmra.mxu0 %v6676
    %v7151 = vpop.f32.mrf.mxu0
    %v7152 = vadd.f32 %v7067, %v7151
    %v7153 = vpop.f32.mrf.mxu0
    %7154 = vmatprep.mubr.f32.mxu0 %v6684
    %7155 = vmatmul.mubr.f32.gmra.mxu0 %v6682
    %v7156 = vpop.f32.mrf.mxu0
    %v7157 = vadd.f32 %v7072, %v7156
    %v7158 = vpop.f32.mrf.mxu0
    %7159 = vmatprep.mubr.f32.mxu0 %v6690
    %7160 = vmatmul.mubr.f32.gmra.mxu0 %v6688
    %v7161 = vpop.f32.mrf.mxu0
    %v7162 = vadd.f32 %v7077, %v7161
    %v7163 = vpop.f32.mrf.mxu0
    %7164 = vdwg.mxu0
    %7165 = vmatprep.subr.mxu0 0.0
    %7166 = vmatpush1.msra.mxu0 %v6828
    %7167 = vmatprep.subr.mxu0 0.0
    %7168 = vmatpush1.msra.mxu0 %v6827
    %7169 = vmatprep.subr.mxu0 0.0
    %7170 = vmatpush1.msra.mxu0 %v6826
    %7171 = vmatprep.subr.mxu0 0.0
    %7172 = vmatpush1.msra.mxu0 %v6825
    %7173 = vmatprep.subr.mxu0 0.0
    %7174 = vmatpush1.msra.mxu0 %v6824
    %7175 = vmatprep.subr.mxu0 0.0
    %7176 = vmatpush1.msra.mxu0 %v6823
    %7177 = vmatprep.subr.mxu0 0.0
    %7178 = vmatpush1.msra.mxu0 %v6822
    %7179 = vmatprep.subr.mxu0 0.0
    %7180 = vmatpush1.msra.mxu0 %v6821
    %7181 = vmatprep.subr.mxu0 0.0
    %7182 = vmatpush1.msra.mxu0 %v6820
    %7183 = vmatprep.subr.mxu0 0.0
    %7184 = vmatpush1.msra.mxu0 %v6819
    %7185 = vmatprep.subr.mxu0 0.0
    %7186 = vmatpush1.msra.mxu0 %v6818
    %7187 = vmatprep.subr.mxu0 0.0
    %7188 = vmatpush1.msra.mxu0 %v6817
    %7189 = vmatprep.subr.mxu0 0.0
    %7190 = vmatpush1.msra.mxu0 %v6816
    %7191 = vmatprep.subr.mxu0 0.0
    %7192 = vmatpush1.msra.mxu0 %v6815
    %7193 = vmatprep.subr.mxu0 0.0
    %7194 = vmatpush1.msra.mxu0 %v6814
    %7195 = vmatprep.subr.mxu0 0.0
    %7196 = vmatpush1.msra.mxu0 %v6813
    %7197 = vmatprep.subr.mxu0 0.0
    %7198 = vmatpush2.msra.mxu0 %v6844
    %7199 = vmatprep.subr.mxu0 0.0
    %7200 = vmatpush2.msra.mxu0 %v6843
    %7201 = vmatprep.subr.mxu0 0.0
    %7202 = vmatpush2.msra.mxu0 %v6842
    %7203 = vmatprep.subr.mxu0 0.0
    %7204 = vmatpush2.msra.mxu0 %v6841
    %7205 = vmatprep.subr.mxu0 0.0
    %7206 = vmatpush2.msra.mxu0 %v6840
    %7207 = vmatprep.subr.mxu0 0.0
    %7208 = vmatpush2.msra.mxu0 %v6839
    %7209 = vmatprep.subr.mxu0 0.0
    %7210 = vmatpush2.msra.mxu0 %v6838
    %7211 = vmatprep.subr.mxu0 0.0
    %7212 = vmatpush2.msra.mxu0 %v6837
    %7213 = vmatprep.subr.mxu0 0.0
    %7214 = vmatpush2.msra.mxu0 %v6836
    %7215 = vmatprep.subr.mxu0 0.0
    %7216 = vmatpush2.msra.mxu0 %v6835
    %7217 = vmatprep.subr.mxu0 0.0
    %7218 = vmatpush2.msra.mxu0 %v6834
    %7219 = vmatprep.subr.mxu0 0.0
    %7220 = vmatpush2.msra.mxu0 %v6833
    %7221 = vmatprep.subr.mxu0 0.0
    %7222 = vmatpush2.msra.mxu0 %v6832
    %7223 = vmatprep.subr.mxu0 0.0
    %7224 = vmatpush2.msra.mxu0 %v6831
    %7225 = vmatprep.subr.mxu0 0.0
    %7226 = vmatpush2.msra.mxu0 %v6830
    %7227 = vmatprep.subr.mxu0 0.0
    %7228 = vmatpush2.msra.mxu0 %v6829
    %7229 = vmatprep.mubr.f32.mxu0 %v6761
    %7230 = vmatmul.mubr.f32.gmra.mxu0 %v6759
    %v7231 = vpop.f32.mrf.mxu0
    %v7232 = vadd.f32 %v7147, %v7231
    %v7233 = vpop.f32.mrf.mxu0
    %7234 = vmatprep.mubr.f32.mxu0 %v6767
    %7235 = vmatmul.mubr.f32.gmra.mxu0 %v6765
    %v7236 = vpop.f32.mrf.mxu0
    %v7237 = vadd.f32 %v7152, %v7236
    %v7238 = vpop.f32.mrf.mxu0
    %7239 = vmatprep.mubr.f32.mxu0 %v6773
    %7240 = vmatmul.mubr.f32.gmra.mxu0 %v6771
    %v7241 = vpop.f32.mrf.mxu0
    %v7242 = vadd.f32 %v7157, %v7241
    %v7243 = vpop.f32.mrf.mxu0
    %7244 = vmatprep.mubr.f32.mxu0 %v6779
    %7245 = vmatmul.mubr.f32.gmra.mxu0 %v6777
    %v7246 = vpop.f32.mrf.mxu0
    %v7247 = vadd.f32 %v7162, %v7246
    %v7248 = vpop.f32.mrf.mxu0
    %7249 = vdwg.mxu0
    %v7250 = vld [vmem:[%s841] sm:$0xff]
    %v7251 = vld [vmem:[%s841 + $0x8] sm:$0xff]
    %v7252 = vld [vmem:[%s841 + $0x10] sm:$0xff]
    %v7253 = vld [vmem:[%s841 + $0x18] sm:$0xff]
    %v7255 = vsel %vm535, %v7250, 0
    %v7258 = vsel %vm535, %v7251, 0
    %v7261 = vsel %vm535, %v7252, 0
    %v7264 = vsel %vm535, %v7253, 0
    %7266 = vmatprep.subr.mxu0 0.0
    %7267 = vmatpush1.msra.mxu0 0.0
    %7268 = vmatprep.subr.mxu0 0.0
    %7269 = vmatpush1.msra.mxu0 0.0
    %7270 = vmatprep.subr.mxu0 0.0
    %7271 = vmatpush1.msra.mxu0 0.0
    %7272 = vmatprep.subr.mxu0 0.0
    %7273 = vmatpush1.msra.mxu0 0.0
    %7274 = vmatprep.subr.mxu0 0.0
    %7275 = vmatpush1.msra.mxu0 0.0
    %7276 = vmatprep.subr.mxu0 0.0
    %7277 = vmatpush1.msra.mxu0 0.0
    %7278 = vmatprep.subr.mxu0 0.0
    %7279 = vmatpush1.msra.mxu0 0.0
    %7280 = vmatprep.subr.mxu0 0.0
    %7281 = vmatpush1.msra.mxu0 0.0
    %7282 = vmatprep.subr.mxu0 0.0
    %7283 = vmatpush1.msra.mxu0 0.0
    %7284 = vmatprep.subr.mxu0 0.0
    %7285 = vmatpush1.msra.mxu0 0.0
    %7286 = vmatprep.subr.mxu0 0.0
    %7287 = vmatpush1.msra.mxu0 0.0
    %7288 = vmatprep.subr.mxu0 0.0
    %7289 = vmatpush1.msra.mxu0 0.0
    %7290 = vmatprep.subr.mxu0 %v5989
    %7291 = vmatpush1.msra.mxu0 %v5987
    %7292 = vmatprep.subr.mxu0 %v5983
    %7293 = vmatpush1.msra.mxu0 %v5981
    %7294 = vmatprep.subr.mxu0 %v5977
    %7295 = vmatpush1.msra.mxu0 %v5975
    %7296 = vmatprep.subr.mxu0 %v5971
    %7297 = vmatpush1.msra.mxu0 %v5969
    %7298 = vmatprep.subr.mxu0 0.0
    %7299 = vmatpush2.msra.mxu0 0.0
    %7300 = vmatprep.subr.mxu0 0.0
    %7301 = vmatpush2.msra.mxu0 0.0
    %7302 = vmatprep.subr.mxu0 0.0
    %7303 = vmatpush2.msra.mxu0 0.0
    %7304 = vmatprep.subr.mxu0 0.0
    %7305 = vmatpush2.msra.mxu0 0.0
    %7306 = vmatprep.subr.mxu0 0.0
    %7307 = vmatpush2.msra.mxu0 0.0
    %7308 = vmatprep.subr.mxu0 0.0
    %7309 = vmatpush2.msra.mxu0 0.0
    %7310 = vmatprep.subr.mxu0 0.0
    %7311 = vmatpush2.msra.mxu0 0.0
    %7312 = vmatprep.subr.mxu0 0.0
    %7313 = vmatpush2.msra.mxu0 0.0
    %7314 = vmatprep.subr.mxu0 0.0
    %7315 = vmatpush2.msra.mxu0 0.0
    %7316 = vmatprep.subr.mxu0 0.0
    %7317 = vmatpush2.msra.mxu0 0.0
    %7318 = vmatprep.subr.mxu0 0.0
    %7319 = vmatpush2.msra.mxu0 0.0
    %7320 = vmatprep.subr.mxu0 0.0
    %7321 = vmatpush2.msra.mxu0 0.0
    %7322 = vmatprep.subr.mxu0 0.0
    %7323 = vmatpush2.msra.mxu0 0.0
    %7324 = vmatprep.subr.mxu0 0.0
    %7325 = vmatpush2.msra.mxu0 0.0
    %7326 = vmatprep.subr.mxu0 0.0
    %7327 = vmatpush2.msra.mxu0 0.0
    %7328 = vmatprep.subr.mxu0 0.0
    %7329 = vmatpush2.msra.mxu0 0.0
    %7330 = vmatprep.mubr.f32.mxu0 0.0
    %7331 = vmatmul.mubr.f32.gmra.mxu0 %v7255
    %v7332 = vpop.f32.mrf.mxu0
    %v7333 = vadd.f32 0.0, %v7332
    %v7334 = vpop.f32.mrf.mxu0
    %v7335 = vadd.f32 0.0, %v7334
    %7336 = vmatprep.mubr.f32.mxu0 0.0
    %7337 = vmatmul.mubr.f32.gmra.mxu0 %v7258
    %v7338 = vpop.f32.mrf.mxu0
    %v7339 = vadd.f32 0.0, %v7338
    %v7340 = vpop.f32.mrf.mxu0
    %v7341 = vadd.f32 0.0, %v7340
    %7342 = vmatprep.mubr.f32.mxu0 0.0
    %7343 = vmatmul.mubr.f32.gmra.mxu0 %v7261
    %v7344 = vpop.f32.mrf.mxu0
    %v7345 = vadd.f32 0.0, %v7344
    %v7346 = vpop.f32.mrf.mxu0
    %v7347 = vadd.f32 0.0, %v7346
    %7348 = vmatprep.mubr.f32.mxu0 0.0
    %7349 = vmatmul.mubr.f32.gmra.mxu0 %v7264
    %v7350 = vpop.f32.mrf.mxu0
    %v7351 = vadd.f32 0.0, %v7350
    %v7352 = vpop.f32.mrf.mxu0
    %v7353 = vadd.f32 0.0, %v7352
    %7354 = vdwg.mxu0
    %7355 = vmatprep.subr.mxu0 0.0
    %7356 = vmatpush1.msra.mxu0 0.0
    %7357 = vmatprep.subr.mxu0 0.0
    %7358 = vmatpush1.msra.mxu0 0.0
    %7359 = vmatprep.subr.mxu0 0.0
    %7360 = vmatpush1.msra.mxu0 0.0
    %7361 = vmatprep.subr.mxu0 0.0
    %7362 = vmatpush1.msra.mxu0 0.0
    %7363 = vmatprep.subr.mxu0 0.0
    %7364 = vmatpush1.msra.mxu0 0.0
    %7365 = vmatprep.subr.mxu0 0.0
    %7366 = vmatpush1.msra.mxu0 0.0
    %7367 = vmatprep.subr.mxu0 0.0
    %7368 = vmatpush1.msra.mxu0 0.0
    %7369 = vmatprep.subr.mxu0 0.0
    %7370 = vmatpush1.msra.mxu0 0.0
    %7371 = vmatprep.subr.mxu0 0.0
    %7372 = vmatpush1.msra.mxu0 0.0
    %7373 = vmatprep.subr.mxu0 0.0
    %7374 = vmatpush1.msra.mxu0 0.0
    %7375 = vmatprep.subr.mxu0 0.0
    %7376 = vmatpush1.msra.mxu0 0.0
    %7377 = vmatprep.subr.mxu0 0.0
    %7378 = vmatpush1.msra.mxu0 0.0
    %7379 = vmatprep.subr.mxu0 %v6078
    %7380 = vmatpush1.msra.mxu0 %v6076
    %7381 = vmatprep.subr.mxu0 %v6072
    %7382 = vmatpush1.msra.mxu0 %v6070
    %7383 = vmatprep.subr.mxu0 %v6066
    %7384 = vmatpush1.msra.mxu0 %v6064
    %7385 = vmatprep.subr.mxu0 %v6060
    %7386 = vmatpush1.msra.mxu0 %v6058
    %7387 = vmatprep.subr.mxu0 0.0
    %7388 = vmatpush2.msra.mxu0 0.0
    %7389 = vmatprep.subr.mxu0 0.0
    %7390 = vmatpush2.msra.mxu0 0.0
    %7391 = vmatprep.subr.mxu0 0.0
    %7392 = vmatpush2.msra.mxu0 0.0
    %7393 = vmatprep.subr.mxu0 0.0
    %7394 = vmatpush2.msra.mxu0 0.0
    %7395 = vmatprep.subr.mxu0 0.0
    %7396 = vmatpush2.msra.mxu0 0.0
    %7397 = vmatprep.subr.mxu0 0.0
    %7398 = vmatpush2.msra.mxu0 0.0
    %7399 = vmatprep.subr.mxu0 0.0
    %7400 = vmatpush2.msra.mxu0 0.0
    %7401 = vmatprep.subr.mxu0 0.0
    %7402 = vmatpush2.msra.mxu0 0.0
    %7403 = vmatprep.subr.mxu0 0.0
    %7404 = vmatpush2.msra.mxu0 0.0
    %7405 = vmatprep.subr.mxu0 0.0
    %7406 = vmatpush2.msra.mxu0 0.0
    %7407 = vmatprep.subr.mxu0 0.0
    %7408 = vmatpush2.msra.mxu0 0.0
    %7409 = vmatprep.subr.mxu0 0.0
    %7410 = vmatpush2.msra.mxu0 0.0
    %7411 = vmatprep.subr.mxu0 0.0
    %7412 = vmatpush2.msra.mxu0 0.0
    %7413 = vmatprep.subr.mxu0 0.0
    %7414 = vmatpush2.msra.mxu0 0.0
    %7415 = vmatprep.subr.mxu0 0.0
    %7416 = vmatpush2.msra.mxu0 0.0
    %7417 = vmatprep.subr.mxu0 0.0
    %7418 = vmatpush2.msra.mxu0 0.0
    %7419 = vmatprep.mubr.f32.mxu0 0.0
    %7420 = vmatmul.mubr.f32.gmra.mxu0 %v7255
    %v7421 = vpop.f32.mrf.mxu0
    %v7422 = vadd.f32 0.0, %v7421
    %v7423 = vpop.f32.mrf.mxu0
    %v7424 = vadd.f32 0.0, %v7423
    %7425 = vmatprep.mubr.f32.mxu0 0.0
    %7426 = vmatmul.mubr.f32.gmra.mxu0 %v7258
    %v7427 = vpop.f32.mrf.mxu0
    %v7428 = vadd.f32 0.0, %v7427
    %v7429 = vpop.f32.mrf.mxu0
    %v7430 = vadd.f32 0.0, %v7429
    %7431 = vmatprep.mubr.f32.mxu0 0.0
    %7432 = vmatmul.mubr.f32.gmra.mxu0 %v7261
    %v7433 = vpop.f32.mrf.mxu0
    %v7434 = vadd.f32 0.0, %v7433
    %v7435 = vpop.f32.mrf.mxu0
    %v7436 = vadd.f32 0.0, %v7435
    %7437 = vmatprep.mubr.f32.mxu0 0.0
    %7438 = vmatmul.mubr.f32.gmra.mxu0 %v7264
    %v7439 = vpop.f32.mrf.mxu0
    %v7440 = vadd.f32 0.0, %v7439
    %v7441 = vpop.f32.mrf.mxu0
    %v7442 = vadd.f32 0.0, %v7441
    %7443 = vdwg.mxu0
    %s7444 = scalar_lea.vmem [#allocation40], 1024
    %v7445 = vld [vmem:[%s7444] sm:$0xff]
    %v7446 = vld [vmem:[%s7444 + $0x8] sm:$0xff]
    %v7447 = vld [vmem:[%s7444 + $0x10] sm:$0xff]
    %v7448 = vld [vmem:[%s7444 + $0x18] sm:$0xff]
    %v7449 = vld [vmem:[%s7444 + $0x20] sm:$0xff]
    %v7450 = vld [vmem:[%s7444 + $0x28] sm:$0xff]
    %v7451 = vld [vmem:[%s7444 + $0x30] sm:$0xff]
    %v7452 = vld [vmem:[%s7444 + $0x38] sm:$0xff]
    %v7453 = vld [vmem:[%s7444 + $0x40] sm:$0xff]
    %v7454 = vld [vmem:[%s7444 + $0x48] sm:$0xff]
    %v7455 = vld [vmem:[%s7444 + $0x50] sm:$0xff]
    %v7456 = vld [vmem:[%s7444 + $0x58] sm:$0xff]
    %v7457 = vld [vmem:[%s7444 + $0x60] sm:$0xff]
    %v7458 = vld [vmem:[%s7444 + $0x68] sm:$0xff]
    %v7459 = vld [vmem:[%s7444 + $0x70] sm:$0xff]
    %v7460 = vld [vmem:[%s7444 + $0x78] sm:$0xff]
    %v7461 = vld [vmem:[%s7444 + $0x80] sm:$0xff]
    %v7462 = vld [vmem:[%s7444 + $0x88] sm:$0xff]
    %v7463 = vld [vmem:[%s7444 + $0x90] sm:$0xff]
    %v7464 = vld [vmem:[%s7444 + $0x98] sm:$0xff]
    %v7465 = vld [vmem:[%s7444 + $0xa0] sm:$0xff]
    %v7466 = vld [vmem:[%s7444 + $0xa8] sm:$0xff]
    %v7467 = vld [vmem:[%s7444 + $0xb0] sm:$0xff]
    %v7468 = vld [vmem:[%s7444 + $0xb8] sm:$0xff]
    %v7469 = vld [vmem:[%s7444 + $0xc0] sm:$0xff]
    %v7470 = vld [vmem:[%s7444 + $0xc8] sm:$0xff]
    %v7471 = vld [vmem:[%s7444 + $0xd0] sm:$0xff]
    %v7472 = vld [vmem:[%s7444 + $0xd8] sm:$0xff]
    %v7473 = vld [vmem:[%s7444 + $0xe0] sm:$0xff]
    %v7474 = vld [vmem:[%s7444 + $0xe8] sm:$0xff]
    %v7475 = vld [vmem:[%s7444 + $0xf0] sm:$0xff]
    %v7476 = vld [vmem:[%s7444 + $0xf8] sm:$0xff]
    %v7477 = vld [vmem:[%s7444 + $0x100] sm:$0xff]
    %v7478 = vld [vmem:[%s7444 + $0x108] sm:$0xff]
    %v7479 = vld [vmem:[%s7444 + $0x110] sm:$0xff]
    %v7480 = vld [vmem:[%s7444 + $0x118] sm:$0xff]
    %v7481 = vld [vmem:[%s7444 + $0x120] sm:$0xff]
    %v7482 = vld [vmem:[%s7444 + $0x128] sm:$0xff]
    %v7483 = vld [vmem:[%s7444 + $0x130] sm:$0xff]
    %v7484 = vld [vmem:[%s7444 + $0x138] sm:$0xff]
    %v7485 = vld [vmem:[%s7444 + $0x140] sm:$0xff]
    %v7486 = vld [vmem:[%s7444 + $0x148] sm:$0xff]
    %v7487 = vld [vmem:[%s7444 + $0x150] sm:$0xff]
    %v7488 = vld [vmem:[%s7444 + $0x158] sm:$0xff]
    %v7489 = vld [vmem:[%s7444 + $0x160] sm:$0xff]
    %v7490 = vld [vmem:[%s7444 + $0x168] sm:$0xff]
    %v7491 = vld [vmem:[%s7444 + $0x170] sm:$0xff]
    %v7492 = vld [vmem:[%s7444 + $0x178] sm:$0xff]
    %v7493 = vld [vmem:[%s7444 + $0x180] sm:$0xff]
    %v7494 = vld [vmem:[%s7444 + $0x188] sm:$0xff]
    %v7495 = vld [vmem:[%s7444 + $0x190] sm:$0xff]
    %v7496 = vld [vmem:[%s7444 + $0x198] sm:$0xff]
    %v7497 = vld [vmem:[%s7444 + $0x1a0] sm:$0xff]
    %v7498 = vld [vmem:[%s7444 + $0x1a8] sm:$0xff]
    %v7499 = vld [vmem:[%s7444 + $0x1b0] sm:$0xff]
    %v7500 = vld [vmem:[%s7444 + $0x1b8] sm:$0xff]
    %v7501 = vld [vmem:[%s7444 + $0x1c0] sm:$0xff]
    %v7502 = vld [vmem:[%s7444 + $0x1c8] sm:$0xff]
    %v7503 = vld [vmem:[%s7444 + $0x1d0] sm:$0xff]
    %v7504 = vld [vmem:[%s7444 + $0x1d8] sm:$0xff]
    %v7505 = vld [vmem:[%s7444 + $0x1e0] sm:$0xff]
    %v7506 = vld [vmem:[%s7444 + $0x1e8] sm:$0xff]
    %v7507 = vld [vmem:[%s7444 + $0x1f0] sm:$0xff]
    %v7508 = vld [vmem:[%s7444 + $0x1f8] sm:$0xff]
    %7509 = vmatprep.subr.mxu0 0.0
    %7510 = vmatpush1.msra.mxu0 %v7460
    %7511 = vmatprep.subr.mxu0 0.0
    %7512 = vmatpush1.msra.mxu0 %v7459
    %7513 = vmatprep.subr.mxu0 0.0
    %7514 = vmatpush1.msra.mxu0 %v7458
    %7515 = vmatprep.subr.mxu0 0.0
    %7516 = vmatpush1.msra.mxu0 %v7457
    %7517 = vmatprep.subr.mxu0 0.0
    %7518 = vmatpush1.msra.mxu0 %v7456
    %7519 = vmatprep.subr.mxu0 0.0
    %7520 = vmatpush1.msra.mxu0 %v7455
    %7521 = vmatprep.subr.mxu0 0.0
    %7522 = vmatpush1.msra.mxu0 %v7454
    %7523 = vmatprep.subr.mxu0 0.0
    %7524 = vmatpush1.msra.mxu0 %v7453
    %7525 = vmatprep.subr.mxu0 0.0
    %7526 = vmatpush1.msra.mxu0 %v7452
    %7527 = vmatprep.subr.mxu0 0.0
    %7528 = vmatpush1.msra.mxu0 %v7451
    %7529 = vmatprep.subr.mxu0 0.0
    %7530 = vmatpush1.msra.mxu0 %v7450
    %7531 = vmatprep.subr.mxu0 0.0
    %7532 = vmatpush1.msra.mxu0 %v7449
    %7533 = vmatprep.subr.mxu0 0.0
    %7534 = vmatpush1.msra.mxu0 %v7448
    %7535 = vmatprep.subr.mxu0 0.0
    %7536 = vmatpush1.msra.mxu0 %v7447
    %7537 = vmatprep.subr.mxu0 0.0
    %7538 = vmatpush1.msra.mxu0 %v7446
    %7539 = vmatprep.subr.mxu0 0.0
    %7540 = vmatpush1.msra.mxu0 %v7445
    %7541 = vmatprep.subr.mxu0 0.0
    %7542 = vmatpush2.msra.mxu0 %v7476
    %7543 = vmatprep.subr.mxu0 0.0
    %7544 = vmatpush2.msra.mxu0 %v7475
    %7545 = vmatprep.subr.mxu0 0.0
    %7546 = vmatpush2.msra.mxu0 %v7474
    %7547 = vmatprep.subr.mxu0 0.0
    %7548 = vmatpush2.msra.mxu0 %v7473
    %7549 = vmatprep.subr.mxu0 0.0
    %7550 = vmatpush2.msra.mxu0 %v7472
    %7551 = vmatprep.subr.mxu0 0.0
    %7552 = vmatpush2.msra.mxu0 %v7471
    %7553 = vmatprep.subr.mxu0 0.0
    %7554 = vmatpush2.msra.mxu0 %v7470
    %7555 = vmatprep.subr.mxu0 0.0
    %7556 = vmatpush2.msra.mxu0 %v7469
    %7557 = vmatprep.subr.mxu0 0.0
    %7558 = vmatpush2.msra.mxu0 %v7468
    %7559 = vmatprep.subr.mxu0 0.0
    %7560 = vmatpush2.msra.mxu0 %v7467
    %7561 = vmatprep.subr.mxu0 0.0
    %7562 = vmatpush2.msra.mxu0 %v7466
    %7563 = vmatprep.subr.mxu0 0.0
    %7564 = vmatpush2.msra.mxu0 %v7465
    %7565 = vmatprep.subr.mxu0 0.0
    %7566 = vmatpush2.msra.mxu0 %v7464
    %7567 = vmatprep.subr.mxu0 0.0
    %7568 = vmatpush2.msra.mxu0 %v7463
    %7569 = vmatprep.subr.mxu0 0.0
    %7570 = vmatpush2.msra.mxu0 %v7462
    %7571 = vmatprep.subr.mxu0 0.0
    %7572 = vmatpush2.msra.mxu0 %v7461
    %7573 = vmatprep.mubr.f32.mxu0 %v7335
    %7574 = vmatmul.mubr.f32.gmra.mxu0 %v7333
    %v7575 = vpop.f32.mrf.mxu0
    %v7576 = vadd.f32 0.0, %v7575
    %v7577 = vpop.f32.mrf.mxu0
    %7578 = vmatprep.mubr.f32.mxu0 %v7341
    %7579 = vmatmul.mubr.f32.gmra.mxu0 %v7339
    %v7580 = vpop.f32.mrf.mxu0
    %v7581 = vadd.f32 0.0, %v7580
    %v7582 = vpop.f32.mrf.mxu0
    %7583 = vmatprep.mubr.f32.mxu0 %v7347
    %7584 = vmatmul.mubr.f32.gmra.mxu0 %v7345
    %v7585 = vpop.f32.mrf.mxu0
    %v7586 = vadd.f32 0.0, %v7585
    %v7587 = vpop.f32.mrf.mxu0
    %7588 = vmatprep.mubr.f32.mxu0 %v7353
    %7589 = vmatmul.mubr.f32.gmra.mxu0 %v7351
    %v7590 = vpop.f32.mrf.mxu0
    %v7591 = vadd.f32 0.0, %v7590
    %v7592 = vpop.f32.mrf.mxu0
    %7593 = vdwg.mxu0
    %7594 = vmatprep.subr.mxu0 0.0
    %7595 = vmatpush1.msra.mxu0 %v7492
    %7596 = vmatprep.subr.mxu0 0.0
    %7597 = vmatpush1.msra.mxu0 %v7491
    %7598 = vmatprep.subr.mxu0 0.0
    %7599 = vmatpush1.msra.mxu0 %v7490
    %7600 = vmatprep.subr.mxu0 0.0
    %7601 = vmatpush1.msra.mxu0 %v7489
    %7602 = vmatprep.subr.mxu0 0.0
    %7603 = vmatpush1.msra.mxu0 %v7488
    %7604 = vmatprep.subr.mxu0 0.0
    %7605 = vmatpush1.msra.mxu0 %v7487
    %7606 = vmatprep.subr.mxu0 0.0
    %7607 = vmatpush1.msra.mxu0 %v7486
    %7608 = vmatprep.subr.mxu0 0.0
    %7609 = vmatpush1.msra.mxu0 %v7485
    %7610 = vmatprep.subr.mxu0 0.0
    %7611 = vmatpush1.msra.mxu0 %v7484
    %7612 = vmatprep.subr.mxu0 0.0
    %7613 = vmatpush1.msra.mxu0 %v7483
    %7614 = vmatprep.subr.mxu0 0.0
    %7615 = vmatpush1.msra.mxu0 %v7482
    %7616 = vmatprep.subr.mxu0 0.0
    %7617 = vmatpush1.msra.mxu0 %v7481
    %7618 = vmatprep.subr.mxu0 0.0
    %7619 = vmatpush1.msra.mxu0 %v7480
    %7620 = vmatprep.subr.mxu0 0.0
    %7621 = vmatpush1.msra.mxu0 %v7479
    %7622 = vmatprep.subr.mxu0 0.0
    %7623 = vmatpush1.msra.mxu0 %v7478
    %7624 = vmatprep.subr.mxu0 0.0
    %7625 = vmatpush1.msra.mxu0 %v7477
    %7626 = vmatprep.subr.mxu0 0.0
    %7627 = vmatpush2.msra.mxu0 %v7508
    %7628 = vmatprep.subr.mxu0 0.0
    %7629 = vmatpush2.msra.mxu0 %v7507
    %7630 = vmatprep.subr.mxu0 0.0
    %7631 = vmatpush2.msra.mxu0 %v7506
    %7632 = vmatprep.subr.mxu0 0.0
    %7633 = vmatpush2.msra.mxu0 %v7505
    %7634 = vmatprep.subr.mxu0 0.0
    %7635 = vmatpush2.msra.mxu0 %v7504
    %7636 = vmatprep.subr.mxu0 0.0
    %7637 = vmatpush2.msra.mxu0 %v7503
    %7638 = vmatprep.subr.mxu0 0.0
    %7639 = vmatpush2.msra.mxu0 %v7502
    %7640 = vmatprep.subr.mxu0 0.0
    %7641 = vmatpush2.msra.mxu0 %v7501
    %7642 = vmatprep.subr.mxu0 0.0
    %7643 = vmatpush2.msra.mxu0 %v7500
    %7644 = vmatprep.subr.mxu0 0.0
    %7645 = vmatpush2.msra.mxu0 %v7499
    %7646 = vmatprep.subr.mxu0 0.0
    %7647 = vmatpush2.msra.mxu0 %v7498
    %7648 = vmatprep.subr.mxu0 0.0
    %7649 = vmatpush2.msra.mxu0 %v7497
    %7650 = vmatprep.subr.mxu0 0.0
    %7651 = vmatpush2.msra.mxu0 %v7496
    %7652 = vmatprep.subr.mxu0 0.0
    %7653 = vmatpush2.msra.mxu0 %v7495
    %7654 = vmatprep.subr.mxu0 0.0
    %7655 = vmatpush2.msra.mxu0 %v7494
    %7656 = vmatprep.subr.mxu0 0.0
    %7657 = vmatpush2.msra.mxu0 %v7493
    %7658 = vmatprep.mubr.f32.mxu0 %v7424
    %7659 = vmatmul.mubr.f32.gmra.mxu0 %v7422
    %v7660 = vpop.f32.mrf.mxu0
    %v7661 = vadd.f32 %v7576, %v7660
    %v7662 = vpop.f32.mrf.mxu0
    %7663 = vmatprep.mubr.f32.mxu0 %v7430
    %7664 = vmatmul.mubr.f32.gmra.mxu0 %v7428
    %v7665 = vpop.f32.mrf.mxu0
    %v7666 = vadd.f32 %v7581, %v7665
    %v7667 = vpop.f32.mrf.mxu0
    %7668 = vmatprep.mubr.f32.mxu0 %v7436
    %7669 = vmatmul.mubr.f32.gmra.mxu0 %v7434
    %v7670 = vpop.f32.mrf.mxu0
    %v7671 = vadd.f32 %v7586, %v7670
    %v7672 = vpop.f32.mrf.mxu0
    %7673 = vmatprep.mubr.f32.mxu0 %v7442
    %7674 = vmatmul.mubr.f32.gmra.mxu0 %v7440
    %v7675 = vpop.f32.mrf.mxu0
    %v7676 = vadd.f32 %v7591, %v7675
    %v7677 = vpop.f32.mrf.mxu0
    %7678 = vdwg.mxu0
    %v7679 = vadd.f32 %v7232, %v7661
    %v7680 = vadd.f32 %v7237, %v7666
    %v7681 = vadd.f32 %v7242, %v7671
    %v7682 = vadd.f32 %v7247, %v7676
    %v7683 = vld [vmem:[#allocation42] sm:$0x1]
    %v7685 = vlaneseq
    %v7686 = vshrl.u32 %v7685, 7
    %v7687 = vsub.s32 0, %v7686
    %v7688 = vrot.slane %v7683, %v7687
    %v7690 = vadd.f32 %v7679, %v7688
    %v7691 = vadd.f32 %v7680, %v7688
    %v7692 = vadd.f32 %v7681, %v7688
    %v7693 = vadd.f32 %v7682, %v7688
    %7694 = vst [vmem:[%s77] sm:$0xff] %v7690
    %7695 = vst [vmem:[%s77 + $0x8] sm:$0xff] %v7691
    %7696 = vst [vmem:[%s77 + $0x10] sm:$0xff] %v7692
    %7697 = vst [vmem:[%s77 + $0x18] sm:$0xff] %v7693
    // Predicated region
    $region262: #{featurenet_apply.1} parent=1 // pred_check
      _
    $region263: #{featurenet_apply.1} parent=1 // pred_check_branch
      %7699 = sbr.rel (0) target = $region265
    $region264: #{featurenet_apply.1} parent=1 // pred_region
      _
    $region265: #{featurenet_apply.1} parent=1 // pred_fallthru
      _
    // Predicated region
    $region266: #{featurenet_apply.1} parent=1 // pred_check
      _
    $region267: #{featurenet_apply.1} parent=1 // pred_check_branch
      %7701 = sbr.rel (0) target = $region269
    $region268: #{featurenet_apply.1} parent=1 // pred_region
      _
    $region269: #{featurenet_apply.1} parent=1 // pred_fallthru
      _
    // Predicated region
    $region270: #{featurenet_apply.1} parent=1 // pred_check
      _
    $region271: #{featurenet_apply.1} parent=1 // pred_check_branch
      %7703 = sbr.rel (0) target = $region273
    $region272: #{featurenet_apply.1} parent=1 // pred_region
      _
    $region273: #{featurenet_apply.1} parent=1 // pred_fallthru
      _
    // Predicated region
    $region274: #{featurenet_apply.1} parent=1 // pred_check
      _
    $region275: #{featurenet_apply.1} parent=1 // pred_check_branch
      %7705 = sbr.rel (0) target = $region277
    $region276: #{featurenet_apply.1} parent=1 // pred_region
      _
    $region277: #{featurenet_apply.1} parent=1 // pred_fallthru
      _
    // Predicated region
    $region278: #{featurenet_apply.1} parent=1 // pred_check
      _
    $region279: #{featurenet_apply.1} parent=1 // pred_check_branch
      %7707 = sbr.rel (0) target = $region281
    $region280: #{featurenet_apply.1} parent=1 // pred_region
      _
    $region281: #{featurenet_apply.1} parent=1 // pred_fallthru
      _
    // Predicated region
    $region282: #{featurenet_apply.1} parent=1 // pred_check
      _
    $region283: #{featurenet_apply.1} parent=1 // pred_check_branch
      %7709 = sbr.rel (0) target = $region285
    $region284: #{featurenet_apply.1} parent=1 // pred_region
      _
    $region285: #{featurenet_apply.1} parent=1 // pred_fallthru
      _
    %7710 = vsyncpa [#allocation3], 1
    %7711 = vsyncpa [#allocation5], 1
    %7712 = vsyncpa [#allocation8], 1
    %7713 = vsyncpa [#allocation11], 1
    %7714 = vsyncpa [#allocation14], 1
    %7715 = vsyncpa [#allocation17], 1
    %7716 = vsyncpa [#allocation20], 1
    %7717 = vsyncpa [#allocation23], 1
    %7718 = vsyncpa [#allocation26], 1
    %7719 = vsyncpa [#allocation29], 1
    %7720 = vsyncpa [#allocation32], 1
    %7721 = vsyncpa [#allocation35], 1
    %7722 = vsyncpa [#allocation38], 1
    %7723 = vsyncpa [#allocation41], 1
    %7724 = vsyncpa [#allocation44], 1

</llo_original>
